<compile_context>
chip_gen: v6e
topology: v6e:2x2x1
jax: 0.10.0
libtpu: 0.0.40
codegen_flags: <defaults>
</compile_context>

<pallas_src>
import functools

import numpy as np
import jax
import jax.numpy as jnp
from jax.experimental import pallas as pl
from jax.experimental.pallas import tpu as pltpu


_POOL_K = 5   # avg_pool2d kernel_size
_POOL_S = 3   # avg_pool2d stride


# ----------------------------------------------------------------------------
# Fused kernel.
#   x_ref:  (TN, H, W, C)   f32 batch tile, NHWC (channels on lanes)
#   cw_ref: (C, 128)        bf16 1x1-conv weight (input-major)
#   cb_ref: (1, 128)        f32 conv bias
#   w1_ref: (P*128, 1024)   bf16 fc1 weight, input axis permuted to (p*128 + oc)
#   b1_ref: (1, 1024)       f32
#   w2_ref: (1024, OCP)     bf16 fc2 weight, output lane-padded to a multiple of 128
#   b2_ref: (1, OCP)        f32
#   o_ref:  (TN, OCP)       f32 output tile (lane-dense stores)
#   feat_ref: (TN, P*128)   bf16 VMEM scratch holding the flattened conv features
# ----------------------------------------------------------------------------
def _inception_aux_kernel(x_ref, cw_ref, cb_ref, w1_ref, b1_ref, w2_ref, b2_ref,
                          o_ref, feat_ref):
    TN, H, W, C = x_ref.shape
    OC = cw_ref.shape[1]
    HO = (H - _POOL_K) // _POOL_S + 1
    WO = (W - _POOL_K) // _POOL_S + 1
    inv_area = 1.0 / float(_POOL_K * _POOL_K)

    cw = cw_ref[...]            # (C, OC) bf16, loaded once
    cb = cb_ref[...]            # (1, OC) f32

    # Separable avg_pool(5,3): sum 5 H-rows per output row (20 slab loads + adds),
    # then 5 W-columns per output column (VPU only, exact f32, no transposes).
    for i in range(HO):
        rows = x_ref[:, i * _POOL_S, :, :].astype(jnp.float32)        # (TN, W, C)
        for dh in range(1, _POOL_K):
            rows = rows + x_ref[:, i * _POOL_S + dh, :, :].astype(jnp.float32)
        for j in range(WO):
            win = rows[:, j * _POOL_S, :]                             # (TN, C)
            for dw in range(1, _POOL_K):
                win = win + rows[:, j * _POOL_S + dw, :]
            pooled = win * inv_area                                   # exact avg pool

            # 1x1 conv + bias + ReLU on the MXU (bf16 operands, f32 accumulation).
            z = jnp.dot(pooled.astype(jnp.bfloat16), cw,
                        preferred_element_type=jnp.float32) + cb
            z = jnp.maximum(z, 0.0)                                   # (TN, OC)

            # Write directly into the flattened feature slab at lane offset p*OC
            # ((p, oc)-major, matching the host-permuted fc1 weight). This replaces
            # the old slice/concat flatten: a plain 128-aligned lane store, no relayout.
            p = i * WO + j
            feat_ref[:, p * OC:(p + 1) * OC] = z.astype(jnp.bfloat16)

    # fc1 + ReLU: one dense (TN, P*OC) @ (P*OC, F1) matmul.
    h = jnp.dot(feat_ref[...], w1_ref[...], preferred_element_type=jnp.float32)
    h = jnp.maximum(h + b1_ref[...], 0.0)

    # F.dropout(p=0.7) is identity in eval mode.

    # fc2 (output lane-padded to a multiple of 128; padding sliced off outside).
    out = jnp.dot(h.astype(jnp.bfloat16), w2_ref[...],
                  preferred_element_type=jnp.float32) + b2_ref[...]
    o_ref[...] = out.astype(o_ref.dtype)


# ----------------------------------------------------------------------------
# One-time parameter preparation (hoisted out of the forward).
# ----------------------------------------------------------------------------
def prepare_params(conv_w, conv_b, fc1_w, fc1_b, fc2_w, fc2_b, pooled_hw=(4, 4)):
    OC, C = conv_w.shape[0], conv_w.shape[1]
    HO, WO = pooled_hw
    P = HO * WO
    F1 = fc1_w.shape[0]
    num_classes = fc2_w.shape[0]
    ocp = ((num_classes + 127) // 128) * 128

    cw = conv_w.reshape(OC, C).T.astype(jnp.bfloat16)                 # (C, OC)
    cb = conv_b.reshape(1, OC).astype(jnp.float32)
    # PyTorch flattens the conv output in NCHW order (index = oc*P + p); the kernel
    # builds features in (p*OC + oc) order, so permute the fc1 input axis once here.
    w1 = (fc1_w.reshape(F1, OC, P).transpose(2, 1, 0)
          .reshape(P * OC, F1).astype(jnp.bfloat16))                  # (P*OC, F1)
    b1 = fc1_b.reshape(1, F1).astype(jnp.float32)
    w2 = jnp.zeros((F1, ocp), jnp.bfloat16).at[:, :num_classes].set(
        fc2_w.T.astype(jnp.bfloat16))
    b2 = jnp.zeros((1, ocp), jnp.float32).at[:, :num_classes].set(
        fc2_b.astype(jnp.float32))
    return dict(cw=cw, cb=cb, w1=w1, b1=b1, w2=w2, b2=b2)


# ----------------------------------------------------------------------------
# Per-generation batch-tile / VMEM derivation.
# ----------------------------------------------------------------------------
def _round_up(v, m):
    return ((v + m - 1) // m) * m


def _vmem_capacity_bytes():
    try:
        return int(pltpu.get_tpu_info().vmem_capacity_bytes)
    except Exception:
        return 64 * 1024 * 1024          # conservative (v7x-sized) fallback


def _pick_batch_tile(N, H, W, C, vmem_cap, x_itemsize=4):
    # Spend VMEM on the double-buffered activation tile after reserving room for the
    # (double-buffered) bf16 weights, the feature scratch, the output tile and slack.
    reserve = 24 * 1024 * 1024
    budget = max(vmem_cap - reserve, 8 * 1024 * 1024)
    tn_mem = budget // max(2 * H * W * C * x_itemsize, 1)
    # MXU M-dim saturates around 128 rows; v7x's 64 MiB VMEM (and 2 TCs) wants smaller tiles.
    tn_cap = 64 if vmem_cap <= 64 * 1024 * 1024 else 128
    tn = int(max(8, min(tn_mem, tn_cap)))
    if N > 8:
        # Keep >=2 grid tiles when the batch allows it (v7x megacore split).
        tn = min(tn, _round_up(-(-N // 2), 8))
    return max(8, (tn // 8) * 8)


# ----------------------------------------------------------------------------
# Forward pass: single fused pallas_call, tiled over the batch axis.
# ----------------------------------------------------------------------------
def inception_aux_forward(x, params, num_classes, *, batch_tile=None):
    N, C, H, W = x.shape
    HO = (H - _POOL_K) // _POOL_S + 1
    WO = (W - _POOL_K) // _POOL_S + 1
    P = HO * WO

    cw, cb = params["cw"], params["cb"]
    w1, b1 = params["w1"], params["b1"]
    w2, b2 = params["w2"], params["b2"]
    OC = cw.shape[1]
    F1 = w1.shape[1]
    OCP = w2.shape[1]
    assert w1.shape[0] == P * OC, "spatial size inconsistent with fc1 (expects 4x4 pooled)"

    vmem_cap = _vmem_capacity_bytes()
    if batch_tile is None:
        batch_tile = _pick_batch_tile(N, H, W, C, vmem_cap)
    TN = max(8, (min(batch_tile, _round_up(N, 8)) // 8) * 8)
    n_tiles = pl.cdiv(N, TN)
    N_pad = n_tiles * TN

    # Layout plumbing (once, outside the kernel): NCHW -> NHWC so channels sit on lanes.
    x_nhwc = jnp.transpose(x, (0, 2, 3, 1))
    if N_pad != N:
        x_nhwc = jnp.pad(x_nhwc, ((0, N_pad - N), (0, 0), (0, 0), (0, 0)))

    # VMEM budget actually needed (double-buffered tiles + resident weights + scratch).
    w_bytes = sum(int(np.prod(a.shape)) * a.dtype.itemsize
                  for a in (cw, cb, w1, b1, w2, b2))
    x_tile_bytes = TN * H * W * C * x_nhwc.dtype.itemsize
    out_tile_bytes = TN * OCP * 4
    feat_bytes = TN * P * OC * 2
    need = 2 * (x_tile_bytes + out_tile_bytes + w_bytes) + feat_bytes + (8 << 20)
    vmem_limit = int(min(max(need, 32 << 20), int(vmem_cap * 0.9)))

    flops = (N_pad * P * _POOL_K * _POOL_K * C          # pooling adds
             + 2 * N_pad * P * C * OC                   # 1x1 conv
             + 2 * N_pad * (P * OC) * F1                # fc1
             + 2 * N_pad * F1 * OCP)                    # fc2
    bytes_accessed = (int(np.prod(x_nhwc.shape)) * x_nhwc.dtype.itemsize
                      + w_bytes + N_pad * OCP * 4)

    out = pl.pallas_call(
        _inception_aux_kernel,
        out_shape=jax.ShapeDtypeStruct((N_pad, OCP), x.dtype),
        grid=(n_tiles,),
        in_specs=[
            pl.BlockSpec((TN, H, W, C), lambda i: (i, 0, 0, 0)),   # batch tile of x
            pl.BlockSpec((C, OC), lambda i: (0, 0)),               # conv weight (resident)
            pl.BlockSpec((1, OC), lambda i: (0, 0)),
            pl.BlockSpec((P * OC, F1), lambda i: (0, 0)),          # fc1 weight (resident)
            pl.BlockSpec((1, F1), lambda i: (0, 0)),
            pl.BlockSpec((F1, OCP), lambda i: (0, 0)),             # fc2 weight (resident)
            pl.BlockSpec((1, OCP), lambda i: (0, 0)),
        ],
        out_specs=pl.BlockSpec((TN, OCP), lambda i: (i, 0)),
        scratch_shapes=[pltpu.VMEM((TN, P * OC), jnp.bfloat16)],   # flattened features
        compiler_params=pltpu.CompilerParams(
            dimension_semantics=("parallel",),
            vmem_limit_bytes=vmem_limit,
        ),
        cost_estimate=pl.CostEstimate(
            flops=int(flops), transcendentals=0, bytes_accessed=int(bytes_accessed)),
    )(x_nhwc, cw, cb, w1, b1, w2, b2)

    return out[:N, :num_classes]


# ----------------------------------------------------------------------------
# Pure-JAX reference mirroring the PyTorch forward (eval mode), for the sanity check.
# ----------------------------------------------------------------------------
def _reference_forward(x, conv_w, conv_b, fc1_w, fc1_b, fc2_w, fc2_b):
    N, C, H, W = x.shape
    k, s = _POOL_K, _POOL_S
    HO = (H - k) // s + 1
    WO = (W - k) // s + 1
    pooled = jnp.stack([
        jnp.stack([x[:, :, i * s:i * s + k, j * s:j * s + k].mean(axis=(2, 3))
                   for j in range(WO)], axis=-1)
        for i in range(HO)], axis=-2)                                 # (N, C, HO, WO)
    conv = jnp.einsum("nchw,oc->nohw", pooled, conv_w.reshape(conv_w.shape[0], C))
    conv = jax.nn.relu(conv + conv_b[None, :, None, None])            # (N, 128, 4, 4)
    feat = conv.reshape(N, -1)                                        # NCHW flatten order
    h1 = jax.nn.relu(feat @ fc1_w.T + fc1_b)
    return h1 @ fc2_w.T + fc2_b                                       # dropout = id (eval)


if __name__ == "__main__":
    # 14x14 spatial is what InceptionAux assumes (avg_pool(5,3) -> 4x4 -> fc1 = 128*4*4).
    N, C, H, W = 2, 16, 14, 14
    num_classes = 10

    key = jax.random.PRNGKey(0)
    ks = jax.random.split(key, 7)
    x = jax.random.normal(ks[0], (N, C, H, W), jnp.float32)

    # Deterministic synthetic parameters in PyTorch shapes.
    conv_w = jax.random.normal(ks[1], (128, C, 1, 1), jnp.float32) * 0.1
    conv_b = jax.random.normal(ks[2], (128,), jnp.float32) * 0.1
    fc1_w = jax.random.normal(ks[3], (1024, 128 * 4 * 4), jnp.float32) * 0.02
    fc1_b = jax.random.normal(ks[4], (1024,), jnp.float32) * 0.02
    fc2_w = jax.random.normal(ks[5], (num_classes, 1024), jnp.float32) * 0.02
    fc2_b = jax.random.normal(ks[6], (num_classes,), jnp.float32) * 0.02

    params = prepare_params(conv_w, conv_b, fc1_w, fc1_b, fc2_w, fc2_b)
    fwd = jax.jit(functools.partial(inception_aux_forward, num_classes=num_classes))
    out = jax.block_until_ready(fwd(x, params))

    with jax.default_matmul_precision("highest"):
        ref = _reference_forward(x, conv_w, conv_b, fc1_w, fc1_b, fc2_w, fc2_b)
    np.testing.assert_allclose(np.asarray(out), np.asarray(ref), rtol=2e-2, atol=2e-2)
    assert out.shape == (N, num_classes)

    print("KERNEL_OK")
</pallas_src>

<mosaic_0001>
module attributes {stable_mosaic.version = 11 : i64} {
  func.func @_inception_aux_kernel(%arg0: i32, %arg1: memref<8x14x14x16xf32, #tpu.memory_space<vmem>>, %arg2: memref<16x128xbf16, #tpu.memory_space<vmem>>, %arg3: memref<1x128xf32, #tpu.memory_space<vmem>>, %arg4: memref<2048x1024xbf16, #tpu.memory_space<vmem>>, %arg5: memref<1x1024xf32, #tpu.memory_space<vmem>>, %arg6: memref<1024x128xbf16, #tpu.memory_space<vmem>>, %arg7: memref<1x128xf32, #tpu.memory_space<vmem>>, %arg8: memref<8x128xf32, #tpu.memory_space<vmem>>, %arg9: memref<8x2048xbf16, #tpu.memory_space<vmem>>) attributes {dimension_semantics = [#tpu.dimension_semantics<parallel>], iteration_bounds = array<i64: 1>, scalar_prefetch = 0 : i64, scratch_operands = 1 : i64, tpu.core_type = #tpu.core_type<tc>, window_params = [{transform_indices = @transform_0, window_bounds = array<i64: 8, 14, 14, 16>}, {pipeline_mode = #tpu.pipeline_mode<synchronous>, transform_indices = @transform_1, window_bounds = array<i64: 16, 128>}, {pipeline_mode = #tpu.pipeline_mode<synchronous>, transform_indices = @transform_2, window_bounds = array<i64: 1, 128>}, {pipeline_mode = #tpu.pipeline_mode<synchronous>, transform_indices = @transform_3, window_bounds = array<i64: 2048, 1024>}, {pipeline_mode = #tpu.pipeline_mode<synchronous>, transform_indices = @transform_4, window_bounds = array<i64: 1, 1024>}, {pipeline_mode = #tpu.pipeline_mode<synchronous>, transform_indices = @transform_5, window_bounds = array<i64: 1024, 128>}, {pipeline_mode = #tpu.pipeline_mode<synchronous>, transform_indices = @transform_6, window_bounds = array<i64: 1, 128>}, {transform_indices = @transform_7, window_bounds = array<i64: 8, 128>}]} {
    %c0 = arith.constant 0 : index
    %c0_0 = arith.constant 0 : index
    %0 = vector.load %arg2[%c0, %c0_0] : memref<16x128xbf16, #tpu.memory_space<vmem>>, vector<16x128xbf16>
    %c0_1 = arith.constant 0 : index
    %c0_2 = arith.constant 0 : index
    %1 = vector.load %arg3[%c0_1, %c0_2] : memref<1x128xf32, #tpu.memory_space<vmem>>, vector<1x128xf32>
    %c0_3 = arith.constant 0 : index
    %c0_4 = arith.constant 0 : index
    %c0_5 = arith.constant 0 : index
    %c0_6 = arith.constant 0 : index
    %2 = vector.load %arg1[%c0_3, %c0_4, %c0_5, %c0_6] : memref<8x14x14x16xf32, #tpu.memory_space<vmem>>, vector<8x1x14x16xf32>
    %3 = vector.shape_cast %2 : vector<8x1x14x16xf32> to vector<8x14x16xf32>
    %c0_7 = arith.constant 0 : index
    %c1 = arith.constant 1 : index
    %c0_8 = arith.constant 0 : index
    %c0_9 = arith.constant 0 : index
    %4 = vector.load %arg1[%c0_7, %c1, %c0_8, %c0_9] : memref<8x14x14x16xf32, #tpu.memory_space<vmem>>, vector<8x1x14x16xf32>
    %5 = vector.shape_cast %4 : vector<8x1x14x16xf32> to vector<8x14x16xf32>
    %6 = arith.addf %3, %5 : vector<8x14x16xf32>
    %c0_10 = arith.constant 0 : index
    %c2 = arith.constant 2 : index
    %c0_11 = arith.constant 0 : index
    %c0_12 = arith.constant 0 : index
    %7 = vector.load %arg1[%c0_10, %c2, %c0_11, %c0_12] : memref<8x14x14x16xf32, #tpu.memory_space<vmem>>, vector<8x1x14x16xf32>
    %8 = vector.shape_cast %7 : vector<8x1x14x16xf32> to vector<8x14x16xf32>
    %9 = arith.addf %6, %8 : vector<8x14x16xf32>
    %c0_13 = arith.constant 0 : index
    %c3 = arith.constant 3 : index
    %c0_14 = arith.constant 0 : index
    %c0_15 = arith.constant 0 : index
    %10 = vector.load %arg1[%c0_13, %c3, %c0_14, %c0_15] : memref<8x14x14x16xf32, #tpu.memory_space<vmem>>, vector<8x1x14x16xf32>
    %11 = vector.shape_cast %10 : vector<8x1x14x16xf32> to vector<8x14x16xf32>
    %12 = arith.addf %9, %11 : vector<8x14x16xf32>
    %c0_16 = arith.constant 0 : index
    %c4 = arith.constant 4 : index
    %c0_17 = arith.constant 0 : index
    %c0_18 = arith.constant 0 : index
    %13 = vector.load %arg1[%c0_16, %c4, %c0_17, %c0_18] : memref<8x14x14x16xf32, #tpu.memory_space<vmem>>, vector<8x1x14x16xf32>
    %14 = vector.shape_cast %13 : vector<8x1x14x16xf32> to vector<8x14x16xf32>
    %15 = arith.addf %12, %14 : vector<8x14x16xf32>
    %16 = vector.extract_strided_slice %15 {offsets = [0, 0, 0], sizes = [8, 1, 16], strides = [1, 1, 1]} : vector<8x14x16xf32> to vector<8x1x16xf32>
    %17 = vector.shape_cast %16 : vector<8x1x16xf32> to vector<8x16xf32>
    %18 = vector.extract_strided_slice %15 {offsets = [0, 1, 0], sizes = [8, 1, 16], strides = [1, 1, 1]} : vector<8x14x16xf32> to vector<8x1x16xf32>
    %19 = vector.shape_cast %18 : vector<8x1x16xf32> to vector<8x16xf32>
    %20 = arith.addf %17, %19 : vector<8x16xf32>
    %21 = vector.extract_strided_slice %15 {offsets = [0, 2, 0], sizes = [8, 1, 16], strides = [1, 1, 1]} : vector<8x14x16xf32> to vector<8x1x16xf32>
    %22 = vector.shape_cast %21 : vector<8x1x16xf32> to vector<8x16xf32>
    %23 = arith.addf %20, %22 : vector<8x16xf32>
    %24 = vector.extract_strided_slice %15 {offsets = [0, 3, 0], sizes = [8, 1, 16], strides = [1, 1, 1]} : vector<8x14x16xf32> to vector<8x1x16xf32>
    %25 = vector.shape_cast %24 : vector<8x1x16xf32> to vector<8x16xf32>
    %26 = arith.addf %23, %25 : vector<8x16xf32>
    %27 = vector.extract_strided_slice %15 {offsets = [0, 4, 0], sizes = [8, 1, 16], strides = [1, 1, 1]} : vector<8x14x16xf32> to vector<8x1x16xf32>
    %28 = vector.shape_cast %27 : vector<8x1x16xf32> to vector<8x16xf32>
    %29 = arith.addf %26, %28 : vector<8x16xf32>
    %cst = arith.constant 4.000000e-02 : f32
    %30 = vector.broadcast %cst : f32 to vector<8x16xf32>
    %31 = arith.mulf %29, %30 : vector<8x16xf32>
    %32 = arith.truncf %31 : vector<8x16xf32> to vector<8x16xbf16>
    %cst_19 = arith.constant dense<0.000000e+00> : vector<8x128xf32>
    %33 = tpu.matmul %32, %0, %cst_19 {dimension_numbers = #tpu.dot_dimension_numbers<[1], [0], [0], [1], [0, 0, 1, 1], [], []>} : vector<8x16xbf16>, vector<16x128xbf16>, vector<8x128xf32> -> vector<8x128xf32>
    %34 = vector.broadcast %1 : vector<1x128xf32> to vector<8x128xf32>
    %35 = arith.addf %33, %34 : vector<8x128xf32>
    %cst_20 = arith.constant 0.000000e+00 : f32
    %36 = vector.broadcast %cst_20 : f32 to vector<8x128xf32>
    %37 = arith.maximumf %35, %36 : vector<8x128xf32>
    %38 = arith.truncf %37 : vector<8x128xf32> to vector<8x128xbf16>
    %c0_21 = arith.constant 0 : index
    %c0_22 = arith.constant 0 : index
    %39 = vector.load %arg9[%c0_21, %c0_22] : memref<8x2048xbf16, #tpu.memory_space<vmem>>, vector<8x128xbf16>
    tpu.vector_store %arg9[%c0_21, %c0_22], %38 {strides = array<i32>} : memref<8x2048xbf16, #tpu.memory_space<vmem>>, vector<8x128xbf16>,
    %40 = vector.extract_strided_slice %15 {offsets = [0, 3, 0], sizes = [8, 1, 16], strides = [1, 1, 1]} : vector<8x14x16xf32> to vector<8x1x16xf32>
    %41 = vector.shape_cast %40 : vector<8x1x16xf32> to vector<8x16xf32>
    %42 = vector.extract_strided_slice %15 {offsets = [0, 4, 0], sizes = [8, 1, 16], strides = [1, 1, 1]} : vector<8x14x16xf32> to vector<8x1x16xf32>
    %43 = vector.shape_cast %42 : vector<8x1x16xf32> to vector<8x16xf32>
    %44 = arith.addf %41, %43 : vector<8x16xf32>
    %45 = vector.extract_strided_slice %15 {offsets = [0, 5, 0], sizes = [8, 1, 16], strides = [1, 1, 1]} : vector<8x14x16xf32> to vector<8x1x16xf32>
    %46 = vector.shape_cast %45 : vector<8x1x16xf32> to vector<8x16xf32>
    %47 = arith.addf %44, %46 : vector<8x16xf32>
    %48 = vector.extract_strided_slice %15 {offsets = [0, 6, 0], sizes = [8, 1, 16], strides = [1, 1, 1]} : vector<8x14x16xf32> to vector<8x1x16xf32>
    %49 = vector.shape_cast %48 : vector<8x1x16xf32> to vector<8x16xf32>
    %50 = arith.addf %47, %49 : vector<8x16xf32>
    %51 = vector.extract_strided_slice %15 {offsets = [0, 7, 0], sizes = [8, 1, 16], strides = [1, 1, 1]} : vector<8x14x16xf32> to vector<8x1x16xf32>
    %52 = vector.shape_cast %51 : vector<8x1x16xf32> to vector<8x16xf32>
    %53 = arith.addf %50, %52 : vector<8x16xf32>
    %cst_23 = arith.constant 4.000000e-02 : f32
    %54 = vector.broadcast %cst_23 : f32 to vector<8x16xf32>
    %55 = arith.mulf %53, %54 : vector<8x16xf32>
    %56 = arith.truncf %55 : vector<8x16xf32> to vector<8x16xbf16>
    %cst_24 = arith.constant dense<0.000000e+00> : vector<8x128xf32>
    %57 = tpu.matmul %56, %0, %cst_24 {dimension_numbers = #tpu.dot_dimension_numbers<[1], [0], [0], [1], [0, 0, 1, 1], [], []>} : vector<8x16xbf16>, vector<16x128xbf16>, vector<8x128xf32> -> vector<8x128xf32>
    %58 = vector.broadcast %1 : vector<1x128xf32> to vector<8x128xf32>
    %59 = arith.addf %57, %58 : vector<8x128xf32>
    %cst_25 = arith.constant 0.000000e+00 : f32
    %60 = vector.broadcast %cst_25 : f32 to vector<8x128xf32>
    %61 = arith.maximumf %59, %60 : vector<8x128xf32>
    %62 = arith.truncf %61 : vector<8x128xf32> to vector<8x128xbf16>
    %c0_26 = arith.constant 0 : index
    %c128 = arith.constant 128 : index
    %63 = vector.load %arg9[%c0_26, %c128] : memref<8x2048xbf16, #tpu.memory_space<vmem>>, vector<8x128xbf16>
    tpu.vector_store %arg9[%c0_26, %c128], %62 {strides = array<i32>} : memref<8x2048xbf16, #tpu.memory_space<vmem>>, vector<8x128xbf16>,
    %64 = vector.extract_strided_slice %15 {offsets = [0, 6, 0], sizes = [8, 1, 16], strides = [1, 1, 1]} : vector<8x14x16xf32> to vector<8x1x16xf32>
    %65 = vector.shape_cast %64 : vector<8x1x16xf32> to vector<8x16xf32>
    %66 = vector.extract_strided_slice %15 {offsets = [0, 7, 0], sizes = [8, 1, 16], strides = [1, 1, 1]} : vector<8x14x16xf32> to vector<8x1x16xf32>
    %67 = vector.shape_cast %66 : vector<8x1x16xf32> to vector<8x16xf32>
    %68 = arith.addf %65, %67 : vector<8x16xf32>
    %69 = vector.extract_strided_slice %15 {offsets = [0, 8, 0], sizes = [8, 1, 16], strides = [1, 1, 1]} : vector<8x14x16xf32> to vector<8x1x16xf32>
    %70 = vector.shape_cast %69 : vector<8x1x16xf32> to vector<8x16xf32>
    %71 = arith.addf %68, %70 : vector<8x16xf32>
    %72 = vector.extract_strided_slice %15 {offsets = [0, 9, 0], sizes = [8, 1, 16], strides = [1, 1, 1]} : vector<8x14x16xf32> to vector<8x1x16xf32>
    %73 = vector.shape_cast %72 : vector<8x1x16xf32> to vector<8x16xf32>
    %74 = arith.addf %71, %73 : vector<8x16xf32>
    %75 = vector.extract_strided_slice %15 {offsets = [0, 10, 0], sizes = [8, 1, 16], strides = [1, 1, 1]} : vector<8x14x16xf32> to vector<8x1x16xf32>
    %76 = vector.shape_cast %75 : vector<8x1x16xf32> to vector<8x16xf32>
    %77 = arith.addf %74, %76 : vector<8x16xf32>
    %cst_27 = arith.constant 4.000000e-02 : f32
    %78 = vector.broadcast %cst_27 : f32 to vector<8x16xf32>
    %79 = arith.mulf %77, %78 : vector<8x16xf32>
    %80 = arith.truncf %79 : vector<8x16xf32> to vector<8x16xbf16>
    %cst_28 = arith.constant dense<0.000000e+00> : vector<8x128xf32>
    %81 = tpu.matmul %80, %0, %cst_28 {dimension_numbers = #tpu.dot_dimension_numbers<[1], [0], [0], [1], [0, 0, 1, 1], [], []>} : vector<8x16xbf16>, vector<16x128xbf16>, vector<8x128xf32> -> vector<8x128xf32>
    %82 = vector.broadcast %1 : vector<1x128xf32> to vector<8x128xf32>
    %83 = arith.addf %81, %82 : vector<8x128xf32>
    %cst_29 = arith.constant 0.000000e+00 : f32
    %84 = vector.broadcast %cst_29 : f32 to vector<8x128xf32>
    %85 = arith.maximumf %83, %84 : vector<8x128xf32>
    %86 = arith.truncf %85 : vector<8x128xf32> to vector<8x128xbf16>
    %c0_30 = arith.constant 0 : index
    %c256 = arith.constant 256 : index
    %87 = vector.load %arg9[%c0_30, %c256] : memref<8x2048xbf16, #tpu.memory_space<vmem>>, vector<8x128xbf16>
    tpu.vector_store %arg9[%c0_30, %c256], %86 {strides = array<i32>} : memref<8x2048xbf16, #tpu.memory_space<vmem>>, vector<8x128xbf16>,
    %88 = vector.extract_strided_slice %15 {offsets = [0, 9, 0], sizes = [8, 1, 16], strides = [1, 1, 1]} : vector<8x14x16xf32> to vector<8x1x16xf32>
    %89 = vector.shape_cast %88 : vector<8x1x16xf32> to vector<8x16xf32>
    %90 = vector.extract_strided_slice %15 {offsets = [0, 10, 0], sizes = [8, 1, 16], strides = [1, 1, 1]} : vector<8x14x16xf32> to vector<8x1x16xf32>
    %91 = vector.shape_cast %90 : vector<8x1x16xf32> to vector<8x16xf32>
    %92 = arith.addf %89, %91 : vector<8x16xf32>
    %93 = vector.extract_strided_slice %15 {offsets = [0, 11, 0], sizes = [8, 1, 16], strides = [1, 1, 1]} : vector<8x14x16xf32> to vector<8x1x16xf32>
    %94 = vector.shape_cast %93 : vector<8x1x16xf32> to vector<8x16xf32>
    %95 = arith.addf %92, %94 : vector<8x16xf32>
    %96 = vector.extract_strided_slice %15 {offsets = [0, 12, 0], sizes = [8, 1, 16], strides = [1, 1, 1]} : vector<8x14x16xf32> to vector<8x1x16xf32>
    %97 = vector.shape_cast %96 : vector<8x1x16xf32> to vector<8x16xf32>
    %98 = arith.addf %95, %97 : vector<8x16xf32>
    %99 = vector.extract_strided_slice %15 {offsets = [0, 13, 0], sizes = [8, 1, 16], strides = [1, 1, 1]} : vector<8x14x16xf32> to vector<8x1x16xf32>
    %100 = vector.shape_cast %99 : vector<8x1x16xf32> to vector<8x16xf32>
    %101 = arith.addf %98, %100 : vector<8x16xf32>
    %cst_31 = arith.constant 4.000000e-02 : f32
    %102 = vector.broadcast %cst_31 : f32 to vector<8x16xf32>
    %103 = arith.mulf %101, %102 : vector<8x16xf32>
    %104 = arith.truncf %103 : vector<8x16xf32> to vector<8x16xbf16>
    %cst_32 = arith.constant dense<0.000000e+00> : vector<8x128xf32>
    %105 = tpu.matmul %104, %0, %cst_32 {dimension_numbers = #tpu.dot_dimension_numbers<[1], [0], [0], [1], [0, 0, 1, 1], [], []>} : vector<8x16xbf16>, vector<16x128xbf16>, vector<8x128xf32> -> vector<8x128xf32>
    %106 = vector.broadcast %1 : vector<1x128xf32> to vector<8x128xf32>
    %107 = arith.addf %105, %106 : vector<8x128xf32>
    %cst_33 = arith.constant 0.000000e+00 : f32
    %108 = vector.broadcast %cst_33 : f32 to vector<8x128xf32>
    %109 = arith.maximumf %107, %108 : vector<8x128xf32>
    %110 = arith.truncf %109 : vector<8x128xf32> to vector<8x128xbf16>
    %c0_34 = arith.constant 0 : index
    %c384 = arith.constant 384 : index
    %111 = vector.load %arg9[%c0_34, %c384] : memref<8x2048xbf16, #tpu.memory_space<vmem>>, vector<8x128xbf16>
    tpu.vector_store %arg9[%c0_34, %c384], %110 {strides = array<i32>} : memref<8x2048xbf16, #tpu.memory_space<vmem>>, vector<8x128xbf16>,
    %c0_35 = arith.constant 0 : index
    %c3_36 = arith.constant 3 : index
    %c0_37 = arith.constant 0 : index
    %c0_38 = arith.constant 0 : index
    %112 = vector.load %arg1[%c0_35, %c3_36, %c0_37, %c0_38] : memref<8x14x14x16xf32, #tpu.memory_space<vmem>>, vector<8x1x14x16xf32>
    %113 = vector.shape_cast %112 : vector<8x1x14x16xf32> to vector<8x14x16xf32>
    %c0_39 = arith.constant 0 : index
    %c4_40 = arith.constant 4 : index
    %c0_41 = arith.constant 0 : index
    %c0_42 = arith.constant 0 : index
    %114 = vector.load %arg1[%c0_39, %c4_40, %c0_41, %c0_42] : memref<8x14x14x16xf32, #tpu.memory_space<vmem>>, vector<8x1x14x16xf32>
    %115 = vector.shape_cast %114 : vector<8x1x14x16xf32> to vector<8x14x16xf32>
    %116 = arith.addf %113, %115 : vector<8x14x16xf32>
    %c0_43 = arith.constant 0 : index
    %c5 = arith.constant 5 : index
    %c0_44 = arith.constant 0 : index
    %c0_45 = arith.constant 0 : index
    %117 = vector.load %arg1[%c0_43, %c5, %c0_44, %c0_45] : memref<8x14x14x16xf32, #tpu.memory_space<vmem>>, vector<8x1x14x16xf32>
    %118 = vector.shape_cast %117 : vector<8x1x14x16xf32> to vector<8x14x16xf32>
    %119 = arith.addf %116, %118 : vector<8x14x16xf32>
    %c0_46 = arith.constant 0 : index
    %c6 = arith.constant 6 : index
    %c0_47 = arith.constant 0 : index
    %c0_48 = arith.constant 0 : index
    %120 = vector.load %arg1[%c0_46, %c6, %c0_47, %c0_48] : memref<8x14x14x16xf32, #tpu.memory_space<vmem>>, vector<8x1x14x16xf32>
    %121 = vector.shape_cast %120 : vector<8x1x14x16xf32> to vector<8x14x16xf32>
    %122 = arith.addf %119, %121 : vector<8x14x16xf32>
    %c0_49 = arith.constant 0 : index
    %c7 = arith.constant 7 : index
    %c0_50 = arith.constant 0 : index
    %c0_51 = arith.constant 0 : index
    %123 = vector.load %arg1[%c0_49, %c7, %c0_50, %c0_51] : memref<8x14x14x16xf32, #tpu.memory_space<vmem>>, vector<8x1x14x16xf32>
    %124 = vector.shape_cast %123 : vector<8x1x14x16xf32> to vector<8x14x16xf32>
    %125 = arith.addf %122, %124 : vector<8x14x16xf32>
    %126 = vector.extract_strided_slice %125 {offsets = [0, 0, 0], sizes = [8, 1, 16], strides = [1, 1, 1]} : vector<8x14x16xf32> to vector<8x1x16xf32>
    %127 = vector.shape_cast %126 : vector<8x1x16xf32> to vector<8x16xf32>
    %128 = vector.extract_strided_slice %125 {offsets = [0, 1, 0], sizes = [8, 1, 16], strides = [1, 1, 1]} : vector<8x14x16xf32> to vector<8x1x16xf32>
    %129 = vector.shape_cast %128 : vector<8x1x16xf32> to vector<8x16xf32>
    %130 = arith.addf %127, %129 : vector<8x16xf32>
    %131 = vector.extract_strided_slice %125 {offsets = [0, 2, 0], sizes = [8, 1, 16], strides = [1, 1, 1]} : vector<8x14x16xf32> to vector<8x1x16xf32>
    %132 = vector.shape_cast %131 : vector<8x1x16xf32> to vector<8x16xf32>
    %133 = arith.addf %130, %132 : vector<8x16xf32>
    %134 = vector.extract_strided_slice %125 {offsets = [0, 3, 0], sizes = [8, 1, 16], strides = [1, 1, 1]} : vector<8x14x16xf32> to vector<8x1x16xf32>
    %135 = vector.shape_cast %134 : vector<8x1x16xf32> to vector<8x16xf32>
    %136 = arith.addf %133, %135 : vector<8x16xf32>
    %137 = vector.extract_strided_slice %125 {offsets = [0, 4, 0], sizes = [8, 1, 16], strides = [1, 1, 1]} : vector<8x14x16xf32> to vector<8x1x16xf32>
    %138 = vector.shape_cast %137 : vector<8x1x16xf32> to vector<8x16xf32>
    %139 = arith.addf %136, %138 : vector<8x16xf32>
    %cst_52 = arith.constant 4.000000e-02 : f32
    %140 = vector.broadcast %cst_52 : f32 to vector<8x16xf32>
    %141 = arith.mulf %139, %140 : vector<8x16xf32>
    %142 = arith.truncf %141 : vector<8x16xf32> to vector<8x16xbf16>
    %cst_53 = arith.constant dense<0.000000e+00> : vector<8x128xf32>
    %143 = tpu.matmul %142, %0, %cst_53 {dimension_numbers = #tpu.dot_dimension_numbers<[1], [0], [0], [1], [0, 0, 1, 1], [], []>} : vector<8x16xbf16>, vector<16x128xbf16>, vector<8x128xf32> -> vector<8x128xf32>
    %144 = vector.broadcast %1 : vector<1x128xf32> to vector<8x128xf32>
    %145 = arith.addf %143, %144 : vector<8x128xf32>
    %cst_54 = arith.constant 0.000000e+00 : f32
    %146 = vector.broadcast %cst_54 : f32 to vector<8x128xf32>
    %147 = arith.maximumf %145, %146 : vector<8x128xf32>
    %148 = arith.truncf %147 : vector<8x128xf32> to vector<8x128xbf16>
    %c0_55 = arith.constant 0 : index
    %c512 = arith.constant 512 : index
    %149 = vector.load %arg9[%c0_55, %c512] : memref<8x2048xbf16, #tpu.memory_space<vmem>>, vector<8x128xbf16>
    tpu.vector_store %arg9[%c0_55, %c512], %148 {strides = array<i32>} : memref<8x2048xbf16, #tpu.memory_space<vmem>>, vector<8x128xbf16>,
    %150 = vector.extract_strided_slice %125 {offsets = [0, 3, 0], sizes = [8, 1, 16], strides = [1, 1, 1]} : vector<8x14x16xf32> to vector<8x1x16xf32>
    %151 = vector.shape_cast %150 : vector<8x1x16xf32> to vector<8x16xf32>
    %152 = vector.extract_strided_slice %125 {offsets = [0, 4, 0], sizes = [8, 1, 16], strides = [1, 1, 1]} : vector<8x14x16xf32> to vector<8x1x16xf32>
    %153 = vector.shape_cast %152 : vector<8x1x16xf32> to vector<8x16xf32>
    %154 = arith.addf %151, %153 : vector<8x16xf32>
    %155 = vector.extract_strided_slice %125 {offsets = [0, 5, 0], sizes = [8, 1, 16], strides = [1, 1, 1]} : vector<8x14x16xf32> to vector<8x1x16xf32>
    %156 = vector.shape_cast %155 : vector<8x1x16xf32> to vector<8x16xf32>
    %157 = arith.addf %154, %156 : vector<8x16xf32>
    %158 = vector.extract_strided_slice %125 {offsets = [0, 6, 0], sizes = [8, 1, 16], strides = [1, 1, 1]} : vector<8x14x16xf32> to vector<8x1x16xf32>
    %159 = vector.shape_cast %158 : vector<8x1x16xf32> to vector<8x16xf32>
    %160 = arith.addf %157, %159 : vector<8x16xf32>
    %161 = vector.extract_strided_slice %125 {offsets = [0, 7, 0], sizes = [8, 1, 16], strides = [1, 1, 1]} : vector<8x14x16xf32> to vector<8x1x16xf32>
    %162 = vector.shape_cast %161 : vector<8x1x16xf32> to vector<8x16xf32>
    %163 = arith.addf %160, %162 : vector<8x16xf32>
    %cst_56 = arith.constant 4.000000e-02 : f32
    %164 = vector.broadcast %cst_56 : f32 to vector<8x16xf32>
    %165 = arith.mulf %163, %164 : vector<8x16xf32>
    %166 = arith.truncf %165 : vector<8x16xf32> to vector<8x16xbf16>
    %cst_57 = arith.constant dense<0.000000e+00> : vector<8x128xf32>
    %167 = tpu.matmul %166, %0, %cst_57 {dimension_numbers = #tpu.dot_dimension_numbers<[1], [0], [0], [1], [0, 0, 1, 1], [], []>} : vector<8x16xbf16>, vector<16x128xbf16>, vector<8x128xf32> -> vector<8x128xf32>
    %168 = vector.broadcast %1 : vector<1x128xf32> to vector<8x128xf32>
    %169 = arith.addf %167, %168 : vector<8x128xf32>
    %cst_58 = arith.constant 0.000000e+00 : f32
    %170 = vector.broadcast %cst_58 : f32 to vector<8x128xf32>
    %171 = arith.maximumf %169, %170 : vector<8x128xf32>
    %172 = arith.truncf %171 : vector<8x128xf32> to vector<8x128xbf16>
    %c0_59 = arith.constant 0 : index
    %c640 = arith.constant 640 : index
    %173 = vector.load %arg9[%c0_59, %c640] : memref<8x2048xbf16, #tpu.memory_space<vmem>>, vector<8x128xbf16>
    tpu.vector_store %arg9[%c0_59, %c640], %172 {strides = array<i32>} : memref<8x2048xbf16, #tpu.memory_space<vmem>>, vector<8x128xbf16>,
    %174 = vector.extract_strided_slice %125 {offsets = [0, 6, 0], sizes = [8, 1, 16], strides = [1, 1, 1]} : vector<8x14x16xf32> to vector<8x1x16xf32>
    %175 = vector.shape_cast %174 : vector<8x1x16xf32> to vector<8x16xf32>
    %176 = vector.extract_strided_slice %125 {offsets = [0, 7, 0], sizes = [8, 1, 16], strides = [1, 1, 1]} : vector<8x14x16xf32> to vector<8x1x16xf32>
    %177 = vector.shape_cast %176 : vector<8x1x16xf32> to vector<8x16xf32>
    %178 = arith.addf %175, %177 : vector<8x16xf32>
    %179 = vector.extract_strided_slice %125 {offsets = [0, 8, 0], sizes = [8, 1, 16], strides = [1, 1, 1]} : vector<8x14x16xf32> to vector<8x1x16xf32>
    %180 = vector.shape_cast %179 : vector<8x1x16xf32> to vector<8x16xf32>
    %181 = arith.addf %178, %180 : vector<8x16xf32>
    %182 = vector.extract_strided_slice %125 {offsets = [0, 9, 0], sizes = [8, 1, 16], strides = [1, 1, 1]} : vector<8x14x16xf32> to vector<8x1x16xf32>
    %183 = vector.shape_cast %182 : vector<8x1x16xf32> to vector<8x16xf32>
    %184 = arith.addf %181, %183 : vector<8x16xf32>
    %185 = vector.extract_strided_slice %125 {offsets = [0, 10, 0], sizes = [8, 1, 16], strides = [1, 1, 1]} : vector<8x14x16xf32> to vector<8x1x16xf32>
    %186 = vector.shape_cast %185 : vector<8x1x16xf32> to vector<8x16xf32>
    %187 = arith.addf %184, %186 : vector<8x16xf32>
    %cst_60 = arith.constant 4.000000e-02 : f32
    %188 = vector.broadcast %cst_60 : f32 to vector<8x16xf32>
    %189 = arith.mulf %187, %188 : vector<8x16xf32>
    %190 = arith.truncf %189 : vector<8x16xf32> to vector<8x16xbf16>
    %cst_61 = arith.constant dense<0.000000e+00> : vector<8x128xf32>
    %191 = tpu.matmul %190, %0, %cst_61 {dimension_numbers = #tpu.dot_dimension_numbers<[1], [0], [0], [1], [0, 0, 1, 1], [], []>} : vector<8x16xbf16>, vector<16x128xbf16>, vector<8x128xf32> -> vector<8x128xf32>
    %192 = vector.broadcast %1 : vector<1x128xf32> to vector<8x128xf32>
    %193 = arith.addf %191, %192 : vector<8x128xf32>
    %cst_62 = arith.constant 0.000000e+00 : f32
    %194 = vector.broadcast %cst_62 : f32 to vector<8x128xf32>
    %195 = arith.maximumf %193, %194 : vector<8x128xf32>
    %196 = arith.truncf %195 : vector<8x128xf32> to vector<8x128xbf16>
    %c0_63 = arith.constant 0 : index
    %c768 = arith.constant 768 : index
    %197 = vector.load %arg9[%c0_63, %c768] : memref<8x2048xbf16, #tpu.memory_space<vmem>>, vector<8x128xbf16>
    tpu.vector_store %arg9[%c0_63, %c768], %196 {strides = array<i32>} : memref<8x2048xbf16, #tpu.memory_space<vmem>>, vector<8x128xbf16>,
    %198 = vector.extract_strided_slice %125 {offsets = [0, 9, 0], sizes = [8, 1, 16], strides = [1, 1, 1]} : vector<8x14x16xf32> to vector<8x1x16xf32>
    %199 = vector.shape_cast %198 : vector<8x1x16xf32> to vector<8x16xf32>
    %200 = vector.extract_strided_slice %125 {offsets = [0, 10, 0], sizes = [8, 1, 16], strides = [1, 1, 1]} : vector<8x14x16xf32> to vector<8x1x16xf32>
    %201 = vector.shape_cast %200 : vector<8x1x16xf32> to vector<8x16xf32>
    %202 = arith.addf %199, %201 : vector<8x16xf32>
    %203 = vector.extract_strided_slice %125 {offsets = [0, 11, 0], sizes = [8, 1, 16], strides = [1, 1, 1]} : vector<8x14x16xf32> to vector<8x1x16xf32>
    %204 = vector.shape_cast %203 : vector<8x1x16xf32> to vector<8x16xf32>
    %205 = arith.addf %202, %204 : vector<8x16xf32>
    %206 = vector.extract_strided_slice %125 {offsets = [0, 12, 0], sizes = [8, 1, 16], strides = [1, 1, 1]} : vector<8x14x16xf32> to vector<8x1x16xf32>
    %207 = vector.shape_cast %206 : vector<8x1x16xf32> to vector<8x16xf32>
    %208 = arith.addf %205, %207 : vector<8x16xf32>
    %209 = vector.extract_strided_slice %125 {offsets = [0, 13, 0], sizes = [8, 1, 16], strides = [1, 1, 1]} : vector<8x14x16xf32> to vector<8x1x16xf32>
    %210 = vector.shape_cast %209 : vector<8x1x16xf32> to vector<8x16xf32>
    %211 = arith.addf %208, %210 : vector<8x16xf32>
    %cst_64 = arith.constant 4.000000e-02 : f32
    %212 = vector.broadcast %cst_64 : f32 to vector<8x16xf32>
    %213 = arith.mulf %211, %212 : vector<8x16xf32>
    %214 = arith.truncf %213 : vector<8x16xf32> to vector<8x16xbf16>
    %cst_65 = arith.constant dense<0.000000e+00> : vector<8x128xf32>
    %215 = tpu.matmul %214, %0, %cst_65 {dimension_numbers = #tpu.dot_dimension_numbers<[1], [0], [0], [1], [0, 0, 1, 1], [], []>} : vector<8x16xbf16>, vector<16x128xbf16>, vector<8x128xf32> -> vector<8x128xf32>
    %216 = vector.broadcast %1 : vector<1x128xf32> to vector<8x128xf32>
    %217 = arith.addf %215, %216 : vector<8x128xf32>
    %cst_66 = arith.constant 0.000000e+00 : f32
    %218 = vector.broadcast %cst_66 : f32 to vector<8x128xf32>
    %219 = arith.maximumf %217, %218 : vector<8x128xf32>
    %220 = arith.truncf %219 : vector<8x128xf32> to vector<8x128xbf16>
    %c0_67 = arith.constant 0 : index
    %c896 = arith.constant 896 : index
    %221 = vector.load %arg9[%c0_67, %c896] : memref<8x2048xbf16, #tpu.memory_space<vmem>>, vector<8x128xbf16>
    tpu.vector_store %arg9[%c0_67, %c896], %220 {strides = array<i32>} : memref<8x2048xbf16, #tpu.memory_space<vmem>>, vector<8x128xbf16>,
    %c0_68 = arith.constant 0 : index
    %c6_69 = arith.constant 6 : index
    %c0_70 = arith.constant 0 : index
    %c0_71 = arith.constant 0 : index
    %222 = vector.load %arg1[%c0_68, %c6_69, %c0_70, %c0_71] : memref<8x14x14x16xf32, #tpu.memory_space<vmem>>, vector<8x1x14x16xf32>
    %223 = vector.shape_cast %222 : vector<8x1x14x16xf32> to vector<8x14x16xf32>
    %c0_72 = arith.constant 0 : index
    %c7_73 = arith.constant 7 : index
    %c0_74 = arith.constant 0 : index
    %c0_75 = arith.constant 0 : index
    %224 = vector.load %arg1[%c0_72, %c7_73, %c0_74, %c0_75] : memref<8x14x14x16xf32, #tpu.memory_space<vmem>>, vector<8x1x14x16xf32>
    %225 = vector.shape_cast %224 : vector<8x1x14x16xf32> to vector<8x14x16xf32>
    %226 = arith.addf %223, %225 : vector<8x14x16xf32>
    %c0_76 = arith.constant 0 : index
    %c8 = arith.constant 8 : index
    %c0_77 = arith.constant 0 : index
    %c0_78 = arith.constant 0 : index
    %227 = vector.load %arg1[%c0_76, %c8, %c0_77, %c0_78] : memref<8x14x14x16xf32, #tpu.memory_space<vmem>>, vector<8x1x14x16xf32>
    %228 = vector.shape_cast %227 : vector<8x1x14x16xf32> to vector<8x14x16xf32>
    %229 = arith.addf %226, %228 : vector<8x14x16xf32>
    %c0_79 = arith.constant 0 : index
    %c9 = arith.constant 9 : index
    %c0_80 = arith.constant 0 : index
    %c0_81 = arith.constant 0 : index
    %230 = vector.load %arg1[%c0_79, %c9, %c0_80, %c0_81] : memref<8x14x14x16xf32, #tpu.memory_space<vmem>>, vector<8x1x14x16xf32>
    %231 = vector.shape_cast %230 : vector<8x1x14x16xf32> to vector<8x14x16xf32>
    %232 = arith.addf %229, %231 : vector<8x14x16xf32>
    %c0_82 = arith.constant 0 : index
    %c10 = arith.constant 10 : index
    %c0_83 = arith.constant 0 : index
    %c0_84 = arith.constant 0 : index
    %233 = vector.load %arg1[%c0_82, %c10, %c0_83, %c0_84] : memref<8x14x14x16xf32, #tpu.memory_space<vmem>>, vector<8x1x14x16xf32>
    %234 = vector.shape_cast %233 : vector<8x1x14x16xf32> to vector<8x14x16xf32>
    %235 = arith.addf %232, %234 : vector<8x14x16xf32>
    %236 = vector.extract_strided_slice %235 {offsets = [0, 0, 0], sizes = [8, 1, 16], strides = [1, 1, 1]} : vector<8x14x16xf32> to vector<8x1x16xf32>
    %237 = vector.shape_cast %236 : vector<8x1x16xf32> to vector<8x16xf32>
    %238 = vector.extract_strided_slice %235 {offsets = [0, 1, 0], sizes = [8, 1, 16], strides = [1, 1, 1]} : vector<8x14x16xf32> to vector<8x1x16xf32>
    %239 = vector.shape_cast %238 : vector<8x1x16xf32> to vector<8x16xf32>
    %240 = arith.addf %237, %239 : vector<8x16xf32>
    %241 = vector.extract_strided_slice %235 {offsets = [0, 2, 0], sizes = [8, 1, 16], strides = [1, 1, 1]} : vector<8x14x16xf32> to vector<8x1x16xf32>
    %242 = vector.shape_cast %241 : vector<8x1x16xf32> to vector<8x16xf32>
    %243 = arith.addf %240, %242 : vector<8x16xf32>
    %244 = vector.extract_strided_slice %235 {offsets = [0, 3, 0], sizes = [8, 1, 16], strides = [1, 1, 1]} : vector<8x14x16xf32> to vector<8x1x16xf32>
    %245 = vector.shape_cast %244 : vector<8x1x16xf32> to vector<8x16xf32>
    %246 = arith.addf %243, %245 : vector<8x16xf32>
    %247 = vector.extract_strided_slice %235 {offsets = [0, 4, 0], sizes = [8, 1, 16], strides = [1, 1, 1]} : vector<8x14x16xf32> to vector<8x1x16xf32>
    %248 = vector.shape_cast %247 : vector<8x1x16xf32> to vector<8x16xf32>
    %249 = arith.addf %246, %248 : vector<8x16xf32>
    %cst_85 = arith.constant 4.000000e-02 : f32
    %250 = vector.broadcast %cst_85 : f32 to vector<8x16xf32>
    %251 = arith.mulf %249, %250 : vector<8x16xf32>
    %252 = arith.truncf %251 : vector<8x16xf32> to vector<8x16xbf16>
    %cst_86 = arith.constant dense<0.000000e+00> : vector<8x128xf32>
    %253 = tpu.matmul %252, %0, %cst_86 {dimension_numbers = #tpu.dot_dimension_numbers<[1], [0], [0], [1], [0, 0, 1, 1], [], []>} : vector<8x16xbf16>, vector<16x128xbf16>, vector<8x128xf32> -> vector<8x128xf32>
    %254 = vector.broadcast %1 : vector<1x128xf32> to vector<8x128xf32>
    %255 = arith.addf %253, %254 : vector<8x128xf32>
    %cst_87 = arith.constant 0.000000e+00 : f32
    %256 = vector.broadcast %cst_87 : f32 to vector<8x128xf32>
    %257 = arith.maximumf %255, %256 : vector<8x128xf32>
    %258 = arith.truncf %257 : vector<8x128xf32> to vector<8x128xbf16>
    %c0_88 = arith.constant 0 : index
    %c1024 = arith.constant 1024 : index
    %259 = vector.load %arg9[%c0_88, %c1024] : memref<8x2048xbf16, #tpu.memory_space<vmem>>, vector<8x128xbf16>
    tpu.vector_store %arg9[%c0_88, %c1024], %258 {strides = array<i32>} : memref<8x2048xbf16, #tpu.memory_space<vmem>>, vector<8x128xbf16>,
    %260 = vector.extract_strided_slice %235 {offsets = [0, 3, 0], sizes = [8, 1, 16], strides = [1, 1, 1]} : vector<8x14x16xf32> to vector<8x1x16xf32>
    %261 = vector.shape_cast %260 : vector<8x1x16xf32> to vector<8x16xf32>
    %262 = vector.extract_strided_slice %235 {offsets = [0, 4, 0], sizes = [8, 1, 16], strides = [1, 1, 1]} : vector<8x14x16xf32> to vector<8x1x16xf32>
    %263 = vector.shape_cast %262 : vector<8x1x16xf32> to vector<8x16xf32>
    %264 = arith.addf %261, %263 : vector<8x16xf32>
    %265 = vector.extract_strided_slice %235 {offsets = [0, 5, 0], sizes = [8, 1, 16], strides = [1, 1, 1]} : vector<8x14x16xf32> to vector<8x1x16xf32>
    %266 = vector.shape_cast %265 : vector<8x1x16xf32> to vector<8x16xf32>
    %267 = arith.addf %264, %266 : vector<8x16xf32>
    %268 = vector.extract_strided_slice %235 {offsets = [0, 6, 0], sizes = [8, 1, 16], strides = [1, 1, 1]} : vector<8x14x16xf32> to vector<8x1x16xf32>
    %269 = vector.shape_cast %268 : vector<8x1x16xf32> to vector<8x16xf32>
    %270 = arith.addf %267, %269 : vector<8x16xf32>
    %271 = vector.extract_strided_slice %235 {offsets = [0, 7, 0], sizes = [8, 1, 16], strides = [1, 1, 1]} : vector<8x14x16xf32> to vector<8x1x16xf32>
    %272 = vector.shape_cast %271 : vector<8x1x16xf32> to vector<8x16xf32>
    %273 = arith.addf %270, %272 : vector<8x16xf32>
    %cst_89 = arith.constant 4.000000e-02 : f32
    %274 = vector.broadcast %cst_89 : f32 to vector<8x16xf32>
    %275 = arith.mulf %273, %274 : vector<8x16xf32>
    %276 = arith.truncf %275 : vector<8x16xf32> to vector<8x16xbf16>
    %cst_90 = arith.constant dense<0.000000e+00> : vector<8x128xf32>
    %277 = tpu.matmul %276, %0, %cst_90 {dimension_numbers = #tpu.dot_dimension_numbers<[1], [0], [0], [1], [0, 0, 1, 1], [], []>} : vector<8x16xbf16>, vector<16x128xbf16>, vector<8x128xf32> -> vector<8x128xf32>
    %278 = vector.broadcast %1 : vector<1x128xf32> to vector<8x128xf32>
    %279 = arith.addf %277, %278 : vector<8x128xf32>
    %cst_91 = arith.constant 0.000000e+00 : f32
    %280 = vector.broadcast %cst_91 : f32 to vector<8x128xf32>
    %281 = arith.maximumf %279, %280 : vector<8x128xf32>
    %282 = arith.truncf %281 : vector<8x128xf32> to vector<8x128xbf16>
    %c0_92 = arith.constant 0 : index
    %c1152 = arith.constant 1152 : index
    %283 = vector.load %arg9[%c0_92, %c1152] : memref<8x2048xbf16, #tpu.memory_space<vmem>>, vector<8x128xbf16>
    tpu.vector_store %arg9[%c0_92, %c1152], %282 {strides = array<i32>} : memref<8x2048xbf16, #tpu.memory_space<vmem>>, vector<8x128xbf16>,
    %284 = vector.extract_strided_slice %235 {offsets = [0, 6, 0], sizes = [8, 1, 16], strides = [1, 1, 1]} : vector<8x14x16xf32> to vector<8x1x16xf32>
    %285 = vector.shape_cast %284 : vector<8x1x16xf32> to vector<8x16xf32>
    %286 = vector.extract_strided_slice %235 {offsets = [0, 7, 0], sizes = [8, 1, 16], strides = [1, 1, 1]} : vector<8x14x16xf32> to vector<8x1x16xf32>
    %287 = vector.shape_cast %286 : vector<8x1x16xf32> to vector<8x16xf32>
    %288 = arith.addf %285, %287 : vector<8x16xf32>
    %289 = vector.extract_strided_slice %235 {offsets = [0, 8, 0], sizes = [8, 1, 16], strides = [1, 1, 1]} : vector<8x14x16xf32> to vector<8x1x16xf32>
    %290 = vector.shape_cast %289 : vector<8x1x16xf32> to vector<8x16xf32>
    %291 = arith.addf %288, %290 : vector<8x16xf32>
    %292 = vector.extract_strided_slice %235 {offsets = [0, 9, 0], sizes = [8, 1, 16], strides = [1, 1, 1]} : vector<8x14x16xf32> to vector<8x1x16xf32>
    %293 = vector.shape_cast %292 : vector<8x1x16xf32> to vector<8x16xf32>
    %294 = arith.addf %291, %293 : vector<8x16xf32>
    %295 = vector.extract_strided_slice %235 {offsets = [0, 10, 0], sizes = [8, 1, 16], strides = [1, 1, 1]} : vector<8x14x16xf32> to vector<8x1x16xf32>
    %296 = vector.shape_cast %295 : vector<8x1x16xf32> to vector<8x16xf32>
    %297 = arith.addf %294, %296 : vector<8x16xf32>
    %cst_93 = arith.constant 4.000000e-02 : f32
    %298 = vector.broadcast %cst_93 : f32 to vector<8x16xf32>
    %299 = arith.mulf %297, %298 : vector<8x16xf32>
    %300 = arith.truncf %299 : vector<8x16xf32> to vector<8x16xbf16>
    %cst_94 = arith.constant dense<0.000000e+00> : vector<8x128xf32>
    %301 = tpu.matmul %300, %0, %cst_94 {dimension_numbers = #tpu.dot_dimension_numbers<[1], [0], [0], [1], [0, 0, 1, 1], [], []>} : vector<8x16xbf16>, vector<16x128xbf16>, vector<8x128xf32> -> vector<8x128xf32>
    %302 = vector.broadcast %1 : vector<1x128xf32> to vector<8x128xf32>
    %303 = arith.addf %301, %302 : vector<8x128xf32>
    %cst_95 = arith.constant 0.000000e+00 : f32
    %304 = vector.broadcast %cst_95 : f32 to vector<8x128xf32>
    %305 = arith.maximumf %303, %304 : vector<8x128xf32>
    %306 = arith.truncf %305 : vector<8x128xf32> to vector<8x128xbf16>
    %c0_96 = arith.constant 0 : index
    %c1280 = arith.constant 1280 : index
    %307 = vector.load %arg9[%c0_96, %c1280] : memref<8x2048xbf16, #tpu.memory_space<vmem>>, vector<8x128xbf16>
    tpu.vector_store %arg9[%c0_96, %c1280], %306 {strides = array<i32>} : memref<8x2048xbf16, #tpu.memory_space<vmem>>, vector<8x128xbf16>,
    %308 = vector.extract_strided_slice %235 {offsets = [0, 9, 0], sizes = [8, 1, 16], strides = [1, 1, 1]} : vector<8x14x16xf32> to vector<8x1x16xf32>
    %309 = vector.shape_cast %308 : vector<8x1x16xf32> to vector<8x16xf32>
    %310 = vector.extract_strided_slice %235 {offsets = [0, 10, 0], sizes = [8, 1, 16], strides = [1, 1, 1]} : vector<8x14x16xf32> to vector<8x1x16xf32>
    %311 = vector.shape_cast %310 : vector<8x1x16xf32> to vector<8x16xf32>
    %312 = arith.addf %309, %311 : vector<8x16xf32>
    %313 = vector.extract_strided_slice %235 {offsets = [0, 11, 0], sizes = [8, 1, 16], strides = [1, 1, 1]} : vector<8x14x16xf32> to vector<8x1x16xf32>
    %314 = vector.shape_cast %313 : vector<8x1x16xf32> to vector<8x16xf32>
    %315 = arith.addf %312, %314 : vector<8x16xf32>
    %316 = vector.extract_strided_slice %235 {offsets = [0, 12, 0], sizes = [8, 1, 16], strides = [1, 1, 1]} : vector<8x14x16xf32> to vector<8x1x16xf32>
    %317 = vector.shape_cast %316 : vector<8x1x16xf32> to vector<8x16xf32>
    %318 = arith.addf %315, %317 : vector<8x16xf32>
    %319 = vector.extract_strided_slice %235 {offsets = [0, 13, 0], sizes = [8, 1, 16], strides = [1, 1, 1]} : vector<8x14x16xf32> to vector<8x1x16xf32>
    %320 = vector.shape_cast %319 : vector<8x1x16xf32> to vector<8x16xf32>
    %321 = arith.addf %318, %320 : vector<8x16xf32>
    %cst_97 = arith.constant 4.000000e-02 : f32
    %322 = vector.broadcast %cst_97 : f32 to vector<8x16xf32>
    %323 = arith.mulf %321, %322 : vector<8x16xf32>
    %324 = arith.truncf %323 : vector<8x16xf32> to vector<8x16xbf16>
    %cst_98 = arith.constant dense<0.000000e+00> : vector<8x128xf32>
    %325 = tpu.matmul %324, %0, %cst_98 {dimension_numbers = #tpu.dot_dimension_numbers<[1], [0], [0], [1], [0, 0, 1, 1], [], []>} : vector<8x16xbf16>, vector<16x128xbf16>, vector<8x128xf32> -> vector<8x128xf32>
    %326 = vector.broadcast %1 : vector<1x128xf32> to vector<8x128xf32>
    %327 = arith.addf %325, %326 : vector<8x128xf32>
    %cst_99 = arith.constant 0.000000e+00 : f32
    %328 = vector.broadcast %cst_99 : f32 to vector<8x128xf32>
    %329 = arith.maximumf %327, %328 : vector<8x128xf32>
    %330 = arith.truncf %329 : vector<8x128xf32> to vector<8x128xbf16>
    %c0_100 = arith.constant 0 : index
    %c1408 = arith.constant 1408 : index
    %331 = vector.load %arg9[%c0_100, %c1408] : memref<8x2048xbf16, #tpu.memory_space<vmem>>, vector<8x128xbf16>
    tpu.vector_store %arg9[%c0_100, %c1408], %330 {strides = array<i32>} : memref<8x2048xbf16, #tpu.memory_space<vmem>>, vector<8x128xbf16>,
    %c0_101 = arith.constant 0 : index
    %c9_102 = arith.constant 9 : index
    %c0_103 = arith.constant 0 : index
    %c0_104 = arith.constant 0 : index
    %332 = vector.load %arg1[%c0_101, %c9_102, %c0_103, %c0_104] : memref<8x14x14x16xf32, #tpu.memory_space<vmem>>, vector<8x1x14x16xf32>
    %333 = vector.shape_cast %332 : vector<8x1x14x16xf32> to vector<8x14x16xf32>
    %c0_105 = arith.constant 0 : index
    %c10_106 = arith.constant 10 : index
    %c0_107 = arith.constant 0 : index
    %c0_108 = arith.constant 0 : index
    %334 = vector.load %arg1[%c0_105, %c10_106, %c0_107, %c0_108] : memref<8x14x14x16xf32, #tpu.memory_space<vmem>>, vector<8x1x14x16xf32>
    %335 = vector.shape_cast %334 : vector<8x1x14x16xf32> to vector<8x14x16xf32>
    %336 = arith.addf %333, %335 : vector<8x14x16xf32>
    %c0_109 = arith.constant 0 : index
    %c11 = arith.constant 11 : index
    %c0_110 = arith.constant 0 : index
    %c0_111 = arith.constant 0 : index
    %337 = vector.load %arg1[%c0_109, %c11, %c0_110, %c0_111] : memref<8x14x14x16xf32, #tpu.memory_space<vmem>>, vector<8x1x14x16xf32>
    %338 = vector.shape_cast %337 : vector<8x1x14x16xf32> to vector<8x14x16xf32>
    %339 = arith.addf %336, %338 : vector<8x14x16xf32>
    %c0_112 = arith.constant 0 : index
    %c12 = arith.constant 12 : index
    %c0_113 = arith.constant 0 : index
    %c0_114 = arith.constant 0 : index
    %340 = vector.load %arg1[%c0_112, %c12, %c0_113, %c0_114] : memref<8x14x14x16xf32, #tpu.memory_space<vmem>>, vector<8x1x14x16xf32>
    %341 = vector.shape_cast %340 : vector<8x1x14x16xf32> to vector<8x14x16xf32>
    %342 = arith.addf %339, %341 : vector<8x14x16xf32>
    %c0_115 = arith.constant 0 : index
    %c13 = arith.constant 13 : index
    %c0_116 = arith.constant 0 : index
    %c0_117 = arith.constant 0 : index
    %343 = vector.load %arg1[%c0_115, %c13, %c0_116, %c0_117] : memref<8x14x14x16xf32, #tpu.memory_space<vmem>>, vector<8x1x14x16xf32>
    %344 = vector.shape_cast %343 : vector<8x1x14x16xf32> to vector<8x14x16xf32>
    %345 = arith.addf %342, %344 : vector<8x14x16xf32>
    %346 = vector.extract_strided_slice %345 {offsets = [0, 0, 0], sizes = [8, 1, 16], strides = [1, 1, 1]} : vector<8x14x16xf32> to vector<8x1x16xf32>
    %347 = vector.shape_cast %346 : vector<8x1x16xf32> to vector<8x16xf32>
    %348 = vector.extract_strided_slice %345 {offsets = [0, 1, 0], sizes = [8, 1, 16], strides = [1, 1, 1]} : vector<8x14x16xf32> to vector<8x1x16xf32>
    %349 = vector.shape_cast %348 : vector<8x1x16xf32> to vector<8x16xf32>
    %350 = arith.addf %347, %349 : vector<8x16xf32>
    %351 = vector.extract_strided_slice %345 {offsets = [0, 2, 0], sizes = [8, 1, 16], strides = [1, 1, 1]} : vector<8x14x16xf32> to vector<8x1x16xf32>
    %352 = vector.shape_cast %351 : vector<8x1x16xf32> to vector<8x16xf32>
    %353 = arith.addf %350, %352 : vector<8x16xf32>
    %354 = vector.extract_strided_slice %345 {offsets = [0, 3, 0], sizes = [8, 1, 16], strides = [1, 1, 1]} : vector<8x14x16xf32> to vector<8x1x16xf32>
    %355 = vector.shape_cast %354 : vector<8x1x16xf32> to vector<8x16xf32>
    %356 = arith.addf %353, %355 : vector<8x16xf32>
    %357 = vector.extract_strided_slice %345 {offsets = [0, 4, 0], sizes = [8, 1, 16], strides = [1, 1, 1]} : vector<8x14x16xf32> to vector<8x1x16xf32>
    %358 = vector.shape_cast %357 : vector<8x1x16xf32> to vector<8x16xf32>
    %359 = arith.addf %356, %358 : vector<8x16xf32>
    %cst_118 = arith.constant 4.000000e-02 : f32
    %360 = vector.broadcast %cst_118 : f32 to vector<8x16xf32>
    %361 = arith.mulf %359, %360 : vector<8x16xf32>
    %362 = arith.truncf %361 : vector<8x16xf32> to vector<8x16xbf16>
    %cst_119 = arith.constant dense<0.000000e+00> : vector<8x128xf32>
    %363 = tpu.matmul %362, %0, %cst_119 {dimension_numbers = #tpu.dot_dimension_numbers<[1], [0], [0], [1], [0, 0, 1, 1], [], []>} : vector<8x16xbf16>, vector<16x128xbf16>, vector<8x128xf32> -> vector<8x128xf32>
    %364 = vector.broadcast %1 : vector<1x128xf32> to vector<8x128xf32>
    %365 = arith.addf %363, %364 : vector<8x128xf32>
    %cst_120 = arith.constant 0.000000e+00 : f32
    %366 = vector.broadcast %cst_120 : f32 to vector<8x128xf32>
    %367 = arith.maximumf %365, %366 : vector<8x128xf32>
    %368 = arith.truncf %367 : vector<8x128xf32> to vector<8x128xbf16>
    %c0_121 = arith.constant 0 : index
    %c1536 = arith.constant 1536 : index
    %369 = vector.load %arg9[%c0_121, %c1536] : memref<8x2048xbf16, #tpu.memory_space<vmem>>, vector<8x128xbf16>
    tpu.vector_store %arg9[%c0_121, %c1536], %368 {strides = array<i32>} : memref<8x2048xbf16, #tpu.memory_space<vmem>>, vector<8x128xbf16>,
    %370 = vector.extract_strided_slice %345 {offsets = [0, 3, 0], sizes = [8, 1, 16], strides = [1, 1, 1]} : vector<8x14x16xf32> to vector<8x1x16xf32>
    %371 = vector.shape_cast %370 : vector<8x1x16xf32> to vector<8x16xf32>
    %372 = vector.extract_strided_slice %345 {offsets = [0, 4, 0], sizes = [8, 1, 16], strides = [1, 1, 1]} : vector<8x14x16xf32> to vector<8x1x16xf32>
    %373 = vector.shape_cast %372 : vector<8x1x16xf32> to vector<8x16xf32>
    %374 = arith.addf %371, %373 : vector<8x16xf32>
    %375 = vector.extract_strided_slice %345 {offsets = [0, 5, 0], sizes = [8, 1, 16], strides = [1, 1, 1]} : vector<8x14x16xf32> to vector<8x1x16xf32>
    %376 = vector.shape_cast %375 : vector<8x1x16xf32> to vector<8x16xf32>
    %377 = arith.addf %374, %376 : vector<8x16xf32>
    %378 = vector.extract_strided_slice %345 {offsets = [0, 6, 0], sizes = [8, 1, 16], strides = [1, 1, 1]} : vector<8x14x16xf32> to vector<8x1x16xf32>
    %379 = vector.shape_cast %378 : vector<8x1x16xf32> to vector<8x16xf32>
    %380 = arith.addf %377, %379 : vector<8x16xf32>
    %381 = vector.extract_strided_slice %345 {offsets = [0, 7, 0], sizes = [8, 1, 16], strides = [1, 1, 1]} : vector<8x14x16xf32> to vector<8x1x16xf32>
    %382 = vector.shape_cast %381 : vector<8x1x16xf32> to vector<8x16xf32>
    %383 = arith.addf %380, %382 : vector<8x16xf32>
    %cst_122 = arith.constant 4.000000e-02 : f32
    %384 = vector.broadcast %cst_122 : f32 to vector<8x16xf32>
    %385 = arith.mulf %383, %384 : vector<8x16xf32>
    %386 = arith.truncf %385 : vector<8x16xf32> to vector<8x16xbf16>
    %cst_123 = arith.constant dense<0.000000e+00> : vector<8x128xf32>
    %387 = tpu.matmul %386, %0, %cst_123 {dimension_numbers = #tpu.dot_dimension_numbers<[1], [0], [0], [1], [0, 0, 1, 1], [], []>} : vector<8x16xbf16>, vector<16x128xbf16>, vector<8x128xf32> -> vector<8x128xf32>
    %388 = vector.broadcast %1 : vector<1x128xf32> to vector<8x128xf32>
    %389 = arith.addf %387, %388 : vector<8x128xf32>
    %cst_124 = arith.constant 0.000000e+00 : f32
    %390 = vector.broadcast %cst_124 : f32 to vector<8x128xf32>
    %391 = arith.maximumf %389, %390 : vector<8x128xf32>
    %392 = arith.truncf %391 : vector<8x128xf32> to vector<8x128xbf16>
    %c0_125 = arith.constant 0 : index
    %c1664 = arith.constant 1664 : index
    %393 = vector.load %arg9[%c0_125, %c1664] : memref<8x2048xbf16, #tpu.memory_space<vmem>>, vector<8x128xbf16>
    tpu.vector_store %arg9[%c0_125, %c1664], %392 {strides = array<i32>} : memref<8x2048xbf16, #tpu.memory_space<vmem>>, vector<8x128xbf16>,
    %394 = vector.extract_strided_slice %345 {offsets = [0, 6, 0], sizes = [8, 1, 16], strides = [1, 1, 1]} : vector<8x14x16xf32> to vector<8x1x16xf32>
    %395 = vector.shape_cast %394 : vector<8x1x16xf32> to vector<8x16xf32>
    %396 = vector.extract_strided_slice %345 {offsets = [0, 7, 0], sizes = [8, 1, 16], strides = [1, 1, 1]} : vector<8x14x16xf32> to vector<8x1x16xf32>
    %397 = vector.shape_cast %396 : vector<8x1x16xf32> to vector<8x16xf32>
    %398 = arith.addf %395, %397 : vector<8x16xf32>
    %399 = vector.extract_strided_slice %345 {offsets = [0, 8, 0], sizes = [8, 1, 16], strides = [1, 1, 1]} : vector<8x14x16xf32> to vector<8x1x16xf32>
    %400 = vector.shape_cast %399 : vector<8x1x16xf32> to vector<8x16xf32>
    %401 = arith.addf %398, %400 : vector<8x16xf32>
    %402 = vector.extract_strided_slice %345 {offsets = [0, 9, 0], sizes = [8, 1, 16], strides = [1, 1, 1]} : vector<8x14x16xf32> to vector<8x1x16xf32>
    %403 = vector.shape_cast %402 : vector<8x1x16xf32> to vector<8x16xf32>
    %404 = arith.addf %401, %403 : vector<8x16xf32>
    %405 = vector.extract_strided_slice %345 {offsets = [0, 10, 0], sizes = [8, 1, 16], strides = [1, 1, 1]} : vector<8x14x16xf32> to vector<8x1x16xf32>
    %406 = vector.shape_cast %405 : vector<8x1x16xf32> to vector<8x16xf32>
    %407 = arith.addf %404, %406 : vector<8x16xf32>
    %cst_126 = arith.constant 4.000000e-02 : f32
    %408 = vector.broadcast %cst_126 : f32 to vector<8x16xf32>
    %409 = arith.mulf %407, %408 : vector<8x16xf32>
    %410 = arith.truncf %409 : vector<8x16xf32> to vector<8x16xbf16>
    %cst_127 = arith.constant dense<0.000000e+00> : vector<8x128xf32>
    %411 = tpu.matmul %410, %0, %cst_127 {dimension_numbers = #tpu.dot_dimension_numbers<[1], [0], [0], [1], [0, 0, 1, 1], [], []>} : vector<8x16xbf16>, vector<16x128xbf16>, vector<8x128xf32> -> vector<8x128xf32>
    %412 = vector.broadcast %1 : vector<1x128xf32> to vector<8x128xf32>
    %413 = arith.addf %411, %412 : vector<8x128xf32>
    %cst_128 = arith.constant 0.000000e+00 : f32
    %414 = vector.broadcast %cst_128 : f32 to vector<8x128xf32>
    %415 = arith.maximumf %413, %414 : vector<8x128xf32>
    %416 = arith.truncf %415 : vector<8x128xf32> to vector<8x128xbf16>
    %c0_129 = arith.constant 0 : index
    %c1792 = arith.constant 1792 : index
    %417 = vector.load %arg9[%c0_129, %c1792] : memref<8x2048xbf16, #tpu.memory_space<vmem>>, vector<8x128xbf16>
    tpu.vector_store %arg9[%c0_129, %c1792], %416 {strides = array<i32>} : memref<8x2048xbf16, #tpu.memory_space<vmem>>, vector<8x128xbf16>,
    %418 = vector.extract_strided_slice %345 {offsets = [0, 9, 0], sizes = [8, 1, 16], strides = [1, 1, 1]} : vector<8x14x16xf32> to vector<8x1x16xf32>
    %419 = vector.shape_cast %418 : vector<8x1x16xf32> to vector<8x16xf32>
    %420 = vector.extract_strided_slice %345 {offsets = [0, 10, 0], sizes = [8, 1, 16], strides = [1, 1, 1]} : vector<8x14x16xf32> to vector<8x1x16xf32>
    %421 = vector.shape_cast %420 : vector<8x1x16xf32> to vector<8x16xf32>
    %422 = arith.addf %419, %421 : vector<8x16xf32>
    %423 = vector.extract_strided_slice %345 {offsets = [0, 11, 0], sizes = [8, 1, 16], strides = [1, 1, 1]} : vector<8x14x16xf32> to vector<8x1x16xf32>
    %424 = vector.shape_cast %423 : vector<8x1x16xf32> to vector<8x16xf32>
    %425 = arith.addf %422, %424 : vector<8x16xf32>
    %426 = vector.extract_strided_slice %345 {offsets = [0, 12, 0], sizes = [8, 1, 16], strides = [1, 1, 1]} : vector<8x14x16xf32> to vector<8x1x16xf32>
    %427 = vector.shape_cast %426 : vector<8x1x16xf32> to vector<8x16xf32>
    %428 = arith.addf %425, %427 : vector<8x16xf32>
    %429 = vector.extract_strided_slice %345 {offsets = [0, 13, 0], sizes = [8, 1, 16], strides = [1, 1, 1]} : vector<8x14x16xf32> to vector<8x1x16xf32>
    %430 = vector.shape_cast %429 : vector<8x1x16xf32> to vector<8x16xf32>
    %431 = arith.addf %428, %430 : vector<8x16xf32>
    %cst_130 = arith.constant 4.000000e-02 : f32
    %432 = vector.broadcast %cst_130 : f32 to vector<8x16xf32>
    %433 = arith.mulf %431, %432 : vector<8x16xf32>
    %434 = arith.truncf %433 : vector<8x16xf32> to vector<8x16xbf16>
    %cst_131 = arith.constant dense<0.000000e+00> : vector<8x128xf32>
    %435 = tpu.matmul %434, %0, %cst_131 {dimension_numbers = #tpu.dot_dimension_numbers<[1], [0], [0], [1], [0, 0, 1, 1], [], []>} : vector<8x16xbf16>, vector<16x128xbf16>, vector<8x128xf32> -> vector<8x128xf32>
    %436 = vector.broadcast %1 : vector<1x128xf32> to vector<8x128xf32>
    %437 = arith.addf %435, %436 : vector<8x128xf32>
    %cst_132 = arith.constant 0.000000e+00 : f32
    %438 = vector.broadcast %cst_132 : f32 to vector<8x128xf32>
    %439 = arith.maximumf %437, %438 : vector<8x128xf32>
    %440 = arith.truncf %439 : vector<8x128xf32> to vector<8x128xbf16>
    %c0_133 = arith.constant 0 : index
    %c1920 = arith.constant 1920 : index
    %441 = vector.load %arg9[%c0_133, %c1920] : memref<8x2048xbf16, #tpu.memory_space<vmem>>, vector<8x128xbf16>
    tpu.vector_store %arg9[%c0_133, %c1920], %440 {strides = array<i32>} : memref<8x2048xbf16, #tpu.memory_space<vmem>>, vector<8x128xbf16>,
    %c0_134 = arith.constant 0 : index
    %c0_135 = arith.constant 0 : index
    %442 = vector.load %arg9[%c0_134, %c0_135] : memref<8x2048xbf16, #tpu.memory_space<vmem>>, vector<8x2048xbf16>
    %c0_136 = arith.constant 0 : index
    %c0_137 = arith.constant 0 : index
    %443 = vector.load %arg4[%c0_136, %c0_137] : memref<2048x1024xbf16, #tpu.memory_space<vmem>>, vector<2048x1024xbf16>
    %cst_138 = arith.constant dense<0.000000e+00> : vector<8x1024xf32>
    %444 = tpu.matmul %442, %443, %cst_138 {dimension_numbers = #tpu.dot_dimension_numbers<[1], [0], [0], [1], [0, 0, 1, 1], [], []>} : vector<8x2048xbf16>, vector<2048x1024xbf16>, vector<8x1024xf32> -> vector<8x1024xf32>
    %c0_139 = arith.constant 0 : index
    %c0_140 = arith.constant 0 : index
    %445 = vector.load %arg5[%c0_139, %c0_140] : memref<1x1024xf32, #tpu.memory_space<vmem>>, vector<1x1024xf32>
    %446 = vector.broadcast %445 : vector<1x1024xf32> to vector<8x1024xf32>
    %447 = arith.addf %444, %446 : vector<8x1024xf32>
    %cst_141 = arith.constant 0.000000e+00 : f32
    %448 = vector.broadcast %cst_141 : f32 to vector<8x1024xf32>
    %449 = arith.maximumf %447, %448 : vector<8x1024xf32>
    %450 = arith.truncf %449 : vector<8x1024xf32> to vector<8x1024xbf16>
    %c0_142 = arith.constant 0 : index
    %c0_143 = arith.constant 0 : index
    %451 = vector.load %arg6[%c0_142, %c0_143] : memref<1024x128xbf16, #tpu.memory_space<vmem>>, vector<1024x128xbf16>
    %cst_144 = arith.constant dense<0.000000e+00> : vector<8x128xf32>
    %452 = tpu.matmul %450, %451, %cst_144 {dimension_numbers = #tpu.dot_dimension_numbers<[1], [0], [0], [1], [0, 0, 1, 1], [], []>} : vector<8x1024xbf16>, vector<1024x128xbf16>, vector<8x128xf32> -> vector<8x128xf32>
    %c0_145 = arith.constant 0 : index
    %c0_146 = arith.constant 0 : index
    %453 = vector.load %arg7[%c0_145, %c0_146] : memref<1x128xf32, #tpu.memory_space<vmem>>, vector<1x128xf32>
    %454 = vector.broadcast %453 : vector<1x128xf32> to vector<8x128xf32>
    %455 = arith.addf %452, %454 : vector<8x128xf32>
    %c0_147 = arith.constant 0 : index
    %c0_148 = arith.constant 0 : index
    %456 = vector.load %arg8[%c0_147, %c0_148] : memref<8x128xf32, #tpu.memory_space<vmem>>, vector<8x128xf32>
    tpu.vector_store %arg8[%c0_147, %c0_148], %455 {strides = array<i32>} : memref<8x128xf32, #tpu.memory_space<vmem>>, vector<8x128xf32>,
    return
  }
  func.func @transform_0(%arg0: i32) -> (i32, i32, i32, i32) {
    %c0_i32 = arith.constant 0 : i32
    %c0_i32_0 = arith.constant 0 : i32
    %c0_i32_1 = arith.constant 0 : i32
    %c0_i32_2 = arith.constant 0 : i32
    return %arg0, %c0_i32, %c0_i32_0, %c0_i32_1 : i32, i32, i32, i32
  }
  func.func @transform_1(%arg0: i32) -> (i32, i32) {
    %c0_i32 = arith.constant 0 : i32
    %c0_i32_0 = arith.constant 0 : i32
    %c0_i32_1 = arith.constant 0 : i32
    return %c0_i32, %c0_i32_0 : i32, i32
  }
  func.func @transform_2(%arg0: i32) -> (i32, i32) {
    %c0_i32 = arith.constant 0 : i32
    %c0_i32_0 = arith.constant 0 : i32
    %c0_i32_1 = arith.constant 0 : i32
    return %c0_i32, %c0_i32_0 : i32, i32
  }
  func.func @transform_3(%arg0: i32) -> (i32, i32) {
    %c0_i32 = arith.constant 0 : i32
    %c0_i32_0 = arith.constant 0 : i32
    %c0_i32_1 = arith.constant 0 : i32
    return %c0_i32, %c0_i32_0 : i32, i32
  }
  func.func @transform_4(%arg0: i32) -> (i32, i32) {
    %c0_i32 = arith.constant 0 : i32
    %c0_i32_0 = arith.constant 0 : i32
    %c0_i32_1 = arith.constant 0 : i32
    return %c0_i32, %c0_i32_0 : i32, i32
  }
  func.func @transform_5(%arg0: i32) -> (i32, i32) {
    %c0_i32 = arith.constant 0 : i32
    %c0_i32_0 = arith.constant 0 : i32
    %c0_i32_1 = arith.constant 0 : i32
    return %c0_i32, %c0_i32_0 : i32, i32
  }
  func.func @transform_6(%arg0: i32) -> (i32, i32) {
    %c0_i32 = arith.constant 0 : i32
    %c0_i32_0 = arith.constant 0 : i32
    %c0_i32_1 = arith.constant 0 : i32
    return %c0_i32, %c0_i32_0 : i32, i32
  }
  func.func @transform_7(%arg0: i32) -> (i32, i32) {
    %c0_i32 = arith.constant 0 : i32
    %c0_i32_0 = arith.constant 0 : i32
    return %arg0, %c0_i32 : i32, i32
  }
}

</mosaic_0001>

<llo_original>
// kernel: inception_aux_forward.1
$region0: #{inception_aux_forward.1}
  #allocation0 [shape = 'u32[]', space=smem, size = 0x4, offset = 0x4, fixed_abs, tag = 'smem constant byte address 0x4 - core index']
  #allocation1 [shape = 'u32[144,128]{1,0:T(1,128)}', space=vmem, size = 0x12000, scoped, tag = 'internal scratch']
  #allocation2 [shape = 'bf16[8,2048]{1,0:T(8,128)(2,1)}', space=vmem, size = 0x8000, scoped, tag = 'scratch operand']
  %s0 = inlined_call_operand.vmem [shape: f32[8,14,14,16], index: 0, kind: input, shape index: {}]
  %s1 = inlined_call_operand.hbm [shape: bf16[16,128], index: 1, kind: input, shape index: {}]
  %s2 = inlined_call_operand.hbm [shape: f32[1,128], index: 2, kind: input, shape index: {}]
  %s3 = inlined_call_operand.hbm [shape: bf16[2048,1024], index: 3, kind: input, shape index: {}]
  %s4 = inlined_call_operand.hbm [shape: f32[1,1024], index: 4, kind: input, shape index: {}]
  %s5 = inlined_call_operand.hbm [shape: bf16[1024,128], index: 5, kind: input, shape index: {}]
  %s6 = inlined_call_operand.hbm [shape: f32[1,128], index: 6, kind: input, shape index: {}]
  %s7 = inlined_call_operand.vmem [shape: f32[8,128], index: 7, kind: output, shape index: {}]
  %s8 = sld [smem:[#allocation0]]
  $region62: #{inception_aux_forward.1} parent=0
    _
  %s10 = ssub.s32 1, %s8
  %s11 = scalar_select 0, %s10, %s8
  $region1: #{inception_aux_forward.1} parent=0
    #allocation3 [shape = 'u8[4096]{0}', space=vmem, size = 0x1000, scoped, tag = 'input window, operand 1, single buffered']
    #allocation4 [shape = 's32[1]{0}', space=sflag, size = 0x4, scoped, tag = 'scoped memory for inception_aux_forward.1']
    #allocation5 [shape = 'u8[512]{0}', space=vmem, size = 0x400, scoped, tag = 'input window, operand 2, single buffered']
    #allocation6 [shape = 's32[1]{0}', space=sflag, size = 0x4, scoped, tag = 'scoped memory for inception_aux_forward.1']
    #allocation7 [shape = 'u8[4194304]{0}', space=vmem, size = 0x400000, scoped, tag = 'input window, operand 3, single buffered']
    #allocation8 [shape = 'u8[4096]{0}', space=vmem, size = 0x1000, scoped, tag = 'input window, operand 4, single buffered']
    #allocation9 [shape = 's32[1]{0}', space=sflag, size = 0x4, scoped, tag = 'scoped memory for inception_aux_forward.1']
    #allocation10 [shape = 'u8[262144]{0}', space=vmem, size = 0x40000, scoped, tag = 'input window, operand 5, single buffered']
    #allocation11 [shape = 'u8[512]{0}', space=vmem, size = 0x400, scoped, tag = 'input window, operand 6, single buffered']
    #allocation12 [shape = 's32[1]{0}', space=sflag, size = 0x4, scoped, tag = 'scoped memory for inception_aux_forward.1']
    %12 = vsyncpa [#allocation4], 0
    %13 = vsyncpa [#allocation6], 0
    %14 = vsyncpa [#allocation9], 0
    %15 = vsyncpa [#allocation12], 0
    // Predicated region
    $region2: #{inception_aux_forward.1} parent=1 // pred_check
      _
    $region3: #{inception_aux_forward.1} parent=1 // pred_check_branch
      %17 = sbr.rel (0) target = $region5
    $region4: #{inception_aux_forward.1} parent=1 // pred_region
      _
    $region5: #{inception_aux_forward.1} parent=1 // pred_fallthru
      _
    // Predicated region
    $region6: #{inception_aux_forward.1} parent=1 // pred_check
      _
    $region7: #{inception_aux_forward.1} parent=1 // pred_check_branch
      %19 = sbr.rel (0) target = $region9
    $region8: #{inception_aux_forward.1} parent=1 // pred_region
      %s21 = ssub.s32 128, 128
      %22 = vsyncadd [#allocation4], %s21
      %s23 = sshll.u32 [#allocation3], 4
      %s24 = int_to_ptr.vmem [resolvable:$true] %s23
      %29 = dma.hbm_to_vmem [thread:$0]  %s1, 128, %s24, [#allocation4], 64, 64, 4
    $region9: #{inception_aux_forward.1} parent=1 // pred_fallthru
      _
    // Predicated region
    $region10: #{inception_aux_forward.1} parent=1 // pred_check
      _
    $region11: #{inception_aux_forward.1} parent=1 // pred_check_branch
      %31 = sbr.rel (0) target = $region13
    $region12: #{inception_aux_forward.1} parent=1 // pred_region
      %s33 = ssub.s32 16, 16
      %34 = vsyncadd [#allocation6], %s33
      %s36 = sshll.u32 [#allocation5], 4
      %s37 = int_to_ptr.vmem [resolvable:$true] %s36
      %39 = dma.hbm_to_vmem [thread:$0]  %s2, 16, %s37, [#allocation6]
    $region13: #{inception_aux_forward.1} parent=1 // pred_fallthru
      _
    // Predicated region
    $region14: #{inception_aux_forward.1} parent=1 // pred_check
      _
    $region15: #{inception_aux_forward.1} parent=1 // pred_check_branch
      %41 = sbr.rel (0) target = $region17
    $region16: #{inception_aux_forward.1} parent=1 // pred_region
      %s43 = ssub.s32 131072, 131072
      %44 = vsyncadd [#allocation6], %s43
      %s45 = sshll.u32 [#allocation7], 4
      %s46 = int_to_ptr.vmem [resolvable:$true] %s45
      %51 = dma.hbm_to_vmem [thread:$0]  %s3, 131072, %s46, [#allocation6], 512, 512, 32
    $region17: #{inception_aux_forward.1} parent=1 // pred_fallthru
      _
    // Predicated region
    $region18: #{inception_aux_forward.1} parent=1 // pred_check
      _
    $region19: #{inception_aux_forward.1} parent=1 // pred_check_branch
      %53 = sbr.rel (0) target = $region21
    $region20: #{inception_aux_forward.1} parent=1 // pred_region
      %s55 = ssub.s32 128, 128
      %56 = vsyncadd [#allocation9], %s55
      %s58 = sshll.u32 [#allocation8], 4
      %s59 = int_to_ptr.vmem [resolvable:$true] %s58
      %61 = dma.hbm_to_vmem [thread:$0]  %s4, 128, %s59, [#allocation9]
    $region21: #{inception_aux_forward.1} parent=1 // pred_fallthru
      _
    // Predicated region
    $region22: #{inception_aux_forward.1} parent=1 // pred_check
      _
    $region23: #{inception_aux_forward.1} parent=1 // pred_check_branch
      %63 = sbr.rel (0) target = $region25
    $region24: #{inception_aux_forward.1} parent=1 // pred_region
      %s65 = ssub.s32 8192, 8192
      %66 = vsyncadd [#allocation9], %s65
      %s67 = sshll.u32 [#allocation10], 4
      %s68 = int_to_ptr.vmem [resolvable:$true] %s67
      %73 = dma.hbm_to_vmem [thread:$0]  %s5, 8192, %s68, [#allocation9], 64, 64, 4
    $region25: #{inception_aux_forward.1} parent=1 // pred_fallthru
      _
    // Predicated region
    $region26: #{inception_aux_forward.1} parent=1 // pred_check
      _
    $region27: #{inception_aux_forward.1} parent=1 // pred_check_branch
      %75 = sbr.rel (0) target = $region29
    $region28: #{inception_aux_forward.1} parent=1 // pred_region
      %s77 = ssub.s32 16, 16
      %78 = vsyncadd [#allocation12], %s77
      %s80 = sshll.u32 [#allocation11], 4
      %s81 = int_to_ptr.vmem [resolvable:$true] %s80
      %83 = dma.hbm_to_vmem [thread:$0]  %s6, 16, %s81, [#allocation12]
    $region29: #{inception_aux_forward.1} parent=1 // pred_fallthru
      _
    // Predicated region
    $region30: #{inception_aux_forward.1} parent=1 // pred_check
      _
    $region31: #{inception_aux_forward.1} parent=1 // pred_check_branch
      %85 = sbr.rel (0) target = $region33
    $region32: #{inception_aux_forward.1} parent=1 // pred_region
      %86 = dma.done [#allocation4], 128
    $region33: #{inception_aux_forward.1} parent=1 // pred_fallthru
      _
    // Predicated region
    $region34: #{inception_aux_forward.1} parent=1 // pred_check
      _
    $region35: #{inception_aux_forward.1} parent=1 // pred_check_branch
      %88 = sbr.rel (0) target = $region37
    $region36: #{inception_aux_forward.1} parent=1 // pred_region
      %89 = dma.done [#allocation6], 16
    $region37: #{inception_aux_forward.1} parent=1 // pred_fallthru
      _
    // Predicated region
    $region38: #{inception_aux_forward.1} parent=1 // pred_check
      _
    $region39: #{inception_aux_forward.1} parent=1 // pred_check_branch
      %91 = sbr.rel (0) target = $region41
    $region40: #{inception_aux_forward.1} parent=1 // pred_region
      %92 = dma.done [#allocation6], 131072
    $region41: #{inception_aux_forward.1} parent=1 // pred_fallthru
      _
    // Predicated region
    $region42: #{inception_aux_forward.1} parent=1 // pred_check
      _
    $region43: #{inception_aux_forward.1} parent=1 // pred_check_branch
      %94 = sbr.rel (0) target = $region45
    $region44: #{inception_aux_forward.1} parent=1 // pred_region
      %95 = dma.done [#allocation9], 128
    $region45: #{inception_aux_forward.1} parent=1 // pred_fallthru
      _
    // Predicated region
    $region46: #{inception_aux_forward.1} parent=1 // pred_check
      _
    $region47: #{inception_aux_forward.1} parent=1 // pred_check_branch
      %97 = sbr.rel (0) target = $region49
    $region48: #{inception_aux_forward.1} parent=1 // pred_region
      %98 = dma.done [#allocation9], 8192
    $region49: #{inception_aux_forward.1} parent=1 // pred_fallthru
      _
    // Predicated region
    $region50: #{inception_aux_forward.1} parent=1 // pred_check
      _
    $region51: #{inception_aux_forward.1} parent=1 // pred_check_branch
      %100 = sbr.rel (0) target = $region53
    $region52: #{inception_aux_forward.1} parent=1 // pred_region
      %101 = dma.done [#allocation12], 16
    $region53: #{inception_aux_forward.1} parent=1 // pred_fallthru
      _
    %v103 = vld [vmem:[#allocation3] sm:$0xf]
    %v104 = vld [vmem:[#allocation3 + $0x4] sm:$0xf]
    %v105 = vld [vmem:[#allocation5] sm:$0x1]
    %v106 = vld [vmem:[%s0] sm:$0xff]
    %v107 = vld [vmem:[%s0 + $0x8] sm:$0x3f]
    %v108 = vld [vmem:[%s0 + $0xe0] sm:$0xff]
    %v109 = vld [vmem:[%s0 + $0xe8] sm:$0x3f]
    %v110 = vld [vmem:[%s0 + $0x1c0] sm:$0xff]
    %v111 = vld [vmem:[%s0 + $0x1c8] sm:$0x3f]
    %v112 = vld [vmem:[%s0 + $0x2a0] sm:$0xff]
    %v113 = vld [vmem:[%s0 + $0x2a8] sm:$0x3f]
    %v114 = vld [vmem:[%s0 + $0x380] sm:$0xff]
    %v115 = vld [vmem:[%s0 + $0x388] sm:$0x3f]
    %v116 = vld [vmem:[%s0 + $0x460] sm:$0xff]
    %v117 = vld [vmem:[%s0 + $0x468] sm:$0x3f]
    %v118 = vld [vmem:[%s0 + $0x540] sm:$0xff]
    %v119 = vld [vmem:[%s0 + $0x548] sm:$0x3f]
    %v120 = vld [vmem:[%s0 + $0x620] sm:$0xff]
    %v121 = vld [vmem:[%s0 + $0x628] sm:$0x3f]
    %s122 = scalar_lea.vmem %s0, 16
    %v123 = vld [vmem:[%s122] sm:$0xff]
    %v124 = vld [vmem:[%s122 + $0x8] sm:$0x3f]
    %v125 = vld [vmem:[%s122 + $0xe0] sm:$0xff]
    %v126 = vld [vmem:[%s122 + $0xe8] sm:$0x3f]
    %v127 = vld [vmem:[%s122 + $0x1c0] sm:$0xff]
    %v128 = vld [vmem:[%s122 + $0x1c8] sm:$0x3f]
    %v129 = vld [vmem:[%s122 + $0x2a0] sm:$0xff]
    %v130 = vld [vmem:[%s122 + $0x2a8] sm:$0x3f]
    %v131 = vld [vmem:[%s122 + $0x380] sm:$0xff]
    %v132 = vld [vmem:[%s122 + $0x388] sm:$0x3f]
    %v133 = vld [vmem:[%s122 + $0x460] sm:$0xff]
    %v134 = vld [vmem:[%s122 + $0x468] sm:$0x3f]
    %v135 = vld [vmem:[%s122 + $0x540] sm:$0xff]
    %v136 = vld [vmem:[%s122 + $0x548] sm:$0x3f]
    %v137 = vld [vmem:[%s122 + $0x620] sm:$0xff]
    %v138 = vld [vmem:[%s122 + $0x628] sm:$0x3f]
    %v139 = vadd.f32 %v106, %v123
    %v140 = vadd.f32 %v107, %v124
    %v141 = vadd.f32 %v108, %v125
    %v142 = vadd.f32 %v109, %v126
    %v143 = vadd.f32 %v110, %v127
    %v144 = vadd.f32 %v111, %v128
    %v145 = vadd.f32 %v112, %v129
    %v146 = vadd.f32 %v113, %v130
    %v147 = vadd.f32 %v114, %v131
    %v148 = vadd.f32 %v115, %v132
    %v149 = vadd.f32 %v116, %v133
    %v150 = vadd.f32 %v117, %v134
    %v151 = vadd.f32 %v118, %v135
    %v152 = vadd.f32 %v119, %v136
    %v153 = vadd.f32 %v120, %v137
    %v154 = vadd.f32 %v121, %v138
    %s155 = scalar_lea.vmem %s0, 32
    %v156 = vld [vmem:[%s155] sm:$0xff]
    %v157 = vld [vmem:[%s155 + $0x8] sm:$0x3f]
    %v158 = vld [vmem:[%s155 + $0xe0] sm:$0xff]
    %v159 = vld [vmem:[%s155 + $0xe8] sm:$0x3f]
    %v160 = vld [vmem:[%s155 + $0x1c0] sm:$0xff]
    %v161 = vld [vmem:[%s155 + $0x1c8] sm:$0x3f]
    %v162 = vld [vmem:[%s155 + $0x2a0] sm:$0xff]
    %v163 = vld [vmem:[%s155 + $0x2a8] sm:$0x3f]
    %v164 = vld [vmem:[%s155 + $0x380] sm:$0xff]
    %v165 = vld [vmem:[%s155 + $0x388] sm:$0x3f]
    %v166 = vld [vmem:[%s155 + $0x460] sm:$0xff]
    %v167 = vld [vmem:[%s155 + $0x468] sm:$0x3f]
    %v168 = vld [vmem:[%s155 + $0x540] sm:$0xff]
    %v169 = vld [vmem:[%s155 + $0x548] sm:$0x3f]
    %v170 = vld [vmem:[%s155 + $0x620] sm:$0xff]
    %v171 = vld [vmem:[%s155 + $0x628] sm:$0x3f]
    %v172 = vadd.f32 %v139, %v156
    %v173 = vadd.f32 %v140, %v157
    %v174 = vadd.f32 %v141, %v158
    %v175 = vadd.f32 %v142, %v159
    %v176 = vadd.f32 %v143, %v160
    %v177 = vadd.f32 %v144, %v161
    %v178 = vadd.f32 %v145, %v162
    %v179 = vadd.f32 %v146, %v163
    %v180 = vadd.f32 %v147, %v164
    %v181 = vadd.f32 %v148, %v165
    %v182 = vadd.f32 %v149, %v166
    %v183 = vadd.f32 %v150, %v167
    %v184 = vadd.f32 %v151, %v168
    %v185 = vadd.f32 %v152, %v169
    %v186 = vadd.f32 %v153, %v170
    %v187 = vadd.f32 %v154, %v171
    %s188 = scalar_lea.vmem %s0, 48
    %v189 = vld [vmem:[%s188] sm:$0xff]
    %v190 = vld [vmem:[%s188 + $0x8] sm:$0x3f]
    %v191 = vld [vmem:[%s188 + $0xe0] sm:$0xff]
    %v192 = vld [vmem:[%s188 + $0xe8] sm:$0x3f]
    %v193 = vld [vmem:[%s188 + $0x1c0] sm:$0xff]
    %v194 = vld [vmem:[%s188 + $0x1c8] sm:$0x3f]
    %v195 = vld [vmem:[%s188 + $0x2a0] sm:$0xff]
    %v196 = vld [vmem:[%s188 + $0x2a8] sm:$0x3f]
    %v197 = vld [vmem:[%s188 + $0x380] sm:$0xff]
    %v198 = vld [vmem:[%s188 + $0x388] sm:$0x3f]
    %v199 = vld [vmem:[%s188 + $0x460] sm:$0xff]
    %v200 = vld [vmem:[%s188 + $0x468] sm:$0x3f]
    %v201 = vld [vmem:[%s188 + $0x540] sm:$0xff]
    %v202 = vld [vmem:[%s188 + $0x548] sm:$0x3f]
    %v203 = vld [vmem:[%s188 + $0x620] sm:$0xff]
    %v204 = vld [vmem:[%s188 + $0x628] sm:$0x3f]
    %v205 = vadd.f32 %v172, %v189
    %v206 = vadd.f32 %v173, %v190
    %v207 = vadd.f32 %v174, %v191
    %v208 = vadd.f32 %v175, %v192
    %v209 = vadd.f32 %v176, %v193
    %v210 = vadd.f32 %v177, %v194
    %v211 = vadd.f32 %v178, %v195
    %v212 = vadd.f32 %v179, %v196
    %v213 = vadd.f32 %v180, %v197
    %v214 = vadd.f32 %v181, %v198
    %v215 = vadd.f32 %v182, %v199
    %v216 = vadd.f32 %v183, %v200
    %v217 = vadd.f32 %v184, %v201
    %v218 = vadd.f32 %v185, %v202
    %v219 = vadd.f32 %v186, %v203
    %v220 = vadd.f32 %v187, %v204
    %s221 = scalar_lea.vmem %s0, 64
    %v222 = vld [vmem:[%s221] sm:$0xff]
    %v223 = vld [vmem:[%s221 + $0x8] sm:$0x3f]
    %v224 = vld [vmem:[%s221 + $0xe0] sm:$0xff]
    %v225 = vld [vmem:[%s221 + $0xe8] sm:$0x3f]
    %v226 = vld [vmem:[%s221 + $0x1c0] sm:$0xff]
    %v227 = vld [vmem:[%s221 + $0x1c8] sm:$0x3f]
    %v228 = vld [vmem:[%s221 + $0x2a0] sm:$0xff]
    %v229 = vld [vmem:[%s221 + $0x2a8] sm:$0x3f]
    %v230 = vld [vmem:[%s221 + $0x380] sm:$0xff]
    %v231 = vld [vmem:[%s221 + $0x388] sm:$0x3f]
    %v232 = vld [vmem:[%s221 + $0x460] sm:$0xff]
    %v233 = vld [vmem:[%s221 + $0x468] sm:$0x3f]
    %v234 = vld [vmem:[%s221 + $0x540] sm:$0xff]
    %v235 = vld [vmem:[%s221 + $0x548] sm:$0x3f]
    %v236 = vld [vmem:[%s221 + $0x620] sm:$0xff]
    %v237 = vld [vmem:[%s221 + $0x628] sm:$0x3f]
    %v238 = vadd.f32 %v205, %v222
    %v239 = vadd.f32 %v206, %v223
    %v240 = vadd.f32 %v207, %v224
    %v241 = vadd.f32 %v208, %v225
    %v242 = vadd.f32 %v209, %v226
    %v243 = vadd.f32 %v210, %v227
    %v244 = vadd.f32 %v211, %v228
    %v245 = vadd.f32 %v212, %v229
    %v246 = vadd.f32 %v213, %v230
    %v247 = vadd.f32 %v214, %v231
    %v248 = vadd.f32 %v215, %v232
    %v249 = vadd.f32 %v216, %v233
    %v250 = vadd.f32 %v217, %v234
    %v251 = vadd.f32 %v218, %v235
    %v252 = vadd.f32 %v219, %v236
    %v253 = vadd.f32 %v220, %v237
    %v262 = vrot.slane %v238, 1
    %v263 = vrot.slane %v240, 1
    %v264 = vrot.slane %v242, 1
    %v265 = vrot.slane %v244, 1
    %v266 = vrot.slane %v246, 1
    %v267 = vrot.slane %v248, 1
    %v268 = vrot.slane %v250, 1
    %v269 = vrot.slane %v252, 1
    %v278 = vadd.f32 %v238, %v262
    %v279 = vadd.f32 %v240, %v263
    %v280 = vadd.f32 %v242, %v264
    %v281 = vadd.f32 %v244, %v265
    %v282 = vadd.f32 %v246, %v266
    %v283 = vadd.f32 %v248, %v267
    %v284 = vadd.f32 %v250, %v268
    %v285 = vadd.f32 %v252, %v269
    %v286 = vrot.slane %v238, 2
    %v287 = vrot.slane %v240, 2
    %v288 = vrot.slane %v242, 2
    %v289 = vrot.slane %v244, 2
    %v290 = vrot.slane %v246, 2
    %v291 = vrot.slane %v248, 2
    %v292 = vrot.slane %v250, 2
    %v293 = vrot.slane %v252, 2
    %v302 = vadd.f32 %v278, %v286
    %v303 = vadd.f32 %v279, %v287
    %v304 = vadd.f32 %v280, %v288
    %v305 = vadd.f32 %v281, %v289
    %v306 = vadd.f32 %v282, %v290
    %v307 = vadd.f32 %v283, %v291
    %v308 = vadd.f32 %v284, %v292
    %v309 = vadd.f32 %v285, %v293
    %v310 = vrot.slane %v238, 3
    %v311 = vrot.slane %v240, 3
    %v312 = vrot.slane %v242, 3
    %v313 = vrot.slane %v244, 3
    %v314 = vrot.slane %v246, 3
    %v315 = vrot.slane %v248, 3
    %v316 = vrot.slane %v250, 3
    %v317 = vrot.slane %v252, 3
    %v326 = vadd.f32 %v302, %v310
    %v327 = vadd.f32 %v303, %v311
    %v328 = vadd.f32 %v304, %v312
    %v329 = vadd.f32 %v305, %v313
    %v330 = vadd.f32 %v306, %v314
    %v331 = vadd.f32 %v307, %v315
    %v332 = vadd.f32 %v308, %v316
    %v333 = vadd.f32 %v309, %v317
    %v334 = vrot.slane %v238, 4
    %v335 = vrot.slane %v240, 4
    %v336 = vrot.slane %v242, 4
    %v337 = vrot.slane %v244, 4
    %v338 = vrot.slane %v246, 4
    %v339 = vrot.slane %v248, 4
    %v340 = vrot.slane %v250, 4
    %v341 = vrot.slane %v252, 4
    %v350 = vadd.f32 %v326, %v334
    %v351 = vadd.f32 %v327, %v335
    %v352 = vadd.f32 %v328, %v336
    %v353 = vadd.f32 %v329, %v337
    %v354 = vadd.f32 %v330, %v338
    %v355 = vadd.f32 %v331, %v339
    %v356 = vadd.f32 %v332, %v340
    %v357 = vadd.f32 %v333, %v341
    %v358 = vmul.f32 %v350, 0.04
    %v359 = vmul.f32 %v351, 0.04
    %v360 = vmul.f32 %v352, 0.04
    %v361 = vmul.f32 %v353, 0.04
    %v362 = vmul.f32 %v354, 0.04
    %v363 = vmul.f32 %v355, 0.04
    %v364 = vmul.f32 %v356, 0.04
    %v365 = vmul.f32 %v357, 0.04
    %v366 = vpack.c.bf16 %v358, %v358
    %v367 = vpack.c.bf16 %v359, %v359
    %v368 = vpack.c.bf16 %v360, %v360
    %v369 = vpack.c.bf16 %v361, %v361
    %v370 = vpack.c.bf16 %v362, %v362
    %v371 = vpack.c.bf16 %v363, %v363
    %v372 = vpack.c.bf16 %v364, %v364
    %v373 = vpack.c.bf16 %v365, %v365
    %v375 = vlaneseq
    %v376 = vshrl.u32 %v375, 7
    %v377 = vsub.s32 0, %v376
    %v378 = vrot.slane %v105, %v377
    %v388 = vunpack.c.l.b16 %v366
    %v389 = vunpack.c.l.b16 %v367
    %v390 = vunpack.c.l.b16 %v368
    %v391 = vunpack.c.l.b16 %v369
    %v392 = vunpack.c.l.b16 %v370
    %v393 = vunpack.c.l.b16 %v371
    %v394 = vunpack.c.l.b16 %v372
    %v395 = vunpack.c.l.b16 %v373
    %v396 = vrot.slane %v389, 7
    %vm397 = vcmask 1041409
    %v398 = vsel %vm397, %v396, %v388
    %v399 = vrot.slane %v390, 6
    %vm400 = vcmask 1042434
    %v401 = vsel %vm400, %v399, %v398
    %v402 = vrot.slane %v391, 5
    %vm403 = vcmask 1043459
    %v404 = vsel %vm403, %v402, %v401
    %v405 = vrot.slane %v392, 4
    %vm406 = vcmask 1044484
    %v407 = vsel %vm406, %v405, %v404
    %v408 = vrot.slane %v393, 3
    %vm409 = vcmask 1045509
    %v410 = vsel %vm409, %v408, %v407
    %v411 = vrot.slane %v394, 2
    %vm412 = vcmask 1046534
    %v413 = vsel %vm412, %v411, %v410
    %v414 = vrot.slane %v395, 1
    %vm415 = vcmask 1047559
    %v416 = vsel %vm415, %v414, %v413
    %v417 = vpack.c.b16 %v416, %v416
    %v420 = vunpack.c.l.b16 %v103
    %v421 = vunpack.c.l.b16 %v104
    %v422 = vpack.c.b16 %v421, %v420
    %vm424 = vcmask 130048
    %v426 = vsel %vm424, %v417, 0
    %428 = vmatprep.subr.bf16.mxu0 0
    %429 = vmatpush1.bf16.msra.mxu0 0
    %430 = vmatprep.subr.bf16.mxu0 0
    %431 = vmatpush1.bf16.msra.mxu0 0
    %432 = vmatprep.subr.bf16.mxu0 0
    %433 = vmatpush1.bf16.msra.mxu0 0
    %434 = vmatprep.subr.bf16.mxu0 0
    %435 = vmatpush1.bf16.msra.mxu0 0
    %436 = vmatprep.subr.bf16.mxu0 0
    %437 = vmatpush1.bf16.msra.mxu0 0
    %438 = vmatprep.subr.bf16.mxu0 0
    %439 = vmatpush1.bf16.msra.mxu0 0
    %440 = vmatprep.subr.bf16.mxu0 0
    %441 = vmatpush1.bf16.msra.mxu0 0
    %442 = vmatprep.subr.bf16.mxu0 0
    %443 = vmatpush1.bf16.msra.mxu0 %v422
    %444 = vmatprep.subr.bf16.mxu0 0
    %445 = vmatpush2.bf16.msra.mxu0 0
    %446 = vmatprep.subr.bf16.mxu0 0
    %447 = vmatpush2.bf16.msra.mxu0 0
    %448 = vmatprep.subr.bf16.mxu0 0
    %449 = vmatpush2.bf16.msra.mxu0 0
    %450 = vmatprep.subr.bf16.mxu0 0
    %451 = vmatpush2.bf16.msra.mxu0 0
    %452 = vmatprep.subr.bf16.mxu0 0
    %453 = vmatpush2.bf16.msra.mxu0 0
    %454 = vmatprep.subr.bf16.mxu0 0
    %455 = vmatpush2.bf16.msra.mxu0 0
    %456 = vmatprep.subr.bf16.mxu0 0
    %457 = vmatpush2.bf16.msra.mxu0 0
    %458 = vmatprep.subr.bf16.mxu0 0
    %459 = vmatpush2.bf16.msra.mxu0 0
    %460 = vmatprep.mubr.bf16.mxu0 0
    %461 = vmatmul.mubr.bf16.gmra.mxu0 %v426
    %v462 = vpop.f32.mrf.mxu0
    %v463 = vadd.f32 %v378, %v462
    %v464 = vpop.f32.mrf.mxu0
    %v465 = vpop.f32.mrf.mxu0
    %v466 = vpop.f32.mrf.mxu0
    %467 = vdwg.mxu0
    %v468 = vmax.f32 %v463, 0.0
    %v469 = vpack.c.bf16 %v468, %v468
    %470 = vst [vmem:[#allocation2] sm:$0xf] %v469
    %v471 = vrot.slane %v388, 3
    %v472 = vrot.slane %v389, 2
    %v473 = vsel %vm397, %v472, %v471
    %v474 = vrot.slane %v390, 1
    %v475 = vsel %vm400, %v474, %v473
    %v476 = vsel %vm403, %v391, %v475
    %v477 = vrot.slane %v392, 7
    %v478 = vsel %vm406, %v477, %v476
    %v479 = vrot.slane %v393, 6
    %v480 = vsel %vm409, %v479, %v478
    %v481 = vrot.slane %v394, 5
    %v482 = vsel %vm412, %v481, %v480
    %v483 = vrot.slane %v395, 4
    %v484 = vsel %vm415, %v483, %v482
    %v485 = vpack.c.b16 %v484, %v484
    %v487 = vsel %vm424, %v485, 0
    %489 = vmatprep.subr.bf16.mxu0 0
    %490 = vmatpush1.bf16.msra.mxu0 0
    %491 = vmatprep.subr.bf16.mxu0 0
    %492 = vmatpush1.bf16.msra.mxu0 0
    %493 = vmatprep.subr.bf16.mxu0 0
    %494 = vmatpush1.bf16.msra.mxu0 0
    %495 = vmatprep.subr.bf16.mxu0 0
    %496 = vmatpush1.bf16.msra.mxu0 0
    %497 = vmatprep.subr.bf16.mxu0 0
    %498 = vmatpush1.bf16.msra.mxu0 0
    %499 = vmatprep.subr.bf16.mxu0 0
    %500 = vmatpush1.bf16.msra.mxu0 0
    %501 = vmatprep.subr.bf16.mxu0 0
    %502 = vmatpush1.bf16.msra.mxu0 0
    %503 = vmatprep.subr.bf16.mxu0 0
    %504 = vmatpush1.bf16.msra.mxu0 %v422
    %505 = vmatprep.subr.bf16.mxu0 0
    %506 = vmatpush2.bf16.msra.mxu0 0
    %507 = vmatprep.subr.bf16.mxu0 0
    %508 = vmatpush2.bf16.msra.mxu0 0
    %509 = vmatprep.subr.bf16.mxu0 0
    %510 = vmatpush2.bf16.msra.mxu0 0
    %511 = vmatprep.subr.bf16.mxu0 0
    %512 = vmatpush2.bf16.msra.mxu0 0
    %513 = vmatprep.subr.bf16.mxu0 0
    %514 = vmatpush2.bf16.msra.mxu0 0
    %515 = vmatprep.subr.bf16.mxu0 0
    %516 = vmatpush2.bf16.msra.mxu0 0
    %517 = vmatprep.subr.bf16.mxu0 0
    %518 = vmatpush2.bf16.msra.mxu0 0
    %519 = vmatprep.subr.bf16.mxu0 0
    %520 = vmatpush2.bf16.msra.mxu0 0
    %521 = vmatprep.mubr.bf16.mxu0 0
    %522 = vmatmul.mubr.bf16.gmra.mxu0 %v487
    %v523 = vpop.f32.mrf.mxu0
    %v524 = vadd.f32 %v378, %v523
    %v525 = vpop.f32.mrf.mxu0
    %v526 = vpop.f32.mrf.mxu0
    %v527 = vpop.f32.mrf.mxu0
    %528 = vdwg.mxu0
    %v529 = vmax.f32 %v524, 0.0
    %v530 = vpack.c.bf16 %v529, %v529
    %531 = vst [vmem:[#allocation2 + $0x4] sm:$0xf] %v530
    %v540 = vrot.slane %v239, 2
    %v541 = vrot.slane %v241, 2
    %v542 = vrot.slane %v243, 2
    %v543 = vrot.slane %v245, 2
    %v544 = vrot.slane %v247, 2
    %v545 = vrot.slane %v249, 2
    %v546 = vrot.slane %v251, 2
    %v547 = vrot.slane %v253, 2
    %v556 = vadd.f32 %v278, %v540
    %v557 = vadd.f32 %v279, %v541
    %v558 = vadd.f32 %v280, %v542
    %v559 = vadd.f32 %v281, %v543
    %v560 = vadd.f32 %v282, %v544
    %v561 = vadd.f32 %v283, %v545
    %v562 = vadd.f32 %v284, %v546
    %v563 = vadd.f32 %v285, %v547
    %v564 = vrot.slane %v239, 3
    %v565 = vrot.slane %v241, 3
    %v566 = vrot.slane %v243, 3
    %v567 = vrot.slane %v245, 3
    %v568 = vrot.slane %v247, 3
    %v569 = vrot.slane %v249, 3
    %v570 = vrot.slane %v251, 3
    %v571 = vrot.slane %v253, 3
    %v580 = vadd.f32 %v556, %v564
    %v581 = vadd.f32 %v557, %v565
    %v582 = vadd.f32 %v558, %v566
    %v583 = vadd.f32 %v559, %v567
    %v584 = vadd.f32 %v560, %v568
    %v585 = vadd.f32 %v561, %v569
    %v586 = vadd.f32 %v562, %v570
    %v587 = vadd.f32 %v563, %v571
    %v588 = vrot.slane %v239, 4
    %v589 = vrot.slane %v241, 4
    %v590 = vrot.slane %v243, 4
    %v591 = vrot.slane %v245, 4
    %v592 = vrot.slane %v247, 4
    %v593 = vrot.slane %v249, 4
    %v594 = vrot.slane %v251, 4
    %v595 = vrot.slane %v253, 4
    %v604 = vadd.f32 %v580, %v588
    %v605 = vadd.f32 %v581, %v589
    %v606 = vadd.f32 %v582, %v590
    %v607 = vadd.f32 %v583, %v591
    %v608 = vadd.f32 %v584, %v592
    %v609 = vadd.f32 %v585, %v593
    %v610 = vadd.f32 %v586, %v594
    %v611 = vadd.f32 %v587, %v595
    %v612 = vmul.f32 %v604, 0.04
    %v613 = vmul.f32 %v605, 0.04
    %v614 = vmul.f32 %v606, 0.04
    %v615 = vmul.f32 %v607, 0.04
    %v616 = vmul.f32 %v608, 0.04
    %v617 = vmul.f32 %v609, 0.04
    %v618 = vmul.f32 %v610, 0.04
    %v619 = vmul.f32 %v611, 0.04
    %v620 = vpack.c.bf16 %v612, %v612
    %v621 = vpack.c.bf16 %v613, %v613
    %v622 = vpack.c.bf16 %v614, %v614
    %v623 = vpack.c.bf16 %v615, %v615
    %v624 = vpack.c.bf16 %v616, %v616
    %v625 = vpack.c.bf16 %v617, %v617
    %v626 = vpack.c.bf16 %v618, %v618
    %v627 = vpack.c.bf16 %v619, %v619
    %v636 = vunpack.c.l.b16 %v620
    %v637 = vunpack.c.l.b16 %v621
    %v638 = vunpack.c.l.b16 %v622
    %v639 = vunpack.c.l.b16 %v623
    %v640 = vunpack.c.l.b16 %v624
    %v641 = vunpack.c.l.b16 %v625
    %v642 = vunpack.c.l.b16 %v626
    %v643 = vunpack.c.l.b16 %v627
    %v644 = vrot.slane %v636, 6
    %v645 = vrot.slane %v637, 5
    %v646 = vsel %vm397, %v645, %v644
    %v647 = vrot.slane %v638, 4
    %v648 = vsel %vm400, %v647, %v646
    %v649 = vrot.slane %v639, 3
    %v650 = vsel %vm403, %v649, %v648
    %v651 = vrot.slane %v640, 2
    %v652 = vsel %vm406, %v651, %v650
    %v653 = vrot.slane %v641, 1
    %v654 = vsel %vm409, %v653, %v652
    %v655 = vsel %vm412, %v642, %v654
    %v656 = vrot.slane %v643, 7
    %v657 = vsel %vm415, %v656, %v655
    %v658 = vpack.c.b16 %v657, %v657
    %v660 = vsel %vm424, %v658, 0
    %662 = vmatprep.subr.bf16.mxu0 0
    %663 = vmatpush1.bf16.msra.mxu0 0
    %664 = vmatprep.subr.bf16.mxu0 0
    %665 = vmatpush1.bf16.msra.mxu0 0
    %666 = vmatprep.subr.bf16.mxu0 0
    %667 = vmatpush1.bf16.msra.mxu0 0
    %668 = vmatprep.subr.bf16.mxu0 0
    %669 = vmatpush1.bf16.msra.mxu0 0
    %670 = vmatprep.subr.bf16.mxu0 0
    %671 = vmatpush1.bf16.msra.mxu0 0
    %672 = vmatprep.subr.bf16.mxu0 0
    %673 = vmatpush1.bf16.msra.mxu0 0
    %674 = vmatprep.subr.bf16.mxu0 0
    %675 = vmatpush1.bf16.msra.mxu0 0
    %676 = vmatprep.subr.bf16.mxu0 0
    %677 = vmatpush1.bf16.msra.mxu0 %v422
    %678 = vmatprep.subr.bf16.mxu0 0
    %679 = vmatpush2.bf16.msra.mxu0 0
    %680 = vmatprep.subr.bf16.mxu0 0
    %681 = vmatpush2.bf16.msra.mxu0 0
    %682 = vmatprep.subr.bf16.mxu0 0
    %683 = vmatpush2.bf16.msra.mxu0 0
    %684 = vmatprep.subr.bf16.mxu0 0
    %685 = vmatpush2.bf16.msra.mxu0 0
    %686 = vmatprep.subr.bf16.mxu0 0
    %687 = vmatpush2.bf16.msra.mxu0 0
    %688 = vmatprep.subr.bf16.mxu0 0
    %689 = vmatpush2.bf16.msra.mxu0 0
    %690 = vmatprep.subr.bf16.mxu0 0
    %691 = vmatpush2.bf16.msra.mxu0 0
    %692 = vmatprep.subr.bf16.mxu0 0
    %693 = vmatpush2.bf16.msra.mxu0 0
    %694 = vmatprep.mubr.bf16.mxu0 0
    %695 = vmatmul.mubr.bf16.gmra.mxu0 %v660
    %v696 = vpop.f32.mrf.mxu0
    %v697 = vadd.f32 %v378, %v696
    %v698 = vpop.f32.mrf.mxu0
    %v699 = vpop.f32.mrf.mxu0
    %v700 = vpop.f32.mrf.mxu0
    %701 = vdwg.mxu0
    %v702 = vmax.f32 %v697, 0.0
    %v703 = vpack.c.bf16 %v702, %v702
    %704 = vst [vmem:[#allocation2 + $0x8] sm:$0xf] %v703
    %v705 = vrot.slane %v239, 1
    %v706 = vrot.slane %v241, 1
    %v707 = vrot.slane %v243, 1
    %v708 = vrot.slane %v245, 1
    %v709 = vrot.slane %v247, 1
    %v710 = vrot.slane %v249, 1
    %v711 = vrot.slane %v251, 1
    %v712 = vrot.slane %v253, 1
    %v721 = vadd.f32 %v239, %v705
    %v722 = vadd.f32 %v241, %v706
    %v723 = vadd.f32 %v243, %v707
    %v724 = vadd.f32 %v245, %v708
    %v725 = vadd.f32 %v247, %v709
    %v726 = vadd.f32 %v249, %v710
    %v727 = vadd.f32 %v251, %v711
    %v728 = vadd.f32 %v253, %v712
    %v729 = vadd.f32 %v721, %v540
    %v730 = vadd.f32 %v722, %v541
    %v731 = vadd.f32 %v723, %v542
    %v732 = vadd.f32 %v724, %v543
    %v733 = vadd.f32 %v725, %v544
    %v734 = vadd.f32 %v726, %v545
    %v735 = vadd.f32 %v727, %v546
    %v736 = vadd.f32 %v728, %v547
    %v737 = vadd.f32 %v729, %v564
    %v738 = vadd.f32 %v730, %v565
    %v739 = vadd.f32 %v731, %v566
    %v740 = vadd.f32 %v732, %v567
    %v741 = vadd.f32 %v733, %v568
    %v742 = vadd.f32 %v734, %v569
    %v743 = vadd.f32 %v735, %v570
    %v744 = vadd.f32 %v736, %v571
    %v745 = vadd.f32 %v737, %v588
    %v746 = vadd.f32 %v738, %v589
    %v747 = vadd.f32 %v739, %v590
    %v748 = vadd.f32 %v740, %v591
    %v749 = vadd.f32 %v741, %v592
    %v750 = vadd.f32 %v742, %v593
    %v751 = vadd.f32 %v743, %v594
    %v752 = vadd.f32 %v744, %v595
    %v753 = vmul.f32 %v745, 0.04
    %v754 = vmul.f32 %v746, 0.04
    %v755 = vmul.f32 %v747, 0.04
    %v756 = vmul.f32 %v748, 0.04
    %v757 = vmul.f32 %v749, 0.04
    %v758 = vmul.f32 %v750, 0.04
    %v759 = vmul.f32 %v751, 0.04
    %v760 = vmul.f32 %v752, 0.04
    %v761 = vpack.c.bf16 %v753, %v753
    %v762 = vpack.c.bf16 %v754, %v754
    %v763 = vpack.c.bf16 %v755, %v755
    %v764 = vpack.c.bf16 %v756, %v756
    %v765 = vpack.c.bf16 %v757, %v757
    %v766 = vpack.c.bf16 %v758, %v758
    %v767 = vpack.c.bf16 %v759, %v759
    %v768 = vpack.c.bf16 %v760, %v760
    %v777 = vunpack.c.l.b16 %v761
    %v778 = vunpack.c.l.b16 %v762
    %v779 = vunpack.c.l.b16 %v763
    %v780 = vunpack.c.l.b16 %v764
    %v781 = vunpack.c.l.b16 %v765
    %v782 = vunpack.c.l.b16 %v766
    %v783 = vunpack.c.l.b16 %v767
    %v784 = vunpack.c.l.b16 %v768
    %v785 = vrot.slane %v777, 1
    %v786 = vsel %vm397, %v778, %v785
    %v787 = vrot.slane %v779, 7
    %v788 = vsel %vm400, %v787, %v786
    %v789 = vrot.slane %v780, 6
    %v790 = vsel %vm403, %v789, %v788
    %v791 = vrot.slane %v781, 5
    %v792 = vsel %vm406, %v791, %v790
    %v793 = vrot.slane %v782, 4
    %v794 = vsel %vm409, %v793, %v792
    %v795 = vrot.slane %v783, 3
    %v796 = vsel %vm412, %v795, %v794
    %v797 = vrot.slane %v784, 2
    %v798 = vsel %vm415, %v797, %v796
    %v799 = vpack.c.b16 %v798, %v798
    %v801 = vsel %vm424, %v799, 0
    %803 = vmatprep.subr.bf16.mxu0 0
    %804 = vmatpush1.bf16.msra.mxu0 0
    %805 = vmatprep.subr.bf16.mxu0 0
    %806 = vmatpush1.bf16.msra.mxu0 0
    %807 = vmatprep.subr.bf16.mxu0 0
    %808 = vmatpush1.bf16.msra.mxu0 0
    %809 = vmatprep.subr.bf16.mxu0 0
    %810 = vmatpush1.bf16.msra.mxu0 0
    %811 = vmatprep.subr.bf16.mxu0 0
    %812 = vmatpush1.bf16.msra.mxu0 0
    %813 = vmatprep.subr.bf16.mxu0 0
    %814 = vmatpush1.bf16.msra.mxu0 0
    %815 = vmatprep.subr.bf16.mxu0 0
    %816 = vmatpush1.bf16.msra.mxu0 0
    %817 = vmatprep.subr.bf16.mxu0 0
    %818 = vmatpush1.bf16.msra.mxu0 %v422
    %819 = vmatprep.subr.bf16.mxu0 0
    %820 = vmatpush2.bf16.msra.mxu0 0
    %821 = vmatprep.subr.bf16.mxu0 0
    %822 = vmatpush2.bf16.msra.mxu0 0
    %823 = vmatprep.subr.bf16.mxu0 0
    %824 = vmatpush2.bf16.msra.mxu0 0
    %825 = vmatprep.subr.bf16.mxu0 0
    %826 = vmatpush2.bf16.msra.mxu0 0
    %827 = vmatprep.subr.bf16.mxu0 0
    %828 = vmatpush2.bf16.msra.mxu0 0
    %829 = vmatprep.subr.bf16.mxu0 0
    %830 = vmatpush2.bf16.msra.mxu0 0
    %831 = vmatprep.subr.bf16.mxu0 0
    %832 = vmatpush2.bf16.msra.mxu0 0
    %833 = vmatprep.subr.bf16.mxu0 0
    %834 = vmatpush2.bf16.msra.mxu0 0
    %835 = vmatprep.mubr.bf16.mxu0 0
    %836 = vmatmul.mubr.bf16.gmra.mxu0 %v801
    %v837 = vpop.f32.mrf.mxu0
    %v838 = vadd.f32 %v378, %v837
    %v839 = vpop.f32.mrf.mxu0
    %v840 = vpop.f32.mrf.mxu0
    %v841 = vpop.f32.mrf.mxu0
    %842 = vdwg.mxu0
    %v843 = vmax.f32 %v838, 0.0
    %v844 = vpack.c.bf16 %v843, %v843
    %845 = vst [vmem:[#allocation2 + $0xc] sm:$0xf] %v844
    %v846 = vld [vmem:[%s188] sm:$0xff]
    %v847 = vld [vmem:[%s188 + $0x8] sm:$0x3f]
    %v848 = vld [vmem:[%s188 + $0xe0] sm:$0xff]
    %v849 = vld [vmem:[%s188 + $0xe8] sm:$0x3f]
    %v850 = vld [vmem:[%s188 + $0x1c0] sm:$0xff]
    %v851 = vld [vmem:[%s188 + $0x1c8] sm:$0x3f]
    %v852 = vld [vmem:[%s188 + $0x2a0] sm:$0xff]
    %v853 = vld [vmem:[%s188 + $0x2a8] sm:$0x3f]
    %v854 = vld [vmem:[%s188 + $0x380] sm:$0xff]
    %v855 = vld [vmem:[%s188 + $0x388] sm:$0x3f]
    %v856 = vld [vmem:[%s188 + $0x460] sm:$0xff]
    %v857 = vld [vmem:[%s188 + $0x468] sm:$0x3f]
    %v858 = vld [vmem:[%s188 + $0x540] sm:$0xff]
    %v859 = vld [vmem:[%s188 + $0x548] sm:$0x3f]
    %v860 = vld [vmem:[%s188 + $0x620] sm:$0xff]
    %v861 = vld [vmem:[%s188 + $0x628] sm:$0x3f]
    %v862 = vld [vmem:[%s221] sm:$0xff]
    %v863 = vld [vmem:[%s221 + $0x8] sm:$0x3f]
    %v864 = vld [vmem:[%s221 + $0xe0] sm:$0xff]
    %v865 = vld [vmem:[%s221 + $0xe8] sm:$0x3f]
    %v866 = vld [vmem:[%s221 + $0x1c0] sm:$0xff]
    %v867 = vld [vmem:[%s221 + $0x1c8] sm:$0x3f]
    %v868 = vld [vmem:[%s221 + $0x2a0] sm:$0xff]
    %v869 = vld [vmem:[%s221 + $0x2a8] sm:$0x3f]
    %v870 = vld [vmem:[%s221 + $0x380] sm:$0xff]
    %v871 = vld [vmem:[%s221 + $0x388] sm:$0x3f]
    %v872 = vld [vmem:[%s221 + $0x460] sm:$0xff]
    %v873 = vld [vmem:[%s221 + $0x468] sm:$0x3f]
    %v874 = vld [vmem:[%s221 + $0x540] sm:$0xff]
    %v875 = vld [vmem:[%s221 + $0x548] sm:$0x3f]
    %v876 = vld [vmem:[%s221 + $0x620] sm:$0xff]
    %v877 = vld [vmem:[%s221 + $0x628] sm:$0x3f]
    %v878 = vadd.f32 %v846, %v862
    %v879 = vadd.f32 %v847, %v863
    %v880 = vadd.f32 %v848, %v864
    %v881 = vadd.f32 %v849, %v865
    %v882 = vadd.f32 %v850, %v866
    %v883 = vadd.f32 %v851, %v867
    %v884 = vadd.f32 %v852, %v868
    %v885 = vadd.f32 %v853, %v869
    %v886 = vadd.f32 %v854, %v870
    %v887 = vadd.f32 %v855, %v871
    %v888 = vadd.f32 %v856, %v872
    %v889 = vadd.f32 %v857, %v873
    %v890 = vadd.f32 %v858, %v874
    %v891 = vadd.f32 %v859, %v875
    %v892 = vadd.f32 %v860, %v876
    %v893 = vadd.f32 %v861, %v877
    %s894 = scalar_lea.vmem %s0, 80
    %v895 = vld [vmem:[%s894] sm:$0xff]
    %v896 = vld [vmem:[%s894 + $0x8] sm:$0x3f]
    %v897 = vld [vmem:[%s894 + $0xe0] sm:$0xff]
    %v898 = vld [vmem:[%s894 + $0xe8] sm:$0x3f]
    %v899 = vld [vmem:[%s894 + $0x1c0] sm:$0xff]
    %v900 = vld [vmem:[%s894 + $0x1c8] sm:$0x3f]
    %v901 = vld [vmem:[%s894 + $0x2a0] sm:$0xff]
    %v902 = vld [vmem:[%s894 + $0x2a8] sm:$0x3f]
    %v903 = vld [vmem:[%s894 + $0x380] sm:$0xff]
    %v904 = vld [vmem:[%s894 + $0x388] sm:$0x3f]
    %v905 = vld [vmem:[%s894 + $0x460] sm:$0xff]
    %v906 = vld [vmem:[%s894 + $0x468] sm:$0x3f]
    %v907 = vld [vmem:[%s894 + $0x540] sm:$0xff]
    %v908 = vld [vmem:[%s894 + $0x548] sm:$0x3f]
    %v909 = vld [vmem:[%s894 + $0x620] sm:$0xff]
    %v910 = vld [vmem:[%s894 + $0x628] sm:$0x3f]
    %v911 = vadd.f32 %v878, %v895
    %v912 = vadd.f32 %v879, %v896
    %v913 = vadd.f32 %v880, %v897
    %v914 = vadd.f32 %v881, %v898
    %v915 = vadd.f32 %v882, %v899
    %v916 = vadd.f32 %v883, %v900
    %v917 = vadd.f32 %v884, %v901
    %v918 = vadd.f32 %v885, %v902
    %v919 = vadd.f32 %v886, %v903
    %v920 = vadd.f32 %v887, %v904
    %v921 = vadd.f32 %v888, %v905
    %v922 = vadd.f32 %v889, %v906
    %v923 = vadd.f32 %v890, %v907
    %v924 = vadd.f32 %v891, %v908
    %v925 = vadd.f32 %v892, %v909
    %v926 = vadd.f32 %v893, %v910
    %s927 = scalar_lea.vmem %s0, 96
    %v928 = vld [vmem:[%s927] sm:$0xff]
    %v929 = vld [vmem:[%s927 + $0x8] sm:$0x3f]
    %v930 = vld [vmem:[%s927 + $0xe0] sm:$0xff]
    %v931 = vld [vmem:[%s927 + $0xe8] sm:$0x3f]
    %v932 = vld [vmem:[%s927 + $0x1c0] sm:$0xff]
    %v933 = vld [vmem:[%s927 + $0x1c8] sm:$0x3f]
    %v934 = vld [vmem:[%s927 + $0x2a0] sm:$0xff]
    %v935 = vld [vmem:[%s927 + $0x2a8] sm:$0x3f]
    %v936 = vld [vmem:[%s927 + $0x380] sm:$0xff]
    %v937 = vld [vmem:[%s927 + $0x388] sm:$0x3f]
    %v938 = vld [vmem:[%s927 + $0x460] sm:$0xff]
    %v939 = vld [vmem:[%s927 + $0x468] sm:$0x3f]
    %v940 = vld [vmem:[%s927 + $0x540] sm:$0xff]
    %v941 = vld [vmem:[%s927 + $0x548] sm:$0x3f]
    %v942 = vld [vmem:[%s927 + $0x620] sm:$0xff]
    %v943 = vld [vmem:[%s927 + $0x628] sm:$0x3f]
    %v944 = vadd.f32 %v911, %v928
    %v945 = vadd.f32 %v912, %v929
    %v946 = vadd.f32 %v913, %v930
    %v947 = vadd.f32 %v914, %v931
    %v948 = vadd.f32 %v915, %v932
    %v949 = vadd.f32 %v916, %v933
    %v950 = vadd.f32 %v917, %v934
    %v951 = vadd.f32 %v918, %v935
    %v952 = vadd.f32 %v919, %v936
    %v953 = vadd.f32 %v920, %v937
    %v954 = vadd.f32 %v921, %v938
    %v955 = vadd.f32 %v922, %v939
    %v956 = vadd.f32 %v923, %v940
    %v957 = vadd.f32 %v924, %v941
    %v958 = vadd.f32 %v925, %v942
    %v959 = vadd.f32 %v926, %v943
    %s960 = scalar_lea.vmem %s0, 112
    %v961 = vld [vmem:[%s960] sm:$0xff]
    %v962 = vld [vmem:[%s960 + $0x8] sm:$0x3f]
    %v963 = vld [vmem:[%s960 + $0xe0] sm:$0xff]
    %v964 = vld [vmem:[%s960 + $0xe8] sm:$0x3f]
    %v965 = vld [vmem:[%s960 + $0x1c0] sm:$0xff]
    %v966 = vld [vmem:[%s960 + $0x1c8] sm:$0x3f]
    %v967 = vld [vmem:[%s960 + $0x2a0] sm:$0xff]
    %v968 = vld [vmem:[%s960 + $0x2a8] sm:$0x3f]
    %v969 = vld [vmem:[%s960 + $0x380] sm:$0xff]
    %v970 = vld [vmem:[%s960 + $0x388] sm:$0x3f]
    %v971 = vld [vmem:[%s960 + $0x460] sm:$0xff]
    %v972 = vld [vmem:[%s960 + $0x468] sm:$0x3f]
    %v973 = vld [vmem:[%s960 + $0x540] sm:$0xff]
    %v974 = vld [vmem:[%s960 + $0x548] sm:$0x3f]
    %v975 = vld [vmem:[%s960 + $0x620] sm:$0xff]
    %v976 = vld [vmem:[%s960 + $0x628] sm:$0x3f]
    %v977 = vadd.f32 %v944, %v961
    %v978 = vadd.f32 %v945, %v962
    %v979 = vadd.f32 %v946, %v963
    %v980 = vadd.f32 %v947, %v964
    %v981 = vadd.f32 %v948, %v965
    %v982 = vadd.f32 %v949, %v966
    %v983 = vadd.f32 %v950, %v967
    %v984 = vadd.f32 %v951, %v968
    %v985 = vadd.f32 %v952, %v969
    %v986 = vadd.f32 %v953, %v970
    %v987 = vadd.f32 %v954, %v971
    %v988 = vadd.f32 %v955, %v972
    %v989 = vadd.f32 %v956, %v973
    %v990 = vadd.f32 %v957, %v974
    %v991 = vadd.f32 %v958, %v975
    %v992 = vadd.f32 %v959, %v976
    %v1001 = vrot.slane %v977, 1
    %v1002 = vrot.slane %v979, 1
    %v1003 = vrot.slane %v981, 1
    %v1004 = vrot.slane %v983, 1
    %v1005 = vrot.slane %v985, 1
    %v1006 = vrot.slane %v987, 1
    %v1007 = vrot.slane %v989, 1
    %v1008 = vrot.slane %v991, 1
    %v1017 = vadd.f32 %v977, %v1001
    %v1018 = vadd.f32 %v979, %v1002
    %v1019 = vadd.f32 %v981, %v1003
    %v1020 = vadd.f32 %v983, %v1004
    %v1021 = vadd.f32 %v985, %v1005
    %v1022 = vadd.f32 %v987, %v1006
    %v1023 = vadd.f32 %v989, %v1007
    %v1024 = vadd.f32 %v991, %v1008
    %v1025 = vrot.slane %v977, 2
    %v1026 = vrot.slane %v979, 2
    %v1027 = vrot.slane %v981, 2
    %v1028 = vrot.slane %v983, 2
    %v1029 = vrot.slane %v985, 2
    %v1030 = vrot.slane %v987, 2
    %v1031 = vrot.slane %v989, 2
    %v1032 = vrot.slane %v991, 2
    %v1041 = vadd.f32 %v1017, %v1025
    %v1042 = vadd.f32 %v1018, %v1026
    %v1043 = vadd.f32 %v1019, %v1027
    %v1044 = vadd.f32 %v1020, %v1028
    %v1045 = vadd.f32 %v1021, %v1029
    %v1046 = vadd.f32 %v1022, %v1030
    %v1047 = vadd.f32 %v1023, %v1031
    %v1048 = vadd.f32 %v1024, %v1032
    %v1049 = vrot.slane %v977, 3
    %v1050 = vrot.slane %v979, 3
    %v1051 = vrot.slane %v981, 3
    %v1052 = vrot.slane %v983, 3
    %v1053 = vrot.slane %v985, 3
    %v1054 = vrot.slane %v987, 3
    %v1055 = vrot.slane %v989, 3
    %v1056 = vrot.slane %v991, 3
    %v1065 = vadd.f32 %v1041, %v1049
    %v1066 = vadd.f32 %v1042, %v1050
    %v1067 = vadd.f32 %v1043, %v1051
    %v1068 = vadd.f32 %v1044, %v1052
    %v1069 = vadd.f32 %v1045, %v1053
    %v1070 = vadd.f32 %v1046, %v1054
    %v1071 = vadd.f32 %v1047, %v1055
    %v1072 = vadd.f32 %v1048, %v1056
    %v1073 = vrot.slane %v977, 4
    %v1074 = vrot.slane %v979, 4
    %v1075 = vrot.slane %v981, 4
    %v1076 = vrot.slane %v983, 4
    %v1077 = vrot.slane %v985, 4
    %v1078 = vrot.slane %v987, 4
    %v1079 = vrot.slane %v989, 4
    %v1080 = vrot.slane %v991, 4
    %v1089 = vadd.f32 %v1065, %v1073
    %v1090 = vadd.f32 %v1066, %v1074
    %v1091 = vadd.f32 %v1067, %v1075
    %v1092 = vadd.f32 %v1068, %v1076
    %v1093 = vadd.f32 %v1069, %v1077
    %v1094 = vadd.f32 %v1070, %v1078
    %v1095 = vadd.f32 %v1071, %v1079
    %v1096 = vadd.f32 %v1072, %v1080
    %v1097 = vmul.f32 %v1089, 0.04
    %v1098 = vmul.f32 %v1090, 0.04
    %v1099 = vmul.f32 %v1091, 0.04
    %v1100 = vmul.f32 %v1092, 0.04
    %v1101 = vmul.f32 %v1093, 0.04
    %v1102 = vmul.f32 %v1094, 0.04
    %v1103 = vmul.f32 %v1095, 0.04
    %v1104 = vmul.f32 %v1096, 0.04
    %v1105 = vpack.c.bf16 %v1097, %v1097
    %v1106 = vpack.c.bf16 %v1098, %v1098
    %v1107 = vpack.c.bf16 %v1099, %v1099
    %v1108 = vpack.c.bf16 %v1100, %v1100
    %v1109 = vpack.c.bf16 %v1101, %v1101
    %v1110 = vpack.c.bf16 %v1102, %v1102
    %v1111 = vpack.c.bf16 %v1103, %v1103
    %v1112 = vpack.c.bf16 %v1104, %v1104
    %v1121 = vunpack.c.l.b16 %v1105
    %v1122 = vunpack.c.l.b16 %v1106
    %v1123 = vunpack.c.l.b16 %v1107
    %v1124 = vunpack.c.l.b16 %v1108
    %v1125 = vunpack.c.l.b16 %v1109
    %v1126 = vunpack.c.l.b16 %v1110
    %v1127 = vunpack.c.l.b16 %v1111
    %v1128 = vunpack.c.l.b16 %v1112
    %v1129 = vrot.slane %v1122, 7
    %v1130 = vsel %vm397, %v1129, %v1121
    %v1131 = vrot.slane %v1123, 6
    %v1132 = vsel %vm400, %v1131, %v1130
    %v1133 = vrot.slane %v1124, 5
    %v1134 = vsel %vm403, %v1133, %v1132
    %v1135 = vrot.slane %v1125, 4
    %v1136 = vsel %vm406, %v1135, %v1134
    %v1137 = vrot.slane %v1126, 3
    %v1138 = vsel %vm409, %v1137, %v1136
    %v1139 = vrot.slane %v1127, 2
    %v1140 = vsel %vm412, %v1139, %v1138
    %v1141 = vrot.slane %v1128, 1
    %v1142 = vsel %vm415, %v1141, %v1140
    %v1143 = vpack.c.b16 %v1142, %v1142
    %v1145 = vsel %vm424, %v1143, 0
    %1147 = vmatprep.subr.bf16.mxu0 0
    %1148 = vmatpush1.bf16.msra.mxu0 0
    %1149 = vmatprep.subr.bf16.mxu0 0
    %1150 = vmatpush1.bf16.msra.mxu0 0
    %1151 = vmatprep.subr.bf16.mxu0 0
    %1152 = vmatpush1.bf16.msra.mxu0 0
    %1153 = vmatprep.subr.bf16.mxu0 0
    %1154 = vmatpush1.bf16.msra.mxu0 0
    %1155 = vmatprep.subr.bf16.mxu0 0
    %1156 = vmatpush1.bf16.msra.mxu0 0
    %1157 = vmatprep.subr.bf16.mxu0 0
    %1158 = vmatpush1.bf16.msra.mxu0 0
    %1159 = vmatprep.subr.bf16.mxu0 0
    %1160 = vmatpush1.bf16.msra.mxu0 0
    %1161 = vmatprep.subr.bf16.mxu0 0
    %1162 = vmatpush1.bf16.msra.mxu0 %v422
    %1163 = vmatprep.subr.bf16.mxu0 0
    %1164 = vmatpush2.bf16.msra.mxu0 0
    %1165 = vmatprep.subr.bf16.mxu0 0
    %1166 = vmatpush2.bf16.msra.mxu0 0
    %1167 = vmatprep.subr.bf16.mxu0 0
    %1168 = vmatpush2.bf16.msra.mxu0 0
    %1169 = vmatprep.subr.bf16.mxu0 0
    %1170 = vmatpush2.bf16.msra.mxu0 0
    %1171 = vmatprep.subr.bf16.mxu0 0
    %1172 = vmatpush2.bf16.msra.mxu0 0
    %1173 = vmatprep.subr.bf16.mxu0 0
    %1174 = vmatpush2.bf16.msra.mxu0 0
    %1175 = vmatprep.subr.bf16.mxu0 0
    %1176 = vmatpush2.bf16.msra.mxu0 0
    %1177 = vmatprep.subr.bf16.mxu0 0
    %1178 = vmatpush2.bf16.msra.mxu0 0
    %1179 = vmatprep.mubr.bf16.mxu0 0
    %1180 = vmatmul.mubr.bf16.gmra.mxu0 %v1145
    %v1181 = vpop.f32.mrf.mxu0
    %v1182 = vadd.f32 %v378, %v1181
    %v1183 = vpop.f32.mrf.mxu0
    %v1184 = vpop.f32.mrf.mxu0
    %v1185 = vpop.f32.mrf.mxu0
    %1186 = vdwg.mxu0
    %v1187 = vmax.f32 %v1182, 0.0
    %v1188 = vpack.c.bf16 %v1187, %v1187
    %1189 = vst [vmem:[#allocation2 + $0x10] sm:$0xf] %v1188
    %v1190 = vrot.slane %v1121, 3
    %v1191 = vrot.slane %v1122, 2
    %v1192 = vsel %vm397, %v1191, %v1190
    %v1193 = vrot.slane %v1123, 1
    %v1194 = vsel %vm400, %v1193, %v1192
    %v1195 = vsel %vm403, %v1124, %v1194
    %v1196 = vrot.slane %v1125, 7
    %v1197 = vsel %vm406, %v1196, %v1195
    %v1198 = vrot.slane %v1126, 6
    %v1199 = vsel %vm409, %v1198, %v1197
    %v1200 = vrot.slane %v1127, 5
    %v1201 = vsel %vm412, %v1200, %v1199
    %v1202 = vrot.slane %v1128, 4
    %v1203 = vsel %vm415, %v1202, %v1201
    %v1204 = vpack.c.b16 %v1203, %v1203
    %v1206 = vsel %vm424, %v1204, 0
    %1208 = vmatprep.subr.bf16.mxu0 0
    %1209 = vmatpush1.bf16.msra.mxu0 0
    %1210 = vmatprep.subr.bf16.mxu0 0
    %1211 = vmatpush1.bf16.msra.mxu0 0
    %1212 = vmatprep.subr.bf16.mxu0 0
    %1213 = vmatpush1.bf16.msra.mxu0 0
    %1214 = vmatprep.subr.bf16.mxu0 0
    %1215 = vmatpush1.bf16.msra.mxu0 0
    %1216 = vmatprep.subr.bf16.mxu0 0
    %1217 = vmatpush1.bf16.msra.mxu0 0
    %1218 = vmatprep.subr.bf16.mxu0 0
    %1219 = vmatpush1.bf16.msra.mxu0 0
    %1220 = vmatprep.subr.bf16.mxu0 0
    %1221 = vmatpush1.bf16.msra.mxu0 0
    %1222 = vmatprep.subr.bf16.mxu0 0
    %1223 = vmatpush1.bf16.msra.mxu0 %v422
    %1224 = vmatprep.subr.bf16.mxu0 0
    %1225 = vmatpush2.bf16.msra.mxu0 0
    %1226 = vmatprep.subr.bf16.mxu0 0
    %1227 = vmatpush2.bf16.msra.mxu0 0
    %1228 = vmatprep.subr.bf16.mxu0 0
    %1229 = vmatpush2.bf16.msra.mxu0 0
    %1230 = vmatprep.subr.bf16.mxu0 0
    %1231 = vmatpush2.bf16.msra.mxu0 0
    %1232 = vmatprep.subr.bf16.mxu0 0
    %1233 = vmatpush2.bf16.msra.mxu0 0
    %1234 = vmatprep.subr.bf16.mxu0 0
    %1235 = vmatpush2.bf16.msra.mxu0 0
    %1236 = vmatprep.subr.bf16.mxu0 0
    %1237 = vmatpush2.bf16.msra.mxu0 0
    %1238 = vmatprep.subr.bf16.mxu0 0
    %1239 = vmatpush2.bf16.msra.mxu0 0
    %1240 = vmatprep.mubr.bf16.mxu0 0
    %1241 = vmatmul.mubr.bf16.gmra.mxu0 %v1206
    %v1242 = vpop.f32.mrf.mxu0
    %v1243 = vadd.f32 %v378, %v1242
    %v1244 = vpop.f32.mrf.mxu0
    %v1245 = vpop.f32.mrf.mxu0
    %v1246 = vpop.f32.mrf.mxu0
    %1247 = vdwg.mxu0
    %v1248 = vmax.f32 %v1243, 0.0
    %v1249 = vpack.c.bf16 %v1248, %v1248
    %1250 = vst [vmem:[#allocation2 + $0x14] sm:$0xf] %v1249
    %v1259 = vrot.slane %v978, 2
    %v1260 = vrot.slane %v980, 2
    %v1261 = vrot.slane %v982, 2
    %v1262 = vrot.slane %v984, 2
    %v1263 = vrot.slane %v986, 2
    %v1264 = vrot.slane %v988, 2
    %v1265 = vrot.slane %v990, 2
    %v1266 = vrot.slane %v992, 2
    %v1275 = vadd.f32 %v1017, %v1259
    %v1276 = vadd.f32 %v1018, %v1260
    %v1277 = vadd.f32 %v1019, %v1261
    %v1278 = vadd.f32 %v1020, %v1262
    %v1279 = vadd.f32 %v1021, %v1263
    %v1280 = vadd.f32 %v1022, %v1264
    %v1281 = vadd.f32 %v1023, %v1265
    %v1282 = vadd.f32 %v1024, %v1266
    %v1283 = vrot.slane %v978, 3
    %v1284 = vrot.slane %v980, 3
    %v1285 = vrot.slane %v982, 3
    %v1286 = vrot.slane %v984, 3
    %v1287 = vrot.slane %v986, 3
    %v1288 = vrot.slane %v988, 3
    %v1289 = vrot.slane %v990, 3
    %v1290 = vrot.slane %v992, 3
    %v1299 = vadd.f32 %v1275, %v1283
    %v1300 = vadd.f32 %v1276, %v1284
    %v1301 = vadd.f32 %v1277, %v1285
    %v1302 = vadd.f32 %v1278, %v1286
    %v1303 = vadd.f32 %v1279, %v1287
    %v1304 = vadd.f32 %v1280, %v1288
    %v1305 = vadd.f32 %v1281, %v1289
    %v1306 = vadd.f32 %v1282, %v1290
    %v1307 = vrot.slane %v978, 4
    %v1308 = vrot.slane %v980, 4
    %v1309 = vrot.slane %v982, 4
    %v1310 = vrot.slane %v984, 4
    %v1311 = vrot.slane %v986, 4
    %v1312 = vrot.slane %v988, 4
    %v1313 = vrot.slane %v990, 4
    %v1314 = vrot.slane %v992, 4
    %v1323 = vadd.f32 %v1299, %v1307
    %v1324 = vadd.f32 %v1300, %v1308
    %v1325 = vadd.f32 %v1301, %v1309
    %v1326 = vadd.f32 %v1302, %v1310
    %v1327 = vadd.f32 %v1303, %v1311
    %v1328 = vadd.f32 %v1304, %v1312
    %v1329 = vadd.f32 %v1305, %v1313
    %v1330 = vadd.f32 %v1306, %v1314
    %v1331 = vmul.f32 %v1323, 0.04
    %v1332 = vmul.f32 %v1324, 0.04
    %v1333 = vmul.f32 %v1325, 0.04
    %v1334 = vmul.f32 %v1326, 0.04
    %v1335 = vmul.f32 %v1327, 0.04
    %v1336 = vmul.f32 %v1328, 0.04
    %v1337 = vmul.f32 %v1329, 0.04
    %v1338 = vmul.f32 %v1330, 0.04
    %v1339 = vpack.c.bf16 %v1331, %v1331
    %v1340 = vpack.c.bf16 %v1332, %v1332
    %v1341 = vpack.c.bf16 %v1333, %v1333
    %v1342 = vpack.c.bf16 %v1334, %v1334
    %v1343 = vpack.c.bf16 %v1335, %v1335
    %v1344 = vpack.c.bf16 %v1336, %v1336
    %v1345 = vpack.c.bf16 %v1337, %v1337
    %v1346 = vpack.c.bf16 %v1338, %v1338
    %v1355 = vunpack.c.l.b16 %v1339
    %v1356 = vunpack.c.l.b16 %v1340
    %v1357 = vunpack.c.l.b16 %v1341
    %v1358 = vunpack.c.l.b16 %v1342
    %v1359 = vunpack.c.l.b16 %v1343
    %v1360 = vunpack.c.l.b16 %v1344
    %v1361 = vunpack.c.l.b16 %v1345
    %v1362 = vunpack.c.l.b16 %v1346
    %v1363 = vrot.slane %v1355, 6
    %v1364 = vrot.slane %v1356, 5
    %v1365 = vsel %vm397, %v1364, %v1363
    %v1366 = vrot.slane %v1357, 4
    %v1367 = vsel %vm400, %v1366, %v1365
    %v1368 = vrot.slane %v1358, 3
    %v1369 = vsel %vm403, %v1368, %v1367
    %v1370 = vrot.slane %v1359, 2
    %v1371 = vsel %vm406, %v1370, %v1369
    %v1372 = vrot.slane %v1360, 1
    %v1373 = vsel %vm409, %v1372, %v1371
    %v1374 = vsel %vm412, %v1361, %v1373
    %v1375 = vrot.slane %v1362, 7
    %v1376 = vsel %vm415, %v1375, %v1374
    %v1377 = vpack.c.b16 %v1376, %v1376
    %v1379 = vsel %vm424, %v1377, 0
    %1381 = vmatprep.subr.bf16.mxu0 0
    %1382 = vmatpush1.bf16.msra.mxu0 0
    %1383 = vmatprep.subr.bf16.mxu0 0
    %1384 = vmatpush1.bf16.msra.mxu0 0
    %1385 = vmatprep.subr.bf16.mxu0 0
    %1386 = vmatpush1.bf16.msra.mxu0 0
    %1387 = vmatprep.subr.bf16.mxu0 0
    %1388 = vmatpush1.bf16.msra.mxu0 0
    %1389 = vmatprep.subr.bf16.mxu0 0
    %1390 = vmatpush1.bf16.msra.mxu0 0
    %1391 = vmatprep.subr.bf16.mxu0 0
    %1392 = vmatpush1.bf16.msra.mxu0 0
    %1393 = vmatprep.subr.bf16.mxu0 0
    %1394 = vmatpush1.bf16.msra.mxu0 0
    %1395 = vmatprep.subr.bf16.mxu0 0
    %1396 = vmatpush1.bf16.msra.mxu0 %v422
    %1397 = vmatprep.subr.bf16.mxu0 0
    %1398 = vmatpush2.bf16.msra.mxu0 0
    %1399 = vmatprep.subr.bf16.mxu0 0
    %1400 = vmatpush2.bf16.msra.mxu0 0
    %1401 = vmatprep.subr.bf16.mxu0 0
    %1402 = vmatpush2.bf16.msra.mxu0 0
    %1403 = vmatprep.subr.bf16.mxu0 0
    %1404 = vmatpush2.bf16.msra.mxu0 0
    %1405 = vmatprep.subr.bf16.mxu0 0
    %1406 = vmatpush2.bf16.msra.mxu0 0
    %1407 = vmatprep.subr.bf16.mxu0 0
    %1408 = vmatpush2.bf16.msra.mxu0 0
    %1409 = vmatprep.subr.bf16.mxu0 0
    %1410 = vmatpush2.bf16.msra.mxu0 0
    %1411 = vmatprep.subr.bf16.mxu0 0
    %1412 = vmatpush2.bf16.msra.mxu0 0
    %1413 = vmatprep.mubr.bf16.mxu0 0
    %1414 = vmatmul.mubr.bf16.gmra.mxu0 %v1379
    %v1415 = vpop.f32.mrf.mxu0
    %v1416 = vadd.f32 %v378, %v1415
    %v1417 = vpop.f32.mrf.mxu0
    %v1418 = vpop.f32.mrf.mxu0
    %v1419 = vpop.f32.mrf.mxu0
    %1420 = vdwg.mxu0
    %v1421 = vmax.f32 %v1416, 0.0
    %v1422 = vpack.c.bf16 %v1421, %v1421
    %1423 = vst [vmem:[#allocation2 + $0x18] sm:$0xf] %v1422
    %v1424 = vrot.slane %v978, 1
    %v1425 = vrot.slane %v980, 1
    %v1426 = vrot.slane %v982, 1
    %v1427 = vrot.slane %v984, 1
    %v1428 = vrot.slane %v986, 1
    %v1429 = vrot.slane %v988, 1
    %v1430 = vrot.slane %v990, 1
    %v1431 = vrot.slane %v992, 1
    %v1440 = vadd.f32 %v978, %v1424
    %v1441 = vadd.f32 %v980, %v1425
    %v1442 = vadd.f32 %v982, %v1426
    %v1443 = vadd.f32 %v984, %v1427
    %v1444 = vadd.f32 %v986, %v1428
    %v1445 = vadd.f32 %v988, %v1429
    %v1446 = vadd.f32 %v990, %v1430
    %v1447 = vadd.f32 %v992, %v1431
    %v1448 = vadd.f32 %v1440, %v1259
    %v1449 = vadd.f32 %v1441, %v1260
    %v1450 = vadd.f32 %v1442, %v1261
    %v1451 = vadd.f32 %v1443, %v1262
    %v1452 = vadd.f32 %v1444, %v1263
    %v1453 = vadd.f32 %v1445, %v1264
    %v1454 = vadd.f32 %v1446, %v1265
    %v1455 = vadd.f32 %v1447, %v1266
    %v1456 = vadd.f32 %v1448, %v1283
    %v1457 = vadd.f32 %v1449, %v1284
    %v1458 = vadd.f32 %v1450, %v1285
    %v1459 = vadd.f32 %v1451, %v1286
    %v1460 = vadd.f32 %v1452, %v1287
    %v1461 = vadd.f32 %v1453, %v1288
    %v1462 = vadd.f32 %v1454, %v1289
    %v1463 = vadd.f32 %v1455, %v1290
    %v1464 = vadd.f32 %v1456, %v1307
    %v1465 = vadd.f32 %v1457, %v1308
    %v1466 = vadd.f32 %v1458, %v1309
    %v1467 = vadd.f32 %v1459, %v1310
    %v1468 = vadd.f32 %v1460, %v1311
    %v1469 = vadd.f32 %v1461, %v1312
    %v1470 = vadd.f32 %v1462, %v1313
    %v1471 = vadd.f32 %v1463, %v1314
    %v1472 = vmul.f32 %v1464, 0.04
    %v1473 = vmul.f32 %v1465, 0.04
    %v1474 = vmul.f32 %v1466, 0.04
    %v1475 = vmul.f32 %v1467, 0.04
    %v1476 = vmul.f32 %v1468, 0.04
    %v1477 = vmul.f32 %v1469, 0.04
    %v1478 = vmul.f32 %v1470, 0.04
    %v1479 = vmul.f32 %v1471, 0.04
    %v1480 = vpack.c.bf16 %v1472, %v1472
    %v1481 = vpack.c.bf16 %v1473, %v1473
    %v1482 = vpack.c.bf16 %v1474, %v1474
    %v1483 = vpack.c.bf16 %v1475, %v1475
    %v1484 = vpack.c.bf16 %v1476, %v1476
    %v1485 = vpack.c.bf16 %v1477, %v1477
    %v1486 = vpack.c.bf16 %v1478, %v1478
    %v1487 = vpack.c.bf16 %v1479, %v1479
    %v1496 = vunpack.c.l.b16 %v1480
    %v1497 = vunpack.c.l.b16 %v1481
    %v1498 = vunpack.c.l.b16 %v1482
    %v1499 = vunpack.c.l.b16 %v1483
    %v1500 = vunpack.c.l.b16 %v1484
    %v1501 = vunpack.c.l.b16 %v1485
    %v1502 = vunpack.c.l.b16 %v1486
    %v1503 = vunpack.c.l.b16 %v1487
    %v1504 = vrot.slane %v1496, 1
    %v1505 = vsel %vm397, %v1497, %v1504
    %v1506 = vrot.slane %v1498, 7
    %v1507 = vsel %vm400, %v1506, %v1505
    %v1508 = vrot.slane %v1499, 6
    %v1509 = vsel %vm403, %v1508, %v1507
    %v1510 = vrot.slane %v1500, 5
    %v1511 = vsel %vm406, %v1510, %v1509
    %v1512 = vrot.slane %v1501, 4
    %v1513 = vsel %vm409, %v1512, %v1511
    %v1514 = vrot.slane %v1502, 3
    %v1515 = vsel %vm412, %v1514, %v1513
    %v1516 = vrot.slane %v1503, 2
    %v1517 = vsel %vm415, %v1516, %v1515
    %v1518 = vpack.c.b16 %v1517, %v1517
    %v1520 = vsel %vm424, %v1518, 0
    %1522 = vmatprep.subr.bf16.mxu0 0
    %1523 = vmatpush1.bf16.msra.mxu0 0
    %1524 = vmatprep.subr.bf16.mxu0 0
    %1525 = vmatpush1.bf16.msra.mxu0 0
    %1526 = vmatprep.subr.bf16.mxu0 0
    %1527 = vmatpush1.bf16.msra.mxu0 0
    %1528 = vmatprep.subr.bf16.mxu0 0
    %1529 = vmatpush1.bf16.msra.mxu0 0
    %1530 = vmatprep.subr.bf16.mxu0 0
    %1531 = vmatpush1.bf16.msra.mxu0 0
    %1532 = vmatprep.subr.bf16.mxu0 0
    %1533 = vmatpush1.bf16.msra.mxu0 0
    %1534 = vmatprep.subr.bf16.mxu0 0
    %1535 = vmatpush1.bf16.msra.mxu0 0
    %1536 = vmatprep.subr.bf16.mxu0 0
    %1537 = vmatpush1.bf16.msra.mxu0 %v422
    %1538 = vmatprep.subr.bf16.mxu0 0
    %1539 = vmatpush2.bf16.msra.mxu0 0
    %1540 = vmatprep.subr.bf16.mxu0 0
    %1541 = vmatpush2.bf16.msra.mxu0 0
    %1542 = vmatprep.subr.bf16.mxu0 0
    %1543 = vmatpush2.bf16.msra.mxu0 0
    %1544 = vmatprep.subr.bf16.mxu0 0
    %1545 = vmatpush2.bf16.msra.mxu0 0
    %1546 = vmatprep.subr.bf16.mxu0 0
    %1547 = vmatpush2.bf16.msra.mxu0 0
    %1548 = vmatprep.subr.bf16.mxu0 0
    %1549 = vmatpush2.bf16.msra.mxu0 0
    %1550 = vmatprep.subr.bf16.mxu0 0
    %1551 = vmatpush2.bf16.msra.mxu0 0
    %1552 = vmatprep.subr.bf16.mxu0 0
    %1553 = vmatpush2.bf16.msra.mxu0 0
    %1554 = vmatprep.mubr.bf16.mxu0 0
    %1555 = vmatmul.mubr.bf16.gmra.mxu0 %v1520
    %v1556 = vpop.f32.mrf.mxu0
    %v1557 = vadd.f32 %v378, %v1556
    %v1558 = vpop.f32.mrf.mxu0
    %v1559 = vpop.f32.mrf.mxu0
    %v1560 = vpop.f32.mrf.mxu0
    %1561 = vdwg.mxu0
    %v1562 = vmax.f32 %v1557, 0.0
    %v1563 = vpack.c.bf16 %v1562, %v1562
    %1564 = vst [vmem:[#allocation2 + $0x1c] sm:$0xf] %v1563
    %v1565 = vld [vmem:[%s927] sm:$0xff]
    %v1566 = vld [vmem:[%s927 + $0x8] sm:$0x3f]
    %v1567 = vld [vmem:[%s927 + $0xe0] sm:$0xff]
    %v1568 = vld [vmem:[%s927 + $0xe8] sm:$0x3f]
    %v1569 = vld [vmem:[%s927 + $0x1c0] sm:$0xff]
    %v1570 = vld [vmem:[%s927 + $0x1c8] sm:$0x3f]
    %v1571 = vld [vmem:[%s927 + $0x2a0] sm:$0xff]
    %v1572 = vld [vmem:[%s927 + $0x2a8] sm:$0x3f]
    %v1573 = vld [vmem:[%s927 + $0x380] sm:$0xff]
    %v1574 = vld [vmem:[%s927 + $0x388] sm:$0x3f]
    %v1575 = vld [vmem:[%s927 + $0x460] sm:$0xff]
    %v1576 = vld [vmem:[%s927 + $0x468] sm:$0x3f]
    %v1577 = vld [vmem:[%s927 + $0x540] sm:$0xff]
    %v1578 = vld [vmem:[%s927 + $0x548] sm:$0x3f]
    %v1579 = vld [vmem:[%s927 + $0x620] sm:$0xff]
    %v1580 = vld [vmem:[%s927 + $0x628] sm:$0x3f]
    %v1581 = vld [vmem:[%s960] sm:$0xff]
    %v1582 = vld [vmem:[%s960 + $0x8] sm:$0x3f]
    %v1583 = vld [vmem:[%s960 + $0xe0] sm:$0xff]
    %v1584 = vld [vmem:[%s960 + $0xe8] sm:$0x3f]
    %v1585 = vld [vmem:[%s960 + $0x1c0] sm:$0xff]
    %v1586 = vld [vmem:[%s960 + $0x1c8] sm:$0x3f]
    %v1587 = vld [vmem:[%s960 + $0x2a0] sm:$0xff]
    %v1588 = vld [vmem:[%s960 + $0x2a8] sm:$0x3f]
    %v1589 = vld [vmem:[%s960 + $0x380] sm:$0xff]
    %v1590 = vld [vmem:[%s960 + $0x388] sm:$0x3f]
    %v1591 = vld [vmem:[%s960 + $0x460] sm:$0xff]
    %v1592 = vld [vmem:[%s960 + $0x468] sm:$0x3f]
    %v1593 = vld [vmem:[%s960 + $0x540] sm:$0xff]
    %v1594 = vld [vmem:[%s960 + $0x548] sm:$0x3f]
    %v1595 = vld [vmem:[%s960 + $0x620] sm:$0xff]
    %v1596 = vld [vmem:[%s960 + $0x628] sm:$0x3f]
    %v1597 = vadd.f32 %v1565, %v1581
    %v1598 = vadd.f32 %v1566, %v1582
    %v1599 = vadd.f32 %v1567, %v1583
    %v1600 = vadd.f32 %v1568, %v1584
    %v1601 = vadd.f32 %v1569, %v1585
    %v1602 = vadd.f32 %v1570, %v1586
    %v1603 = vadd.f32 %v1571, %v1587
    %v1604 = vadd.f32 %v1572, %v1588
    %v1605 = vadd.f32 %v1573, %v1589
    %v1606 = vadd.f32 %v1574, %v1590
    %v1607 = vadd.f32 %v1575, %v1591
    %v1608 = vadd.f32 %v1576, %v1592
    %v1609 = vadd.f32 %v1577, %v1593
    %v1610 = vadd.f32 %v1578, %v1594
    %v1611 = vadd.f32 %v1579, %v1595
    %v1612 = vadd.f32 %v1580, %v1596
    %s1613 = scalar_lea.vmem %s0, 128
    %v1614 = vld [vmem:[%s1613] sm:$0xff]
    %v1615 = vld [vmem:[%s1613 + $0x8] sm:$0x3f]
    %v1616 = vld [vmem:[%s1613 + $0xe0] sm:$0xff]
    %v1617 = vld [vmem:[%s1613 + $0xe8] sm:$0x3f]
    %v1618 = vld [vmem:[%s1613 + $0x1c0] sm:$0xff]
    %v1619 = vld [vmem:[%s1613 + $0x1c8] sm:$0x3f]
    %v1620 = vld [vmem:[%s1613 + $0x2a0] sm:$0xff]
    %v1621 = vld [vmem:[%s1613 + $0x2a8] sm:$0x3f]
    %v1622 = vld [vmem:[%s1613 + $0x380] sm:$0xff]
    %v1623 = vld [vmem:[%s1613 + $0x388] sm:$0x3f]
    %v1624 = vld [vmem:[%s1613 + $0x460] sm:$0xff]
    %v1625 = vld [vmem:[%s1613 + $0x468] sm:$0x3f]
    %v1626 = vld [vmem:[%s1613 + $0x540] sm:$0xff]
    %v1627 = vld [vmem:[%s1613 + $0x548] sm:$0x3f]
    %v1628 = vld [vmem:[%s1613 + $0x620] sm:$0xff]
    %v1629 = vld [vmem:[%s1613 + $0x628] sm:$0x3f]
    %v1630 = vadd.f32 %v1597, %v1614
    %v1631 = vadd.f32 %v1598, %v1615
    %v1632 = vadd.f32 %v1599, %v1616
    %v1633 = vadd.f32 %v1600, %v1617
    %v1634 = vadd.f32 %v1601, %v1618
    %v1635 = vadd.f32 %v1602, %v1619
    %v1636 = vadd.f32 %v1603, %v1620
    %v1637 = vadd.f32 %v1604, %v1621
    %v1638 = vadd.f32 %v1605, %v1622
    %v1639 = vadd.f32 %v1606, %v1623
    %v1640 = vadd.f32 %v1607, %v1624
    %v1641 = vadd.f32 %v1608, %v1625
    %v1642 = vadd.f32 %v1609, %v1626
    %v1643 = vadd.f32 %v1610, %v1627
    %v1644 = vadd.f32 %v1611, %v1628
    %v1645 = vadd.f32 %v1612, %v1629
    %s1646 = scalar_lea.vmem %s0, 144
    %v1647 = vld [vmem:[%s1646] sm:$0xff]
    %v1648 = vld [vmem:[%s1646 + $0x8] sm:$0x3f]
    %v1649 = vld [vmem:[%s1646 + $0xe0] sm:$0xff]
    %v1650 = vld [vmem:[%s1646 + $0xe8] sm:$0x3f]
    %v1651 = vld [vmem:[%s1646 + $0x1c0] sm:$0xff]
    %v1652 = vld [vmem:[%s1646 + $0x1c8] sm:$0x3f]
    %v1653 = vld [vmem:[%s1646 + $0x2a0] sm:$0xff]
    %v1654 = vld [vmem:[%s1646 + $0x2a8] sm:$0x3f]
    %v1655 = vld [vmem:[%s1646 + $0x380] sm:$0xff]
    %v1656 = vld [vmem:[%s1646 + $0x388] sm:$0x3f]
    %v1657 = vld [vmem:[%s1646 + $0x460] sm:$0xff]
    %v1658 = vld [vmem:[%s1646 + $0x468] sm:$0x3f]
    %v1659 = vld [vmem:[%s1646 + $0x540] sm:$0xff]
    %v1660 = vld [vmem:[%s1646 + $0x548] sm:$0x3f]
    %v1661 = vld [vmem:[%s1646 + $0x620] sm:$0xff]
    %v1662 = vld [vmem:[%s1646 + $0x628] sm:$0x3f]
    %v1663 = vadd.f32 %v1630, %v1647
    %v1664 = vadd.f32 %v1631, %v1648
    %v1665 = vadd.f32 %v1632, %v1649
    %v1666 = vadd.f32 %v1633, %v1650
    %v1667 = vadd.f32 %v1634, %v1651
    %v1668 = vadd.f32 %v1635, %v1652
    %v1669 = vadd.f32 %v1636, %v1653
    %v1670 = vadd.f32 %v1637, %v1654
    %v1671 = vadd.f32 %v1638, %v1655
    %v1672 = vadd.f32 %v1639, %v1656
    %v1673 = vadd.f32 %v1640, %v1657
    %v1674 = vadd.f32 %v1641, %v1658
    %v1675 = vadd.f32 %v1642, %v1659
    %v1676 = vadd.f32 %v1643, %v1660
    %v1677 = vadd.f32 %v1644, %v1661
    %v1678 = vadd.f32 %v1645, %v1662
    %s1679 = scalar_lea.vmem %s0, 160
    %v1680 = vld [vmem:[%s1679] sm:$0xff]
    %v1681 = vld [vmem:[%s1679 + $0x8] sm:$0x3f]
    %v1682 = vld [vmem:[%s1679 + $0xe0] sm:$0xff]
    %v1683 = vld [vmem:[%s1679 + $0xe8] sm:$0x3f]
    %v1684 = vld [vmem:[%s1679 + $0x1c0] sm:$0xff]
    %v1685 = vld [vmem:[%s1679 + $0x1c8] sm:$0x3f]
    %v1686 = vld [vmem:[%s1679 + $0x2a0] sm:$0xff]
    %v1687 = vld [vmem:[%s1679 + $0x2a8] sm:$0x3f]
    %v1688 = vld [vmem:[%s1679 + $0x380] sm:$0xff]
    %v1689 = vld [vmem:[%s1679 + $0x388] sm:$0x3f]
    %v1690 = vld [vmem:[%s1679 + $0x460] sm:$0xff]
    %v1691 = vld [vmem:[%s1679 + $0x468] sm:$0x3f]
    %v1692 = vld [vmem:[%s1679 + $0x540] sm:$0xff]
    %v1693 = vld [vmem:[%s1679 + $0x548] sm:$0x3f]
    %v1694 = vld [vmem:[%s1679 + $0x620] sm:$0xff]
    %v1695 = vld [vmem:[%s1679 + $0x628] sm:$0x3f]
    %v1696 = vadd.f32 %v1663, %v1680
    %v1697 = vadd.f32 %v1664, %v1681
    %v1698 = vadd.f32 %v1665, %v1682
    %v1699 = vadd.f32 %v1666, %v1683
    %v1700 = vadd.f32 %v1667, %v1684
    %v1701 = vadd.f32 %v1668, %v1685
    %v1702 = vadd.f32 %v1669, %v1686
    %v1703 = vadd.f32 %v1670, %v1687
    %v1704 = vadd.f32 %v1671, %v1688
    %v1705 = vadd.f32 %v1672, %v1689
    %v1706 = vadd.f32 %v1673, %v1690
    %v1707 = vadd.f32 %v1674, %v1691
    %v1708 = vadd.f32 %v1675, %v1692
    %v1709 = vadd.f32 %v1676, %v1693
    %v1710 = vadd.f32 %v1677, %v1694
    %v1711 = vadd.f32 %v1678, %v1695
    %v1720 = vrot.slane %v1696, 1
    %v1721 = vrot.slane %v1698, 1
    %v1722 = vrot.slane %v1700, 1
    %v1723 = vrot.slane %v1702, 1
    %v1724 = vrot.slane %v1704, 1
    %v1725 = vrot.slane %v1706, 1
    %v1726 = vrot.slane %v1708, 1
    %v1727 = vrot.slane %v1710, 1
    %v1736 = vadd.f32 %v1696, %v1720
    %v1737 = vadd.f32 %v1698, %v1721
    %v1738 = vadd.f32 %v1700, %v1722
    %v1739 = vadd.f32 %v1702, %v1723
    %v1740 = vadd.f32 %v1704, %v1724
    %v1741 = vadd.f32 %v1706, %v1725
    %v1742 = vadd.f32 %v1708, %v1726
    %v1743 = vadd.f32 %v1710, %v1727
    %v1744 = vrot.slane %v1696, 2
    %v1745 = vrot.slane %v1698, 2
    %v1746 = vrot.slane %v1700, 2
    %v1747 = vrot.slane %v1702, 2
    %v1748 = vrot.slane %v1704, 2
    %v1749 = vrot.slane %v1706, 2
    %v1750 = vrot.slane %v1708, 2
    %v1751 = vrot.slane %v1710, 2
    %v1760 = vadd.f32 %v1736, %v1744
    %v1761 = vadd.f32 %v1737, %v1745
    %v1762 = vadd.f32 %v1738, %v1746
    %v1763 = vadd.f32 %v1739, %v1747
    %v1764 = vadd.f32 %v1740, %v1748
    %v1765 = vadd.f32 %v1741, %v1749
    %v1766 = vadd.f32 %v1742, %v1750
    %v1767 = vadd.f32 %v1743, %v1751
    %v1768 = vrot.slane %v1696, 3
    %v1769 = vrot.slane %v1698, 3
    %v1770 = vrot.slane %v1700, 3
    %v1771 = vrot.slane %v1702, 3
    %v1772 = vrot.slane %v1704, 3
    %v1773 = vrot.slane %v1706, 3
    %v1774 = vrot.slane %v1708, 3
    %v1775 = vrot.slane %v1710, 3
    %v1784 = vadd.f32 %v1760, %v1768
    %v1785 = vadd.f32 %v1761, %v1769
    %v1786 = vadd.f32 %v1762, %v1770
    %v1787 = vadd.f32 %v1763, %v1771
    %v1788 = vadd.f32 %v1764, %v1772
    %v1789 = vadd.f32 %v1765, %v1773
    %v1790 = vadd.f32 %v1766, %v1774
    %v1791 = vadd.f32 %v1767, %v1775
    %v1792 = vrot.slane %v1696, 4
    %v1793 = vrot.slane %v1698, 4
    %v1794 = vrot.slane %v1700, 4
    %v1795 = vrot.slane %v1702, 4
    %v1796 = vrot.slane %v1704, 4
    %v1797 = vrot.slane %v1706, 4
    %v1798 = vrot.slane %v1708, 4
    %v1799 = vrot.slane %v1710, 4
    %v1808 = vadd.f32 %v1784, %v1792
    %v1809 = vadd.f32 %v1785, %v1793
    %v1810 = vadd.f32 %v1786, %v1794
    %v1811 = vadd.f32 %v1787, %v1795
    %v1812 = vadd.f32 %v1788, %v1796
    %v1813 = vadd.f32 %v1789, %v1797
    %v1814 = vadd.f32 %v1790, %v1798
    %v1815 = vadd.f32 %v1791, %v1799
    %v1816 = vmul.f32 %v1808, 0.04
    %v1817 = vmul.f32 %v1809, 0.04
    %v1818 = vmul.f32 %v1810, 0.04
    %v1819 = vmul.f32 %v1811, 0.04
    %v1820 = vmul.f32 %v1812, 0.04
    %v1821 = vmul.f32 %v1813, 0.04
    %v1822 = vmul.f32 %v1814, 0.04
    %v1823 = vmul.f32 %v1815, 0.04
    %v1824 = vpack.c.bf16 %v1816, %v1816
    %v1825 = vpack.c.bf16 %v1817, %v1817
    %v1826 = vpack.c.bf16 %v1818, %v1818
    %v1827 = vpack.c.bf16 %v1819, %v1819
    %v1828 = vpack.c.bf16 %v1820, %v1820
    %v1829 = vpack.c.bf16 %v1821, %v1821
    %v1830 = vpack.c.bf16 %v1822, %v1822
    %v1831 = vpack.c.bf16 %v1823, %v1823
    %v1840 = vunpack.c.l.b16 %v1824
    %v1841 = vunpack.c.l.b16 %v1825
    %v1842 = vunpack.c.l.b16 %v1826
    %v1843 = vunpack.c.l.b16 %v1827
    %v1844 = vunpack.c.l.b16 %v1828
    %v1845 = vunpack.c.l.b16 %v1829
    %v1846 = vunpack.c.l.b16 %v1830
    %v1847 = vunpack.c.l.b16 %v1831
    %v1848 = vrot.slane %v1841, 7
    %v1849 = vsel %vm397, %v1848, %v1840
    %v1850 = vrot.slane %v1842, 6
    %v1851 = vsel %vm400, %v1850, %v1849
    %v1852 = vrot.slane %v1843, 5
    %v1853 = vsel %vm403, %v1852, %v1851
    %v1854 = vrot.slane %v1844, 4
    %v1855 = vsel %vm406, %v1854, %v1853
    %v1856 = vrot.slane %v1845, 3
    %v1857 = vsel %vm409, %v1856, %v1855
    %v1858 = vrot.slane %v1846, 2
    %v1859 = vsel %vm412, %v1858, %v1857
    %v1860 = vrot.slane %v1847, 1
    %v1861 = vsel %vm415, %v1860, %v1859
    %v1862 = vpack.c.b16 %v1861, %v1861
    %v1864 = vsel %vm424, %v1862, 0
    %1866 = vmatprep.subr.bf16.mxu0 0
    %1867 = vmatpush1.bf16.msra.mxu0 0
    %1868 = vmatprep.subr.bf16.mxu0 0
    %1869 = vmatpush1.bf16.msra.mxu0 0
    %1870 = vmatprep.subr.bf16.mxu0 0
    %1871 = vmatpush1.bf16.msra.mxu0 0
    %1872 = vmatprep.subr.bf16.mxu0 0
    %1873 = vmatpush1.bf16.msra.mxu0 0
    %1874 = vmatprep.subr.bf16.mxu0 0
    %1875 = vmatpush1.bf16.msra.mxu0 0
    %1876 = vmatprep.subr.bf16.mxu0 0
    %1877 = vmatpush1.bf16.msra.mxu0 0
    %1878 = vmatprep.subr.bf16.mxu0 0
    %1879 = vmatpush1.bf16.msra.mxu0 0
    %1880 = vmatprep.subr.bf16.mxu0 0
    %1881 = vmatpush1.bf16.msra.mxu0 %v422
    %1882 = vmatprep.subr.bf16.mxu0 0
    %1883 = vmatpush2.bf16.msra.mxu0 0
    %1884 = vmatprep.subr.bf16.mxu0 0
    %1885 = vmatpush2.bf16.msra.mxu0 0
    %1886 = vmatprep.subr.bf16.mxu0 0
    %1887 = vmatpush2.bf16.msra.mxu0 0
    %1888 = vmatprep.subr.bf16.mxu0 0
    %1889 = vmatpush2.bf16.msra.mxu0 0
    %1890 = vmatprep.subr.bf16.mxu0 0
    %1891 = vmatpush2.bf16.msra.mxu0 0
    %1892 = vmatprep.subr.bf16.mxu0 0
    %1893 = vmatpush2.bf16.msra.mxu0 0
    %1894 = vmatprep.subr.bf16.mxu0 0
    %1895 = vmatpush2.bf16.msra.mxu0 0
    %1896 = vmatprep.subr.bf16.mxu0 0
    %1897 = vmatpush2.bf16.msra.mxu0 0
    %1898 = vmatprep.mubr.bf16.mxu0 0
    %1899 = vmatmul.mubr.bf16.gmra.mxu0 %v1864
    %v1900 = vpop.f32.mrf.mxu0
    %v1901 = vadd.f32 %v378, %v1900
    %v1902 = vpop.f32.mrf.mxu0
    %v1903 = vpop.f32.mrf.mxu0
    %v1904 = vpop.f32.mrf.mxu0
    %1905 = vdwg.mxu0
    %v1906 = vmax.f32 %v1901, 0.0
    %v1907 = vpack.c.bf16 %v1906, %v1906
    %1908 = vst [vmem:[#allocation2 + $0x20] sm:$0xf] %v1907
    %v1909 = vrot.slane %v1840, 3
    %v1910 = vrot.slane %v1841, 2
    %v1911 = vsel %vm397, %v1910, %v1909
    %v1912 = vrot.slane %v1842, 1
    %v1913 = vsel %vm400, %v1912, %v1911
    %v1914 = vsel %vm403, %v1843, %v1913
    %v1915 = vrot.slane %v1844, 7
    %v1916 = vsel %vm406, %v1915, %v1914
    %v1917 = vrot.slane %v1845, 6
    %v1918 = vsel %vm409, %v1917, %v1916
    %v1919 = vrot.slane %v1846, 5
    %v1920 = vsel %vm412, %v1919, %v1918
    %v1921 = vrot.slane %v1847, 4
    %v1922 = vsel %vm415, %v1921, %v1920
    %v1923 = vpack.c.b16 %v1922, %v1922
    %v1925 = vsel %vm424, %v1923, 0
    %1927 = vmatprep.subr.bf16.mxu0 0
    %1928 = vmatpush1.bf16.msra.mxu0 0
    %1929 = vmatprep.subr.bf16.mxu0 0
    %1930 = vmatpush1.bf16.msra.mxu0 0
    %1931 = vmatprep.subr.bf16.mxu0 0
    %1932 = vmatpush1.bf16.msra.mxu0 0
    %1933 = vmatprep.subr.bf16.mxu0 0
    %1934 = vmatpush1.bf16.msra.mxu0 0
    %1935 = vmatprep.subr.bf16.mxu0 0
    %1936 = vmatpush1.bf16.msra.mxu0 0
    %1937 = vmatprep.subr.bf16.mxu0 0
    %1938 = vmatpush1.bf16.msra.mxu0 0
    %1939 = vmatprep.subr.bf16.mxu0 0
    %1940 = vmatpush1.bf16.msra.mxu0 0
    %1941 = vmatprep.subr.bf16.mxu0 0
    %1942 = vmatpush1.bf16.msra.mxu0 %v422
    %1943 = vmatprep.subr.bf16.mxu0 0
    %1944 = vmatpush2.bf16.msra.mxu0 0
    %1945 = vmatprep.subr.bf16.mxu0 0
    %1946 = vmatpush2.bf16.msra.mxu0 0
    %1947 = vmatprep.subr.bf16.mxu0 0
    %1948 = vmatpush2.bf16.msra.mxu0 0
    %1949 = vmatprep.subr.bf16.mxu0 0
    %1950 = vmatpush2.bf16.msra.mxu0 0
    %1951 = vmatprep.subr.bf16.mxu0 0
    %1952 = vmatpush2.bf16.msra.mxu0 0
    %1953 = vmatprep.subr.bf16.mxu0 0
    %1954 = vmatpush2.bf16.msra.mxu0 0
    %1955 = vmatprep.subr.bf16.mxu0 0
    %1956 = vmatpush2.bf16.msra.mxu0 0
    %1957 = vmatprep.subr.bf16.mxu0 0
    %1958 = vmatpush2.bf16.msra.mxu0 0
    %1959 = vmatprep.mubr.bf16.mxu0 0
    %1960 = vmatmul.mubr.bf16.gmra.mxu0 %v1925
    %v1961 = vpop.f32.mrf.mxu0
    %v1962 = vadd.f32 %v378, %v1961
    %v1963 = vpop.f32.mrf.mxu0
    %v1964 = vpop.f32.mrf.mxu0
    %v1965 = vpop.f32.mrf.mxu0
    %1966 = vdwg.mxu0
    %v1967 = vmax.f32 %v1962, 0.0
    %v1968 = vpack.c.bf16 %v1967, %v1967
    %1969 = vst [vmem:[#allocation2 + $0x24] sm:$0xf] %v1968
    %v1978 = vrot.slane %v1697, 2
    %v1979 = vrot.slane %v1699, 2
    %v1980 = vrot.slane %v1701, 2
    %v1981 = vrot.slane %v1703, 2
    %v1982 = vrot.slane %v1705, 2
    %v1983 = vrot.slane %v1707, 2
    %v1984 = vrot.slane %v1709, 2
    %v1985 = vrot.slane %v1711, 2
    %v1994 = vadd.f32 %v1736, %v1978
    %v1995 = vadd.f32 %v1737, %v1979
    %v1996 = vadd.f32 %v1738, %v1980
    %v1997 = vadd.f32 %v1739, %v1981
    %v1998 = vadd.f32 %v1740, %v1982
    %v1999 = vadd.f32 %v1741, %v1983
    %v2000 = vadd.f32 %v1742, %v1984
    %v2001 = vadd.f32 %v1743, %v1985
    %v2002 = vrot.slane %v1697, 3
    %v2003 = vrot.slane %v1699, 3
    %v2004 = vrot.slane %v1701, 3
    %v2005 = vrot.slane %v1703, 3
    %v2006 = vrot.slane %v1705, 3
    %v2007 = vrot.slane %v1707, 3
    %v2008 = vrot.slane %v1709, 3
    %v2009 = vrot.slane %v1711, 3
    %v2018 = vadd.f32 %v1994, %v2002
    %v2019 = vadd.f32 %v1995, %v2003
    %v2020 = vadd.f32 %v1996, %v2004
    %v2021 = vadd.f32 %v1997, %v2005
    %v2022 = vadd.f32 %v1998, %v2006
    %v2023 = vadd.f32 %v1999, %v2007
    %v2024 = vadd.f32 %v2000, %v2008
    %v2025 = vadd.f32 %v2001, %v2009
    %v2026 = vrot.slane %v1697, 4
    %v2027 = vrot.slane %v1699, 4
    %v2028 = vrot.slane %v1701, 4
    %v2029 = vrot.slane %v1703, 4
    %v2030 = vrot.slane %v1705, 4
    %v2031 = vrot.slane %v1707, 4
    %v2032 = vrot.slane %v1709, 4
    %v2033 = vrot.slane %v1711, 4
    %v2042 = vadd.f32 %v2018, %v2026
    %v2043 = vadd.f32 %v2019, %v2027
    %v2044 = vadd.f32 %v2020, %v2028
    %v2045 = vadd.f32 %v2021, %v2029
    %v2046 = vadd.f32 %v2022, %v2030
    %v2047 = vadd.f32 %v2023, %v2031
    %v2048 = vadd.f32 %v2024, %v2032
    %v2049 = vadd.f32 %v2025, %v2033
    %v2050 = vmul.f32 %v2042, 0.04
    %v2051 = vmul.f32 %v2043, 0.04
    %v2052 = vmul.f32 %v2044, 0.04
    %v2053 = vmul.f32 %v2045, 0.04
    %v2054 = vmul.f32 %v2046, 0.04
    %v2055 = vmul.f32 %v2047, 0.04
    %v2056 = vmul.f32 %v2048, 0.04
    %v2057 = vmul.f32 %v2049, 0.04
    %v2058 = vpack.c.bf16 %v2050, %v2050
    %v2059 = vpack.c.bf16 %v2051, %v2051
    %v2060 = vpack.c.bf16 %v2052, %v2052
    %v2061 = vpack.c.bf16 %v2053, %v2053
    %v2062 = vpack.c.bf16 %v2054, %v2054
    %v2063 = vpack.c.bf16 %v2055, %v2055
    %v2064 = vpack.c.bf16 %v2056, %v2056
    %v2065 = vpack.c.bf16 %v2057, %v2057
    %v2074 = vunpack.c.l.b16 %v2058
    %v2075 = vunpack.c.l.b16 %v2059
    %v2076 = vunpack.c.l.b16 %v2060
    %v2077 = vunpack.c.l.b16 %v2061
    %v2078 = vunpack.c.l.b16 %v2062
    %v2079 = vunpack.c.l.b16 %v2063
    %v2080 = vunpack.c.l.b16 %v2064
    %v2081 = vunpack.c.l.b16 %v2065
    %v2082 = vrot.slane %v2074, 6
    %v2083 = vrot.slane %v2075, 5
    %v2084 = vsel %vm397, %v2083, %v2082
    %v2085 = vrot.slane %v2076, 4
    %v2086 = vsel %vm400, %v2085, %v2084
    %v2087 = vrot.slane %v2077, 3
    %v2088 = vsel %vm403, %v2087, %v2086
    %v2089 = vrot.slane %v2078, 2
    %v2090 = vsel %vm406, %v2089, %v2088
    %v2091 = vrot.slane %v2079, 1
    %v2092 = vsel %vm409, %v2091, %v2090
    %v2093 = vsel %vm412, %v2080, %v2092
    %v2094 = vrot.slane %v2081, 7
    %v2095 = vsel %vm415, %v2094, %v2093
    %v2096 = vpack.c.b16 %v2095, %v2095
    %v2098 = vsel %vm424, %v2096, 0
    %2100 = vmatprep.subr.bf16.mxu0 0
    %2101 = vmatpush1.bf16.msra.mxu0 0
    %2102 = vmatprep.subr.bf16.mxu0 0
    %2103 = vmatpush1.bf16.msra.mxu0 0
    %2104 = vmatprep.subr.bf16.mxu0 0
    %2105 = vmatpush1.bf16.msra.mxu0 0
    %2106 = vmatprep.subr.bf16.mxu0 0
    %2107 = vmatpush1.bf16.msra.mxu0 0
    %2108 = vmatprep.subr.bf16.mxu0 0
    %2109 = vmatpush1.bf16.msra.mxu0 0
    %2110 = vmatprep.subr.bf16.mxu0 0
    %2111 = vmatpush1.bf16.msra.mxu0 0
    %2112 = vmatprep.subr.bf16.mxu0 0
    %2113 = vmatpush1.bf16.msra.mxu0 0
    %2114 = vmatprep.subr.bf16.mxu0 0
    %2115 = vmatpush1.bf16.msra.mxu0 %v422
    %2116 = vmatprep.subr.bf16.mxu0 0
    %2117 = vmatpush2.bf16.msra.mxu0 0
    %2118 = vmatprep.subr.bf16.mxu0 0
    %2119 = vmatpush2.bf16.msra.mxu0 0
    %2120 = vmatprep.subr.bf16.mxu0 0
    %2121 = vmatpush2.bf16.msra.mxu0 0
    %2122 = vmatprep.subr.bf16.mxu0 0
    %2123 = vmatpush2.bf16.msra.mxu0 0
    %2124 = vmatprep.subr.bf16.mxu0 0
    %2125 = vmatpush2.bf16.msra.mxu0 0
    %2126 = vmatprep.subr.bf16.mxu0 0
    %2127 = vmatpush2.bf16.msra.mxu0 0
    %2128 = vmatprep.subr.bf16.mxu0 0
    %2129 = vmatpush2.bf16.msra.mxu0 0
    %2130 = vmatprep.subr.bf16.mxu0 0
    %2131 = vmatpush2.bf16.msra.mxu0 0
    %2132 = vmatprep.mubr.bf16.mxu0 0
    %2133 = vmatmul.mubr.bf16.gmra.mxu0 %v2098
    %v2134 = vpop.f32.mrf.mxu0
    %v2135 = vadd.f32 %v378, %v2134
    %v2136 = vpop.f32.mrf.mxu0
    %v2137 = vpop.f32.mrf.mxu0
    %v2138 = vpop.f32.mrf.mxu0
    %2139 = vdwg.mxu0
    %v2140 = vmax.f32 %v2135, 0.0
    %v2141 = vpack.c.bf16 %v2140, %v2140
    %2142 = vst [vmem:[#allocation2 + $0x28] sm:$0xf] %v2141
    %v2143 = vrot.slane %v1697, 1
    %v2144 = vrot.slane %v1699, 1
    %v2145 = vrot.slane %v1701, 1
    %v2146 = vrot.slane %v1703, 1
    %v2147 = vrot.slane %v1705, 1
    %v2148 = vrot.slane %v1707, 1
    %v2149 = vrot.slane %v1709, 1
    %v2150 = vrot.slane %v1711, 1
    %v2159 = vadd.f32 %v1697, %v2143
    %v2160 = vadd.f32 %v1699, %v2144
    %v2161 = vadd.f32 %v1701, %v2145
    %v2162 = vadd.f32 %v1703, %v2146
    %v2163 = vadd.f32 %v1705, %v2147
    %v2164 = vadd.f32 %v1707, %v2148
    %v2165 = vadd.f32 %v1709, %v2149
    %v2166 = vadd.f32 %v1711, %v2150
    %v2167 = vadd.f32 %v2159, %v1978
    %v2168 = vadd.f32 %v2160, %v1979
    %v2169 = vadd.f32 %v2161, %v1980
    %v2170 = vadd.f32 %v2162, %v1981
    %v2171 = vadd.f32 %v2163, %v1982
    %v2172 = vadd.f32 %v2164, %v1983
    %v2173 = vadd.f32 %v2165, %v1984
    %v2174 = vadd.f32 %v2166, %v1985
    %v2175 = vadd.f32 %v2167, %v2002
    %v2176 = vadd.f32 %v2168, %v2003
    %v2177 = vadd.f32 %v2169, %v2004
    %v2178 = vadd.f32 %v2170, %v2005
    %v2179 = vadd.f32 %v2171, %v2006
    %v2180 = vadd.f32 %v2172, %v2007
    %v2181 = vadd.f32 %v2173, %v2008
    %v2182 = vadd.f32 %v2174, %v2009
    %v2183 = vadd.f32 %v2175, %v2026
    %v2184 = vadd.f32 %v2176, %v2027
    %v2185 = vadd.f32 %v2177, %v2028
    %v2186 = vadd.f32 %v2178, %v2029
    %v2187 = vadd.f32 %v2179, %v2030
    %v2188 = vadd.f32 %v2180, %v2031
    %v2189 = vadd.f32 %v2181, %v2032
    %v2190 = vadd.f32 %v2182, %v2033
    %v2191 = vmul.f32 %v2183, 0.04
    %v2192 = vmul.f32 %v2184, 0.04
    %v2193 = vmul.f32 %v2185, 0.04
    %v2194 = vmul.f32 %v2186, 0.04
    %v2195 = vmul.f32 %v2187, 0.04
    %v2196 = vmul.f32 %v2188, 0.04
    %v2197 = vmul.f32 %v2189, 0.04
    %v2198 = vmul.f32 %v2190, 0.04
    %v2199 = vpack.c.bf16 %v2191, %v2191
    %v2200 = vpack.c.bf16 %v2192, %v2192
    %v2201 = vpack.c.bf16 %v2193, %v2193
    %v2202 = vpack.c.bf16 %v2194, %v2194
    %v2203 = vpack.c.bf16 %v2195, %v2195
    %v2204 = vpack.c.bf16 %v2196, %v2196
    %v2205 = vpack.c.bf16 %v2197, %v2197
    %v2206 = vpack.c.bf16 %v2198, %v2198
    %v2215 = vunpack.c.l.b16 %v2199
    %v2216 = vunpack.c.l.b16 %v2200
    %v2217 = vunpack.c.l.b16 %v2201
    %v2218 = vunpack.c.l.b16 %v2202
    %v2219 = vunpack.c.l.b16 %v2203
    %v2220 = vunpack.c.l.b16 %v2204
    %v2221 = vunpack.c.l.b16 %v2205
    %v2222 = vunpack.c.l.b16 %v2206
    %v2223 = vrot.slane %v2215, 1
    %v2224 = vsel %vm397, %v2216, %v2223
    %v2225 = vrot.slane %v2217, 7
    %v2226 = vsel %vm400, %v2225, %v2224
    %v2227 = vrot.slane %v2218, 6
    %v2228 = vsel %vm403, %v2227, %v2226
    %v2229 = vrot.slane %v2219, 5
    %v2230 = vsel %vm406, %v2229, %v2228
    %v2231 = vrot.slane %v2220, 4
    %v2232 = vsel %vm409, %v2231, %v2230
    %v2233 = vrot.slane %v2221, 3
    %v2234 = vsel %vm412, %v2233, %v2232
    %v2235 = vrot.slane %v2222, 2
    %v2236 = vsel %vm415, %v2235, %v2234
    %v2237 = vpack.c.b16 %v2236, %v2236
    %v2239 = vsel %vm424, %v2237, 0
    %2241 = vmatprep.subr.bf16.mxu0 0
    %2242 = vmatpush1.bf16.msra.mxu0 0
    %2243 = vmatprep.subr.bf16.mxu0 0
    %2244 = vmatpush1.bf16.msra.mxu0 0
    %2245 = vmatprep.subr.bf16.mxu0 0
    %2246 = vmatpush1.bf16.msra.mxu0 0
    %2247 = vmatprep.subr.bf16.mxu0 0
    %2248 = vmatpush1.bf16.msra.mxu0 0
    %2249 = vmatprep.subr.bf16.mxu0 0
    %2250 = vmatpush1.bf16.msra.mxu0 0
    %2251 = vmatprep.subr.bf16.mxu0 0
    %2252 = vmatpush1.bf16.msra.mxu0 0
    %2253 = vmatprep.subr.bf16.mxu0 0
    %2254 = vmatpush1.bf16.msra.mxu0 0
    %2255 = vmatprep.subr.bf16.mxu0 0
    %2256 = vmatpush1.bf16.msra.mxu0 %v422
    %2257 = vmatprep.subr.bf16.mxu0 0
    %2258 = vmatpush2.bf16.msra.mxu0 0
    %2259 = vmatprep.subr.bf16.mxu0 0
    %2260 = vmatpush2.bf16.msra.mxu0 0
    %2261 = vmatprep.subr.bf16.mxu0 0
    %2262 = vmatpush2.bf16.msra.mxu0 0
    %2263 = vmatprep.subr.bf16.mxu0 0
    %2264 = vmatpush2.bf16.msra.mxu0 0
    %2265 = vmatprep.subr.bf16.mxu0 0
    %2266 = vmatpush2.bf16.msra.mxu0 0
    %2267 = vmatprep.subr.bf16.mxu0 0
    %2268 = vmatpush2.bf16.msra.mxu0 0
    %2269 = vmatprep.subr.bf16.mxu0 0
    %2270 = vmatpush2.bf16.msra.mxu0 0
    %2271 = vmatprep.subr.bf16.mxu0 0
    %2272 = vmatpush2.bf16.msra.mxu0 0
    %2273 = vmatprep.mubr.bf16.mxu0 0
    %2274 = vmatmul.mubr.bf16.gmra.mxu0 %v2239
    %v2275 = vpop.f32.mrf.mxu0
    %v2276 = vadd.f32 %v378, %v2275
    %v2277 = vpop.f32.mrf.mxu0
    %v2278 = vpop.f32.mrf.mxu0
    %v2279 = vpop.f32.mrf.mxu0
    %2280 = vdwg.mxu0
    %v2281 = vmax.f32 %v2276, 0.0
    %v2282 = vpack.c.bf16 %v2281, %v2281
    %2283 = vst [vmem:[#allocation2 + $0x2c] sm:$0xf] %v2282
    %v2284 = vld [vmem:[%s1646] sm:$0xff]
    %v2285 = vld [vmem:[%s1646 + $0x8] sm:$0x3f]
    %v2286 = vld [vmem:[%s1646 + $0xe0] sm:$0xff]
    %v2287 = vld [vmem:[%s1646 + $0xe8] sm:$0x3f]
    %v2288 = vld [vmem:[%s1646 + $0x1c0] sm:$0xff]
    %v2289 = vld [vmem:[%s1646 + $0x1c8] sm:$0x3f]
    %v2290 = vld [vmem:[%s1646 + $0x2a0] sm:$0xff]
    %v2291 = vld [vmem:[%s1646 + $0x2a8] sm:$0x3f]
    %v2292 = vld [vmem:[%s1646 + $0x380] sm:$0xff]
    %v2293 = vld [vmem:[%s1646 + $0x388] sm:$0x3f]
    %v2294 = vld [vmem:[%s1646 + $0x460] sm:$0xff]
    %v2295 = vld [vmem:[%s1646 + $0x468] sm:$0x3f]
    %v2296 = vld [vmem:[%s1646 + $0x540] sm:$0xff]
    %v2297 = vld [vmem:[%s1646 + $0x548] sm:$0x3f]
    %v2298 = vld [vmem:[%s1646 + $0x620] sm:$0xff]
    %v2299 = vld [vmem:[%s1646 + $0x628] sm:$0x3f]
    %v2300 = vld [vmem:[%s1679] sm:$0xff]
    %v2301 = vld [vmem:[%s1679 + $0x8] sm:$0x3f]
    %v2302 = vld [vmem:[%s1679 + $0xe0] sm:$0xff]
    %v2303 = vld [vmem:[%s1679 + $0xe8] sm:$0x3f]
    %v2304 = vld [vmem:[%s1679 + $0x1c0] sm:$0xff]
    %v2305 = vld [vmem:[%s1679 + $0x1c8] sm:$0x3f]
    %v2306 = vld [vmem:[%s1679 + $0x2a0] sm:$0xff]
    %v2307 = vld [vmem:[%s1679 + $0x2a8] sm:$0x3f]
    %v2308 = vld [vmem:[%s1679 + $0x380] sm:$0xff]
    %v2309 = vld [vmem:[%s1679 + $0x388] sm:$0x3f]
    %v2310 = vld [vmem:[%s1679 + $0x460] sm:$0xff]
    %v2311 = vld [vmem:[%s1679 + $0x468] sm:$0x3f]
    %v2312 = vld [vmem:[%s1679 + $0x540] sm:$0xff]
    %v2313 = vld [vmem:[%s1679 + $0x548] sm:$0x3f]
    %v2314 = vld [vmem:[%s1679 + $0x620] sm:$0xff]
    %v2315 = vld [vmem:[%s1679 + $0x628] sm:$0x3f]
    %v2316 = vadd.f32 %v2284, %v2300
    %v2317 = vadd.f32 %v2285, %v2301
    %v2318 = vadd.f32 %v2286, %v2302
    %v2319 = vadd.f32 %v2287, %v2303
    %v2320 = vadd.f32 %v2288, %v2304
    %v2321 = vadd.f32 %v2289, %v2305
    %v2322 = vadd.f32 %v2290, %v2306
    %v2323 = vadd.f32 %v2291, %v2307
    %v2324 = vadd.f32 %v2292, %v2308
    %v2325 = vadd.f32 %v2293, %v2309
    %v2326 = vadd.f32 %v2294, %v2310
    %v2327 = vadd.f32 %v2295, %v2311
    %v2328 = vadd.f32 %v2296, %v2312
    %v2329 = vadd.f32 %v2297, %v2313
    %v2330 = vadd.f32 %v2298, %v2314
    %v2331 = vadd.f32 %v2299, %v2315
    %s2332 = scalar_lea.vmem %s0, 176
    %v2333 = vld [vmem:[%s2332] sm:$0xff]
    %v2334 = vld [vmem:[%s2332 + $0x8] sm:$0x3f]
    %v2335 = vld [vmem:[%s2332 + $0xe0] sm:$0xff]
    %v2336 = vld [vmem:[%s2332 + $0xe8] sm:$0x3f]
    %v2337 = vld [vmem:[%s2332 + $0x1c0] sm:$0xff]
    %v2338 = vld [vmem:[%s2332 + $0x1c8] sm:$0x3f]
    %v2339 = vld [vmem:[%s2332 + $0x2a0] sm:$0xff]
    %v2340 = vld [vmem:[%s2332 + $0x2a8] sm:$0x3f]
    %v2341 = vld [vmem:[%s2332 + $0x380] sm:$0xff]
    %v2342 = vld [vmem:[%s2332 + $0x388] sm:$0x3f]
    %v2343 = vld [vmem:[%s2332 + $0x460] sm:$0xff]
    %v2344 = vld [vmem:[%s2332 + $0x468] sm:$0x3f]
    %v2345 = vld [vmem:[%s2332 + $0x540] sm:$0xff]
    %v2346 = vld [vmem:[%s2332 + $0x548] sm:$0x3f]
    %v2347 = vld [vmem:[%s2332 + $0x620] sm:$0xff]
    %v2348 = vld [vmem:[%s2332 + $0x628] sm:$0x3f]
    %v2349 = vadd.f32 %v2316, %v2333
    %v2350 = vadd.f32 %v2317, %v2334
    %v2351 = vadd.f32 %v2318, %v2335
    %v2352 = vadd.f32 %v2319, %v2336
    %v2353 = vadd.f32 %v2320, %v2337
    %v2354 = vadd.f32 %v2321, %v2338
    %v2355 = vadd.f32 %v2322, %v2339
    %v2356 = vadd.f32 %v2323, %v2340
    %v2357 = vadd.f32 %v2324, %v2341
    %v2358 = vadd.f32 %v2325, %v2342
    %v2359 = vadd.f32 %v2326, %v2343
    %v2360 = vadd.f32 %v2327, %v2344
    %v2361 = vadd.f32 %v2328, %v2345
    %v2362 = vadd.f32 %v2329, %v2346
    %v2363 = vadd.f32 %v2330, %v2347
    %v2364 = vadd.f32 %v2331, %v2348
    %s2365 = scalar_lea.vmem %s0, 192
    %v2366 = vld [vmem:[%s2365] sm:$0xff]
    %v2367 = vld [vmem:[%s2365 + $0x8] sm:$0x3f]
    %v2368 = vld [vmem:[%s2365 + $0xe0] sm:$0xff]
    %v2369 = vld [vmem:[%s2365 + $0xe8] sm:$0x3f]
    %v2370 = vld [vmem:[%s2365 + $0x1c0] sm:$0xff]
    %v2371 = vld [vmem:[%s2365 + $0x1c8] sm:$0x3f]
    %v2372 = vld [vmem:[%s2365 + $0x2a0] sm:$0xff]
    %v2373 = vld [vmem:[%s2365 + $0x2a8] sm:$0x3f]
    %v2374 = vld [vmem:[%s2365 + $0x380] sm:$0xff]
    %v2375 = vld [vmem:[%s2365 + $0x388] sm:$0x3f]
    %v2376 = vld [vmem:[%s2365 + $0x460] sm:$0xff]
    %v2377 = vld [vmem:[%s2365 + $0x468] sm:$0x3f]
    %v2378 = vld [vmem:[%s2365 + $0x540] sm:$0xff]
    %v2379 = vld [vmem:[%s2365 + $0x548] sm:$0x3f]
    %v2380 = vld [vmem:[%s2365 + $0x620] sm:$0xff]
    %v2381 = vld [vmem:[%s2365 + $0x628] sm:$0x3f]
    %v2382 = vadd.f32 %v2349, %v2366
    %v2383 = vadd.f32 %v2350, %v2367
    %v2384 = vadd.f32 %v2351, %v2368
    %v2385 = vadd.f32 %v2352, %v2369
    %v2386 = vadd.f32 %v2353, %v2370
    %v2387 = vadd.f32 %v2354, %v2371
    %v2388 = vadd.f32 %v2355, %v2372
    %v2389 = vadd.f32 %v2356, %v2373
    %v2390 = vadd.f32 %v2357, %v2374
    %v2391 = vadd.f32 %v2358, %v2375
    %v2392 = vadd.f32 %v2359, %v2376
    %v2393 = vadd.f32 %v2360, %v2377
    %v2394 = vadd.f32 %v2361, %v2378
    %v2395 = vadd.f32 %v2362, %v2379
    %v2396 = vadd.f32 %v2363, %v2380
    %v2397 = vadd.f32 %v2364, %v2381
    %s2398 = scalar_lea.vmem %s0, 208
    %v2399 = vld [vmem:[%s2398] sm:$0xff]
    %v2400 = vld [vmem:[%s2398 + $0x8] sm:$0x3f]
    %v2401 = vld [vmem:[%s2398 + $0xe0] sm:$0xff]
    %v2402 = vld [vmem:[%s2398 + $0xe8] sm:$0x3f]
    %v2403 = vld [vmem:[%s2398 + $0x1c0] sm:$0xff]
    %v2404 = vld [vmem:[%s2398 + $0x1c8] sm:$0x3f]
    %v2405 = vld [vmem:[%s2398 + $0x2a0] sm:$0xff]
    %v2406 = vld [vmem:[%s2398 + $0x2a8] sm:$0x3f]
    %v2407 = vld [vmem:[%s2398 + $0x380] sm:$0xff]
    %v2408 = vld [vmem:[%s2398 + $0x388] sm:$0x3f]
    %v2409 = vld [vmem:[%s2398 + $0x460] sm:$0xff]
    %v2410 = vld [vmem:[%s2398 + $0x468] sm:$0x3f]
    %v2411 = vld [vmem:[%s2398 + $0x540] sm:$0xff]
    %v2412 = vld [vmem:[%s2398 + $0x548] sm:$0x3f]
    %v2413 = vld [vmem:[%s2398 + $0x620] sm:$0xff]
    %v2414 = vld [vmem:[%s2398 + $0x628] sm:$0x3f]
    %v2415 = vadd.f32 %v2382, %v2399
    %v2416 = vadd.f32 %v2383, %v2400
    %v2417 = vadd.f32 %v2384, %v2401
    %v2418 = vadd.f32 %v2385, %v2402
    %v2419 = vadd.f32 %v2386, %v2403
    %v2420 = vadd.f32 %v2387, %v2404
    %v2421 = vadd.f32 %v2388, %v2405
    %v2422 = vadd.f32 %v2389, %v2406
    %v2423 = vadd.f32 %v2390, %v2407
    %v2424 = vadd.f32 %v2391, %v2408
    %v2425 = vadd.f32 %v2392, %v2409
    %v2426 = vadd.f32 %v2393, %v2410
    %v2427 = vadd.f32 %v2394, %v2411
    %v2428 = vadd.f32 %v2395, %v2412
    %v2429 = vadd.f32 %v2396, %v2413
    %v2430 = vadd.f32 %v2397, %v2414
    %v2439 = vrot.slane %v2415, 1
    %v2440 = vrot.slane %v2417, 1
    %v2441 = vrot.slane %v2419, 1
    %v2442 = vrot.slane %v2421, 1
    %v2443 = vrot.slane %v2423, 1
    %v2444 = vrot.slane %v2425, 1
    %v2445 = vrot.slane %v2427, 1
    %v2446 = vrot.slane %v2429, 1
    %v2455 = vadd.f32 %v2415, %v2439
    %v2456 = vadd.f32 %v2417, %v2440
    %v2457 = vadd.f32 %v2419, %v2441
    %v2458 = vadd.f32 %v2421, %v2442
    %v2459 = vadd.f32 %v2423, %v2443
    %v2460 = vadd.f32 %v2425, %v2444
    %v2461 = vadd.f32 %v2427, %v2445
    %v2462 = vadd.f32 %v2429, %v2446
    %v2463 = vrot.slane %v2415, 2
    %v2464 = vrot.slane %v2417, 2
    %v2465 = vrot.slane %v2419, 2
    %v2466 = vrot.slane %v2421, 2
    %v2467 = vrot.slane %v2423, 2
    %v2468 = vrot.slane %v2425, 2
    %v2469 = vrot.slane %v2427, 2
    %v2470 = vrot.slane %v2429, 2
    %v2479 = vadd.f32 %v2455, %v2463
    %v2480 = vadd.f32 %v2456, %v2464
    %v2481 = vadd.f32 %v2457, %v2465
    %v2482 = vadd.f32 %v2458, %v2466
    %v2483 = vadd.f32 %v2459, %v2467
    %v2484 = vadd.f32 %v2460, %v2468
    %v2485 = vadd.f32 %v2461, %v2469
    %v2486 = vadd.f32 %v2462, %v2470
    %v2487 = vrot.slane %v2415, 3
    %v2488 = vrot.slane %v2417, 3
    %v2489 = vrot.slane %v2419, 3
    %v2490 = vrot.slane %v2421, 3
    %v2491 = vrot.slane %v2423, 3
    %v2492 = vrot.slane %v2425, 3
    %v2493 = vrot.slane %v2427, 3
    %v2494 = vrot.slane %v2429, 3
    %v2503 = vadd.f32 %v2479, %v2487
    %v2504 = vadd.f32 %v2480, %v2488
    %v2505 = vadd.f32 %v2481, %v2489
    %v2506 = vadd.f32 %v2482, %v2490
    %v2507 = vadd.f32 %v2483, %v2491
    %v2508 = vadd.f32 %v2484, %v2492
    %v2509 = vadd.f32 %v2485, %v2493
    %v2510 = vadd.f32 %v2486, %v2494
    %v2511 = vrot.slane %v2415, 4
    %v2512 = vrot.slane %v2417, 4
    %v2513 = vrot.slane %v2419, 4
    %v2514 = vrot.slane %v2421, 4
    %v2515 = vrot.slane %v2423, 4
    %v2516 = vrot.slane %v2425, 4
    %v2517 = vrot.slane %v2427, 4
    %v2518 = vrot.slane %v2429, 4
    %v2527 = vadd.f32 %v2503, %v2511
    %v2528 = vadd.f32 %v2504, %v2512
    %v2529 = vadd.f32 %v2505, %v2513
    %v2530 = vadd.f32 %v2506, %v2514
    %v2531 = vadd.f32 %v2507, %v2515
    %v2532 = vadd.f32 %v2508, %v2516
    %v2533 = vadd.f32 %v2509, %v2517
    %v2534 = vadd.f32 %v2510, %v2518
    %v2535 = vmul.f32 %v2527, 0.04
    %v2536 = vmul.f32 %v2528, 0.04
    %v2537 = vmul.f32 %v2529, 0.04
    %v2538 = vmul.f32 %v2530, 0.04
    %v2539 = vmul.f32 %v2531, 0.04
    %v2540 = vmul.f32 %v2532, 0.04
    %v2541 = vmul.f32 %v2533, 0.04
    %v2542 = vmul.f32 %v2534, 0.04
    %v2543 = vpack.c.bf16 %v2535, %v2535
    %v2544 = vpack.c.bf16 %v2536, %v2536
    %v2545 = vpack.c.bf16 %v2537, %v2537
    %v2546 = vpack.c.bf16 %v2538, %v2538
    %v2547 = vpack.c.bf16 %v2539, %v2539
    %v2548 = vpack.c.bf16 %v2540, %v2540
    %v2549 = vpack.c.bf16 %v2541, %v2541
    %v2550 = vpack.c.bf16 %v2542, %v2542
    %v2559 = vunpack.c.l.b16 %v2543
    %v2560 = vunpack.c.l.b16 %v2544
    %v2561 = vunpack.c.l.b16 %v2545
    %v2562 = vunpack.c.l.b16 %v2546
    %v2563 = vunpack.c.l.b16 %v2547
    %v2564 = vunpack.c.l.b16 %v2548
    %v2565 = vunpack.c.l.b16 %v2549
    %v2566 = vunpack.c.l.b16 %v2550
    %v2567 = vrot.slane %v2560, 7
    %v2568 = vsel %vm397, %v2567, %v2559
    %v2569 = vrot.slane %v2561, 6
    %v2570 = vsel %vm400, %v2569, %v2568
    %v2571 = vrot.slane %v2562, 5
    %v2572 = vsel %vm403, %v2571, %v2570
    %v2573 = vrot.slane %v2563, 4
    %v2574 = vsel %vm406, %v2573, %v2572
    %v2575 = vrot.slane %v2564, 3
    %v2576 = vsel %vm409, %v2575, %v2574
    %v2577 = vrot.slane %v2565, 2
    %v2578 = vsel %vm412, %v2577, %v2576
    %v2579 = vrot.slane %v2566, 1
    %v2580 = vsel %vm415, %v2579, %v2578
    %v2581 = vpack.c.b16 %v2580, %v2580
    %v2583 = vsel %vm424, %v2581, 0
    %2585 = vmatprep.subr.bf16.mxu0 0
    %2586 = vmatpush1.bf16.msra.mxu0 0
    %2587 = vmatprep.subr.bf16.mxu0 0
    %2588 = vmatpush1.bf16.msra.mxu0 0
    %2589 = vmatprep.subr.bf16.mxu0 0
    %2590 = vmatpush1.bf16.msra.mxu0 0
    %2591 = vmatprep.subr.bf16.mxu0 0
    %2592 = vmatpush1.bf16.msra.mxu0 0
    %2593 = vmatprep.subr.bf16.mxu0 0
    %2594 = vmatpush1.bf16.msra.mxu0 0
    %2595 = vmatprep.subr.bf16.mxu0 0
    %2596 = vmatpush1.bf16.msra.mxu0 0
    %2597 = vmatprep.subr.bf16.mxu0 0
    %2598 = vmatpush1.bf16.msra.mxu0 0
    %2599 = vmatprep.subr.bf16.mxu0 0
    %2600 = vmatpush1.bf16.msra.mxu0 %v422
    %2601 = vmatprep.subr.bf16.mxu0 0
    %2602 = vmatpush2.bf16.msra.mxu0 0
    %2603 = vmatprep.subr.bf16.mxu0 0
    %2604 = vmatpush2.bf16.msra.mxu0 0
    %2605 = vmatprep.subr.bf16.mxu0 0
    %2606 = vmatpush2.bf16.msra.mxu0 0
    %2607 = vmatprep.subr.bf16.mxu0 0
    %2608 = vmatpush2.bf16.msra.mxu0 0
    %2609 = vmatprep.subr.bf16.mxu0 0
    %2610 = vmatpush2.bf16.msra.mxu0 0
    %2611 = vmatprep.subr.bf16.mxu0 0
    %2612 = vmatpush2.bf16.msra.mxu0 0
    %2613 = vmatprep.subr.bf16.mxu0 0
    %2614 = vmatpush2.bf16.msra.mxu0 0
    %2615 = vmatprep.subr.bf16.mxu0 0
    %2616 = vmatpush2.bf16.msra.mxu0 0
    %2617 = vmatprep.mubr.bf16.mxu0 0
    %2618 = vmatmul.mubr.bf16.gmra.mxu0 %v2583
    %v2619 = vpop.f32.mrf.mxu0
    %v2620 = vadd.f32 %v378, %v2619
    %v2621 = vpop.f32.mrf.mxu0
    %v2622 = vpop.f32.mrf.mxu0
    %v2623 = vpop.f32.mrf.mxu0
    %2624 = vdwg.mxu0
    %v2625 = vmax.f32 %v2620, 0.0
    %v2626 = vpack.c.bf16 %v2625, %v2625
    %2627 = vst [vmem:[#allocation2 + $0x30] sm:$0xf] %v2626
    %v2628 = vrot.slane %v2559, 3
    %v2629 = vrot.slane %v2560, 2
    %v2630 = vsel %vm397, %v2629, %v2628
    %v2631 = vrot.slane %v2561, 1
    %v2632 = vsel %vm400, %v2631, %v2630
    %v2633 = vsel %vm403, %v2562, %v2632
    %v2634 = vrot.slane %v2563, 7
    %v2635 = vsel %vm406, %v2634, %v2633
    %v2636 = vrot.slane %v2564, 6
    %v2637 = vsel %vm409, %v2636, %v2635
    %v2638 = vrot.slane %v2565, 5
    %v2639 = vsel %vm412, %v2638, %v2637
    %v2640 = vrot.slane %v2566, 4
    %v2641 = vsel %vm415, %v2640, %v2639
    %v2642 = vpack.c.b16 %v2641, %v2641
    %v2644 = vsel %vm424, %v2642, 0
    %2646 = vmatprep.subr.bf16.mxu0 0
    %2647 = vmatpush1.bf16.msra.mxu0 0
    %2648 = vmatprep.subr.bf16.mxu0 0
    %2649 = vmatpush1.bf16.msra.mxu0 0
    %2650 = vmatprep.subr.bf16.mxu0 0
    %2651 = vmatpush1.bf16.msra.mxu0 0
    %2652 = vmatprep.subr.bf16.mxu0 0
    %2653 = vmatpush1.bf16.msra.mxu0 0
    %2654 = vmatprep.subr.bf16.mxu0 0
    %2655 = vmatpush1.bf16.msra.mxu0 0
    %2656 = vmatprep.subr.bf16.mxu0 0
    %2657 = vmatpush1.bf16.msra.mxu0 0
    %2658 = vmatprep.subr.bf16.mxu0 0
    %2659 = vmatpush1.bf16.msra.mxu0 0
    %2660 = vmatprep.subr.bf16.mxu0 0
    %2661 = vmatpush1.bf16.msra.mxu0 %v422
    %2662 = vmatprep.subr.bf16.mxu0 0
    %2663 = vmatpush2.bf16.msra.mxu0 0
    %2664 = vmatprep.subr.bf16.mxu0 0
    %2665 = vmatpush2.bf16.msra.mxu0 0
    %2666 = vmatprep.subr.bf16.mxu0 0
    %2667 = vmatpush2.bf16.msra.mxu0 0
    %2668 = vmatprep.subr.bf16.mxu0 0
    %2669 = vmatpush2.bf16.msra.mxu0 0
    %2670 = vmatprep.subr.bf16.mxu0 0
    %2671 = vmatpush2.bf16.msra.mxu0 0
    %2672 = vmatprep.subr.bf16.mxu0 0
    %2673 = vmatpush2.bf16.msra.mxu0 0
    %2674 = vmatprep.subr.bf16.mxu0 0
    %2675 = vmatpush2.bf16.msra.mxu0 0
    %2676 = vmatprep.subr.bf16.mxu0 0
    %2677 = vmatpush2.bf16.msra.mxu0 0
    %2678 = vmatprep.mubr.bf16.mxu0 0
    %2679 = vmatmul.mubr.bf16.gmra.mxu0 %v2644
    %v2680 = vpop.f32.mrf.mxu0
    %v2681 = vadd.f32 %v378, %v2680
    %v2682 = vpop.f32.mrf.mxu0
    %v2683 = vpop.f32.mrf.mxu0
    %v2684 = vpop.f32.mrf.mxu0
    %2685 = vdwg.mxu0
    %v2686 = vmax.f32 %v2681, 0.0
    %v2687 = vpack.c.bf16 %v2686, %v2686
    %2688 = vst [vmem:[#allocation2 + $0x34] sm:$0xf] %v2687
    %v2697 = vrot.slane %v2416, 2
    %v2698 = vrot.slane %v2418, 2
    %v2699 = vrot.slane %v2420, 2
    %v2700 = vrot.slane %v2422, 2
    %v2701 = vrot.slane %v2424, 2
    %v2702 = vrot.slane %v2426, 2
    %v2703 = vrot.slane %v2428, 2
    %v2704 = vrot.slane %v2430, 2
    %v2713 = vadd.f32 %v2455, %v2697
    %v2714 = vadd.f32 %v2456, %v2698
    %v2715 = vadd.f32 %v2457, %v2699
    %v2716 = vadd.f32 %v2458, %v2700
    %v2717 = vadd.f32 %v2459, %v2701
    %v2718 = vadd.f32 %v2460, %v2702
    %v2719 = vadd.f32 %v2461, %v2703
    %v2720 = vadd.f32 %v2462, %v2704
    %v2721 = vrot.slane %v2416, 3
    %v2722 = vrot.slane %v2418, 3
    %v2723 = vrot.slane %v2420, 3
    %v2724 = vrot.slane %v2422, 3
    %v2725 = vrot.slane %v2424, 3
    %v2726 = vrot.slane %v2426, 3
    %v2727 = vrot.slane %v2428, 3
    %v2728 = vrot.slane %v2430, 3
    %v2737 = vadd.f32 %v2713, %v2721
    %v2738 = vadd.f32 %v2714, %v2722
    %v2739 = vadd.f32 %v2715, %v2723
    %v2740 = vadd.f32 %v2716, %v2724
    %v2741 = vadd.f32 %v2717, %v2725
    %v2742 = vadd.f32 %v2718, %v2726
    %v2743 = vadd.f32 %v2719, %v2727
    %v2744 = vadd.f32 %v2720, %v2728
    %v2745 = vrot.slane %v2416, 4
    %v2746 = vrot.slane %v2418, 4
    %v2747 = vrot.slane %v2420, 4
    %v2748 = vrot.slane %v2422, 4
    %v2749 = vrot.slane %v2424, 4
    %v2750 = vrot.slane %v2426, 4
    %v2751 = vrot.slane %v2428, 4
    %v2752 = vrot.slane %v2430, 4
    %v2761 = vadd.f32 %v2737, %v2745
    %v2762 = vadd.f32 %v2738, %v2746
    %v2763 = vadd.f32 %v2739, %v2747
    %v2764 = vadd.f32 %v2740, %v2748
    %v2765 = vadd.f32 %v2741, %v2749
    %v2766 = vadd.f32 %v2742, %v2750
    %v2767 = vadd.f32 %v2743, %v2751
    %v2768 = vadd.f32 %v2744, %v2752
    %v2769 = vmul.f32 %v2761, 0.04
    %v2770 = vmul.f32 %v2762, 0.04
    %v2771 = vmul.f32 %v2763, 0.04
    %v2772 = vmul.f32 %v2764, 0.04
    %v2773 = vmul.f32 %v2765, 0.04
    %v2774 = vmul.f32 %v2766, 0.04
    %v2775 = vmul.f32 %v2767, 0.04
    %v2776 = vmul.f32 %v2768, 0.04
    %v2777 = vpack.c.bf16 %v2769, %v2769
    %v2778 = vpack.c.bf16 %v2770, %v2770
    %v2779 = vpack.c.bf16 %v2771, %v2771
    %v2780 = vpack.c.bf16 %v2772, %v2772
    %v2781 = vpack.c.bf16 %v2773, %v2773
    %v2782 = vpack.c.bf16 %v2774, %v2774
    %v2783 = vpack.c.bf16 %v2775, %v2775
    %v2784 = vpack.c.bf16 %v2776, %v2776
    %v2793 = vunpack.c.l.b16 %v2777
    %v2794 = vunpack.c.l.b16 %v2778
    %v2795 = vunpack.c.l.b16 %v2779
    %v2796 = vunpack.c.l.b16 %v2780
    %v2797 = vunpack.c.l.b16 %v2781
    %v2798 = vunpack.c.l.b16 %v2782
    %v2799 = vunpack.c.l.b16 %v2783
    %v2800 = vunpack.c.l.b16 %v2784
    %v2801 = vrot.slane %v2793, 6
    %v2802 = vrot.slane %v2794, 5
    %v2803 = vsel %vm397, %v2802, %v2801
    %v2804 = vrot.slane %v2795, 4
    %v2805 = vsel %vm400, %v2804, %v2803
    %v2806 = vrot.slane %v2796, 3
    %v2807 = vsel %vm403, %v2806, %v2805
    %v2808 = vrot.slane %v2797, 2
    %v2809 = vsel %vm406, %v2808, %v2807
    %v2810 = vrot.slane %v2798, 1
    %v2811 = vsel %vm409, %v2810, %v2809
    %v2812 = vsel %vm412, %v2799, %v2811
    %v2813 = vrot.slane %v2800, 7
    %v2814 = vsel %vm415, %v2813, %v2812
    %v2815 = vpack.c.b16 %v2814, %v2814
    %v2817 = vsel %vm424, %v2815, 0
    %2819 = vmatprep.subr.bf16.mxu0 0
    %2820 = vmatpush1.bf16.msra.mxu0 0
    %2821 = vmatprep.subr.bf16.mxu0 0
    %2822 = vmatpush1.bf16.msra.mxu0 0
    %2823 = vmatprep.subr.bf16.mxu0 0
    %2824 = vmatpush1.bf16.msra.mxu0 0
    %2825 = vmatprep.subr.bf16.mxu0 0
    %2826 = vmatpush1.bf16.msra.mxu0 0
    %2827 = vmatprep.subr.bf16.mxu0 0
    %2828 = vmatpush1.bf16.msra.mxu0 0
    %2829 = vmatprep.subr.bf16.mxu0 0
    %2830 = vmatpush1.bf16.msra.mxu0 0
    %2831 = vmatprep.subr.bf16.mxu0 0
    %2832 = vmatpush1.bf16.msra.mxu0 0
    %2833 = vmatprep.subr.bf16.mxu0 0
    %2834 = vmatpush1.bf16.msra.mxu0 %v422
    %2835 = vmatprep.subr.bf16.mxu0 0
    %2836 = vmatpush2.bf16.msra.mxu0 0
    %2837 = vmatprep.subr.bf16.mxu0 0
    %2838 = vmatpush2.bf16.msra.mxu0 0
    %2839 = vmatprep.subr.bf16.mxu0 0
    %2840 = vmatpush2.bf16.msra.mxu0 0
    %2841 = vmatprep.subr.bf16.mxu0 0
    %2842 = vmatpush2.bf16.msra.mxu0 0
    %2843 = vmatprep.subr.bf16.mxu0 0
    %2844 = vmatpush2.bf16.msra.mxu0 0
    %2845 = vmatprep.subr.bf16.mxu0 0
    %2846 = vmatpush2.bf16.msra.mxu0 0
    %2847 = vmatprep.subr.bf16.mxu0 0
    %2848 = vmatpush2.bf16.msra.mxu0 0
    %2849 = vmatprep.subr.bf16.mxu0 0
    %2850 = vmatpush2.bf16.msra.mxu0 0
    %2851 = vmatprep.mubr.bf16.mxu0 0
    %2852 = vmatmul.mubr.bf16.gmra.mxu0 %v2817
    %v2853 = vpop.f32.mrf.mxu0
    %v2854 = vadd.f32 %v378, %v2853
    %v2855 = vpop.f32.mrf.mxu0
    %v2856 = vpop.f32.mrf.mxu0
    %v2857 = vpop.f32.mrf.mxu0
    %2858 = vdwg.mxu0
    %v2859 = vmax.f32 %v2854, 0.0
    %v2860 = vpack.c.bf16 %v2859, %v2859
    %2861 = vst [vmem:[#allocation2 + $0x38] sm:$0xf] %v2860
    %v2862 = vrot.slane %v2416, 1
    %v2863 = vrot.slane %v2418, 1
    %v2864 = vrot.slane %v2420, 1
    %v2865 = vrot.slane %v2422, 1
    %v2866 = vrot.slane %v2424, 1
    %v2867 = vrot.slane %v2426, 1
    %v2868 = vrot.slane %v2428, 1
    %v2869 = vrot.slane %v2430, 1
    %v2878 = vadd.f32 %v2416, %v2862
    %v2879 = vadd.f32 %v2418, %v2863
    %v2880 = vadd.f32 %v2420, %v2864
    %v2881 = vadd.f32 %v2422, %v2865
    %v2882 = vadd.f32 %v2424, %v2866
    %v2883 = vadd.f32 %v2426, %v2867
    %v2884 = vadd.f32 %v2428, %v2868
    %v2885 = vadd.f32 %v2430, %v2869
    %v2886 = vadd.f32 %v2878, %v2697
    %v2887 = vadd.f32 %v2879, %v2698
    %v2888 = vadd.f32 %v2880, %v2699
    %v2889 = vadd.f32 %v2881, %v2700
    %v2890 = vadd.f32 %v2882, %v2701
    %v2891 = vadd.f32 %v2883, %v2702
    %v2892 = vadd.f32 %v2884, %v2703
    %v2893 = vadd.f32 %v2885, %v2704
    %v2894 = vadd.f32 %v2886, %v2721
    %v2895 = vadd.f32 %v2887, %v2722
    %v2896 = vadd.f32 %v2888, %v2723
    %v2897 = vadd.f32 %v2889, %v2724
    %v2898 = vadd.f32 %v2890, %v2725
    %v2899 = vadd.f32 %v2891, %v2726
    %v2900 = vadd.f32 %v2892, %v2727
    %v2901 = vadd.f32 %v2893, %v2728
    %v2902 = vadd.f32 %v2894, %v2745
    %v2903 = vadd.f32 %v2895, %v2746
    %v2904 = vadd.f32 %v2896, %v2747
    %v2905 = vadd.f32 %v2897, %v2748
    %v2906 = vadd.f32 %v2898, %v2749
    %v2907 = vadd.f32 %v2899, %v2750
    %v2908 = vadd.f32 %v2900, %v2751
    %v2909 = vadd.f32 %v2901, %v2752
    %v2910 = vmul.f32 %v2902, 0.04
    %v2911 = vmul.f32 %v2903, 0.04
    %v2912 = vmul.f32 %v2904, 0.04
    %v2913 = vmul.f32 %v2905, 0.04
    %v2914 = vmul.f32 %v2906, 0.04
    %v2915 = vmul.f32 %v2907, 0.04
    %v2916 = vmul.f32 %v2908, 0.04
    %v2917 = vmul.f32 %v2909, 0.04
    %v2918 = vpack.c.bf16 %v2910, %v2910
    %v2919 = vpack.c.bf16 %v2911, %v2911
    %v2920 = vpack.c.bf16 %v2912, %v2912
    %v2921 = vpack.c.bf16 %v2913, %v2913
    %v2922 = vpack.c.bf16 %v2914, %v2914
    %v2923 = vpack.c.bf16 %v2915, %v2915
    %v2924 = vpack.c.bf16 %v2916, %v2916
    %v2925 = vpack.c.bf16 %v2917, %v2917
    %v2934 = vunpack.c.l.b16 %v2918
    %v2935 = vunpack.c.l.b16 %v2919
    %v2936 = vunpack.c.l.b16 %v2920
    %v2937 = vunpack.c.l.b16 %v2921
    %v2938 = vunpack.c.l.b16 %v2922
    %v2939 = vunpack.c.l.b16 %v2923
    %v2940 = vunpack.c.l.b16 %v2924
    %v2941 = vunpack.c.l.b16 %v2925
    %v2942 = vrot.slane %v2934, 1
    %v2943 = vsel %vm397, %v2935, %v2942
    %v2944 = vrot.slane %v2936, 7
    %v2945 = vsel %vm400, %v2944, %v2943
    %v2946 = vrot.slane %v2937, 6
    %v2947 = vsel %vm403, %v2946, %v2945
    %v2948 = vrot.slane %v2938, 5
    %v2949 = vsel %vm406, %v2948, %v2947
    %v2950 = vrot.slane %v2939, 4
    %v2951 = vsel %vm409, %v2950, %v2949
    %v2952 = vrot.slane %v2940, 3
    %v2953 = vsel %vm412, %v2952, %v2951
    %v2954 = vrot.slane %v2941, 2
    %v2955 = vsel %vm415, %v2954, %v2953
    %v2956 = vpack.c.b16 %v2955, %v2955
    %v2958 = vsel %vm424, %v2956, 0
    %2960 = vmatprep.subr.bf16.mxu0 0
    %2961 = vmatpush1.bf16.msra.mxu0 0
    %2962 = vmatprep.subr.bf16.mxu0 0
    %2963 = vmatpush1.bf16.msra.mxu0 0
    %2964 = vmatprep.subr.bf16.mxu0 0
    %2965 = vmatpush1.bf16.msra.mxu0 0
    %2966 = vmatprep.subr.bf16.mxu0 0
    %2967 = vmatpush1.bf16.msra.mxu0 0
    %2968 = vmatprep.subr.bf16.mxu0 0
    %2969 = vmatpush1.bf16.msra.mxu0 0
    %2970 = vmatprep.subr.bf16.mxu0 0
    %2971 = vmatpush1.bf16.msra.mxu0 0
    %2972 = vmatprep.subr.bf16.mxu0 0
    %2973 = vmatpush1.bf16.msra.mxu0 0
    %2974 = vmatprep.subr.bf16.mxu0 0
    %2975 = vmatpush1.bf16.msra.mxu0 %v422
    %2976 = vmatprep.subr.bf16.mxu0 0
    %2977 = vmatpush2.bf16.msra.mxu0 0
    %2978 = vmatprep.subr.bf16.mxu0 0
    %2979 = vmatpush2.bf16.msra.mxu0 0
    %2980 = vmatprep.subr.bf16.mxu0 0
    %2981 = vmatpush2.bf16.msra.mxu0 0
    %2982 = vmatprep.subr.bf16.mxu0 0
    %2983 = vmatpush2.bf16.msra.mxu0 0
    %2984 = vmatprep.subr.bf16.mxu0 0
    %2985 = vmatpush2.bf16.msra.mxu0 0
    %2986 = vmatprep.subr.bf16.mxu0 0
    %2987 = vmatpush2.bf16.msra.mxu0 0
    %2988 = vmatprep.subr.bf16.mxu0 0
    %2989 = vmatpush2.bf16.msra.mxu0 0
    %2990 = vmatprep.subr.bf16.mxu0 0
    %2991 = vmatpush2.bf16.msra.mxu0 0
    %2992 = vmatprep.mubr.bf16.mxu0 0
    %2993 = vmatmul.mubr.bf16.gmra.mxu0 %v2958
    %v2994 = vpop.f32.mrf.mxu0
    %v2995 = vadd.f32 %v378, %v2994
    %v2996 = vpop.f32.mrf.mxu0
    %v2997 = vpop.f32.mrf.mxu0
    %v2998 = vpop.f32.mrf.mxu0
    %2999 = vdwg.mxu0
    %v3000 = vmax.f32 %v2995, 0.0
    %v3001 = vpack.c.bf16 %v3000, %v3000
    %3002 = vst [vmem:[#allocation2 + $0x3c] sm:$0xf] %v3001
    %v3003 = vld [vmem:[#allocation2] sm:$0xff]
    %v3004 = vld [vmem:[#allocation2 + $0x8] sm:$0xff]
    %v3005 = vld [vmem:[#allocation2 + $0x10] sm:$0xff]
    %v3006 = vld [vmem:[#allocation2 + $0x18] sm:$0xff]
    %v3007 = vld [vmem:[#allocation2 + $0x20] sm:$0xff]
    %v3008 = vld [vmem:[#allocation2 + $0x28] sm:$0xff]
    %v3009 = vld [vmem:[#allocation2 + $0x30] sm:$0xff]
    %v3010 = vld [vmem:[#allocation2 + $0x38] sm:$0xff]
    %v3011 = vld [vmem:[#allocation7] sm:$0xff]
    %v3012 = vld [vmem:[#allocation7 + $0x8] sm:$0xff]
    %v3013 = vld [vmem:[#allocation7 + $0x10] sm:$0xff]
    %v3014 = vld [vmem:[#allocation7 + $0x18] sm:$0xff]
    %v3015 = vld [vmem:[#allocation7 + $0x20] sm:$0xff]
    %v3016 = vld [vmem:[#allocation7 + $0x28] sm:$0xff]
    %v3017 = vld [vmem:[#allocation7 + $0x30] sm:$0xff]
    %v3018 = vld [vmem:[#allocation7 + $0x38] sm:$0xff]
    %v3019 = vld [vmem:[#allocation7 + $0x40] sm:$0xff]
    %v3020 = vld [vmem:[#allocation7 + $0x48] sm:$0xff]
    %v3021 = vld [vmem:[#allocation7 + $0x50] sm:$0xff]
    %v3022 = vld [vmem:[#allocation7 + $0x58] sm:$0xff]
    %v3023 = vld [vmem:[#allocation7 + $0x60] sm:$0xff]
    %v3024 = vld [vmem:[#allocation7 + $0x68] sm:$0xff]
    %v3025 = vld [vmem:[#allocation7 + $0x70] sm:$0xff]
    %v3026 = vld [vmem:[#allocation7 + $0x78] sm:$0xff]
    %v3027 = vld [vmem:[#allocation7 + $0x80] sm:$0xff]
    %v3028 = vld [vmem:[#allocation7 + $0x88] sm:$0xff]
    %v3029 = vld [vmem:[#allocation7 + $0x90] sm:$0xff]
    %v3030 = vld [vmem:[#allocation7 + $0x98] sm:$0xff]
    %v3031 = vld [vmem:[#allocation7 + $0xa0] sm:$0xff]
    %v3032 = vld [vmem:[#allocation7 + $0xa8] sm:$0xff]
    %v3033 = vld [vmem:[#allocation7 + $0xb0] sm:$0xff]
    %v3034 = vld [vmem:[#allocation7 + $0xb8] sm:$0xff]
    %v3035 = vld [vmem:[#allocation7 + $0xc0] sm:$0xff]
    %v3036 = vld [vmem:[#allocation7 + $0xc8] sm:$0xff]
    %v3037 = vld [vmem:[#allocation7 + $0xd0] sm:$0xff]
    %v3038 = vld [vmem:[#allocation7 + $0xd8] sm:$0xff]
    %v3039 = vld [vmem:[#allocation7 + $0xe0] sm:$0xff]
    %v3040 = vld [vmem:[#allocation7 + $0xe8] sm:$0xff]
    %v3041 = vld [vmem:[#allocation7 + $0xf0] sm:$0xff]
    %v3042 = vld [vmem:[#allocation7 + $0xf8] sm:$0xff]
    %v3043 = vld [vmem:[#allocation7 + $0x100] sm:$0xff]
    %v3044 = vld [vmem:[#allocation7 + $0x108] sm:$0xff]
    %v3045 = vld [vmem:[#allocation7 + $0x110] sm:$0xff]
    %v3046 = vld [vmem:[#allocation7 + $0x118] sm:$0xff]
    %v3047 = vld [vmem:[#allocation7 + $0x120] sm:$0xff]
    %v3048 = vld [vmem:[#allocation7 + $0x128] sm:$0xff]
    %v3049 = vld [vmem:[#allocation7 + $0x130] sm:$0xff]
    %v3050 = vld [vmem:[#allocation7 + $0x138] sm:$0xff]
    %v3051 = vld [vmem:[#allocation7 + $0x140] sm:$0xff]
    %v3052 = vld [vmem:[#allocation7 + $0x148] sm:$0xff]
    %v3053 = vld [vmem:[#allocation7 + $0x150] sm:$0xff]
    %v3054 = vld [vmem:[#allocation7 + $0x158] sm:$0xff]
    %v3055 = vld [vmem:[#allocation7 + $0x160] sm:$0xff]
    %v3056 = vld [vmem:[#allocation7 + $0x168] sm:$0xff]
    %v3057 = vld [vmem:[#allocation7 + $0x170] sm:$0xff]
    %v3058 = vld [vmem:[#allocation7 + $0x178] sm:$0xff]
    %v3059 = vld [vmem:[#allocation7 + $0x180] sm:$0xff]
    %v3060 = vld [vmem:[#allocation7 + $0x188] sm:$0xff]
    %v3061 = vld [vmem:[#allocation7 + $0x190] sm:$0xff]
    %v3062 = vld [vmem:[#allocation7 + $0x198] sm:$0xff]
    %v3063 = vld [vmem:[#allocation7 + $0x1a0] sm:$0xff]
    %v3064 = vld [vmem:[#allocation7 + $0x1a8] sm:$0xff]
    %v3065 = vld [vmem:[#allocation7 + $0x1b0] sm:$0xff]
    %v3066 = vld [vmem:[#allocation7 + $0x1b8] sm:$0xff]
    %v3067 = vld [vmem:[#allocation7 + $0x1c0] sm:$0xff]
    %v3068 = vld [vmem:[#allocation7 + $0x1c8] sm:$0xff]
    %v3069 = vld [vmem:[#allocation7 + $0x1d0] sm:$0xff]
    %v3070 = vld [vmem:[#allocation7 + $0x1d8] sm:$0xff]
    %v3071 = vld [vmem:[#allocation7 + $0x1e0] sm:$0xff]
    %v3072 = vld [vmem:[#allocation7 + $0x1e8] sm:$0xff]
    %v3073 = vld [vmem:[#allocation7 + $0x1f0] sm:$0xff]
    %v3074 = vld [vmem:[#allocation7 + $0x1f8] sm:$0xff]
    %v3075 = vld [vmem:[#allocation7 + $0x200] sm:$0xff]
    %v3076 = vld [vmem:[#allocation7 + $0x208] sm:$0xff]
    %v3077 = vld [vmem:[#allocation7 + $0x210] sm:$0xff]
    %v3078 = vld [vmem:[#allocation7 + $0x218] sm:$0xff]
    %v3079 = vld [vmem:[#allocation7 + $0x220] sm:$0xff]
    %v3080 = vld [vmem:[#allocation7 + $0x228] sm:$0xff]
    %v3081 = vld [vmem:[#allocation7 + $0x230] sm:$0xff]
    %v3082 = vld [vmem:[#allocation7 + $0x238] sm:$0xff]
    %v3083 = vld [vmem:[#allocation7 + $0x240] sm:$0xff]
    %v3084 = vld [vmem:[#allocation7 + $0x248] sm:$0xff]
    %v3085 = vld [vmem:[#allocation7 + $0x250] sm:$0xff]
    %v3086 = vld [vmem:[#allocation7 + $0x258] sm:$0xff]
    %v3087 = vld [vmem:[#allocation7 + $0x260] sm:$0xff]
    %v3088 = vld [vmem:[#allocation7 + $0x268] sm:$0xff]
    %v3089 = vld [vmem:[#allocation7 + $0x270] sm:$0xff]
    %v3090 = vld [vmem:[#allocation7 + $0x278] sm:$0xff]
    %v3091 = vld [vmem:[#allocation7 + $0x280] sm:$0xff]
    %v3092 = vld [vmem:[#allocation7 + $0x288] sm:$0xff]
    %v3093 = vld [vmem:[#allocation7 + $0x290] sm:$0xff]
    %v3094 = vld [vmem:[#allocation7 + $0x298] sm:$0xff]
    %v3095 = vld [vmem:[#allocation7 + $0x2a0] sm:$0xff]
    %v3096 = vld [vmem:[#allocation7 + $0x2a8] sm:$0xff]
    %v3097 = vld [vmem:[#allocation7 + $0x2b0] sm:$0xff]
    %v3098 = vld [vmem:[#allocation7 + $0x2b8] sm:$0xff]
    %v3099 = vld [vmem:[#allocation7 + $0x2c0] sm:$0xff]
    %v3100 = vld [vmem:[#allocation7 + $0x2c8] sm:$0xff]
    %v3101 = vld [vmem:[#allocation7 + $0x2d0] sm:$0xff]
    %v3102 = vld [vmem:[#allocation7 + $0x2d8] sm:$0xff]
    %v3103 = vld [vmem:[#allocation7 + $0x2e0] sm:$0xff]
    %v3104 = vld [vmem:[#allocation7 + $0x2e8] sm:$0xff]
    %v3105 = vld [vmem:[#allocation7 + $0x2f0] sm:$0xff]
    %v3106 = vld [vmem:[#allocation7 + $0x2f8] sm:$0xff]
    %v3107 = vld [vmem:[#allocation7 + $0x300] sm:$0xff]
    %v3108 = vld [vmem:[#allocation7 + $0x308] sm:$0xff]
    %v3109 = vld [vmem:[#allocation7 + $0x310] sm:$0xff]
    %v3110 = vld [vmem:[#allocation7 + $0x318] sm:$0xff]
    %v3111 = vld [vmem:[#allocation7 + $0x320] sm:$0xff]
    %v3112 = vld [vmem:[#allocation7 + $0x328] sm:$0xff]
    %v3113 = vld [vmem:[#allocation7 + $0x330] sm:$0xff]
    %v3114 = vld [vmem:[#allocation7 + $0x338] sm:$0xff]
    %v3115 = vld [vmem:[#allocation7 + $0x340] sm:$0xff]
    %v3116 = vld [vmem:[#allocation7 + $0x348] sm:$0xff]
    %v3117 = vld [vmem:[#allocation7 + $0x350] sm:$0xff]
    %v3118 = vld [vmem:[#allocation7 + $0x358] sm:$0xff]
    %v3119 = vld [vmem:[#allocation7 + $0x360] sm:$0xff]
    %v3120 = vld [vmem:[#allocation7 + $0x368] sm:$0xff]
    %v3121 = vld [vmem:[#allocation7 + $0x370] sm:$0xff]
    %v3122 = vld [vmem:[#allocation7 + $0x378] sm:$0xff]
    %v3123 = vld [vmem:[#allocation7 + $0x380] sm:$0xff]
    %v3124 = vld [vmem:[#allocation7 + $0x388] sm:$0xff]
    %v3125 = vld [vmem:[#allocation7 + $0x390] sm:$0xff]
    %v3126 = vld [vmem:[#allocation7 + $0x398] sm:$0xff]
    %v3127 = vld [vmem:[#allocation7 + $0x3a0] sm:$0xff]
    %v3128 = vld [vmem:[#allocation7 + $0x3a8] sm:$0xff]
    %v3129 = vld [vmem:[#allocation7 + $0x3b0] sm:$0xff]
    %v3130 = vld [vmem:[#allocation7 + $0x3b8] sm:$0xff]
    %v3131 = vld [vmem:[#allocation7 + $0x3c0] sm:$0xff]
    %v3132 = vld [vmem:[#allocation7 + $0x3c8] sm:$0xff]
    %v3133 = vld [vmem:[#allocation7 + $0x3d0] sm:$0xff]
    %v3134 = vld [vmem:[#allocation7 + $0x3d8] sm:$0xff]
    %v3135 = vld [vmem:[#allocation7 + $0x3e0] sm:$0xff]
    %v3136 = vld [vmem:[#allocation7 + $0x3e8] sm:$0xff]
    %v3137 = vld [vmem:[#allocation7 + $0x3f0] sm:$0xff]
    %v3138 = vld [vmem:[#allocation7 + $0x3f8] sm:$0xff]
    %v3139 = vld [vmem:[#allocation7 + $0x400] sm:$0xff]
    %v3140 = vld [vmem:[#allocation7 + $0x408] sm:$0xff]
    %v3141 = vld [vmem:[#allocation7 + $0x410] sm:$0xff]
    %v3142 = vld [vmem:[#allocation7 + $0x418] sm:$0xff]
    %v3143 = vld [vmem:[#allocation7 + $0x420] sm:$0xff]
    %v3144 = vld [vmem:[#allocation7 + $0x428] sm:$0xff]
    %v3145 = vld [vmem:[#allocation7 + $0x430] sm:$0xff]
    %v3146 = vld [vmem:[#allocation7 + $0x438] sm:$0xff]
    %v3147 = vld [vmem:[#allocation7 + $0x440] sm:$0xff]
    %v3148 = vld [vmem:[#allocation7 + $0x448] sm:$0xff]
    %v3149 = vld [vmem:[#allocation7 + $0x450] sm:$0xff]
    %v3150 = vld [vmem:[#allocation7 + $0x458] sm:$0xff]
    %v3151 = vld [vmem:[#allocation7 + $0x460] sm:$0xff]
    %v3152 = vld [vmem:[#allocation7 + $0x468] sm:$0xff]
    %v3153 = vld [vmem:[#allocation7 + $0x470] sm:$0xff]
    %v3154 = vld [vmem:[#allocation7 + $0x478] sm:$0xff]
    %v3155 = vld [vmem:[#allocation7 + $0x480] sm:$0xff]
    %v3156 = vld [vmem:[#allocation7 + $0x488] sm:$0xff]
    %v3157 = vld [vmem:[#allocation7 + $0x490] sm:$0xff]
    %v3158 = vld [vmem:[#allocation7 + $0x498] sm:$0xff]
    %v3159 = vld [vmem:[#allocation7 + $0x4a0] sm:$0xff]
    %v3160 = vld [vmem:[#allocation7 + $0x4a8] sm:$0xff]
    %v3161 = vld [vmem:[#allocation7 + $0x4b0] sm:$0xff]
    %v3162 = vld [vmem:[#allocation7 + $0x4b8] sm:$0xff]
    %v3163 = vld [vmem:[#allocation7 + $0x4c0] sm:$0xff]
    %v3164 = vld [vmem:[#allocation7 + $0x4c8] sm:$0xff]
    %v3165 = vld [vmem:[#allocation7 + $0x4d0] sm:$0xff]
    %v3166 = vld [vmem:[#allocation7 + $0x4d8] sm:$0xff]
    %v3167 = vld [vmem:[#allocation7 + $0x4e0] sm:$0xff]
    %v3168 = vld [vmem:[#allocation7 + $0x4e8] sm:$0xff]
    %v3169 = vld [vmem:[#allocation7 + $0x4f0] sm:$0xff]
    %v3170 = vld [vmem:[#allocation7 + $0x4f8] sm:$0xff]
    %v3171 = vld [vmem:[#allocation7 + $0x500] sm:$0xff]
    %v3172 = vld [vmem:[#allocation7 + $0x508] sm:$0xff]
    %v3173 = vld [vmem:[#allocation7 + $0x510] sm:$0xff]
    %v3174 = vld [vmem:[#allocation7 + $0x518] sm:$0xff]
    %v3175 = vld [vmem:[#allocation7 + $0x520] sm:$0xff]
    %v3176 = vld [vmem:[#allocation7 + $0x528] sm:$0xff]
    %v3177 = vld [vmem:[#allocation7 + $0x530] sm:$0xff]
    %v3178 = vld [vmem:[#allocation7 + $0x538] sm:$0xff]
    %v3179 = vld [vmem:[#allocation7 + $0x540] sm:$0xff]
    %v3180 = vld [vmem:[#allocation7 + $0x548] sm:$0xff]
    %v3181 = vld [vmem:[#allocation7 + $0x550] sm:$0xff]
    %v3182 = vld [vmem:[#allocation7 + $0x558] sm:$0xff]
    %v3183 = vld [vmem:[#allocation7 + $0x560] sm:$0xff]
    %v3184 = vld [vmem:[#allocation7 + $0x568] sm:$0xff]
    %v3185 = vld [vmem:[#allocation7 + $0x570] sm:$0xff]
    %v3186 = vld [vmem:[#allocation7 + $0x578] sm:$0xff]
    %v3187 = vld [vmem:[#allocation7 + $0x580] sm:$0xff]
    %v3188 = vld [vmem:[#allocation7 + $0x588] sm:$0xff]
    %v3189 = vld [vmem:[#allocation7 + $0x590] sm:$0xff]
    %v3190 = vld [vmem:[#allocation7 + $0x598] sm:$0xff]
    %v3191 = vld [vmem:[#allocation7 + $0x5a0] sm:$0xff]
    %v3192 = vld [vmem:[#allocation7 + $0x5a8] sm:$0xff]
    %v3193 = vld [vmem:[#allocation7 + $0x5b0] sm:$0xff]
    %v3194 = vld [vmem:[#allocation7 + $0x5b8] sm:$0xff]
    %v3195 = vld [vmem:[#allocation7 + $0x5c0] sm:$0xff]
    %v3196 = vld [vmem:[#allocation7 + $0x5c8] sm:$0xff]
    %v3197 = vld [vmem:[#allocation7 + $0x5d0] sm:$0xff]
    %v3198 = vld [vmem:[#allocation7 + $0x5d8] sm:$0xff]
    %v3199 = vld [vmem:[#allocation7 + $0x5e0] sm:$0xff]
    %v3200 = vld [vmem:[#allocation7 + $0x5e8] sm:$0xff]
    %v3201 = vld [vmem:[#allocation7 + $0x5f0] sm:$0xff]
    %v3202 = vld [vmem:[#allocation7 + $0x5f8] sm:$0xff]
    %v3203 = vld [vmem:[#allocation7 + $0x600] sm:$0xff]
    %v3204 = vld [vmem:[#allocation7 + $0x608] sm:$0xff]
    %v3205 = vld [vmem:[#allocation7 + $0x610] sm:$0xff]
    %v3206 = vld [vmem:[#allocation7 + $0x618] sm:$0xff]
    %v3207 = vld [vmem:[#allocation7 + $0x620] sm:$0xff]
    %v3208 = vld [vmem:[#allocation7 + $0x628] sm:$0xff]
    %v3209 = vld [vmem:[#allocation7 + $0x630] sm:$0xff]
    %v3210 = vld [vmem:[#allocation7 + $0x638] sm:$0xff]
    %v3211 = vld [vmem:[#allocation7 + $0x640] sm:$0xff]
    %v3212 = vld [vmem:[#allocation7 + $0x648] sm:$0xff]
    %v3213 = vld [vmem:[#allocation7 + $0x650] sm:$0xff]
    %v3214 = vld [vmem:[#allocation7 + $0x658] sm:$0xff]
    %v3215 = vld [vmem:[#allocation7 + $0x660] sm:$0xff]
    %v3216 = vld [vmem:[#allocation7 + $0x668] sm:$0xff]
    %v3217 = vld [vmem:[#allocation7 + $0x670] sm:$0xff]
    %v3218 = vld [vmem:[#allocation7 + $0x678] sm:$0xff]
    %v3219 = vld [vmem:[#allocation7 + $0x680] sm:$0xff]
    %v3220 = vld [vmem:[#allocation7 + $0x688] sm:$0xff]
    %v3221 = vld [vmem:[#allocation7 + $0x690] sm:$0xff]
    %v3222 = vld [vmem:[#allocation7 + $0x698] sm:$0xff]
    %v3223 = vld [vmem:[#allocation7 + $0x6a0] sm:$0xff]
    %v3224 = vld [vmem:[#allocation7 + $0x6a8] sm:$0xff]
    %v3225 = vld [vmem:[#allocation7 + $0x6b0] sm:$0xff]
    %v3226 = vld [vmem:[#allocation7 + $0x6b8] sm:$0xff]
    %v3227 = vld [vmem:[#allocation7 + $0x6c0] sm:$0xff]
    %v3228 = vld [vmem:[#allocation7 + $0x6c8] sm:$0xff]
    %v3229 = vld [vmem:[#allocation7 + $0x6d0] sm:$0xff]
    %v3230 = vld [vmem:[#allocation7 + $0x6d8] sm:$0xff]
    %v3231 = vld [vmem:[#allocation7 + $0x6e0] sm:$0xff]
    %v3232 = vld [vmem:[#allocation7 + $0x6e8] sm:$0xff]
    %v3233 = vld [vmem:[#allocation7 + $0x6f0] sm:$0xff]
    %v3234 = vld [vmem:[#allocation7 + $0x6f8] sm:$0xff]
    %v3235 = vld [vmem:[#allocation7 + $0x700] sm:$0xff]
    %v3236 = vld [vmem:[#allocation7 + $0x708] sm:$0xff]
    %v3237 = vld [vmem:[#allocation7 + $0x710] sm:$0xff]
    %v3238 = vld [vmem:[#allocation7 + $0x718] sm:$0xff]
    %v3239 = vld [vmem:[#allocation7 + $0x720] sm:$0xff]
    %v3240 = vld [vmem:[#allocation7 + $0x728] sm:$0xff]
    %v3241 = vld [vmem:[#allocation7 + $0x730] sm:$0xff]
    %v3242 = vld [vmem:[#allocation7 + $0x738] sm:$0xff]
    %v3243 = vld [vmem:[#allocation7 + $0x740] sm:$0xff]
    %v3244 = vld [vmem:[#allocation7 + $0x748] sm:$0xff]
    %v3245 = vld [vmem:[#allocation7 + $0x750] sm:$0xff]
    %v3246 = vld [vmem:[#allocation7 + $0x758] sm:$0xff]
    %v3247 = vld [vmem:[#allocation7 + $0x760] sm:$0xff]
    %v3248 = vld [vmem:[#allocation7 + $0x768] sm:$0xff]
    %v3249 = vld [vmem:[#allocation7 + $0x770] sm:$0xff]
    %v3250 = vld [vmem:[#allocation7 + $0x778] sm:$0xff]
    %v3251 = vld [vmem:[#allocation7 + $0x780] sm:$0xff]
    %v3252 = vld [vmem:[#allocation7 + $0x788] sm:$0xff]
    %v3253 = vld [vmem:[#allocation7 + $0x790] sm:$0xff]
    %v3254 = vld [vmem:[#allocation7 + $0x798] sm:$0xff]
    %v3255 = vld [vmem:[#allocation7 + $0x7a0] sm:$0xff]
    %v3256 = vld [vmem:[#allocation7 + $0x7a8] sm:$0xff]
    %v3257 = vld [vmem:[#allocation7 + $0x7b0] sm:$0xff]
    %v3258 = vld [vmem:[#allocation7 + $0x7b8] sm:$0xff]
    %v3259 = vld [vmem:[#allocation7 + $0x7c0] sm:$0xff]
    %v3260 = vld [vmem:[#allocation7 + $0x7c8] sm:$0xff]
    %v3261 = vld [vmem:[#allocation7 + $0x7d0] sm:$0xff]
    %v3262 = vld [vmem:[#allocation7 + $0x7d8] sm:$0xff]
    %v3263 = vld [vmem:[#allocation7 + $0x7e0] sm:$0xff]
    %v3264 = vld [vmem:[#allocation7 + $0x7e8] sm:$0xff]
    %v3265 = vld [vmem:[#allocation7 + $0x7f0] sm:$0xff]
    %v3266 = vld [vmem:[#allocation7 + $0x7f8] sm:$0xff]
    %v3267 = vld [vmem:[#allocation7 + $0x800] sm:$0xff]
    %v3268 = vld [vmem:[#allocation7 + $0x808] sm:$0xff]
    %v3269 = vld [vmem:[#allocation7 + $0x810] sm:$0xff]
    %v3270 = vld [vmem:[#allocation7 + $0x818] sm:$0xff]
    %v3271 = vld [vmem:[#allocation7 + $0x820] sm:$0xff]
    %v3272 = vld [vmem:[#allocation7 + $0x828] sm:$0xff]
    %v3273 = vld [vmem:[#allocation7 + $0x830] sm:$0xff]
    %v3274 = vld [vmem:[#allocation7 + $0x838] sm:$0xff]
    %v3275 = vld [vmem:[#allocation7 + $0x840] sm:$0xff]
    %v3276 = vld [vmem:[#allocation7 + $0x848] sm:$0xff]
    %v3277 = vld [vmem:[#allocation7 + $0x850] sm:$0xff]
    %v3278 = vld [vmem:[#allocation7 + $0x858] sm:$0xff]
    %v3279 = vld [vmem:[#allocation7 + $0x860] sm:$0xff]
    %v3280 = vld [vmem:[#allocation7 + $0x868] sm:$0xff]
    %v3281 = vld [vmem:[#allocation7 + $0x870] sm:$0xff]
    %v3282 = vld [vmem:[#allocation7 + $0x878] sm:$0xff]
    %v3283 = vld [vmem:[#allocation7 + $0x880] sm:$0xff]
    %v3284 = vld [vmem:[#allocation7 + $0x888] sm:$0xff]
    %v3285 = vld [vmem:[#allocation7 + $0x890] sm:$0xff]
    %v3286 = vld [vmem:[#allocation7 + $0x898] sm:$0xff]
    %v3287 = vld [vmem:[#allocation7 + $0x8a0] sm:$0xff]
    %v3288 = vld [vmem:[#allocation7 + $0x8a8] sm:$0xff]
    %v3289 = vld [vmem:[#allocation7 + $0x8b0] sm:$0xff]
    %v3290 = vld [vmem:[#allocation7 + $0x8b8] sm:$0xff]
    %v3291 = vld [vmem:[#allocation7 + $0x8c0] sm:$0xff]
    %v3292 = vld [vmem:[#allocation7 + $0x8c8] sm:$0xff]
    %v3293 = vld [vmem:[#allocation7 + $0x8d0] sm:$0xff]
    %v3294 = vld [vmem:[#allocation7 + $0x8d8] sm:$0xff]
    %v3295 = vld [vmem:[#allocation7 + $0x8e0] sm:$0xff]
    %v3296 = vld [vmem:[#allocation7 + $0x8e8] sm:$0xff]
    %v3297 = vld [vmem:[#allocation7 + $0x8f0] sm:$0xff]
    %v3298 = vld [vmem:[#allocation7 + $0x8f8] sm:$0xff]
    %v3299 = vld [vmem:[#allocation7 + $0x900] sm:$0xff]
    %v3300 = vld [vmem:[#allocation7 + $0x908] sm:$0xff]
    %v3301 = vld [vmem:[#allocation7 + $0x910] sm:$0xff]
    %v3302 = vld [vmem:[#allocation7 + $0x918] sm:$0xff]
    %v3303 = vld [vmem:[#allocation7 + $0x920] sm:$0xff]
    %v3304 = vld [vmem:[#allocation7 + $0x928] sm:$0xff]
    %v3305 = vld [vmem:[#allocation7 + $0x930] sm:$0xff]
    %v3306 = vld [vmem:[#allocation7 + $0x938] sm:$0xff]
    %v3307 = vld [vmem:[#allocation7 + $0x940] sm:$0xff]
    %v3308 = vld [vmem:[#allocation7 + $0x948] sm:$0xff]
    %v3309 = vld [vmem:[#allocation7 + $0x950] sm:$0xff]
    %v3310 = vld [vmem:[#allocation7 + $0x958] sm:$0xff]
    %v3311 = vld [vmem:[#allocation7 + $0x960] sm:$0xff]
    %v3312 = vld [vmem:[#allocation7 + $0x968] sm:$0xff]
    %v3313 = vld [vmem:[#allocation7 + $0x970] sm:$0xff]
    %v3314 = vld [vmem:[#allocation7 + $0x978] sm:$0xff]
    %v3315 = vld [vmem:[#allocation7 + $0x980] sm:$0xff]
    %v3316 = vld [vmem:[#allocation7 + $0x988] sm:$0xff]
    %v3317 = vld [vmem:[#allocation7 + $0x990] sm:$0xff]
    %v3318 = vld [vmem:[#allocation7 + $0x998] sm:$0xff]
    %v3319 = vld [vmem:[#allocation7 + $0x9a0] sm:$0xff]
    %v3320 = vld [vmem:[#allocation7 + $0x9a8] sm:$0xff]
    %v3321 = vld [vmem:[#allocation7 + $0x9b0] sm:$0xff]
    %v3322 = vld [vmem:[#allocation7 + $0x9b8] sm:$0xff]
    %v3323 = vld [vmem:[#allocation7 + $0x9c0] sm:$0xff]
    %v3324 = vld [vmem:[#allocation7 + $0x9c8] sm:$0xff]
    %v3325 = vld [vmem:[#allocation7 + $0x9d0] sm:$0xff]
    %v3326 = vld [vmem:[#allocation7 + $0x9d8] sm:$0xff]
    %v3327 = vld [vmem:[#allocation7 + $0x9e0] sm:$0xff]
    %v3328 = vld [vmem:[#allocation7 + $0x9e8] sm:$0xff]
    %v3329 = vld [vmem:[#allocation7 + $0x9f0] sm:$0xff]
    %v3330 = vld [vmem:[#allocation7 + $0x9f8] sm:$0xff]
    %v3331 = vld [vmem:[#allocation7 + $0xa00] sm:$0xff]
    %v3332 = vld [vmem:[#allocation7 + $0xa08] sm:$0xff]
    %v3333 = vld [vmem:[#allocation7 + $0xa10] sm:$0xff]
    %v3334 = vld [vmem:[#allocation7 + $0xa18] sm:$0xff]
    %v3335 = vld [vmem:[#allocation7 + $0xa20] sm:$0xff]
    %v3336 = vld [vmem:[#allocation7 + $0xa28] sm:$0xff]
    %v3337 = vld [vmem:[#allocation7 + $0xa30] sm:$0xff]
    %v3338 = vld [vmem:[#allocation7 + $0xa38] sm:$0xff]
    %v3339 = vld [vmem:[#allocation7 + $0xa40] sm:$0xff]
    %v3340 = vld [vmem:[#allocation7 + $0xa48] sm:$0xff]
    %v3341 = vld [vmem:[#allocation7 + $0xa50] sm:$0xff]
    %v3342 = vld [vmem:[#allocation7 + $0xa58] sm:$0xff]
    %v3343 = vld [vmem:[#allocation7 + $0xa60] sm:$0xff]
    %v3344 = vld [vmem:[#allocation7 + $0xa68] sm:$0xff]
    %v3345 = vld [vmem:[#allocation7 + $0xa70] sm:$0xff]
    %v3346 = vld [vmem:[#allocation7 + $0xa78] sm:$0xff]
    %v3347 = vld [vmem:[#allocation7 + $0xa80] sm:$0xff]
    %v3348 = vld [vmem:[#allocation7 + $0xa88] sm:$0xff]
    %v3349 = vld [vmem:[#allocation7 + $0xa90] sm:$0xff]
    %v3350 = vld [vmem:[#allocation7 + $0xa98] sm:$0xff]
    %v3351 = vld [vmem:[#allocation7 + $0xaa0] sm:$0xff]
    %v3352 = vld [vmem:[#allocation7 + $0xaa8] sm:$0xff]
    %v3353 = vld [vmem:[#allocation7 + $0xab0] sm:$0xff]
    %v3354 = vld [vmem:[#allocation7 + $0xab8] sm:$0xff]
    %v3355 = vld [vmem:[#allocation7 + $0xac0] sm:$0xff]
    %v3356 = vld [vmem:[#allocation7 + $0xac8] sm:$0xff]
    %v3357 = vld [vmem:[#allocation7 + $0xad0] sm:$0xff]
    %v3358 = vld [vmem:[#allocation7 + $0xad8] sm:$0xff]
    %v3359 = vld [vmem:[#allocation7 + $0xae0] sm:$0xff]
    %v3360 = vld [vmem:[#allocation7 + $0xae8] sm:$0xff]
    %v3361 = vld [vmem:[#allocation7 + $0xaf0] sm:$0xff]
    %v3362 = vld [vmem:[#allocation7 + $0xaf8] sm:$0xff]
    %v3363 = vld [vmem:[#allocation7 + $0xb00] sm:$0xff]
    %v3364 = vld [vmem:[#allocation7 + $0xb08] sm:$0xff]
    %v3365 = vld [vmem:[#allocation7 + $0xb10] sm:$0xff]
    %v3366 = vld [vmem:[#allocation7 + $0xb18] sm:$0xff]
    %v3367 = vld [vmem:[#allocation7 + $0xb20] sm:$0xff]
    %v3368 = vld [vmem:[#allocation7 + $0xb28] sm:$0xff]
    %v3369 = vld [vmem:[#allocation7 + $0xb30] sm:$0xff]
    %v3370 = vld [vmem:[#allocation7 + $0xb38] sm:$0xff]
    %v3371 = vld [vmem:[#allocation7 + $0xb40] sm:$0xff]
    %v3372 = vld [vmem:[#allocation7 + $0xb48] sm:$0xff]
    %v3373 = vld [vmem:[#allocation7 + $0xb50] sm:$0xff]
    %v3374 = vld [vmem:[#allocation7 + $0xb58] sm:$0xff]
    %v3375 = vld [vmem:[#allocation7 + $0xb60] sm:$0xff]
    %v3376 = vld [vmem:[#allocation7 + $0xb68] sm:$0xff]
    %v3377 = vld [vmem:[#allocation7 + $0xb70] sm:$0xff]
    %v3378 = vld [vmem:[#allocation7 + $0xb78] sm:$0xff]
    %v3379 = vld [vmem:[#allocation7 + $0xb80] sm:$0xff]
    %v3380 = vld [vmem:[#allocation7 + $0xb88] sm:$0xff]
    %v3381 = vld [vmem:[#allocation7 + $0xb90] sm:$0xff]
    %v3382 = vld [vmem:[#allocation7 + $0xb98] sm:$0xff]
    %v3383 = vld [vmem:[#allocation7 + $0xba0] sm:$0xff]
    %v3384 = vld [vmem:[#allocation7 + $0xba8] sm:$0xff]
    %v3385 = vld [vmem:[#allocation7 + $0xbb0] sm:$0xff]
    %v3386 = vld [vmem:[#allocation7 + $0xbb8] sm:$0xff]
    %v3387 = vld [vmem:[#allocation7 + $0xbc0] sm:$0xff]
    %v3388 = vld [vmem:[#allocation7 + $0xbc8] sm:$0xff]
    %v3389 = vld [vmem:[#allocation7 + $0xbd0] sm:$0xff]
    %v3390 = vld [vmem:[#allocation7 + $0xbd8] sm:$0xff]
    %v3391 = vld [vmem:[#allocation7 + $0xbe0] sm:$0xff]
    %v3392 = vld [vmem:[#allocation7 + $0xbe8] sm:$0xff]
    %v3393 = vld [vmem:[#allocation7 + $0xbf0] sm:$0xff]
    %v3394 = vld [vmem:[#allocation7 + $0xbf8] sm:$0xff]
    %v3395 = vld [vmem:[#allocation7 + $0xc00] sm:$0xff]
    %v3396 = vld [vmem:[#allocation7 + $0xc08] sm:$0xff]
    %v3397 = vld [vmem:[#allocation7 + $0xc10] sm:$0xff]
    %v3398 = vld [vmem:[#allocation7 + $0xc18] sm:$0xff]
    %v3399 = vld [vmem:[#allocation7 + $0xc20] sm:$0xff]
    %v3400 = vld [vmem:[#allocation7 + $0xc28] sm:$0xff]
    %v3401 = vld [vmem:[#allocation7 + $0xc30] sm:$0xff]
    %v3402 = vld [vmem:[#allocation7 + $0xc38] sm:$0xff]
    %v3403 = vld [vmem:[#allocation7 + $0xc40] sm:$0xff]
    %v3404 = vld [vmem:[#allocation7 + $0xc48] sm:$0xff]
    %v3405 = vld [vmem:[#allocation7 + $0xc50] sm:$0xff]
    %v3406 = vld [vmem:[#allocation7 + $0xc58] sm:$0xff]
    %v3407 = vld [vmem:[#allocation7 + $0xc60] sm:$0xff]
    %v3408 = vld [vmem:[#allocation7 + $0xc68] sm:$0xff]
    %v3409 = vld [vmem:[#allocation7 + $0xc70] sm:$0xff]
    %v3410 = vld [vmem:[#allocation7 + $0xc78] sm:$0xff]
    %v3411 = vld [vmem:[#allocation7 + $0xc80] sm:$0xff]
    %v3412 = vld [vmem:[#allocation7 + $0xc88] sm:$0xff]
    %v3413 = vld [vmem:[#allocation7 + $0xc90] sm:$0xff]
    %v3414 = vld [vmem:[#allocation7 + $0xc98] sm:$0xff]
    %v3415 = vld [vmem:[#allocation7 + $0xca0] sm:$0xff]
    %v3416 = vld [vmem:[#allocation7 + $0xca8] sm:$0xff]
    %v3417 = vld [vmem:[#allocation7 + $0xcb0] sm:$0xff]
    %v3418 = vld [vmem:[#allocation7 + $0xcb8] sm:$0xff]
    %v3419 = vld [vmem:[#allocation7 + $0xcc0] sm:$0xff]
    %v3420 = vld [vmem:[#allocation7 + $0xcc8] sm:$0xff]
    %v3421 = vld [vmem:[#allocation7 + $0xcd0] sm:$0xff]
    %v3422 = vld [vmem:[#allocation7 + $0xcd8] sm:$0xff]
    %v3423 = vld [vmem:[#allocation7 + $0xce0] sm:$0xff]
    %v3424 = vld [vmem:[#allocation7 + $0xce8] sm:$0xff]
    %v3425 = vld [vmem:[#allocation7 + $0xcf0] sm:$0xff]
    %v3426 = vld [vmem:[#allocation7 + $0xcf8] sm:$0xff]
    %v3427 = vld [vmem:[#allocation7 + $0xd00] sm:$0xff]
    %v3428 = vld [vmem:[#allocation7 + $0xd08] sm:$0xff]
    %v3429 = vld [vmem:[#allocation7 + $0xd10] sm:$0xff]
    %v3430 = vld [vmem:[#allocation7 + $0xd18] sm:$0xff]
    %v3431 = vld [vmem:[#allocation7 + $0xd20] sm:$0xff]
    %v3432 = vld [vmem:[#allocation7 + $0xd28] sm:$0xff]
    %v3433 = vld [vmem:[#allocation7 + $0xd30] sm:$0xff]
    %v3434 = vld [vmem:[#allocation7 + $0xd38] sm:$0xff]
    %v3435 = vld [vmem:[#allocation7 + $0xd40] sm:$0xff]
    %v3436 = vld [vmem:[#allocation7 + $0xd48] sm:$0xff]
    %v3437 = vld [vmem:[#allocation7 + $0xd50] sm:$0xff]
    %v3438 = vld [vmem:[#allocation7 + $0xd58] sm:$0xff]
    %v3439 = vld [vmem:[#allocation7 + $0xd60] sm:$0xff]
    %v3440 = vld [vmem:[#allocation7 + $0xd68] sm:$0xff]
    %v3441 = vld [vmem:[#allocation7 + $0xd70] sm:$0xff]
    %v3442 = vld [vmem:[#allocation7 + $0xd78] sm:$0xff]
    %v3443 = vld [vmem:[#allocation7 + $0xd80] sm:$0xff]
    %v3444 = vld [vmem:[#allocation7 + $0xd88] sm:$0xff]
    %v3445 = vld [vmem:[#allocation7 + $0xd90] sm:$0xff]
    %v3446 = vld [vmem:[#allocation7 + $0xd98] sm:$0xff]
    %v3447 = vld [vmem:[#allocation7 + $0xda0] sm:$0xff]
    %v3448 = vld [vmem:[#allocation7 + $0xda8] sm:$0xff]
    %v3449 = vld [vmem:[#allocation7 + $0xdb0] sm:$0xff]
    %v3450 = vld [vmem:[#allocation7 + $0xdb8] sm:$0xff]
    %v3451 = vld [vmem:[#allocation7 + $0xdc0] sm:$0xff]
    %v3452 = vld [vmem:[#allocation7 + $0xdc8] sm:$0xff]
    %v3453 = vld [vmem:[#allocation7 + $0xdd0] sm:$0xff]
    %v3454 = vld [vmem:[#allocation7 + $0xdd8] sm:$0xff]
    %v3455 = vld [vmem:[#allocation7 + $0xde0] sm:$0xff]
    %v3456 = vld [vmem:[#allocation7 + $0xde8] sm:$0xff]
    %v3457 = vld [vmem:[#allocation7 + $0xdf0] sm:$0xff]
    %v3458 = vld [vmem:[#allocation7 + $0xdf8] sm:$0xff]
    %v3459 = vld [vmem:[#allocation7 + $0xe00] sm:$0xff]
    %v3460 = vld [vmem:[#allocation7 + $0xe08] sm:$0xff]
    %v3461 = vld [vmem:[#allocation7 + $0xe10] sm:$0xff]
    %v3462 = vld [vmem:[#allocation7 + $0xe18] sm:$0xff]
    %v3463 = vld [vmem:[#allocation7 + $0xe20] sm:$0xff]
    %v3464 = vld [vmem:[#allocation7 + $0xe28] sm:$0xff]
    %v3465 = vld [vmem:[#allocation7 + $0xe30] sm:$0xff]
    %v3466 = vld [vmem:[#allocation7 + $0xe38] sm:$0xff]
    %v3467 = vld [vmem:[#allocation7 + $0xe40] sm:$0xff]
    %v3468 = vld [vmem:[#allocation7 + $0xe48] sm:$0xff]
    %v3469 = vld [vmem:[#allocation7 + $0xe50] sm:$0xff]
    %v3470 = vld [vmem:[#allocation7 + $0xe58] sm:$0xff]
    %v3471 = vld [vmem:[#allocation7 + $0xe60] sm:$0xff]
    %v3472 = vld [vmem:[#allocation7 + $0xe68] sm:$0xff]
    %v3473 = vld [vmem:[#allocation7 + $0xe70] sm:$0xff]
    %v3474 = vld [vmem:[#allocation7 + $0xe78] sm:$0xff]
    %v3475 = vld [vmem:[#allocation7 + $0xe80] sm:$0xff]
    %v3476 = vld [vmem:[#allocation7 + $0xe88] sm:$0xff]
    %v3477 = vld [vmem:[#allocation7 + $0xe90] sm:$0xff]
    %v3478 = vld [vmem:[#allocation7 + $0xe98] sm:$0xff]
    %v3479 = vld [vmem:[#allocation7 + $0xea0] sm:$0xff]
    %v3480 = vld [vmem:[#allocation7 + $0xea8] sm:$0xff]
    %v3481 = vld [vmem:[#allocation7 + $0xeb0] sm:$0xff]
    %v3482 = vld [vmem:[#allocation7 + $0xeb8] sm:$0xff]
    %v3483 = vld [vmem:[#allocation7 + $0xec0] sm:$0xff]
    %v3484 = vld [vmem:[#allocation7 + $0xec8] sm:$0xff]
    %v3485 = vld [vmem:[#allocation7 + $0xed0] sm:$0xff]
    %v3486 = vld [vmem:[#allocation7 + $0xed8] sm:$0xff]
    %v3487 = vld [vmem:[#allocation7 + $0xee0] sm:$0xff]
    %v3488 = vld [vmem:[#allocation7 + $0xee8] sm:$0xff]
    %v3489 = vld [vmem:[#allocation7 + $0xef0] sm:$0xff]
    %v3490 = vld [vmem:[#allocation7 + $0xef8] sm:$0xff]
    %v3491 = vld [vmem:[#allocation7 + $0xf00] sm:$0xff]
    %v3492 = vld [vmem:[#allocation7 + $0xf08] sm:$0xff]
    %v3493 = vld [vmem:[#allocation7 + $0xf10] sm:$0xff]
    %v3494 = vld [vmem:[#allocation7 + $0xf18] sm:$0xff]
    %v3495 = vld [vmem:[#allocation7 + $0xf20] sm:$0xff]
    %v3496 = vld [vmem:[#allocation7 + $0xf28] sm:$0xff]
    %v3497 = vld [vmem:[#allocation7 + $0xf30] sm:$0xff]
    %v3498 = vld [vmem:[#allocation7 + $0xf38] sm:$0xff]
    %v3499 = vld [vmem:[#allocation7 + $0xf40] sm:$0xff]
    %v3500 = vld [vmem:[#allocation7 + $0xf48] sm:$0xff]
    %v3501 = vld [vmem:[#allocation7 + $0xf50] sm:$0xff]
    %v3502 = vld [vmem:[#allocation7 + $0xf58] sm:$0xff]
    %v3503 = vld [vmem:[#allocation7 + $0xf60] sm:$0xff]
    %v3504 = vld [vmem:[#allocation7 + $0xf68] sm:$0xff]
    %v3505 = vld [vmem:[#allocation7 + $0xf70] sm:$0xff]
    %v3506 = vld [vmem:[#allocation7 + $0xf78] sm:$0xff]
    %v3507 = vld [vmem:[#allocation7 + $0xf80] sm:$0xff]
    %v3508 = vld [vmem:[#allocation7 + $0xf88] sm:$0xff]
    %v3509 = vld [vmem:[#allocation7 + $0xf90] sm:$0xff]
    %v3510 = vld [vmem:[#allocation7 + $0xf98] sm:$0xff]
    %v3511 = vld [vmem:[#allocation7 + $0xfa0] sm:$0xff]
    %v3512 = vld [vmem:[#allocation7 + $0xfa8] sm:$0xff]
    %v3513 = vld [vmem:[#allocation7 + $0xfb0] sm:$0xff]
    %v3514 = vld [vmem:[#allocation7 + $0xfb8] sm:$0xff]
    %v3515 = vld [vmem:[#allocation7 + $0xfc0] sm:$0xff]
    %v3516 = vld [vmem:[#allocation7 + $0xfc8] sm:$0xff]
    %v3517 = vld [vmem:[#allocation7 + $0xfd0] sm:$0xff]
    %v3518 = vld [vmem:[#allocation7 + $0xfd8] sm:$0xff]
    %v3519 = vld [vmem:[#allocation7 + $0xfe0] sm:$0xff]
    %v3520 = vld [vmem:[#allocation7 + $0xfe8] sm:$0xff]
    %v3521 = vld [vmem:[#allocation7 + $0xff0] sm:$0xff]
    %v3522 = vld [vmem:[#allocation7 + $0xff8] sm:$0xff]
    %v3523 = vld [vmem:[#allocation7 + $0x1000] sm:$0xff]
    %v3524 = vld [vmem:[#allocation7 + $0x1008] sm:$0xff]
    %v3525 = vld [vmem:[#allocation7 + $0x1010] sm:$0xff]
    %v3526 = vld [vmem:[#allocation7 + $0x1018] sm:$0xff]
    %v3527 = vld [vmem:[#allocation7 + $0x1020] sm:$0xff]
    %v3528 = vld [vmem:[#allocation7 + $0x1028] sm:$0xff]
    %v3529 = vld [vmem:[#allocation7 + $0x1030] sm:$0xff]
    %v3530 = vld [vmem:[#allocation7 + $0x1038] sm:$0xff]
    %v3531 = vld [vmem:[#allocation7 + $0x1040] sm:$0xff]
    %v3532 = vld [vmem:[#allocation7 + $0x1048] sm:$0xff]
    %v3533 = vld [vmem:[#allocation7 + $0x1050] sm:$0xff]
    %v3534 = vld [vmem:[#allocation7 + $0x1058] sm:$0xff]
    %v3535 = vld [vmem:[#allocation7 + $0x1060] sm:$0xff]
    %v3536 = vld [vmem:[#allocation7 + $0x1068] sm:$0xff]
    %v3537 = vld [vmem:[#allocation7 + $0x1070] sm:$0xff]
    %v3538 = vld [vmem:[#allocation7 + $0x1078] sm:$0xff]
    %v3539 = vld [vmem:[#allocation7 + $0x1080] sm:$0xff]
    %v3540 = vld [vmem:[#allocation7 + $0x1088] sm:$0xff]
    %v3541 = vld [vmem:[#allocation7 + $0x1090] sm:$0xff]
    %v3542 = vld [vmem:[#allocation7 + $0x1098] sm:$0xff]
    %v3543 = vld [vmem:[#allocation7 + $0x10a0] sm:$0xff]
    %v3544 = vld [vmem:[#allocation7 + $0x10a8] sm:$0xff]
    %v3545 = vld [vmem:[#allocation7 + $0x10b0] sm:$0xff]
    %v3546 = vld [vmem:[#allocation7 + $0x10b8] sm:$0xff]
    %v3547 = vld [vmem:[#allocation7 + $0x10c0] sm:$0xff]
    %v3548 = vld [vmem:[#allocation7 + $0x10c8] sm:$0xff]
    %v3549 = vld [vmem:[#allocation7 + $0x10d0] sm:$0xff]
    %v3550 = vld [vmem:[#allocation7 + $0x10d8] sm:$0xff]
    %v3551 = vld [vmem:[#allocation7 + $0x10e0] sm:$0xff]
    %v3552 = vld [vmem:[#allocation7 + $0x10e8] sm:$0xff]
    %v3553 = vld [vmem:[#allocation7 + $0x10f0] sm:$0xff]
    %v3554 = vld [vmem:[#allocation7 + $0x10f8] sm:$0xff]
    %v3555 = vld [vmem:[#allocation7 + $0x1100] sm:$0xff]
    %v3556 = vld [vmem:[#allocation7 + $0x1108] sm:$0xff]
    %v3557 = vld [vmem:[#allocation7 + $0x1110] sm:$0xff]
    %v3558 = vld [vmem:[#allocation7 + $0x1118] sm:$0xff]
    %v3559 = vld [vmem:[#allocation7 + $0x1120] sm:$0xff]
    %v3560 = vld [vmem:[#allocation7 + $0x1128] sm:$0xff]
    %v3561 = vld [vmem:[#allocation7 + $0x1130] sm:$0xff]
    %v3562 = vld [vmem:[#allocation7 + $0x1138] sm:$0xff]
    %v3563 = vld [vmem:[#allocation7 + $0x1140] sm:$0xff]
    %v3564 = vld [vmem:[#allocation7 + $0x1148] sm:$0xff]
    %v3565 = vld [vmem:[#allocation7 + $0x1150] sm:$0xff]
    %v3566 = vld [vmem:[#allocation7 + $0x1158] sm:$0xff]
    %v3567 = vld [vmem:[#allocation7 + $0x1160] sm:$0xff]
    %v3568 = vld [vmem:[#allocation7 + $0x1168] sm:$0xff]
    %v3569 = vld [vmem:[#allocation7 + $0x1170] sm:$0xff]
    %v3570 = vld [vmem:[#allocation7 + $0x1178] sm:$0xff]
    %v3571 = vld [vmem:[#allocation7 + $0x1180] sm:$0xff]
    %v3572 = vld [vmem:[#allocation7 + $0x1188] sm:$0xff]
    %v3573 = vld [vmem:[#allocation7 + $0x1190] sm:$0xff]
    %v3574 = vld [vmem:[#allocation7 + $0x1198] sm:$0xff]
    %v3575 = vld [vmem:[#allocation7 + $0x11a0] sm:$0xff]
    %v3576 = vld [vmem:[#allocation7 + $0x11a8] sm:$0xff]
    %v3577 = vld [vmem:[#allocation7 + $0x11b0] sm:$0xff]
    %v3578 = vld [vmem:[#allocation7 + $0x11b8] sm:$0xff]
    %v3579 = vld [vmem:[#allocation7 + $0x11c0] sm:$0xff]
    %v3580 = vld [vmem:[#allocation7 + $0x11c8] sm:$0xff]
    %v3581 = vld [vmem:[#allocation7 + $0x11d0] sm:$0xff]
    %v3582 = vld [vmem:[#allocation7 + $0x11d8] sm:$0xff]
    %v3583 = vld [vmem:[#allocation7 + $0x11e0] sm:$0xff]
    %v3584 = vld [vmem:[#allocation7 + $0x11e8] sm:$0xff]
    %v3585 = vld [vmem:[#allocation7 + $0x11f0] sm:$0xff]
    %v3586 = vld [vmem:[#allocation7 + $0x11f8] sm:$0xff]
    %v3587 = vld [vmem:[#allocation7 + $0x1200] sm:$0xff]
    %v3588 = vld [vmem:[#allocation7 + $0x1208] sm:$0xff]
    %v3589 = vld [vmem:[#allocation7 + $0x1210] sm:$0xff]
    %v3590 = vld [vmem:[#allocation7 + $0x1218] sm:$0xff]
    %v3591 = vld [vmem:[#allocation7 + $0x1220] sm:$0xff]
    %v3592 = vld [vmem:[#allocation7 + $0x1228] sm:$0xff]
    %v3593 = vld [vmem:[#allocation7 + $0x1230] sm:$0xff]
    %v3594 = vld [vmem:[#allocation7 + $0x1238] sm:$0xff]
    %v3595 = vld [vmem:[#allocation7 + $0x1240] sm:$0xff]
    %v3596 = vld [vmem:[#allocation7 + $0x1248] sm:$0xff]
    %v3597 = vld [vmem:[#allocation7 + $0x1250] sm:$0xff]
    %v3598 = vld [vmem:[#allocation7 + $0x1258] sm:$0xff]
    %v3599 = vld [vmem:[#allocation7 + $0x1260] sm:$0xff]
    %v3600 = vld [vmem:[#allocation7 + $0x1268] sm:$0xff]
    %v3601 = vld [vmem:[#allocation7 + $0x1270] sm:$0xff]
    %v3602 = vld [vmem:[#allocation7 + $0x1278] sm:$0xff]
    %v3603 = vld [vmem:[#allocation7 + $0x1280] sm:$0xff]
    %v3604 = vld [vmem:[#allocation7 + $0x1288] sm:$0xff]
    %v3605 = vld [vmem:[#allocation7 + $0x1290] sm:$0xff]
    %v3606 = vld [vmem:[#allocation7 + $0x1298] sm:$0xff]
    %v3607 = vld [vmem:[#allocation7 + $0x12a0] sm:$0xff]
    %v3608 = vld [vmem:[#allocation7 + $0x12a8] sm:$0xff]
    %v3609 = vld [vmem:[#allocation7 + $0x12b0] sm:$0xff]
    %v3610 = vld [vmem:[#allocation7 + $0x12b8] sm:$0xff]
    %v3611 = vld [vmem:[#allocation7 + $0x12c0] sm:$0xff]
    %v3612 = vld [vmem:[#allocation7 + $0x12c8] sm:$0xff]
    %v3613 = vld [vmem:[#allocation7 + $0x12d0] sm:$0xff]
    %v3614 = vld [vmem:[#allocation7 + $0x12d8] sm:$0xff]
    %v3615 = vld [vmem:[#allocation7 + $0x12e0] sm:$0xff]
    %v3616 = vld [vmem:[#allocation7 + $0x12e8] sm:$0xff]
    %v3617 = vld [vmem:[#allocation7 + $0x12f0] sm:$0xff]
    %v3618 = vld [vmem:[#allocation7 + $0x12f8] sm:$0xff]
    %v3619 = vld [vmem:[#allocation7 + $0x1300] sm:$0xff]
    %v3620 = vld [vmem:[#allocation7 + $0x1308] sm:$0xff]
    %v3621 = vld [vmem:[#allocation7 + $0x1310] sm:$0xff]
    %v3622 = vld [vmem:[#allocation7 + $0x1318] sm:$0xff]
    %v3623 = vld [vmem:[#allocation7 + $0x1320] sm:$0xff]
    %v3624 = vld [vmem:[#allocation7 + $0x1328] sm:$0xff]
    %v3625 = vld [vmem:[#allocation7 + $0x1330] sm:$0xff]
    %v3626 = vld [vmem:[#allocation7 + $0x1338] sm:$0xff]
    %v3627 = vld [vmem:[#allocation7 + $0x1340] sm:$0xff]
    %v3628 = vld [vmem:[#allocation7 + $0x1348] sm:$0xff]
    %v3629 = vld [vmem:[#allocation7 + $0x1350] sm:$0xff]
    %v3630 = vld [vmem:[#allocation7 + $0x1358] sm:$0xff]
    %v3631 = vld [vmem:[#allocation7 + $0x1360] sm:$0xff]
    %v3632 = vld [vmem:[#allocation7 + $0x1368] sm:$0xff]
    %v3633 = vld [vmem:[#allocation7 + $0x1370] sm:$0xff]
    %v3634 = vld [vmem:[#allocation7 + $0x1378] sm:$0xff]
    %v3635 = vld [vmem:[#allocation7 + $0x1380] sm:$0xff]
    %v3636 = vld [vmem:[#allocation7 + $0x1388] sm:$0xff]
    %v3637 = vld [vmem:[#allocation7 + $0x1390] sm:$0xff]
    %v3638 = vld [vmem:[#allocation7 + $0x1398] sm:$0xff]
    %v3639 = vld [vmem:[#allocation7 + $0x13a0] sm:$0xff]
    %v3640 = vld [vmem:[#allocation7 + $0x13a8] sm:$0xff]
    %v3641 = vld [vmem:[#allocation7 + $0x13b0] sm:$0xff]
    %v3642 = vld [vmem:[#allocation7 + $0x13b8] sm:$0xff]
    %v3643 = vld [vmem:[#allocation7 + $0x13c0] sm:$0xff]
    %v3644 = vld [vmem:[#allocation7 + $0x13c8] sm:$0xff]
    %v3645 = vld [vmem:[#allocation7 + $0x13d0] sm:$0xff]
    %v3646 = vld [vmem:[#allocation7 + $0x13d8] sm:$0xff]
    %v3647 = vld [vmem:[#allocation7 + $0x13e0] sm:$0xff]
    %v3648 = vld [vmem:[#allocation7 + $0x13e8] sm:$0xff]
    %v3649 = vld [vmem:[#allocation7 + $0x13f0] sm:$0xff]
    %v3650 = vld [vmem:[#allocation7 + $0x13f8] sm:$0xff]
    %v3651 = vld [vmem:[#allocation7 + $0x1400] sm:$0xff]
    %v3652 = vld [vmem:[#allocation7 + $0x1408] sm:$0xff]
    %v3653 = vld [vmem:[#allocation7 + $0x1410] sm:$0xff]
    %v3654 = vld [vmem:[#allocation7 + $0x1418] sm:$0xff]
    %v3655 = vld [vmem:[#allocation7 + $0x1420] sm:$0xff]
    %v3656 = vld [vmem:[#allocation7 + $0x1428] sm:$0xff]
    %v3657 = vld [vmem:[#allocation7 + $0x1430] sm:$0xff]
    %v3658 = vld [vmem:[#allocation7 + $0x1438] sm:$0xff]
    %v3659 = vld [vmem:[#allocation7 + $0x1440] sm:$0xff]
    %v3660 = vld [vmem:[#allocation7 + $0x1448] sm:$0xff]
    %v3661 = vld [vmem:[#allocation7 + $0x1450] sm:$0xff]
    %v3662 = vld [vmem:[#allocation7 + $0x1458] sm:$0xff]
    %v3663 = vld [vmem:[#allocation7 + $0x1460] sm:$0xff]
    %v3664 = vld [vmem:[#allocation7 + $0x1468] sm:$0xff]
    %v3665 = vld [vmem:[#allocation7 + $0x1470] sm:$0xff]
    %v3666 = vld [vmem:[#allocation7 + $0x1478] sm:$0xff]
    %v3667 = vld [vmem:[#allocation7 + $0x1480] sm:$0xff]
    %v3668 = vld [vmem:[#allocation7 + $0x1488] sm:$0xff]
    %v3669 = vld [vmem:[#allocation7 + $0x1490] sm:$0xff]
    %v3670 = vld [vmem:[#allocation7 + $0x1498] sm:$0xff]
    %v3671 = vld [vmem:[#allocation7 + $0x14a0] sm:$0xff]
    %v3672 = vld [vmem:[#allocation7 + $0x14a8] sm:$0xff]
    %v3673 = vld [vmem:[#allocation7 + $0x14b0] sm:$0xff]
    %v3674 = vld [vmem:[#allocation7 + $0x14b8] sm:$0xff]
    %v3675 = vld [vmem:[#allocation7 + $0x14c0] sm:$0xff]
    %v3676 = vld [vmem:[#allocation7 + $0x14c8] sm:$0xff]
    %v3677 = vld [vmem:[#allocation7 + $0x14d0] sm:$0xff]
    %v3678 = vld [vmem:[#allocation7 + $0x14d8] sm:$0xff]
    %v3679 = vld [vmem:[#allocation7 + $0x14e0] sm:$0xff]
    %v3680 = vld [vmem:[#allocation7 + $0x14e8] sm:$0xff]
    %v3681 = vld [vmem:[#allocation7 + $0x14f0] sm:$0xff]
    %v3682 = vld [vmem:[#allocation7 + $0x14f8] sm:$0xff]
    %v3683 = vld [vmem:[#allocation7 + $0x1500] sm:$0xff]
    %v3684 = vld [vmem:[#allocation7 + $0x1508] sm:$0xff]
    %v3685 = vld [vmem:[#allocation7 + $0x1510] sm:$0xff]
    %v3686 = vld [vmem:[#allocation7 + $0x1518] sm:$0xff]
    %v3687 = vld [vmem:[#allocation7 + $0x1520] sm:$0xff]
    %v3688 = vld [vmem:[#allocation7 + $0x1528] sm:$0xff]
    %v3689 = vld [vmem:[#allocation7 + $0x1530] sm:$0xff]
    %v3690 = vld [vmem:[#allocation7 + $0x1538] sm:$0xff]
    %v3691 = vld [vmem:[#allocation7 + $0x1540] sm:$0xff]
    %v3692 = vld [vmem:[#allocation7 + $0x1548] sm:$0xff]
    %v3693 = vld [vmem:[#allocation7 + $0x1550] sm:$0xff]
    %v3694 = vld [vmem:[#allocation7 + $0x1558] sm:$0xff]
    %v3695 = vld [vmem:[#allocation7 + $0x1560] sm:$0xff]
    %v3696 = vld [vmem:[#allocation7 + $0x1568] sm:$0xff]
    %v3697 = vld [vmem:[#allocation7 + $0x1570] sm:$0xff]
    %v3698 = vld [vmem:[#allocation7 + $0x1578] sm:$0xff]
    %v3699 = vld [vmem:[#allocation7 + $0x1580] sm:$0xff]
    %v3700 = vld [vmem:[#allocation7 + $0x1588] sm:$0xff]
    %v3701 = vld [vmem:[#allocation7 + $0x1590] sm:$0xff]
    %v3702 = vld [vmem:[#allocation7 + $0x1598] sm:$0xff]
    %v3703 = vld [vmem:[#allocation7 + $0x15a0] sm:$0xff]
    %v3704 = vld [vmem:[#allocation7 + $0x15a8] sm:$0xff]
    %v3705 = vld [vmem:[#allocation7 + $0x15b0] sm:$0xff]
    %v3706 = vld [vmem:[#allocation7 + $0x15b8] sm:$0xff]
    %v3707 = vld [vmem:[#allocation7 + $0x15c0] sm:$0xff]
    %v3708 = vld [vmem:[#allocation7 + $0x15c8] sm:$0xff]
    %v3709 = vld [vmem:[#allocation7 + $0x15d0] sm:$0xff]
    %v3710 = vld [vmem:[#allocation7 + $0x15d8] sm:$0xff]
    %v3711 = vld [vmem:[#allocation7 + $0x15e0] sm:$0xff]
    %v3712 = vld [vmem:[#allocation7 + $0x15e8] sm:$0xff]
    %v3713 = vld [vmem:[#allocation7 + $0x15f0] sm:$0xff]
    %v3714 = vld [vmem:[#allocation7 + $0x15f8] sm:$0xff]
    %v3715 = vld [vmem:[#allocation7 + $0x1600] sm:$0xff]
    %v3716 = vld [vmem:[#allocation7 + $0x1608] sm:$0xff]
    %v3717 = vld [vmem:[#allocation7 + $0x1610] sm:$0xff]
    %v3718 = vld [vmem:[#allocation7 + $0x1618] sm:$0xff]
    %v3719 = vld [vmem:[#allocation7 + $0x1620] sm:$0xff]
    %v3720 = vld [vmem:[#allocation7 + $0x1628] sm:$0xff]
    %v3721 = vld [vmem:[#allocation7 + $0x1630] sm:$0xff]
    %v3722 = vld [vmem:[#allocation7 + $0x1638] sm:$0xff]
    %v3723 = vld [vmem:[#allocation7 + $0x1640] sm:$0xff]
    %v3724 = vld [vmem:[#allocation7 + $0x1648] sm:$0xff]
    %v3725 = vld [vmem:[#allocation7 + $0x1650] sm:$0xff]
    %v3726 = vld [vmem:[#allocation7 + $0x1658] sm:$0xff]
    %v3727 = vld [vmem:[#allocation7 + $0x1660] sm:$0xff]
    %v3728 = vld [vmem:[#allocation7 + $0x1668] sm:$0xff]
    %v3729 = vld [vmem:[#allocation7 + $0x1670] sm:$0xff]
    %v3730 = vld [vmem:[#allocation7 + $0x1678] sm:$0xff]
    %v3731 = vld [vmem:[#allocation7 + $0x1680] sm:$0xff]
    %v3732 = vld [vmem:[#allocation7 + $0x1688] sm:$0xff]
    %v3733 = vld [vmem:[#allocation7 + $0x1690] sm:$0xff]
    %v3734 = vld [vmem:[#allocation7 + $0x1698] sm:$0xff]
    %v3735 = vld [vmem:[#allocation7 + $0x16a0] sm:$0xff]
    %v3736 = vld [vmem:[#allocation7 + $0x16a8] sm:$0xff]
    %v3737 = vld [vmem:[#allocation7 + $0x16b0] sm:$0xff]
    %v3738 = vld [vmem:[#allocation7 + $0x16b8] sm:$0xff]
    %v3739 = vld [vmem:[#allocation7 + $0x16c0] sm:$0xff]
    %v3740 = vld [vmem:[#allocation7 + $0x16c8] sm:$0xff]
    %v3741 = vld [vmem:[#allocation7 + $0x16d0] sm:$0xff]
    %v3742 = vld [vmem:[#allocation7 + $0x16d8] sm:$0xff]
    %v3743 = vld [vmem:[#allocation7 + $0x16e0] sm:$0xff]
    %v3744 = vld [vmem:[#allocation7 + $0x16e8] sm:$0xff]
    %v3745 = vld [vmem:[#allocation7 + $0x16f0] sm:$0xff]
    %v3746 = vld [vmem:[#allocation7 + $0x16f8] sm:$0xff]
    %v3747 = vld [vmem:[#allocation7 + $0x1700] sm:$0xff]
    %v3748 = vld [vmem:[#allocation7 + $0x1708] sm:$0xff]
    %v3749 = vld [vmem:[#allocation7 + $0x1710] sm:$0xff]
    %v3750 = vld [vmem:[#allocation7 + $0x1718] sm:$0xff]
    %v3751 = vld [vmem:[#allocation7 + $0x1720] sm:$0xff]
    %v3752 = vld [vmem:[#allocation7 + $0x1728] sm:$0xff]
    %v3753 = vld [vmem:[#allocation7 + $0x1730] sm:$0xff]
    %v3754 = vld [vmem:[#allocation7 + $0x1738] sm:$0xff]
    %v3755 = vld [vmem:[#allocation7 + $0x1740] sm:$0xff]
    %v3756 = vld [vmem:[#allocation7 + $0x1748] sm:$0xff]
    %v3757 = vld [vmem:[#allocation7 + $0x1750] sm:$0xff]
    %v3758 = vld [vmem:[#allocation7 + $0x1758] sm:$0xff]
    %v3759 = vld [vmem:[#allocation7 + $0x1760] sm:$0xff]
    %v3760 = vld [vmem:[#allocation7 + $0x1768] sm:$0xff]
    %v3761 = vld [vmem:[#allocation7 + $0x1770] sm:$0xff]
    %v3762 = vld [vmem:[#allocation7 + $0x1778] sm:$0xff]
    %v3763 = vld [vmem:[#allocation7 + $0x1780] sm:$0xff]
    %v3764 = vld [vmem:[#allocation7 + $0x1788] sm:$0xff]
    %v3765 = vld [vmem:[#allocation7 + $0x1790] sm:$0xff]
    %v3766 = vld [vmem:[#allocation7 + $0x1798] sm:$0xff]
    %v3767 = vld [vmem:[#allocation7 + $0x17a0] sm:$0xff]
    %v3768 = vld [vmem:[#allocation7 + $0x17a8] sm:$0xff]
    %v3769 = vld [vmem:[#allocation7 + $0x17b0] sm:$0xff]
    %v3770 = vld [vmem:[#allocation7 + $0x17b8] sm:$0xff]
    %v3771 = vld [vmem:[#allocation7 + $0x17c0] sm:$0xff]
    %v3772 = vld [vmem:[#allocation7 + $0x17c8] sm:$0xff]
    %v3773 = vld [vmem:[#allocation7 + $0x17d0] sm:$0xff]
    %v3774 = vld [vmem:[#allocation7 + $0x17d8] sm:$0xff]
    %v3775 = vld [vmem:[#allocation7 + $0x17e0] sm:$0xff]
    %v3776 = vld [vmem:[#allocation7 + $0x17e8] sm:$0xff]
    %v3777 = vld [vmem:[#allocation7 + $0x17f0] sm:$0xff]
    %v3778 = vld [vmem:[#allocation7 + $0x17f8] sm:$0xff]
    %v3779 = vld [vmem:[#allocation7 + $0x1800] sm:$0xff]
    %v3780 = vld [vmem:[#allocation7 + $0x1808] sm:$0xff]
    %v3781 = vld [vmem:[#allocation7 + $0x1810] sm:$0xff]
    %v3782 = vld [vmem:[#allocation7 + $0x1818] sm:$0xff]
    %v3783 = vld [vmem:[#allocation7 + $0x1820] sm:$0xff]
    %v3784 = vld [vmem:[#allocation7 + $0x1828] sm:$0xff]
    %v3785 = vld [vmem:[#allocation7 + $0x1830] sm:$0xff]
    %v3786 = vld [vmem:[#allocation7 + $0x1838] sm:$0xff]
    %v3787 = vld [vmem:[#allocation7 + $0x1840] sm:$0xff]
    %v3788 = vld [vmem:[#allocation7 + $0x1848] sm:$0xff]
    %v3789 = vld [vmem:[#allocation7 + $0x1850] sm:$0xff]
    %v3790 = vld [vmem:[#allocation7 + $0x1858] sm:$0xff]
    %v3791 = vld [vmem:[#allocation7 + $0x1860] sm:$0xff]
    %v3792 = vld [vmem:[#allocation7 + $0x1868] sm:$0xff]
    %v3793 = vld [vmem:[#allocation7 + $0x1870] sm:$0xff]
    %v3794 = vld [vmem:[#allocation7 + $0x1878] sm:$0xff]
    %v3795 = vld [vmem:[#allocation7 + $0x1880] sm:$0xff]
    %v3796 = vld [vmem:[#allocation7 + $0x1888] sm:$0xff]
    %v3797 = vld [vmem:[#allocation7 + $0x1890] sm:$0xff]
    %v3798 = vld [vmem:[#allocation7 + $0x1898] sm:$0xff]
    %v3799 = vld [vmem:[#allocation7 + $0x18a0] sm:$0xff]
    %v3800 = vld [vmem:[#allocation7 + $0x18a8] sm:$0xff]
    %v3801 = vld [vmem:[#allocation7 + $0x18b0] sm:$0xff]
    %v3802 = vld [vmem:[#allocation7 + $0x18b8] sm:$0xff]
    %v3803 = vld [vmem:[#allocation7 + $0x18c0] sm:$0xff]
    %v3804 = vld [vmem:[#allocation7 + $0x18c8] sm:$0xff]
    %v3805 = vld [vmem:[#allocation7 + $0x18d0] sm:$0xff]
    %v3806 = vld [vmem:[#allocation7 + $0x18d8] sm:$0xff]
    %v3807 = vld [vmem:[#allocation7 + $0x18e0] sm:$0xff]
    %v3808 = vld [vmem:[#allocation7 + $0x18e8] sm:$0xff]
    %v3809 = vld [vmem:[#allocation7 + $0x18f0] sm:$0xff]
    %v3810 = vld [vmem:[#allocation7 + $0x18f8] sm:$0xff]
    %v3811 = vld [vmem:[#allocation7 + $0x1900] sm:$0xff]
    %v3812 = vld [vmem:[#allocation7 + $0x1908] sm:$0xff]
    %v3813 = vld [vmem:[#allocation7 + $0x1910] sm:$0xff]
    %v3814 = vld [vmem:[#allocation7 + $0x1918] sm:$0xff]
    %v3815 = vld [vmem:[#allocation7 + $0x1920] sm:$0xff]
    %v3816 = vld [vmem:[#allocation7 + $0x1928] sm:$0xff]
    %v3817 = vld [vmem:[#allocation7 + $0x1930] sm:$0xff]
    %v3818 = vld [vmem:[#allocation7 + $0x1938] sm:$0xff]
    %v3819 = vld [vmem:[#allocation7 + $0x1940] sm:$0xff]
    %v3820 = vld [vmem:[#allocation7 + $0x1948] sm:$0xff]
    %v3821 = vld [vmem:[#allocation7 + $0x1950] sm:$0xff]
    %v3822 = vld [vmem:[#allocation7 + $0x1958] sm:$0xff]
    %v3823 = vld [vmem:[#allocation7 + $0x1960] sm:$0xff]
    %v3824 = vld [vmem:[#allocation7 + $0x1968] sm:$0xff]
    %v3825 = vld [vmem:[#allocation7 + $0x1970] sm:$0xff]
    %v3826 = vld [vmem:[#allocation7 + $0x1978] sm:$0xff]
    %v3827 = vld [vmem:[#allocation7 + $0x1980] sm:$0xff]
    %v3828 = vld [vmem:[#allocation7 + $0x1988] sm:$0xff]
    %v3829 = vld [vmem:[#allocation7 + $0x1990] sm:$0xff]
    %v3830 = vld [vmem:[#allocation7 + $0x1998] sm:$0xff]
    %v3831 = vld [vmem:[#allocation7 + $0x19a0] sm:$0xff]
    %v3832 = vld [vmem:[#allocation7 + $0x19a8] sm:$0xff]
    %v3833 = vld [vmem:[#allocation7 + $0x19b0] sm:$0xff]
    %v3834 = vld [vmem:[#allocation7 + $0x19b8] sm:$0xff]
    %v3835 = vld [vmem:[#allocation7 + $0x19c0] sm:$0xff]
    %v3836 = vld [vmem:[#allocation7 + $0x19c8] sm:$0xff]
    %v3837 = vld [vmem:[#allocation7 + $0x19d0] sm:$0xff]
    %v3838 = vld [vmem:[#allocation7 + $0x19d8] sm:$0xff]
    %v3839 = vld [vmem:[#allocation7 + $0x19e0] sm:$0xff]
    %v3840 = vld [vmem:[#allocation7 + $0x19e8] sm:$0xff]
    %v3841 = vld [vmem:[#allocation7 + $0x19f0] sm:$0xff]
    %v3842 = vld [vmem:[#allocation7 + $0x19f8] sm:$0xff]
    %v3843 = vld [vmem:[#allocation7 + $0x1a00] sm:$0xff]
    %v3844 = vld [vmem:[#allocation7 + $0x1a08] sm:$0xff]
    %v3845 = vld [vmem:[#allocation7 + $0x1a10] sm:$0xff]
    %v3846 = vld [vmem:[#allocation7 + $0x1a18] sm:$0xff]
    %v3847 = vld [vmem:[#allocation7 + $0x1a20] sm:$0xff]
    %v3848 = vld [vmem:[#allocation7 + $0x1a28] sm:$0xff]
    %v3849 = vld [vmem:[#allocation7 + $0x1a30] sm:$0xff]
    %v3850 = vld [vmem:[#allocation7 + $0x1a38] sm:$0xff]
    %v3851 = vld [vmem:[#allocation7 + $0x1a40] sm:$0xff]
    %v3852 = vld [vmem:[#allocation7 + $0x1a48] sm:$0xff]
    %v3853 = vld [vmem:[#allocation7 + $0x1a50] sm:$0xff]
    %v3854 = vld [vmem:[#allocation7 + $0x1a58] sm:$0xff]
    %v3855 = vld [vmem:[#allocation7 + $0x1a60] sm:$0xff]
    %v3856 = vld [vmem:[#allocation7 + $0x1a68] sm:$0xff]
    %v3857 = vld [vmem:[#allocation7 + $0x1a70] sm:$0xff]
    %v3858 = vld [vmem:[#allocation7 + $0x1a78] sm:$0xff]
    %v3859 = vld [vmem:[#allocation7 + $0x1a80] sm:$0xff]
    %v3860 = vld [vmem:[#allocation7 + $0x1a88] sm:$0xff]
    %v3861 = vld [vmem:[#allocation7 + $0x1a90] sm:$0xff]
    %v3862 = vld [vmem:[#allocation7 + $0x1a98] sm:$0xff]
    %v3863 = vld [vmem:[#allocation7 + $0x1aa0] sm:$0xff]
    %v3864 = vld [vmem:[#allocation7 + $0x1aa8] sm:$0xff]
    %v3865 = vld [vmem:[#allocation7 + $0x1ab0] sm:$0xff]
    %v3866 = vld [vmem:[#allocation7 + $0x1ab8] sm:$0xff]
    %v3867 = vld [vmem:[#allocation7 + $0x1ac0] sm:$0xff]
    %v3868 = vld [vmem:[#allocation7 + $0x1ac8] sm:$0xff]
    %v3869 = vld [vmem:[#allocation7 + $0x1ad0] sm:$0xff]
    %v3870 = vld [vmem:[#allocation7 + $0x1ad8] sm:$0xff]
    %v3871 = vld [vmem:[#allocation7 + $0x1ae0] sm:$0xff]
    %v3872 = vld [vmem:[#allocation7 + $0x1ae8] sm:$0xff]
    %v3873 = vld [vmem:[#allocation7 + $0x1af0] sm:$0xff]
    %v3874 = vld [vmem:[#allocation7 + $0x1af8] sm:$0xff]
    %v3875 = vld [vmem:[#allocation7 + $0x1b00] sm:$0xff]
    %v3876 = vld [vmem:[#allocation7 + $0x1b08] sm:$0xff]
    %v3877 = vld [vmem:[#allocation7 + $0x1b10] sm:$0xff]
    %v3878 = vld [vmem:[#allocation7 + $0x1b18] sm:$0xff]
    %v3879 = vld [vmem:[#allocation7 + $0x1b20] sm:$0xff]
    %v3880 = vld [vmem:[#allocation7 + $0x1b28] sm:$0xff]
    %v3881 = vld [vmem:[#allocation7 + $0x1b30] sm:$0xff]
    %v3882 = vld [vmem:[#allocation7 + $0x1b38] sm:$0xff]
    %v3883 = vld [vmem:[#allocation7 + $0x1b40] sm:$0xff]
    %v3884 = vld [vmem:[#allocation7 + $0x1b48] sm:$0xff]
    %v3885 = vld [vmem:[#allocation7 + $0x1b50] sm:$0xff]
    %v3886 = vld [vmem:[#allocation7 + $0x1b58] sm:$0xff]
    %v3887 = vld [vmem:[#allocation7 + $0x1b60] sm:$0xff]
    %v3888 = vld [vmem:[#allocation7 + $0x1b68] sm:$0xff]
    %v3889 = vld [vmem:[#allocation7 + $0x1b70] sm:$0xff]
    %v3890 = vld [vmem:[#allocation7 + $0x1b78] sm:$0xff]
    %v3891 = vld [vmem:[#allocation7 + $0x1b80] sm:$0xff]
    %v3892 = vld [vmem:[#allocation7 + $0x1b88] sm:$0xff]
    %v3893 = vld [vmem:[#allocation7 + $0x1b90] sm:$0xff]
    %v3894 = vld [vmem:[#allocation7 + $0x1b98] sm:$0xff]
    %v3895 = vld [vmem:[#allocation7 + $0x1ba0] sm:$0xff]
    %v3896 = vld [vmem:[#allocation7 + $0x1ba8] sm:$0xff]
    %v3897 = vld [vmem:[#allocation7 + $0x1bb0] sm:$0xff]
    %v3898 = vld [vmem:[#allocation7 + $0x1bb8] sm:$0xff]
    %v3899 = vld [vmem:[#allocation7 + $0x1bc0] sm:$0xff]
    %v3900 = vld [vmem:[#allocation7 + $0x1bc8] sm:$0xff]
    %v3901 = vld [vmem:[#allocation7 + $0x1bd0] sm:$0xff]
    %v3902 = vld [vmem:[#allocation7 + $0x1bd8] sm:$0xff]
    %v3903 = vld [vmem:[#allocation7 + $0x1be0] sm:$0xff]
    %v3904 = vld [vmem:[#allocation7 + $0x1be8] sm:$0xff]
    %v3905 = vld [vmem:[#allocation7 + $0x1bf0] sm:$0xff]
    %v3906 = vld [vmem:[#allocation7 + $0x1bf8] sm:$0xff]
    %v3907 = vld [vmem:[#allocation7 + $0x1c00] sm:$0xff]
    %v3908 = vld [vmem:[#allocation7 + $0x1c08] sm:$0xff]
    %v3909 = vld [vmem:[#allocation7 + $0x1c10] sm:$0xff]
    %v3910 = vld [vmem:[#allocation7 + $0x1c18] sm:$0xff]
    %v3911 = vld [vmem:[#allocation7 + $0x1c20] sm:$0xff]
    %v3912 = vld [vmem:[#allocation7 + $0x1c28] sm:$0xff]
    %v3913 = vld [vmem:[#allocation7 + $0x1c30] sm:$0xff]
    %v3914 = vld [vmem:[#allocation7 + $0x1c38] sm:$0xff]
    %v3915 = vld [vmem:[#allocation7 + $0x1c40] sm:$0xff]
    %v3916 = vld [vmem:[#allocation7 + $0x1c48] sm:$0xff]
    %v3917 = vld [vmem:[#allocation7 + $0x1c50] sm:$0xff]
    %v3918 = vld [vmem:[#allocation7 + $0x1c58] sm:$0xff]
    %v3919 = vld [vmem:[#allocation7 + $0x1c60] sm:$0xff]
    %v3920 = vld [vmem:[#allocation7 + $0x1c68] sm:$0xff]
    %v3921 = vld [vmem:[#allocation7 + $0x1c70] sm:$0xff]
    %v3922 = vld [vmem:[#allocation7 + $0x1c78] sm:$0xff]
    %v3923 = vld [vmem:[#allocation7 + $0x1c80] sm:$0xff]
    %v3924 = vld [vmem:[#allocation7 + $0x1c88] sm:$0xff]
    %v3925 = vld [vmem:[#allocation7 + $0x1c90] sm:$0xff]
    %v3926 = vld [vmem:[#allocation7 + $0x1c98] sm:$0xff]
    %v3927 = vld [vmem:[#allocation7 + $0x1ca0] sm:$0xff]
    %v3928 = vld [vmem:[#allocation7 + $0x1ca8] sm:$0xff]
    %v3929 = vld [vmem:[#allocation7 + $0x1cb0] sm:$0xff]
    %v3930 = vld [vmem:[#allocation7 + $0x1cb8] sm:$0xff]
    %v3931 = vld [vmem:[#allocation7 + $0x1cc0] sm:$0xff]
    %v3932 = vld [vmem:[#allocation7 + $0x1cc8] sm:$0xff]
    %v3933 = vld [vmem:[#allocation7 + $0x1cd0] sm:$0xff]
    %v3934 = vld [vmem:[#allocation7 + $0x1cd8] sm:$0xff]
    %v3935 = vld [vmem:[#allocation7 + $0x1ce0] sm:$0xff]
    %v3936 = vld [vmem:[#allocation7 + $0x1ce8] sm:$0xff]
    %v3937 = vld [vmem:[#allocation7 + $0x1cf0] sm:$0xff]
    %v3938 = vld [vmem:[#allocation7 + $0x1cf8] sm:$0xff]
    %v3939 = vld [vmem:[#allocation7 + $0x1d00] sm:$0xff]
    %v3940 = vld [vmem:[#allocation7 + $0x1d08] sm:$0xff]
    %v3941 = vld [vmem:[#allocation7 + $0x1d10] sm:$0xff]
    %v3942 = vld [vmem:[#allocation7 + $0x1d18] sm:$0xff]
    %v3943 = vld [vmem:[#allocation7 + $0x1d20] sm:$0xff]
    %v3944 = vld [vmem:[#allocation7 + $0x1d28] sm:$0xff]
    %v3945 = vld [vmem:[#allocation7 + $0x1d30] sm:$0xff]
    %v3946 = vld [vmem:[#allocation7 + $0x1d38] sm:$0xff]
    %v3947 = vld [vmem:[#allocation7 + $0x1d40] sm:$0xff]
    %v3948 = vld [vmem:[#allocation7 + $0x1d48] sm:$0xff]
    %v3949 = vld [vmem:[#allocation7 + $0x1d50] sm:$0xff]
    %v3950 = vld [vmem:[#allocation7 + $0x1d58] sm:$0xff]
    %v3951 = vld [vmem:[#allocation7 + $0x1d60] sm:$0xff]
    %v3952 = vld [vmem:[#allocation7 + $0x1d68] sm:$0xff]
    %v3953 = vld [vmem:[#allocation7 + $0x1d70] sm:$0xff]
    %v3954 = vld [vmem:[#allocation7 + $0x1d78] sm:$0xff]
    %v3955 = vld [vmem:[#allocation7 + $0x1d80] sm:$0xff]
    %v3956 = vld [vmem:[#allocation7 + $0x1d88] sm:$0xff]
    %v3957 = vld [vmem:[#allocation7 + $0x1d90] sm:$0xff]
    %v3958 = vld [vmem:[#allocation7 + $0x1d98] sm:$0xff]
    %v3959 = vld [vmem:[#allocation7 + $0x1da0] sm:$0xff]
    %v3960 = vld [vmem:[#allocation7 + $0x1da8] sm:$0xff]
    %v3961 = vld [vmem:[#allocation7 + $0x1db0] sm:$0xff]
    %v3962 = vld [vmem:[#allocation7 + $0x1db8] sm:$0xff]
    %v3963 = vld [vmem:[#allocation7 + $0x1dc0] sm:$0xff]
    %v3964 = vld [vmem:[#allocation7 + $0x1dc8] sm:$0xff]
    %v3965 = vld [vmem:[#allocation7 + $0x1dd0] sm:$0xff]
    %v3966 = vld [vmem:[#allocation7 + $0x1dd8] sm:$0xff]
    %v3967 = vld [vmem:[#allocation7 + $0x1de0] sm:$0xff]
    %v3968 = vld [vmem:[#allocation7 + $0x1de8] sm:$0xff]
    %v3969 = vld [vmem:[#allocation7 + $0x1df0] sm:$0xff]
    %v3970 = vld [vmem:[#allocation7 + $0x1df8] sm:$0xff]
    %v3971 = vld [vmem:[#allocation7 + $0x1e00] sm:$0xff]
    %v3972 = vld [vmem:[#allocation7 + $0x1e08] sm:$0xff]
    %v3973 = vld [vmem:[#allocation7 + $0x1e10] sm:$0xff]
    %v3974 = vld [vmem:[#allocation7 + $0x1e18] sm:$0xff]
    %v3975 = vld [vmem:[#allocation7 + $0x1e20] sm:$0xff]
    %v3976 = vld [vmem:[#allocation7 + $0x1e28] sm:$0xff]
    %v3977 = vld [vmem:[#allocation7 + $0x1e30] sm:$0xff]
    %v3978 = vld [vmem:[#allocation7 + $0x1e38] sm:$0xff]
    %v3979 = vld [vmem:[#allocation7 + $0x1e40] sm:$0xff]
    %v3980 = vld [vmem:[#allocation7 + $0x1e48] sm:$0xff]
    %v3981 = vld [vmem:[#allocation7 + $0x1e50] sm:$0xff]
    %v3982 = vld [vmem:[#allocation7 + $0x1e58] sm:$0xff]
    %v3983 = vld [vmem:[#allocation7 + $0x1e60] sm:$0xff]
    %v3984 = vld [vmem:[#allocation7 + $0x1e68] sm:$0xff]
    %v3985 = vld [vmem:[#allocation7 + $0x1e70] sm:$0xff]
    %v3986 = vld [vmem:[#allocation7 + $0x1e78] sm:$0xff]
    %v3987 = vld [vmem:[#allocation7 + $0x1e80] sm:$0xff]
    %v3988 = vld [vmem:[#allocation7 + $0x1e88] sm:$0xff]
    %v3989 = vld [vmem:[#allocation7 + $0x1e90] sm:$0xff]
    %v3990 = vld [vmem:[#allocation7 + $0x1e98] sm:$0xff]
    %v3991 = vld [vmem:[#allocation7 + $0x1ea0] sm:$0xff]
    %v3992 = vld [vmem:[#allocation7 + $0x1ea8] sm:$0xff]
    %v3993 = vld [vmem:[#allocation7 + $0x1eb0] sm:$0xff]
    %v3994 = vld [vmem:[#allocation7 + $0x1eb8] sm:$0xff]
    %v3995 = vld [vmem:[#allocation7 + $0x1ec0] sm:$0xff]
    %v3996 = vld [vmem:[#allocation7 + $0x1ec8] sm:$0xff]
    %v3997 = vld [vmem:[#allocation7 + $0x1ed0] sm:$0xff]
    %v3998 = vld [vmem:[#allocation7 + $0x1ed8] sm:$0xff]
    %v3999 = vld [vmem:[#allocation7 + $0x1ee0] sm:$0xff]
    %v4000 = vld [vmem:[#allocation7 + $0x1ee8] sm:$0xff]
    %v4001 = vld [vmem:[#allocation7 + $0x1ef0] sm:$0xff]
    %v4002 = vld [vmem:[#allocation7 + $0x1ef8] sm:$0xff]
    %v4003 = vld [vmem:[#allocation7 + $0x1f00] sm:$0xff]
    %v4004 = vld [vmem:[#allocation7 + $0x1f08] sm:$0xff]
    %v4005 = vld [vmem:[#allocation7 + $0x1f10] sm:$0xff]
    %v4006 = vld [vmem:[#allocation7 + $0x1f18] sm:$0xff]
    %v4007 = vld [vmem:[#allocation7 + $0x1f20] sm:$0xff]
    %v4008 = vld [vmem:[#allocation7 + $0x1f28] sm:$0xff]
    %v4009 = vld [vmem:[#allocation7 + $0x1f30] sm:$0xff]
    %v4010 = vld [vmem:[#allocation7 + $0x1f38] sm:$0xff]
    %v4011 = vld [vmem:[#allocation7 + $0x1f40] sm:$0xff]
    %v4012 = vld [vmem:[#allocation7 + $0x1f48] sm:$0xff]
    %v4013 = vld [vmem:[#allocation7 + $0x1f50] sm:$0xff]
    %v4014 = vld [vmem:[#allocation7 + $0x1f58] sm:$0xff]
    %v4015 = vld [vmem:[#allocation7 + $0x1f60] sm:$0xff]
    %v4016 = vld [vmem:[#allocation7 + $0x1f68] sm:$0xff]
    %v4017 = vld [vmem:[#allocation7 + $0x1f70] sm:$0xff]
    %v4018 = vld [vmem:[#allocation7 + $0x1f78] sm:$0xff]
    %v4019 = vld [vmem:[#allocation7 + $0x1f80] sm:$0xff]
    %v4020 = vld [vmem:[#allocation7 + $0x1f88] sm:$0xff]
    %v4021 = vld [vmem:[#allocation7 + $0x1f90] sm:$0xff]
    %v4022 = vld [vmem:[#allocation7 + $0x1f98] sm:$0xff]
    %v4023 = vld [vmem:[#allocation7 + $0x1fa0] sm:$0xff]
    %v4024 = vld [vmem:[#allocation7 + $0x1fa8] sm:$0xff]
    %v4025 = vld [vmem:[#allocation7 + $0x1fb0] sm:$0xff]
    %v4026 = vld [vmem:[#allocation7 + $0x1fb8] sm:$0xff]
    %v4027 = vld [vmem:[#allocation7 + $0x1fc0] sm:$0xff]
    %v4028 = vld [vmem:[#allocation7 + $0x1fc8] sm:$0xff]
    %v4029 = vld [vmem:[#allocation7 + $0x1fd0] sm:$0xff]
    %v4030 = vld [vmem:[#allocation7 + $0x1fd8] sm:$0xff]
    %v4031 = vld [vmem:[#allocation7 + $0x1fe0] sm:$0xff]
    %v4032 = vld [vmem:[#allocation7 + $0x1fe8] sm:$0xff]
    %v4033 = vld [vmem:[#allocation7 + $0x1ff0] sm:$0xff]
    %v4034 = vld [vmem:[#allocation7 + $0x1ff8] sm:$0xff]
    %v4035 = vld [vmem:[#allocation8] sm:$0xff]
    %v4037 = vlaneseq
    %v4038 = vshrl.u32 %v4037, 7
    %v4039 = vsub.s32 0, %v4038
    %v4040 = vrot.slane %v4035, %v4039
    %v4041 = vlaneseq
    %v4042 = vshrl.u32 %v4041, 7
    %v4043 = vsub.s32 1, %v4042
    %v4044 = vrot.slane %v4035, %v4043
    %v4045 = vlaneseq
    %v4046 = vshrl.u32 %v4045, 7
    %v4047 = vsub.s32 2, %v4046
    %v4048 = vrot.slane %v4035, %v4047
    %v4049 = vlaneseq
    %v4050 = vshrl.u32 %v4049, 7
    %v4051 = vsub.s32 3, %v4050
    %v4052 = vrot.slane %v4035, %v4051
    %v4053 = vlaneseq
    %v4054 = vshrl.u32 %v4053, 7
    %v4055 = vsub.s32 4, %v4054
    %v4056 = vrot.slane %v4035, %v4055
    %v4057 = vlaneseq
    %v4058 = vshrl.u32 %v4057, 7
    %v4059 = vsub.s32 5, %v4058
    %v4060 = vrot.slane %v4035, %v4059
    %v4061 = vlaneseq
    %v4062 = vshrl.u32 %v4061, 7
    %v4063 = vsub.s32 6, %v4062
    %v4064 = vrot.slane %v4035, %v4063
    %v4065 = vlaneseq
    %v4066 = vshrl.u32 %v4065, 7
    %v4067 = vsub.s32 7, %v4066
    %v4068 = vrot.slane %v4035, %v4067
    %v4085 = vunpack.c.l.b16 %v3003
    %v4086 = vunpack.c.h.b16 %v3003
    %v4087 = vunpack.c.l.b16 %v3004
    %v4088 = vunpack.c.h.b16 %v3004
    %v4089 = vunpack.c.l.b16 %v3005
    %v4090 = vunpack.c.h.b16 %v3005
    %v4091 = vunpack.c.l.b16 %v3006
    %v4092 = vunpack.c.h.b16 %v3006
    %v4093 = vunpack.c.l.b16 %v3007
    %v4094 = vunpack.c.h.b16 %v3007
    %v4095 = vunpack.c.l.b16 %v3008
    %v4096 = vunpack.c.h.b16 %v3008
    %v4097 = vunpack.c.l.b16 %v3009
    %v4098 = vunpack.c.h.b16 %v3009
    %v4099 = vunpack.c.l.b16 %v3010
    %v4100 = vunpack.c.h.b16 %v3010
    %v4101 = vpack.c.b16 %v4085, %v4085
    %v4102 = vpack.c.b16 %v4086, %v4086
    %v4103 = vpack.c.b16 %v4087, %v4087
    %v4104 = vpack.c.b16 %v4088, %v4088
    %v4105 = vpack.c.b16 %v4089, %v4089
    %v4106 = vpack.c.b16 %v4090, %v4090
    %v4107 = vpack.c.b16 %v4091, %v4091
    %v4108 = vpack.c.b16 %v4092, %v4092
    %v4109 = vpack.c.b16 %v4093, %v4093
    %v4110 = vpack.c.b16 %v4094, %v4094
    %v4111 = vpack.c.b16 %v4095, %v4095
    %v4112 = vpack.c.b16 %v4096, %v4096
    %v4113 = vpack.c.b16 %v4097, %v4097
    %v4114 = vpack.c.b16 %v4098, %v4098
    %v4115 = vpack.c.b16 %v4099, %v4099
    %v4116 = vpack.c.b16 %v4100, %v4100
    %v5157 = vunpack.c.l.b16 %v3011
    %v5158 = vunpack.c.h.b16 %v3011
    %v5159 = vunpack.c.l.b16 %v3012
    %v5160 = vunpack.c.h.b16 %v3012
    %v5161 = vunpack.c.l.b16 %v3013
    %v5162 = vunpack.c.h.b16 %v3013
    %v5163 = vunpack.c.l.b16 %v3014
    %v5164 = vunpack.c.h.b16 %v3014
    %v5165 = vunpack.c.l.b16 %v3015
    %v5166 = vunpack.c.h.b16 %v3015
    %v5167 = vunpack.c.l.b16 %v3016
    %v5168 = vunpack.c.h.b16 %v3016
    %v5169 = vunpack.c.l.b16 %v3017
    %v5170 = vunpack.c.h.b16 %v3017
    %v5171 = vunpack.c.l.b16 %v3018
    %v5172 = vunpack.c.h.b16 %v3018
    %v5173 = vunpack.c.l.b16 %v3019
    %v5174 = vunpack.c.h.b16 %v3019
    %v5175 = vunpack.c.l.b16 %v3020
    %v5176 = vunpack.c.h.b16 %v3020
    %v5177 = vunpack.c.l.b16 %v3021
    %v5178 = vunpack.c.h.b16 %v3021
    %v5179 = vunpack.c.l.b16 %v3022
    %v5180 = vunpack.c.h.b16 %v3022
    %v5181 = vunpack.c.l.b16 %v3023
    %v5182 = vunpack.c.h.b16 %v3023
    %v5183 = vunpack.c.l.b16 %v3024
    %v5184 = vunpack.c.h.b16 %v3024
    %v5185 = vunpack.c.l.b16 %v3025
    %v5186 = vunpack.c.h.b16 %v3025
    %v5187 = vunpack.c.l.b16 %v3026
    %v5188 = vunpack.c.h.b16 %v3026
    %v5189 = vunpack.c.l.b16 %v3027
    %v5190 = vunpack.c.h.b16 %v3027
    %v5191 = vunpack.c.l.b16 %v3028
    %v5192 = vunpack.c.h.b16 %v3028
    %v5193 = vunpack.c.l.b16 %v3029
    %v5194 = vunpack.c.h.b16 %v3029
    %v5195 = vunpack.c.l.b16 %v3030
    %v5196 = vunpack.c.h.b16 %v3030
    %v5197 = vunpack.c.l.b16 %v3031
    %v5198 = vunpack.c.h.b16 %v3031
    %v5199 = vunpack.c.l.b16 %v3032
    %v5200 = vunpack.c.h.b16 %v3032
    %v5201 = vunpack.c.l.b16 %v3033
    %v5202 = vunpack.c.h.b16 %v3033
    %v5203 = vunpack.c.l.b16 %v3034
    %v5204 = vunpack.c.h.b16 %v3034
    %v5205 = vunpack.c.l.b16 %v3035
    %v5206 = vunpack.c.h.b16 %v3035
    %v5207 = vunpack.c.l.b16 %v3036
    %v5208 = vunpack.c.h.b16 %v3036
    %v5209 = vunpack.c.l.b16 %v3037
    %v5210 = vunpack.c.h.b16 %v3037
    %v5211 = vunpack.c.l.b16 %v3038
    %v5212 = vunpack.c.h.b16 %v3038
    %v5213 = vunpack.c.l.b16 %v3039
    %v5214 = vunpack.c.h.b16 %v3039
    %v5215 = vunpack.c.l.b16 %v3040
    %v5216 = vunpack.c.h.b16 %v3040
    %v5217 = vunpack.c.l.b16 %v3041
    %v5218 = vunpack.c.h.b16 %v3041
    %v5219 = vunpack.c.l.b16 %v3042
    %v5220 = vunpack.c.h.b16 %v3042
    %v5221 = vunpack.c.l.b16 %v3043
    %v5222 = vunpack.c.h.b16 %v3043
    %v5223 = vunpack.c.l.b16 %v3044
    %v5224 = vunpack.c.h.b16 %v3044
    %v5225 = vunpack.c.l.b16 %v3045
    %v5226 = vunpack.c.h.b16 %v3045
    %v5227 = vunpack.c.l.b16 %v3046
    %v5228 = vunpack.c.h.b16 %v3046
    %v5229 = vunpack.c.l.b16 %v3047
    %v5230 = vunpack.c.h.b16 %v3047
    %v5231 = vunpack.c.l.b16 %v3048
    %v5232 = vunpack.c.h.b16 %v3048
    %v5233 = vunpack.c.l.b16 %v3049
    %v5234 = vunpack.c.h.b16 %v3049
    %v5235 = vunpack.c.l.b16 %v3050
    %v5236 = vunpack.c.h.b16 %v3050
    %v5237 = vunpack.c.l.b16 %v3051
    %v5238 = vunpack.c.h.b16 %v3051
    %v5239 = vunpack.c.l.b16 %v3052
    %v5240 = vunpack.c.h.b16 %v3052
    %v5241 = vunpack.c.l.b16 %v3053
    %v5242 = vunpack.c.h.b16 %v3053
    %v5243 = vunpack.c.l.b16 %v3054
    %v5244 = vunpack.c.h.b16 %v3054
    %v5245 = vunpack.c.l.b16 %v3055
    %v5246 = vunpack.c.h.b16 %v3055
    %v5247 = vunpack.c.l.b16 %v3056
    %v5248 = vunpack.c.h.b16 %v3056
    %v5249 = vunpack.c.l.b16 %v3057
    %v5250 = vunpack.c.h.b16 %v3057
    %v5251 = vunpack.c.l.b16 %v3058
    %v5252 = vunpack.c.h.b16 %v3058
    %v5253 = vunpack.c.l.b16 %v3059
    %v5254 = vunpack.c.h.b16 %v3059
    %v5255 = vunpack.c.l.b16 %v3060
    %v5256 = vunpack.c.h.b16 %v3060
    %v5257 = vunpack.c.l.b16 %v3061
    %v5258 = vunpack.c.h.b16 %v3061
    %v5259 = vunpack.c.l.b16 %v3062
    %v5260 = vunpack.c.h.b16 %v3062
    %v5261 = vunpack.c.l.b16 %v3063
    %v5262 = vunpack.c.h.b16 %v3063
    %v5263 = vunpack.c.l.b16 %v3064
    %v5264 = vunpack.c.h.b16 %v3064
    %v5265 = vunpack.c.l.b16 %v3065
    %v5266 = vunpack.c.h.b16 %v3065
    %v5267 = vunpack.c.l.b16 %v3066
    %v5268 = vunpack.c.h.b16 %v3066
    %v5269 = vunpack.c.l.b16 %v3067
    %v5270 = vunpack.c.h.b16 %v3067
    %v5271 = vunpack.c.l.b16 %v3068
    %v5272 = vunpack.c.h.b16 %v3068
    %v5273 = vunpack.c.l.b16 %v3069
    %v5274 = vunpack.c.h.b16 %v3069
    %v5275 = vunpack.c.l.b16 %v3070
    %v5276 = vunpack.c.h.b16 %v3070
    %v5277 = vunpack.c.l.b16 %v3071
    %v5278 = vunpack.c.h.b16 %v3071
    %v5279 = vunpack.c.l.b16 %v3072
    %v5280 = vunpack.c.h.b16 %v3072
    %v5281 = vunpack.c.l.b16 %v3073
    %v5282 = vunpack.c.h.b16 %v3073
    %v5283 = vunpack.c.l.b16 %v3074
    %v5284 = vunpack.c.h.b16 %v3074
    %v5285 = vunpack.c.l.b16 %v3075
    %v5286 = vunpack.c.h.b16 %v3075
    %v5287 = vunpack.c.l.b16 %v3076
    %v5288 = vunpack.c.h.b16 %v3076
    %v5289 = vunpack.c.l.b16 %v3077
    %v5290 = vunpack.c.h.b16 %v3077
    %v5291 = vunpack.c.l.b16 %v3078
    %v5292 = vunpack.c.h.b16 %v3078
    %v5293 = vunpack.c.l.b16 %v3079
    %v5294 = vunpack.c.h.b16 %v3079
    %v5295 = vunpack.c.l.b16 %v3080
    %v5296 = vunpack.c.h.b16 %v3080
    %v5297 = vunpack.c.l.b16 %v3081
    %v5298 = vunpack.c.h.b16 %v3081
    %v5299 = vunpack.c.l.b16 %v3082
    %v5300 = vunpack.c.h.b16 %v3082
    %v5301 = vunpack.c.l.b16 %v3083
    %v5302 = vunpack.c.h.b16 %v3083
    %v5303 = vunpack.c.l.b16 %v3084
    %v5304 = vunpack.c.h.b16 %v3084
    %v5305 = vunpack.c.l.b16 %v3085
    %v5306 = vunpack.c.h.b16 %v3085
    %v5307 = vunpack.c.l.b16 %v3086
    %v5308 = vunpack.c.h.b16 %v3086
    %v5309 = vunpack.c.l.b16 %v3087
    %v5310 = vunpack.c.h.b16 %v3087
    %v5311 = vunpack.c.l.b16 %v3088
    %v5312 = vunpack.c.h.b16 %v3088
    %v5313 = vunpack.c.l.b16 %v3089
    %v5314 = vunpack.c.h.b16 %v3089
    %v5315 = vunpack.c.l.b16 %v3090
    %v5316 = vunpack.c.h.b16 %v3090
    %v5317 = vunpack.c.l.b16 %v3091
    %v5318 = vunpack.c.h.b16 %v3091
    %v5319 = vunpack.c.l.b16 %v3092
    %v5320 = vunpack.c.h.b16 %v3092
    %v5321 = vunpack.c.l.b16 %v3093
    %v5322 = vunpack.c.h.b16 %v3093
    %v5323 = vunpack.c.l.b16 %v3094
    %v5324 = vunpack.c.h.b16 %v3094
    %v5325 = vunpack.c.l.b16 %v3095
    %v5326 = vunpack.c.h.b16 %v3095
    %v5327 = vunpack.c.l.b16 %v3096
    %v5328 = vunpack.c.h.b16 %v3096
    %v5329 = vunpack.c.l.b16 %v3097
    %v5330 = vunpack.c.h.b16 %v3097
    %v5331 = vunpack.c.l.b16 %v3098
    %v5332 = vunpack.c.h.b16 %v3098
    %v5333 = vunpack.c.l.b16 %v3099
    %v5334 = vunpack.c.h.b16 %v3099
    %v5335 = vunpack.c.l.b16 %v3100
    %v5336 = vunpack.c.h.b16 %v3100
    %v5337 = vunpack.c.l.b16 %v3101
    %v5338 = vunpack.c.h.b16 %v3101
    %v5339 = vunpack.c.l.b16 %v3102
    %v5340 = vunpack.c.h.b16 %v3102
    %v5341 = vunpack.c.l.b16 %v3103
    %v5342 = vunpack.c.h.b16 %v3103
    %v5343 = vunpack.c.l.b16 %v3104
    %v5344 = vunpack.c.h.b16 %v3104
    %v5345 = vunpack.c.l.b16 %v3105
    %v5346 = vunpack.c.h.b16 %v3105
    %v5347 = vunpack.c.l.b16 %v3106
    %v5348 = vunpack.c.h.b16 %v3106
    %v5349 = vunpack.c.l.b16 %v3107
    %v5350 = vunpack.c.h.b16 %v3107
    %v5351 = vunpack.c.l.b16 %v3108
    %v5352 = vunpack.c.h.b16 %v3108
    %v5353 = vunpack.c.l.b16 %v3109
    %v5354 = vunpack.c.h.b16 %v3109
    %v5355 = vunpack.c.l.b16 %v3110
    %v5356 = vunpack.c.h.b16 %v3110
    %v5357 = vunpack.c.l.b16 %v3111
    %v5358 = vunpack.c.h.b16 %v3111
    %v5359 = vunpack.c.l.b16 %v3112
    %v5360 = vunpack.c.h.b16 %v3112
    %v5361 = vunpack.c.l.b16 %v3113
    %v5362 = vunpack.c.h.b16 %v3113
    %v5363 = vunpack.c.l.b16 %v3114
    %v5364 = vunpack.c.h.b16 %v3114
    %v5365 = vunpack.c.l.b16 %v3115
    %v5366 = vunpack.c.h.b16 %v3115
    %v5367 = vunpack.c.l.b16 %v3116
    %v5368 = vunpack.c.h.b16 %v3116
    %v5369 = vunpack.c.l.b16 %v3117
    %v5370 = vunpack.c.h.b16 %v3117
    %v5371 = vunpack.c.l.b16 %v3118
    %v5372 = vunpack.c.h.b16 %v3118
    %v5373 = vunpack.c.l.b16 %v3119
    %v5374 = vunpack.c.h.b16 %v3119
    %v5375 = vunpack.c.l.b16 %v3120
    %v5376 = vunpack.c.h.b16 %v3120
    %v5377 = vunpack.c.l.b16 %v3121
    %v5378 = vunpack.c.h.b16 %v3121
    %v5379 = vunpack.c.l.b16 %v3122
    %v5380 = vunpack.c.h.b16 %v3122
    %v5381 = vunpack.c.l.b16 %v3123
    %v5382 = vunpack.c.h.b16 %v3123
    %v5383 = vunpack.c.l.b16 %v3124
    %v5384 = vunpack.c.h.b16 %v3124
    %v5385 = vunpack.c.l.b16 %v3125
    %v5386 = vunpack.c.h.b16 %v3125
    %v5387 = vunpack.c.l.b16 %v3126
    %v5388 = vunpack.c.h.b16 %v3126
    %v5389 = vunpack.c.l.b16 %v3127
    %v5390 = vunpack.c.h.b16 %v3127
    %v5391 = vunpack.c.l.b16 %v3128
    %v5392 = vunpack.c.h.b16 %v3128
    %v5393 = vunpack.c.l.b16 %v3129
    %v5394 = vunpack.c.h.b16 %v3129
    %v5395 = vunpack.c.l.b16 %v3130
    %v5396 = vunpack.c.h.b16 %v3130
    %v5397 = vunpack.c.l.b16 %v3131
    %v5398 = vunpack.c.h.b16 %v3131
    %v5399 = vunpack.c.l.b16 %v3132
    %v5400 = vunpack.c.h.b16 %v3132
    %v5401 = vunpack.c.l.b16 %v3133
    %v5402 = vunpack.c.h.b16 %v3133
    %v5403 = vunpack.c.l.b16 %v3134
    %v5404 = vunpack.c.h.b16 %v3134
    %v5405 = vunpack.c.l.b16 %v3135
    %v5406 = vunpack.c.h.b16 %v3135
    %v5407 = vunpack.c.l.b16 %v3136
    %v5408 = vunpack.c.h.b16 %v3136
    %v5409 = vunpack.c.l.b16 %v3137
    %v5410 = vunpack.c.h.b16 %v3137
    %v5411 = vunpack.c.l.b16 %v3138
    %v5412 = vunpack.c.h.b16 %v3138
    %v5413 = vunpack.c.l.b16 %v3139
    %v5414 = vunpack.c.h.b16 %v3139
    %v5415 = vunpack.c.l.b16 %v3140
    %v5416 = vunpack.c.h.b16 %v3140
    %v5417 = vunpack.c.l.b16 %v3141
    %v5418 = vunpack.c.h.b16 %v3141
    %v5419 = vunpack.c.l.b16 %v3142
    %v5420 = vunpack.c.h.b16 %v3142
    %v5421 = vunpack.c.l.b16 %v3143
    %v5422 = vunpack.c.h.b16 %v3143
    %v5423 = vunpack.c.l.b16 %v3144
    %v5424 = vunpack.c.h.b16 %v3144
    %v5425 = vunpack.c.l.b16 %v3145
    %v5426 = vunpack.c.h.b16 %v3145
    %v5427 = vunpack.c.l.b16 %v3146
    %v5428 = vunpack.c.h.b16 %v3146
    %v5429 = vunpack.c.l.b16 %v3147
    %v5430 = vunpack.c.h.b16 %v3147
    %v5431 = vunpack.c.l.b16 %v3148
    %v5432 = vunpack.c.h.b16 %v3148
    %v5433 = vunpack.c.l.b16 %v3149
    %v5434 = vunpack.c.h.b16 %v3149
    %v5435 = vunpack.c.l.b16 %v3150
    %v5436 = vunpack.c.h.b16 %v3150
    %v5437 = vunpack.c.l.b16 %v3151
    %v5438 = vunpack.c.h.b16 %v3151
    %v5439 = vunpack.c.l.b16 %v3152
    %v5440 = vunpack.c.h.b16 %v3152
    %v5441 = vunpack.c.l.b16 %v3153
    %v5442 = vunpack.c.h.b16 %v3153
    %v5443 = vunpack.c.l.b16 %v3154
    %v5444 = vunpack.c.h.b16 %v3154
    %v5445 = vunpack.c.l.b16 %v3155
    %v5446 = vunpack.c.h.b16 %v3155
    %v5447 = vunpack.c.l.b16 %v3156
    %v5448 = vunpack.c.h.b16 %v3156
    %v5449 = vunpack.c.l.b16 %v3157
    %v5450 = vunpack.c.h.b16 %v3157
    %v5451 = vunpack.c.l.b16 %v3158
    %v5452 = vunpack.c.h.b16 %v3158
    %v5453 = vunpack.c.l.b16 %v3159
    %v5454 = vunpack.c.h.b16 %v3159
    %v5455 = vunpack.c.l.b16 %v3160
    %v5456 = vunpack.c.h.b16 %v3160
    %v5457 = vunpack.c.l.b16 %v3161
    %v5458 = vunpack.c.h.b16 %v3161
    %v5459 = vunpack.c.l.b16 %v3162
    %v5460 = vunpack.c.h.b16 %v3162
    %v5461 = vunpack.c.l.b16 %v3163
    %v5462 = vunpack.c.h.b16 %v3163
    %v5463 = vunpack.c.l.b16 %v3164
    %v5464 = vunpack.c.h.b16 %v3164
    %v5465 = vunpack.c.l.b16 %v3165
    %v5466 = vunpack.c.h.b16 %v3165
    %v5467 = vunpack.c.l.b16 %v3166
    %v5468 = vunpack.c.h.b16 %v3166
    %v5469 = vunpack.c.l.b16 %v3167
    %v5470 = vunpack.c.h.b16 %v3167
    %v5471 = vunpack.c.l.b16 %v3168
    %v5472 = vunpack.c.h.b16 %v3168
    %v5473 = vunpack.c.l.b16 %v3169
    %v5474 = vunpack.c.h.b16 %v3169
    %v5475 = vunpack.c.l.b16 %v3170
    %v5476 = vunpack.c.h.b16 %v3170
    %v5477 = vunpack.c.l.b16 %v3171
    %v5478 = vunpack.c.h.b16 %v3171
    %v5479 = vunpack.c.l.b16 %v3172
    %v5480 = vunpack.c.h.b16 %v3172
    %v5481 = vunpack.c.l.b16 %v3173
    %v5482 = vunpack.c.h.b16 %v3173
    %v5483 = vunpack.c.l.b16 %v3174
    %v5484 = vunpack.c.h.b16 %v3174
    %v5485 = vunpack.c.l.b16 %v3175
    %v5486 = vunpack.c.h.b16 %v3175
    %v5487 = vunpack.c.l.b16 %v3176
    %v5488 = vunpack.c.h.b16 %v3176
    %v5489 = vunpack.c.l.b16 %v3177
    %v5490 = vunpack.c.h.b16 %v3177
    %v5491 = vunpack.c.l.b16 %v3178
    %v5492 = vunpack.c.h.b16 %v3178
    %v5493 = vunpack.c.l.b16 %v3179
    %v5494 = vunpack.c.h.b16 %v3179
    %v5495 = vunpack.c.l.b16 %v3180
    %v5496 = vunpack.c.h.b16 %v3180
    %v5497 = vunpack.c.l.b16 %v3181
    %v5498 = vunpack.c.h.b16 %v3181
    %v5499 = vunpack.c.l.b16 %v3182
    %v5500 = vunpack.c.h.b16 %v3182
    %v5501 = vunpack.c.l.b16 %v3183
    %v5502 = vunpack.c.h.b16 %v3183
    %v5503 = vunpack.c.l.b16 %v3184
    %v5504 = vunpack.c.h.b16 %v3184
    %v5505 = vunpack.c.l.b16 %v3185
    %v5506 = vunpack.c.h.b16 %v3185
    %v5507 = vunpack.c.l.b16 %v3186
    %v5508 = vunpack.c.h.b16 %v3186
    %v5509 = vunpack.c.l.b16 %v3187
    %v5510 = vunpack.c.h.b16 %v3187
    %v5511 = vunpack.c.l.b16 %v3188
    %v5512 = vunpack.c.h.b16 %v3188
    %v5513 = vunpack.c.l.b16 %v3189
    %v5514 = vunpack.c.h.b16 %v3189
    %v5515 = vunpack.c.l.b16 %v3190
    %v5516 = vunpack.c.h.b16 %v3190
    %v5517 = vunpack.c.l.b16 %v3191
    %v5518 = vunpack.c.h.b16 %v3191
    %v5519 = vunpack.c.l.b16 %v3192
    %v5520 = vunpack.c.h.b16 %v3192
    %v5521 = vunpack.c.l.b16 %v3193
    %v5522 = vunpack.c.h.b16 %v3193
    %v5523 = vunpack.c.l.b16 %v3194
    %v5524 = vunpack.c.h.b16 %v3194
    %v5525 = vunpack.c.l.b16 %v3195
    %v5526 = vunpack.c.h.b16 %v3195
    %v5527 = vunpack.c.l.b16 %v3196
    %v5528 = vunpack.c.h.b16 %v3196
    %v5529 = vunpack.c.l.b16 %v3197
    %v5530 = vunpack.c.h.b16 %v3197
    %v5531 = vunpack.c.l.b16 %v3198
    %v5532 = vunpack.c.h.b16 %v3198
    %v5533 = vunpack.c.l.b16 %v3199
    %v5534 = vunpack.c.h.b16 %v3199
    %v5535 = vunpack.c.l.b16 %v3200
    %v5536 = vunpack.c.h.b16 %v3200
    %v5537 = vunpack.c.l.b16 %v3201
    %v5538 = vunpack.c.h.b16 %v3201
    %v5539 = vunpack.c.l.b16 %v3202
    %v5540 = vunpack.c.h.b16 %v3202
    %v5541 = vunpack.c.l.b16 %v3203
    %v5542 = vunpack.c.h.b16 %v3203
    %v5543 = vunpack.c.l.b16 %v3204
    %v5544 = vunpack.c.h.b16 %v3204
    %v5545 = vunpack.c.l.b16 %v3205
    %v5546 = vunpack.c.h.b16 %v3205
    %v5547 = vunpack.c.l.b16 %v3206
    %v5548 = vunpack.c.h.b16 %v3206
    %v5549 = vunpack.c.l.b16 %v3207
    %v5550 = vunpack.c.h.b16 %v3207
    %v5551 = vunpack.c.l.b16 %v3208
    %v5552 = vunpack.c.h.b16 %v3208
    %v5553 = vunpack.c.l.b16 %v3209
    %v5554 = vunpack.c.h.b16 %v3209
    %v5555 = vunpack.c.l.b16 %v3210
    %v5556 = vunpack.c.h.b16 %v3210
    %v5557 = vunpack.c.l.b16 %v3211
    %v5558 = vunpack.c.h.b16 %v3211
    %v5559 = vunpack.c.l.b16 %v3212
    %v5560 = vunpack.c.h.b16 %v3212
    %v5561 = vunpack.c.l.b16 %v3213
    %v5562 = vunpack.c.h.b16 %v3213
    %v5563 = vunpack.c.l.b16 %v3214
    %v5564 = vunpack.c.h.b16 %v3214
    %v5565 = vunpack.c.l.b16 %v3215
    %v5566 = vunpack.c.h.b16 %v3215
    %v5567 = vunpack.c.l.b16 %v3216
    %v5568 = vunpack.c.h.b16 %v3216
    %v5569 = vunpack.c.l.b16 %v3217
    %v5570 = vunpack.c.h.b16 %v3217
    %v5571 = vunpack.c.l.b16 %v3218
    %v5572 = vunpack.c.h.b16 %v3218
    %v5573 = vunpack.c.l.b16 %v3219
    %v5574 = vunpack.c.h.b16 %v3219
    %v5575 = vunpack.c.l.b16 %v3220
    %v5576 = vunpack.c.h.b16 %v3220
    %v5577 = vunpack.c.l.b16 %v3221
    %v5578 = vunpack.c.h.b16 %v3221
    %v5579 = vunpack.c.l.b16 %v3222
    %v5580 = vunpack.c.h.b16 %v3222
    %v5581 = vunpack.c.l.b16 %v3223
    %v5582 = vunpack.c.h.b16 %v3223
    %v5583 = vunpack.c.l.b16 %v3224
    %v5584 = vunpack.c.h.b16 %v3224
    %v5585 = vunpack.c.l.b16 %v3225
    %v5586 = vunpack.c.h.b16 %v3225
    %v5587 = vunpack.c.l.b16 %v3226
    %v5588 = vunpack.c.h.b16 %v3226
    %v5589 = vunpack.c.l.b16 %v3227
    %v5590 = vunpack.c.h.b16 %v3227
    %v5591 = vunpack.c.l.b16 %v3228
    %v5592 = vunpack.c.h.b16 %v3228
    %v5593 = vunpack.c.l.b16 %v3229
    %v5594 = vunpack.c.h.b16 %v3229
    %v5595 = vunpack.c.l.b16 %v3230
    %v5596 = vunpack.c.h.b16 %v3230
    %v5597 = vunpack.c.l.b16 %v3231
    %v5598 = vunpack.c.h.b16 %v3231
    %v5599 = vunpack.c.l.b16 %v3232
    %v5600 = vunpack.c.h.b16 %v3232
    %v5601 = vunpack.c.l.b16 %v3233
    %v5602 = vunpack.c.h.b16 %v3233
    %v5603 = vunpack.c.l.b16 %v3234
    %v5604 = vunpack.c.h.b16 %v3234
    %v5605 = vunpack.c.l.b16 %v3235
    %v5606 = vunpack.c.h.b16 %v3235
    %v5607 = vunpack.c.l.b16 %v3236
    %v5608 = vunpack.c.h.b16 %v3236
    %v5609 = vunpack.c.l.b16 %v3237
    %v5610 = vunpack.c.h.b16 %v3237
    %v5611 = vunpack.c.l.b16 %v3238
    %v5612 = vunpack.c.h.b16 %v3238
    %v5613 = vunpack.c.l.b16 %v3239
    %v5614 = vunpack.c.h.b16 %v3239
    %v5615 = vunpack.c.l.b16 %v3240
    %v5616 = vunpack.c.h.b16 %v3240
    %v5617 = vunpack.c.l.b16 %v3241
    %v5618 = vunpack.c.h.b16 %v3241
    %v5619 = vunpack.c.l.b16 %v3242
    %v5620 = vunpack.c.h.b16 %v3242
    %v5621 = vunpack.c.l.b16 %v3243
    %v5622 = vunpack.c.h.b16 %v3243
    %v5623 = vunpack.c.l.b16 %v3244
    %v5624 = vunpack.c.h.b16 %v3244
    %v5625 = vunpack.c.l.b16 %v3245
    %v5626 = vunpack.c.h.b16 %v3245
    %v5627 = vunpack.c.l.b16 %v3246
    %v5628 = vunpack.c.h.b16 %v3246
    %v5629 = vunpack.c.l.b16 %v3247
    %v5630 = vunpack.c.h.b16 %v3247
    %v5631 = vunpack.c.l.b16 %v3248
    %v5632 = vunpack.c.h.b16 %v3248
    %v5633 = vunpack.c.l.b16 %v3249
    %v5634 = vunpack.c.h.b16 %v3249
    %v5635 = vunpack.c.l.b16 %v3250
    %v5636 = vunpack.c.h.b16 %v3250
    %v5637 = vunpack.c.l.b16 %v3251
    %v5638 = vunpack.c.h.b16 %v3251
    %v5639 = vunpack.c.l.b16 %v3252
    %v5640 = vunpack.c.h.b16 %v3252
    %v5641 = vunpack.c.l.b16 %v3253
    %v5642 = vunpack.c.h.b16 %v3253
    %v5643 = vunpack.c.l.b16 %v3254
    %v5644 = vunpack.c.h.b16 %v3254
    %v5645 = vunpack.c.l.b16 %v3255
    %v5646 = vunpack.c.h.b16 %v3255
    %v5647 = vunpack.c.l.b16 %v3256
    %v5648 = vunpack.c.h.b16 %v3256
    %v5649 = vunpack.c.l.b16 %v3257
    %v5650 = vunpack.c.h.b16 %v3257
    %v5651 = vunpack.c.l.b16 %v3258
    %v5652 = vunpack.c.h.b16 %v3258
    %v5653 = vunpack.c.l.b16 %v3259
    %v5654 = vunpack.c.h.b16 %v3259
    %v5655 = vunpack.c.l.b16 %v3260
    %v5656 = vunpack.c.h.b16 %v3260
    %v5657 = vunpack.c.l.b16 %v3261
    %v5658 = vunpack.c.h.b16 %v3261
    %v5659 = vunpack.c.l.b16 %v3262
    %v5660 = vunpack.c.h.b16 %v3262
    %v5661 = vunpack.c.l.b16 %v3263
    %v5662 = vunpack.c.h.b16 %v3263
    %v5663 = vunpack.c.l.b16 %v3264
    %v5664 = vunpack.c.h.b16 %v3264
    %v5665 = vunpack.c.l.b16 %v3265
    %v5666 = vunpack.c.h.b16 %v3265
    %v5667 = vunpack.c.l.b16 %v3266
    %v5668 = vunpack.c.h.b16 %v3266
    %v5669 = vunpack.c.l.b16 %v3267
    %v5670 = vunpack.c.h.b16 %v3267
    %v5671 = vunpack.c.l.b16 %v3268
    %v5672 = vunpack.c.h.b16 %v3268
    %v5673 = vunpack.c.l.b16 %v3269
    %v5674 = vunpack.c.h.b16 %v3269
    %v5675 = vunpack.c.l.b16 %v3270
    %v5676 = vunpack.c.h.b16 %v3270
    %v5677 = vunpack.c.l.b16 %v3271
    %v5678 = vunpack.c.h.b16 %v3271
    %v5679 = vunpack.c.l.b16 %v3272
    %v5680 = vunpack.c.h.b16 %v3272
    %v5681 = vunpack.c.l.b16 %v3273
    %v5682 = vunpack.c.h.b16 %v3273
    %v5683 = vunpack.c.l.b16 %v3274
    %v5684 = vunpack.c.h.b16 %v3274
    %v5685 = vunpack.c.l.b16 %v3275
    %v5686 = vunpack.c.h.b16 %v3275
    %v5687 = vunpack.c.l.b16 %v3276
    %v5688 = vunpack.c.h.b16 %v3276
    %v5689 = vunpack.c.l.b16 %v3277
    %v5690 = vunpack.c.h.b16 %v3277
    %v5691 = vunpack.c.l.b16 %v3278
    %v5692 = vunpack.c.h.b16 %v3278
    %v5693 = vunpack.c.l.b16 %v3279
    %v5694 = vunpack.c.h.b16 %v3279
    %v5695 = vunpack.c.l.b16 %v3280
    %v5696 = vunpack.c.h.b16 %v3280
    %v5697 = vunpack.c.l.b16 %v3281
    %v5698 = vunpack.c.h.b16 %v3281
    %v5699 = vunpack.c.l.b16 %v3282
    %v5700 = vunpack.c.h.b16 %v3282
    %v5701 = vunpack.c.l.b16 %v3283
    %v5702 = vunpack.c.h.b16 %v3283
    %v5703 = vunpack.c.l.b16 %v3284
    %v5704 = vunpack.c.h.b16 %v3284
    %v5705 = vunpack.c.l.b16 %v3285
    %v5706 = vunpack.c.h.b16 %v3285
    %v5707 = vunpack.c.l.b16 %v3286
    %v5708 = vunpack.c.h.b16 %v3286
    %v5709 = vunpack.c.l.b16 %v3287
    %v5710 = vunpack.c.h.b16 %v3287
    %v5711 = vunpack.c.l.b16 %v3288
    %v5712 = vunpack.c.h.b16 %v3288
    %v5713 = vunpack.c.l.b16 %v3289
    %v5714 = vunpack.c.h.b16 %v3289
    %v5715 = vunpack.c.l.b16 %v3290
    %v5716 = vunpack.c.h.b16 %v3290
    %v5717 = vunpack.c.l.b16 %v3291
    %v5718 = vunpack.c.h.b16 %v3291
    %v5719 = vunpack.c.l.b16 %v3292
    %v5720 = vunpack.c.h.b16 %v3292
    %v5721 = vunpack.c.l.b16 %v3293
    %v5722 = vunpack.c.h.b16 %v3293
    %v5723 = vunpack.c.l.b16 %v3294
    %v5724 = vunpack.c.h.b16 %v3294
    %v5725 = vunpack.c.l.b16 %v3295
    %v5726 = vunpack.c.h.b16 %v3295
    %v5727 = vunpack.c.l.b16 %v3296
    %v5728 = vunpack.c.h.b16 %v3296
    %v5729 = vunpack.c.l.b16 %v3297
    %v5730 = vunpack.c.h.b16 %v3297
    %v5731 = vunpack.c.l.b16 %v3298
    %v5732 = vunpack.c.h.b16 %v3298
    %v5733 = vunpack.c.l.b16 %v3299
    %v5734 = vunpack.c.h.b16 %v3299
    %v5735 = vunpack.c.l.b16 %v3300
    %v5736 = vunpack.c.h.b16 %v3300
    %v5737 = vunpack.c.l.b16 %v3301
    %v5738 = vunpack.c.h.b16 %v3301
    %v5739 = vunpack.c.l.b16 %v3302
    %v5740 = vunpack.c.h.b16 %v3302
    %v5741 = vunpack.c.l.b16 %v3303
    %v5742 = vunpack.c.h.b16 %v3303
    %v5743 = vunpack.c.l.b16 %v3304
    %v5744 = vunpack.c.h.b16 %v3304
    %v5745 = vunpack.c.l.b16 %v3305
    %v5746 = vunpack.c.h.b16 %v3305
    %v5747 = vunpack.c.l.b16 %v3306
    %v5748 = vunpack.c.h.b16 %v3306
    %v5749 = vunpack.c.l.b16 %v3307
    %v5750 = vunpack.c.h.b16 %v3307
    %v5751 = vunpack.c.l.b16 %v3308
    %v5752 = vunpack.c.h.b16 %v3308
    %v5753 = vunpack.c.l.b16 %v3309
    %v5754 = vunpack.c.h.b16 %v3309
    %v5755 = vunpack.c.l.b16 %v3310
    %v5756 = vunpack.c.h.b16 %v3310
    %v5757 = vunpack.c.l.b16 %v3311
    %v5758 = vunpack.c.h.b16 %v3311
    %v5759 = vunpack.c.l.b16 %v3312
    %v5760 = vunpack.c.h.b16 %v3312
    %v5761 = vunpack.c.l.b16 %v3313
    %v5762 = vunpack.c.h.b16 %v3313
    %v5763 = vunpack.c.l.b16 %v3314
    %v5764 = vunpack.c.h.b16 %v3314
    %v5765 = vunpack.c.l.b16 %v3315
    %v5766 = vunpack.c.h.b16 %v3315
    %v5767 = vunpack.c.l.b16 %v3316
    %v5768 = vunpack.c.h.b16 %v3316
    %v5769 = vunpack.c.l.b16 %v3317
    %v5770 = vunpack.c.h.b16 %v3317
    %v5771 = vunpack.c.l.b16 %v3318
    %v5772 = vunpack.c.h.b16 %v3318
    %v5773 = vunpack.c.l.b16 %v3319
    %v5774 = vunpack.c.h.b16 %v3319
    %v5775 = vunpack.c.l.b16 %v3320
    %v5776 = vunpack.c.h.b16 %v3320
    %v5777 = vunpack.c.l.b16 %v3321
    %v5778 = vunpack.c.h.b16 %v3321
    %v5779 = vunpack.c.l.b16 %v3322
    %v5780 = vunpack.c.h.b16 %v3322
    %v5781 = vunpack.c.l.b16 %v3323
    %v5782 = vunpack.c.h.b16 %v3323
    %v5783 = vunpack.c.l.b16 %v3324
    %v5784 = vunpack.c.h.b16 %v3324
    %v5785 = vunpack.c.l.b16 %v3325
    %v5786 = vunpack.c.h.b16 %v3325
    %v5787 = vunpack.c.l.b16 %v3326
    %v5788 = vunpack.c.h.b16 %v3326
    %v5789 = vunpack.c.l.b16 %v3327
    %v5790 = vunpack.c.h.b16 %v3327
    %v5791 = vunpack.c.l.b16 %v3328
    %v5792 = vunpack.c.h.b16 %v3328
    %v5793 = vunpack.c.l.b16 %v3329
    %v5794 = vunpack.c.h.b16 %v3329
    %v5795 = vunpack.c.l.b16 %v3330
    %v5796 = vunpack.c.h.b16 %v3330
    %v5797 = vunpack.c.l.b16 %v3331
    %v5798 = vunpack.c.h.b16 %v3331
    %v5799 = vunpack.c.l.b16 %v3332
    %v5800 = vunpack.c.h.b16 %v3332
    %v5801 = vunpack.c.l.b16 %v3333
    %v5802 = vunpack.c.h.b16 %v3333
    %v5803 = vunpack.c.l.b16 %v3334
    %v5804 = vunpack.c.h.b16 %v3334
    %v5805 = vunpack.c.l.b16 %v3335
    %v5806 = vunpack.c.h.b16 %v3335
    %v5807 = vunpack.c.l.b16 %v3336
    %v5808 = vunpack.c.h.b16 %v3336
    %v5809 = vunpack.c.l.b16 %v3337
    %v5810 = vunpack.c.h.b16 %v3337
    %v5811 = vunpack.c.l.b16 %v3338
    %v5812 = vunpack.c.h.b16 %v3338
    %v5813 = vunpack.c.l.b16 %v3339
    %v5814 = vunpack.c.h.b16 %v3339
    %v5815 = vunpack.c.l.b16 %v3340
    %v5816 = vunpack.c.h.b16 %v3340
    %v5817 = vunpack.c.l.b16 %v3341
    %v5818 = vunpack.c.h.b16 %v3341
    %v5819 = vunpack.c.l.b16 %v3342
    %v5820 = vunpack.c.h.b16 %v3342
    %v5821 = vunpack.c.l.b16 %v3343
    %v5822 = vunpack.c.h.b16 %v3343
    %v5823 = vunpack.c.l.b16 %v3344
    %v5824 = vunpack.c.h.b16 %v3344
    %v5825 = vunpack.c.l.b16 %v3345
    %v5826 = vunpack.c.h.b16 %v3345
    %v5827 = vunpack.c.l.b16 %v3346
    %v5828 = vunpack.c.h.b16 %v3346
    %v5829 = vunpack.c.l.b16 %v3347
    %v5830 = vunpack.c.h.b16 %v3347
    %v5831 = vunpack.c.l.b16 %v3348
    %v5832 = vunpack.c.h.b16 %v3348
    %v5833 = vunpack.c.l.b16 %v3349
    %v5834 = vunpack.c.h.b16 %v3349
    %v5835 = vunpack.c.l.b16 %v3350
    %v5836 = vunpack.c.h.b16 %v3350
    %v5837 = vunpack.c.l.b16 %v3351
    %v5838 = vunpack.c.h.b16 %v3351
    %v5839 = vunpack.c.l.b16 %v3352
    %v5840 = vunpack.c.h.b16 %v3352
    %v5841 = vunpack.c.l.b16 %v3353
    %v5842 = vunpack.c.h.b16 %v3353
    %v5843 = vunpack.c.l.b16 %v3354
    %v5844 = vunpack.c.h.b16 %v3354
    %v5845 = vunpack.c.l.b16 %v3355
    %v5846 = vunpack.c.h.b16 %v3355
    %v5847 = vunpack.c.l.b16 %v3356
    %v5848 = vunpack.c.h.b16 %v3356
    %v5849 = vunpack.c.l.b16 %v3357
    %v5850 = vunpack.c.h.b16 %v3357
    %v5851 = vunpack.c.l.b16 %v3358
    %v5852 = vunpack.c.h.b16 %v3358
    %v5853 = vunpack.c.l.b16 %v3359
    %v5854 = vunpack.c.h.b16 %v3359
    %v5855 = vunpack.c.l.b16 %v3360
    %v5856 = vunpack.c.h.b16 %v3360
    %v5857 = vunpack.c.l.b16 %v3361
    %v5858 = vunpack.c.h.b16 %v3361
    %v5859 = vunpack.c.l.b16 %v3362
    %v5860 = vunpack.c.h.b16 %v3362
    %v5861 = vunpack.c.l.b16 %v3363
    %v5862 = vunpack.c.h.b16 %v3363
    %v5863 = vunpack.c.l.b16 %v3364
    %v5864 = vunpack.c.h.b16 %v3364
    %v5865 = vunpack.c.l.b16 %v3365
    %v5866 = vunpack.c.h.b16 %v3365
    %v5867 = vunpack.c.l.b16 %v3366
    %v5868 = vunpack.c.h.b16 %v3366
    %v5869 = vunpack.c.l.b16 %v3367
    %v5870 = vunpack.c.h.b16 %v3367
    %v5871 = vunpack.c.l.b16 %v3368
    %v5872 = vunpack.c.h.b16 %v3368
    %v5873 = vunpack.c.l.b16 %v3369
    %v5874 = vunpack.c.h.b16 %v3369
    %v5875 = vunpack.c.l.b16 %v3370
    %v5876 = vunpack.c.h.b16 %v3370
    %v5877 = vunpack.c.l.b16 %v3371
    %v5878 = vunpack.c.h.b16 %v3371
    %v5879 = vunpack.c.l.b16 %v3372
    %v5880 = vunpack.c.h.b16 %v3372
    %v5881 = vunpack.c.l.b16 %v3373
    %v5882 = vunpack.c.h.b16 %v3373
    %v5883 = vunpack.c.l.b16 %v3374
    %v5884 = vunpack.c.h.b16 %v3374
    %v5885 = vunpack.c.l.b16 %v3375
    %v5886 = vunpack.c.h.b16 %v3375
    %v5887 = vunpack.c.l.b16 %v3376
    %v5888 = vunpack.c.h.b16 %v3376
    %v5889 = vunpack.c.l.b16 %v3377
    %v5890 = vunpack.c.h.b16 %v3377
    %v5891 = vunpack.c.l.b16 %v3378
    %v5892 = vunpack.c.h.b16 %v3378
    %v5893 = vunpack.c.l.b16 %v3379
    %v5894 = vunpack.c.h.b16 %v3379
    %v5895 = vunpack.c.l.b16 %v3380
    %v5896 = vunpack.c.h.b16 %v3380
    %v5897 = vunpack.c.l.b16 %v3381
    %v5898 = vunpack.c.h.b16 %v3381
    %v5899 = vunpack.c.l.b16 %v3382
    %v5900 = vunpack.c.h.b16 %v3382
    %v5901 = vunpack.c.l.b16 %v3383
    %v5902 = vunpack.c.h.b16 %v3383
    %v5903 = vunpack.c.l.b16 %v3384
    %v5904 = vunpack.c.h.b16 %v3384
    %v5905 = vunpack.c.l.b16 %v3385
    %v5906 = vunpack.c.h.b16 %v3385
    %v5907 = vunpack.c.l.b16 %v3386
    %v5908 = vunpack.c.h.b16 %v3386
    %v5909 = vunpack.c.l.b16 %v3387
    %v5910 = vunpack.c.h.b16 %v3387
    %v5911 = vunpack.c.l.b16 %v3388
    %v5912 = vunpack.c.h.b16 %v3388
    %v5913 = vunpack.c.l.b16 %v3389
    %v5914 = vunpack.c.h.b16 %v3389
    %v5915 = vunpack.c.l.b16 %v3390
    %v5916 = vunpack.c.h.b16 %v3390
    %v5917 = vunpack.c.l.b16 %v3391
    %v5918 = vunpack.c.h.b16 %v3391
    %v5919 = vunpack.c.l.b16 %v3392
    %v5920 = vunpack.c.h.b16 %v3392
    %v5921 = vunpack.c.l.b16 %v3393
    %v5922 = vunpack.c.h.b16 %v3393
    %v5923 = vunpack.c.l.b16 %v3394
    %v5924 = vunpack.c.h.b16 %v3394
    %v5925 = vunpack.c.l.b16 %v3395
    %v5926 = vunpack.c.h.b16 %v3395
    %v5927 = vunpack.c.l.b16 %v3396
    %v5928 = vunpack.c.h.b16 %v3396
    %v5929 = vunpack.c.l.b16 %v3397
    %v5930 = vunpack.c.h.b16 %v3397
    %v5931 = vunpack.c.l.b16 %v3398
    %v5932 = vunpack.c.h.b16 %v3398
    %v5933 = vunpack.c.l.b16 %v3399
    %v5934 = vunpack.c.h.b16 %v3399
    %v5935 = vunpack.c.l.b16 %v3400
    %v5936 = vunpack.c.h.b16 %v3400
    %v5937 = vunpack.c.l.b16 %v3401
    %v5938 = vunpack.c.h.b16 %v3401
    %v5939 = vunpack.c.l.b16 %v3402
    %v5940 = vunpack.c.h.b16 %v3402
    %v5941 = vunpack.c.l.b16 %v3403
    %v5942 = vunpack.c.h.b16 %v3403
    %v5943 = vunpack.c.l.b16 %v3404
    %v5944 = vunpack.c.h.b16 %v3404
    %v5945 = vunpack.c.l.b16 %v3405
    %v5946 = vunpack.c.h.b16 %v3405
    %v5947 = vunpack.c.l.b16 %v3406
    %v5948 = vunpack.c.h.b16 %v3406
    %v5949 = vunpack.c.l.b16 %v3407
    %v5950 = vunpack.c.h.b16 %v3407
    %v5951 = vunpack.c.l.b16 %v3408
    %v5952 = vunpack.c.h.b16 %v3408
    %v5953 = vunpack.c.l.b16 %v3409
    %v5954 = vunpack.c.h.b16 %v3409
    %v5955 = vunpack.c.l.b16 %v3410
    %v5956 = vunpack.c.h.b16 %v3410
    %v5957 = vunpack.c.l.b16 %v3411
    %v5958 = vunpack.c.h.b16 %v3411
    %v5959 = vunpack.c.l.b16 %v3412
    %v5960 = vunpack.c.h.b16 %v3412
    %v5961 = vunpack.c.l.b16 %v3413
    %v5962 = vunpack.c.h.b16 %v3413
    %v5963 = vunpack.c.l.b16 %v3414
    %v5964 = vunpack.c.h.b16 %v3414
    %v5965 = vunpack.c.l.b16 %v3415
    %v5966 = vunpack.c.h.b16 %v3415
    %v5967 = vunpack.c.l.b16 %v3416
    %v5968 = vunpack.c.h.b16 %v3416
    %v5969 = vunpack.c.l.b16 %v3417
    %v5970 = vunpack.c.h.b16 %v3417
    %v5971 = vunpack.c.l.b16 %v3418
    %v5972 = vunpack.c.h.b16 %v3418
    %v5973 = vunpack.c.l.b16 %v3419
    %v5974 = vunpack.c.h.b16 %v3419
    %v5975 = vunpack.c.l.b16 %v3420
    %v5976 = vunpack.c.h.b16 %v3420
    %v5977 = vunpack.c.l.b16 %v3421
    %v5978 = vunpack.c.h.b16 %v3421
    %v5979 = vunpack.c.l.b16 %v3422
    %v5980 = vunpack.c.h.b16 %v3422
    %v5981 = vunpack.c.l.b16 %v3423
    %v5982 = vunpack.c.h.b16 %v3423
    %v5983 = vunpack.c.l.b16 %v3424
    %v5984 = vunpack.c.h.b16 %v3424
    %v5985 = vunpack.c.l.b16 %v3425
    %v5986 = vunpack.c.h.b16 %v3425
    %v5987 = vunpack.c.l.b16 %v3426
    %v5988 = vunpack.c.h.b16 %v3426
    %v5989 = vunpack.c.l.b16 %v3427
    %v5990 = vunpack.c.h.b16 %v3427
    %v5991 = vunpack.c.l.b16 %v3428
    %v5992 = vunpack.c.h.b16 %v3428
    %v5993 = vunpack.c.l.b16 %v3429
    %v5994 = vunpack.c.h.b16 %v3429
    %v5995 = vunpack.c.l.b16 %v3430
    %v5996 = vunpack.c.h.b16 %v3430
    %v5997 = vunpack.c.l.b16 %v3431
    %v5998 = vunpack.c.h.b16 %v3431
    %v5999 = vunpack.c.l.b16 %v3432
    %v6000 = vunpack.c.h.b16 %v3432
    %v6001 = vunpack.c.l.b16 %v3433
    %v6002 = vunpack.c.h.b16 %v3433
    %v6003 = vunpack.c.l.b16 %v3434
    %v6004 = vunpack.c.h.b16 %v3434
    %v6005 = vunpack.c.l.b16 %v3435
    %v6006 = vunpack.c.h.b16 %v3435
    %v6007 = vunpack.c.l.b16 %v3436
    %v6008 = vunpack.c.h.b16 %v3436
    %v6009 = vunpack.c.l.b16 %v3437
    %v6010 = vunpack.c.h.b16 %v3437
    %v6011 = vunpack.c.l.b16 %v3438
    %v6012 = vunpack.c.h.b16 %v3438
    %v6013 = vunpack.c.l.b16 %v3439
    %v6014 = vunpack.c.h.b16 %v3439
    %v6015 = vunpack.c.l.b16 %v3440
    %v6016 = vunpack.c.h.b16 %v3440
    %v6017 = vunpack.c.l.b16 %v3441
    %v6018 = vunpack.c.h.b16 %v3441
    %v6019 = vunpack.c.l.b16 %v3442
    %v6020 = vunpack.c.h.b16 %v3442
    %v6021 = vunpack.c.l.b16 %v3443
    %v6022 = vunpack.c.h.b16 %v3443
    %v6023 = vunpack.c.l.b16 %v3444
    %v6024 = vunpack.c.h.b16 %v3444
    %v6025 = vunpack.c.l.b16 %v3445
    %v6026 = vunpack.c.h.b16 %v3445
    %v6027 = vunpack.c.l.b16 %v3446
    %v6028 = vunpack.c.h.b16 %v3446
    %v6029 = vunpack.c.l.b16 %v3447
    %v6030 = vunpack.c.h.b16 %v3447
    %v6031 = vunpack.c.l.b16 %v3448
    %v6032 = vunpack.c.h.b16 %v3448
    %v6033 = vunpack.c.l.b16 %v3449
    %v6034 = vunpack.c.h.b16 %v3449
    %v6035 = vunpack.c.l.b16 %v3450
    %v6036 = vunpack.c.h.b16 %v3450
    %v6037 = vunpack.c.l.b16 %v3451
    %v6038 = vunpack.c.h.b16 %v3451
    %v6039 = vunpack.c.l.b16 %v3452
    %v6040 = vunpack.c.h.b16 %v3452
    %v6041 = vunpack.c.l.b16 %v3453
    %v6042 = vunpack.c.h.b16 %v3453
    %v6043 = vunpack.c.l.b16 %v3454
    %v6044 = vunpack.c.h.b16 %v3454
    %v6045 = vunpack.c.l.b16 %v3455
    %v6046 = vunpack.c.h.b16 %v3455
    %v6047 = vunpack.c.l.b16 %v3456
    %v6048 = vunpack.c.h.b16 %v3456
    %v6049 = vunpack.c.l.b16 %v3457
    %v6050 = vunpack.c.h.b16 %v3457
    %v6051 = vunpack.c.l.b16 %v3458
    %v6052 = vunpack.c.h.b16 %v3458
    %v6053 = vunpack.c.l.b16 %v3459
    %v6054 = vunpack.c.h.b16 %v3459
    %v6055 = vunpack.c.l.b16 %v3460
    %v6056 = vunpack.c.h.b16 %v3460
    %v6057 = vunpack.c.l.b16 %v3461
    %v6058 = vunpack.c.h.b16 %v3461
    %v6059 = vunpack.c.l.b16 %v3462
    %v6060 = vunpack.c.h.b16 %v3462
    %v6061 = vunpack.c.l.b16 %v3463
    %v6062 = vunpack.c.h.b16 %v3463
    %v6063 = vunpack.c.l.b16 %v3464
    %v6064 = vunpack.c.h.b16 %v3464
    %v6065 = vunpack.c.l.b16 %v3465
    %v6066 = vunpack.c.h.b16 %v3465
    %v6067 = vunpack.c.l.b16 %v3466
    %v6068 = vunpack.c.h.b16 %v3466
    %v6069 = vunpack.c.l.b16 %v3467
    %v6070 = vunpack.c.h.b16 %v3467
    %v6071 = vunpack.c.l.b16 %v3468
    %v6072 = vunpack.c.h.b16 %v3468
    %v6073 = vunpack.c.l.b16 %v3469
    %v6074 = vunpack.c.h.b16 %v3469
    %v6075 = vunpack.c.l.b16 %v3470
    %v6076 = vunpack.c.h.b16 %v3470
    %v6077 = vunpack.c.l.b16 %v3471
    %v6078 = vunpack.c.h.b16 %v3471
    %v6079 = vunpack.c.l.b16 %v3472
    %v6080 = vunpack.c.h.b16 %v3472
    %v6081 = vunpack.c.l.b16 %v3473
    %v6082 = vunpack.c.h.b16 %v3473
    %v6083 = vunpack.c.l.b16 %v3474
    %v6084 = vunpack.c.h.b16 %v3474
    %v6085 = vunpack.c.l.b16 %v3475
    %v6086 = vunpack.c.h.b16 %v3475
    %v6087 = vunpack.c.l.b16 %v3476
    %v6088 = vunpack.c.h.b16 %v3476
    %v6089 = vunpack.c.l.b16 %v3477
    %v6090 = vunpack.c.h.b16 %v3477
    %v6091 = vunpack.c.l.b16 %v3478
    %v6092 = vunpack.c.h.b16 %v3478
    %v6093 = vunpack.c.l.b16 %v3479
    %v6094 = vunpack.c.h.b16 %v3479
    %v6095 = vunpack.c.l.b16 %v3480
    %v6096 = vunpack.c.h.b16 %v3480
    %v6097 = vunpack.c.l.b16 %v3481
    %v6098 = vunpack.c.h.b16 %v3481
    %v6099 = vunpack.c.l.b16 %v3482
    %v6100 = vunpack.c.h.b16 %v3482
    %v6101 = vunpack.c.l.b16 %v3483
    %v6102 = vunpack.c.h.b16 %v3483
    %v6103 = vunpack.c.l.b16 %v3484
    %v6104 = vunpack.c.h.b16 %v3484
    %v6105 = vunpack.c.l.b16 %v3485
    %v6106 = vunpack.c.h.b16 %v3485
    %v6107 = vunpack.c.l.b16 %v3486
    %v6108 = vunpack.c.h.b16 %v3486
    %v6109 = vunpack.c.l.b16 %v3487
    %v6110 = vunpack.c.h.b16 %v3487
    %v6111 = vunpack.c.l.b16 %v3488
    %v6112 = vunpack.c.h.b16 %v3488
    %v6113 = vunpack.c.l.b16 %v3489
    %v6114 = vunpack.c.h.b16 %v3489
    %v6115 = vunpack.c.l.b16 %v3490
    %v6116 = vunpack.c.h.b16 %v3490
    %v6117 = vunpack.c.l.b16 %v3491
    %v6118 = vunpack.c.h.b16 %v3491
    %v6119 = vunpack.c.l.b16 %v3492
    %v6120 = vunpack.c.h.b16 %v3492
    %v6121 = vunpack.c.l.b16 %v3493
    %v6122 = vunpack.c.h.b16 %v3493
    %v6123 = vunpack.c.l.b16 %v3494
    %v6124 = vunpack.c.h.b16 %v3494
    %v6125 = vunpack.c.l.b16 %v3495
    %v6126 = vunpack.c.h.b16 %v3495
    %v6127 = vunpack.c.l.b16 %v3496
    %v6128 = vunpack.c.h.b16 %v3496
    %v6129 = vunpack.c.l.b16 %v3497
    %v6130 = vunpack.c.h.b16 %v3497
    %v6131 = vunpack.c.l.b16 %v3498
    %v6132 = vunpack.c.h.b16 %v3498
    %v6133 = vunpack.c.l.b16 %v3499
    %v6134 = vunpack.c.h.b16 %v3499
    %v6135 = vunpack.c.l.b16 %v3500
    %v6136 = vunpack.c.h.b16 %v3500
    %v6137 = vunpack.c.l.b16 %v3501
    %v6138 = vunpack.c.h.b16 %v3501
    %v6139 = vunpack.c.l.b16 %v3502
    %v6140 = vunpack.c.h.b16 %v3502
    %v6141 = vunpack.c.l.b16 %v3503
    %v6142 = vunpack.c.h.b16 %v3503
    %v6143 = vunpack.c.l.b16 %v3504
    %v6144 = vunpack.c.h.b16 %v3504
    %v6145 = vunpack.c.l.b16 %v3505
    %v6146 = vunpack.c.h.b16 %v3505
    %v6147 = vunpack.c.l.b16 %v3506
    %v6148 = vunpack.c.h.b16 %v3506
    %v6149 = vunpack.c.l.b16 %v3507
    %v6150 = vunpack.c.h.b16 %v3507
    %v6151 = vunpack.c.l.b16 %v3508
    %v6152 = vunpack.c.h.b16 %v3508
    %v6153 = vunpack.c.l.b16 %v3509
    %v6154 = vunpack.c.h.b16 %v3509
    %v6155 = vunpack.c.l.b16 %v3510
    %v6156 = vunpack.c.h.b16 %v3510
    %v6157 = vunpack.c.l.b16 %v3511
    %v6158 = vunpack.c.h.b16 %v3511
    %v6159 = vunpack.c.l.b16 %v3512
    %v6160 = vunpack.c.h.b16 %v3512
    %v6161 = vunpack.c.l.b16 %v3513
    %v6162 = vunpack.c.h.b16 %v3513
    %v6163 = vunpack.c.l.b16 %v3514
    %v6164 = vunpack.c.h.b16 %v3514
    %v6165 = vunpack.c.l.b16 %v3515
    %v6166 = vunpack.c.h.b16 %v3515
    %v6167 = vunpack.c.l.b16 %v3516
    %v6168 = vunpack.c.h.b16 %v3516
    %v6169 = vunpack.c.l.b16 %v3517
    %v6170 = vunpack.c.h.b16 %v3517
    %v6171 = vunpack.c.l.b16 %v3518
    %v6172 = vunpack.c.h.b16 %v3518
    %v6173 = vunpack.c.l.b16 %v3519
    %v6174 = vunpack.c.h.b16 %v3519
    %v6175 = vunpack.c.l.b16 %v3520
    %v6176 = vunpack.c.h.b16 %v3520
    %v6177 = vunpack.c.l.b16 %v3521
    %v6178 = vunpack.c.h.b16 %v3521
    %v6179 = vunpack.c.l.b16 %v3522
    %v6180 = vunpack.c.h.b16 %v3522
    %v6181 = vunpack.c.l.b16 %v3523
    %v6182 = vunpack.c.h.b16 %v3523
    %v6183 = vunpack.c.l.b16 %v3524
    %v6184 = vunpack.c.h.b16 %v3524
    %v6185 = vunpack.c.l.b16 %v3525
    %v6186 = vunpack.c.h.b16 %v3525
    %v6187 = vunpack.c.l.b16 %v3526
    %v6188 = vunpack.c.h.b16 %v3526
    %v6189 = vunpack.c.l.b16 %v3527
    %v6190 = vunpack.c.h.b16 %v3527
    %v6191 = vunpack.c.l.b16 %v3528
    %v6192 = vunpack.c.h.b16 %v3528
    %v6193 = vunpack.c.l.b16 %v3529
    %v6194 = vunpack.c.h.b16 %v3529
    %v6195 = vunpack.c.l.b16 %v3530
    %v6196 = vunpack.c.h.b16 %v3530
    %v6197 = vunpack.c.l.b16 %v3531
    %v6198 = vunpack.c.h.b16 %v3531
    %v6199 = vunpack.c.l.b16 %v3532
    %v6200 = vunpack.c.h.b16 %v3532
    %v6201 = vunpack.c.l.b16 %v3533
    %v6202 = vunpack.c.h.b16 %v3533
    %v6203 = vunpack.c.l.b16 %v3534
    %v6204 = vunpack.c.h.b16 %v3534
    %v6205 = vunpack.c.l.b16 %v3535
    %v6206 = vunpack.c.h.b16 %v3535
    %v6207 = vunpack.c.l.b16 %v3536
    %v6208 = vunpack.c.h.b16 %v3536
    %v6209 = vunpack.c.l.b16 %v3537
    %v6210 = vunpack.c.h.b16 %v3537
    %v6211 = vunpack.c.l.b16 %v3538
    %v6212 = vunpack.c.h.b16 %v3538
    %v6213 = vunpack.c.l.b16 %v3539
    %v6214 = vunpack.c.h.b16 %v3539
    %v6215 = vunpack.c.l.b16 %v3540
    %v6216 = vunpack.c.h.b16 %v3540
    %v6217 = vunpack.c.l.b16 %v3541
    %v6218 = vunpack.c.h.b16 %v3541
    %v6219 = vunpack.c.l.b16 %v3542
    %v6220 = vunpack.c.h.b16 %v3542
    %v6221 = vunpack.c.l.b16 %v3543
    %v6222 = vunpack.c.h.b16 %v3543
    %v6223 = vunpack.c.l.b16 %v3544
    %v6224 = vunpack.c.h.b16 %v3544
    %v6225 = vunpack.c.l.b16 %v3545
    %v6226 = vunpack.c.h.b16 %v3545
    %v6227 = vunpack.c.l.b16 %v3546
    %v6228 = vunpack.c.h.b16 %v3546
    %v6229 = vunpack.c.l.b16 %v3547
    %v6230 = vunpack.c.h.b16 %v3547
    %v6231 = vunpack.c.l.b16 %v3548
    %v6232 = vunpack.c.h.b16 %v3548
    %v6233 = vunpack.c.l.b16 %v3549
    %v6234 = vunpack.c.h.b16 %v3549
    %v6235 = vunpack.c.l.b16 %v3550
    %v6236 = vunpack.c.h.b16 %v3550
    %v6237 = vunpack.c.l.b16 %v3551
    %v6238 = vunpack.c.h.b16 %v3551
    %v6239 = vunpack.c.l.b16 %v3552
    %v6240 = vunpack.c.h.b16 %v3552
    %v6241 = vunpack.c.l.b16 %v3553
    %v6242 = vunpack.c.h.b16 %v3553
    %v6243 = vunpack.c.l.b16 %v3554
    %v6244 = vunpack.c.h.b16 %v3554
    %v6245 = vunpack.c.l.b16 %v3555
    %v6246 = vunpack.c.h.b16 %v3555
    %v6247 = vunpack.c.l.b16 %v3556
    %v6248 = vunpack.c.h.b16 %v3556
    %v6249 = vunpack.c.l.b16 %v3557
    %v6250 = vunpack.c.h.b16 %v3557
    %v6251 = vunpack.c.l.b16 %v3558
    %v6252 = vunpack.c.h.b16 %v3558
    %v6253 = vunpack.c.l.b16 %v3559
    %v6254 = vunpack.c.h.b16 %v3559
    %v6255 = vunpack.c.l.b16 %v3560
    %v6256 = vunpack.c.h.b16 %v3560
    %v6257 = vunpack.c.l.b16 %v3561
    %v6258 = vunpack.c.h.b16 %v3561
    %v6259 = vunpack.c.l.b16 %v3562
    %v6260 = vunpack.c.h.b16 %v3562
    %v6261 = vunpack.c.l.b16 %v3563
    %v6262 = vunpack.c.h.b16 %v3563
    %v6263 = vunpack.c.l.b16 %v3564
    %v6264 = vunpack.c.h.b16 %v3564
    %v6265 = vunpack.c.l.b16 %v3565
    %v6266 = vunpack.c.h.b16 %v3565
    %v6267 = vunpack.c.l.b16 %v3566
    %v6268 = vunpack.c.h.b16 %v3566
    %v6269 = vunpack.c.l.b16 %v3567
    %v6270 = vunpack.c.h.b16 %v3567
    %v6271 = vunpack.c.l.b16 %v3568
    %v6272 = vunpack.c.h.b16 %v3568
    %v6273 = vunpack.c.l.b16 %v3569
    %v6274 = vunpack.c.h.b16 %v3569
    %v6275 = vunpack.c.l.b16 %v3570
    %v6276 = vunpack.c.h.b16 %v3570
    %v6277 = vunpack.c.l.b16 %v3571
    %v6278 = vunpack.c.h.b16 %v3571
    %v6279 = vunpack.c.l.b16 %v3572
    %v6280 = vunpack.c.h.b16 %v3572
    %v6281 = vunpack.c.l.b16 %v3573
    %v6282 = vunpack.c.h.b16 %v3573
    %v6283 = vunpack.c.l.b16 %v3574
    %v6284 = vunpack.c.h.b16 %v3574
    %v6285 = vunpack.c.l.b16 %v3575
    %v6286 = vunpack.c.h.b16 %v3575
    %v6287 = vunpack.c.l.b16 %v3576
    %v6288 = vunpack.c.h.b16 %v3576
    %v6289 = vunpack.c.l.b16 %v3577
    %v6290 = vunpack.c.h.b16 %v3577
    %v6291 = vunpack.c.l.b16 %v3578
    %v6292 = vunpack.c.h.b16 %v3578
    %v6293 = vunpack.c.l.b16 %v3579
    %v6294 = vunpack.c.h.b16 %v3579
    %v6295 = vunpack.c.l.b16 %v3580
    %v6296 = vunpack.c.h.b16 %v3580
    %v6297 = vunpack.c.l.b16 %v3581
    %v6298 = vunpack.c.h.b16 %v3581
    %v6299 = vunpack.c.l.b16 %v3582
    %v6300 = vunpack.c.h.b16 %v3582
    %v6301 = vunpack.c.l.b16 %v3583
    %v6302 = vunpack.c.h.b16 %v3583
    %v6303 = vunpack.c.l.b16 %v3584
    %v6304 = vunpack.c.h.b16 %v3584
    %v6305 = vunpack.c.l.b16 %v3585
    %v6306 = vunpack.c.h.b16 %v3585
    %v6307 = vunpack.c.l.b16 %v3586
    %v6308 = vunpack.c.h.b16 %v3586
    %v6309 = vunpack.c.l.b16 %v3587
    %v6310 = vunpack.c.h.b16 %v3587
    %v6311 = vunpack.c.l.b16 %v3588
    %v6312 = vunpack.c.h.b16 %v3588
    %v6313 = vunpack.c.l.b16 %v3589
    %v6314 = vunpack.c.h.b16 %v3589
    %v6315 = vunpack.c.l.b16 %v3590
    %v6316 = vunpack.c.h.b16 %v3590
    %v6317 = vunpack.c.l.b16 %v3591
    %v6318 = vunpack.c.h.b16 %v3591
    %v6319 = vunpack.c.l.b16 %v3592
    %v6320 = vunpack.c.h.b16 %v3592
    %v6321 = vunpack.c.l.b16 %v3593
    %v6322 = vunpack.c.h.b16 %v3593
    %v6323 = vunpack.c.l.b16 %v3594
    %v6324 = vunpack.c.h.b16 %v3594
    %v6325 = vunpack.c.l.b16 %v3595
    %v6326 = vunpack.c.h.b16 %v3595
    %v6327 = vunpack.c.l.b16 %v3596
    %v6328 = vunpack.c.h.b16 %v3596
    %v6329 = vunpack.c.l.b16 %v3597
    %v6330 = vunpack.c.h.b16 %v3597
    %v6331 = vunpack.c.l.b16 %v3598
    %v6332 = vunpack.c.h.b16 %v3598
    %v6333 = vunpack.c.l.b16 %v3599
    %v6334 = vunpack.c.h.b16 %v3599
    %v6335 = vunpack.c.l.b16 %v3600
    %v6336 = vunpack.c.h.b16 %v3600
    %v6337 = vunpack.c.l.b16 %v3601
    %v6338 = vunpack.c.h.b16 %v3601
    %v6339 = vunpack.c.l.b16 %v3602
    %v6340 = vunpack.c.h.b16 %v3602
    %v6341 = vunpack.c.l.b16 %v3603
    %v6342 = vunpack.c.h.b16 %v3603
    %v6343 = vunpack.c.l.b16 %v3604
    %v6344 = vunpack.c.h.b16 %v3604
    %v6345 = vunpack.c.l.b16 %v3605
    %v6346 = vunpack.c.h.b16 %v3605
    %v6347 = vunpack.c.l.b16 %v3606
    %v6348 = vunpack.c.h.b16 %v3606
    %v6349 = vunpack.c.l.b16 %v3607
    %v6350 = vunpack.c.h.b16 %v3607
    %v6351 = vunpack.c.l.b16 %v3608
    %v6352 = vunpack.c.h.b16 %v3608
    %v6353 = vunpack.c.l.b16 %v3609
    %v6354 = vunpack.c.h.b16 %v3609
    %v6355 = vunpack.c.l.b16 %v3610
    %v6356 = vunpack.c.h.b16 %v3610
    %v6357 = vunpack.c.l.b16 %v3611
    %v6358 = vunpack.c.h.b16 %v3611
    %v6359 = vunpack.c.l.b16 %v3612
    %v6360 = vunpack.c.h.b16 %v3612
    %v6361 = vunpack.c.l.b16 %v3613
    %v6362 = vunpack.c.h.b16 %v3613
    %v6363 = vunpack.c.l.b16 %v3614
    %v6364 = vunpack.c.h.b16 %v3614
    %v6365 = vunpack.c.l.b16 %v3615
    %v6366 = vunpack.c.h.b16 %v3615
    %v6367 = vunpack.c.l.b16 %v3616
    %v6368 = vunpack.c.h.b16 %v3616
    %v6369 = vunpack.c.l.b16 %v3617
    %v6370 = vunpack.c.h.b16 %v3617
    %v6371 = vunpack.c.l.b16 %v3618
    %v6372 = vunpack.c.h.b16 %v3618
    %v6373 = vunpack.c.l.b16 %v3619
    %v6374 = vunpack.c.h.b16 %v3619
    %v6375 = vunpack.c.l.b16 %v3620
    %v6376 = vunpack.c.h.b16 %v3620
    %v6377 = vunpack.c.l.b16 %v3621
    %v6378 = vunpack.c.h.b16 %v3621
    %v6379 = vunpack.c.l.b16 %v3622
    %v6380 = vunpack.c.h.b16 %v3622
    %v6381 = vunpack.c.l.b16 %v3623
    %v6382 = vunpack.c.h.b16 %v3623
    %v6383 = vunpack.c.l.b16 %v3624
    %v6384 = vunpack.c.h.b16 %v3624
    %v6385 = vunpack.c.l.b16 %v3625
    %v6386 = vunpack.c.h.b16 %v3625
    %v6387 = vunpack.c.l.b16 %v3626
    %v6388 = vunpack.c.h.b16 %v3626
    %v6389 = vunpack.c.l.b16 %v3627
    %v6390 = vunpack.c.h.b16 %v3627
    %v6391 = vunpack.c.l.b16 %v3628
    %v6392 = vunpack.c.h.b16 %v3628
    %v6393 = vunpack.c.l.b16 %v3629
    %v6394 = vunpack.c.h.b16 %v3629
    %v6395 = vunpack.c.l.b16 %v3630
    %v6396 = vunpack.c.h.b16 %v3630
    %v6397 = vunpack.c.l.b16 %v3631
    %v6398 = vunpack.c.h.b16 %v3631
    %v6399 = vunpack.c.l.b16 %v3632
    %v6400 = vunpack.c.h.b16 %v3632
    %v6401 = vunpack.c.l.b16 %v3633
    %v6402 = vunpack.c.h.b16 %v3633
    %v6403 = vunpack.c.l.b16 %v3634
    %v6404 = vunpack.c.h.b16 %v3634
    %v6405 = vunpack.c.l.b16 %v3635
    %v6406 = vunpack.c.h.b16 %v3635
    %v6407 = vunpack.c.l.b16 %v3636
    %v6408 = vunpack.c.h.b16 %v3636
    %v6409 = vunpack.c.l.b16 %v3637
    %v6410 = vunpack.c.h.b16 %v3637
    %v6411 = vunpack.c.l.b16 %v3638
    %v6412 = vunpack.c.h.b16 %v3638
    %v6413 = vunpack.c.l.b16 %v3639
    %v6414 = vunpack.c.h.b16 %v3639
    %v6415 = vunpack.c.l.b16 %v3640
    %v6416 = vunpack.c.h.b16 %v3640
    %v6417 = vunpack.c.l.b16 %v3641
    %v6418 = vunpack.c.h.b16 %v3641
    %v6419 = vunpack.c.l.b16 %v3642
    %v6420 = vunpack.c.h.b16 %v3642
    %v6421 = vunpack.c.l.b16 %v3643
    %v6422 = vunpack.c.h.b16 %v3643
    %v6423 = vunpack.c.l.b16 %v3644
    %v6424 = vunpack.c.h.b16 %v3644
    %v6425 = vunpack.c.l.b16 %v3645
    %v6426 = vunpack.c.h.b16 %v3645
    %v6427 = vunpack.c.l.b16 %v3646
    %v6428 = vunpack.c.h.b16 %v3646
    %v6429 = vunpack.c.l.b16 %v3647
    %v6430 = vunpack.c.h.b16 %v3647
    %v6431 = vunpack.c.l.b16 %v3648
    %v6432 = vunpack.c.h.b16 %v3648
    %v6433 = vunpack.c.l.b16 %v3649
    %v6434 = vunpack.c.h.b16 %v3649
    %v6435 = vunpack.c.l.b16 %v3650
    %v6436 = vunpack.c.h.b16 %v3650
    %v6437 = vunpack.c.l.b16 %v3651
    %v6438 = vunpack.c.h.b16 %v3651
    %v6439 = vunpack.c.l.b16 %v3652
    %v6440 = vunpack.c.h.b16 %v3652
    %v6441 = vunpack.c.l.b16 %v3653
    %v6442 = vunpack.c.h.b16 %v3653
    %v6443 = vunpack.c.l.b16 %v3654
    %v6444 = vunpack.c.h.b16 %v3654
    %v6445 = vunpack.c.l.b16 %v3655
    %v6446 = vunpack.c.h.b16 %v3655
    %v6447 = vunpack.c.l.b16 %v3656
    %v6448 = vunpack.c.h.b16 %v3656
    %v6449 = vunpack.c.l.b16 %v3657
    %v6450 = vunpack.c.h.b16 %v3657
    %v6451 = vunpack.c.l.b16 %v3658
    %v6452 = vunpack.c.h.b16 %v3658
    %v6453 = vunpack.c.l.b16 %v3659
    %v6454 = vunpack.c.h.b16 %v3659
    %v6455 = vunpack.c.l.b16 %v3660
    %v6456 = vunpack.c.h.b16 %v3660
    %v6457 = vunpack.c.l.b16 %v3661
    %v6458 = vunpack.c.h.b16 %v3661
    %v6459 = vunpack.c.l.b16 %v3662
    %v6460 = vunpack.c.h.b16 %v3662
    %v6461 = vunpack.c.l.b16 %v3663
    %v6462 = vunpack.c.h.b16 %v3663
    %v6463 = vunpack.c.l.b16 %v3664
    %v6464 = vunpack.c.h.b16 %v3664
    %v6465 = vunpack.c.l.b16 %v3665
    %v6466 = vunpack.c.h.b16 %v3665
    %v6467 = vunpack.c.l.b16 %v3666
    %v6468 = vunpack.c.h.b16 %v3666
    %v6469 = vunpack.c.l.b16 %v3667
    %v6470 = vunpack.c.h.b16 %v3667
    %v6471 = vunpack.c.l.b16 %v3668
    %v6472 = vunpack.c.h.b16 %v3668
    %v6473 = vunpack.c.l.b16 %v3669
    %v6474 = vunpack.c.h.b16 %v3669
    %v6475 = vunpack.c.l.b16 %v3670
    %v6476 = vunpack.c.h.b16 %v3670
    %v6477 = vunpack.c.l.b16 %v3671
    %v6478 = vunpack.c.h.b16 %v3671
    %v6479 = vunpack.c.l.b16 %v3672
    %v6480 = vunpack.c.h.b16 %v3672
    %v6481 = vunpack.c.l.b16 %v3673
    %v6482 = vunpack.c.h.b16 %v3673
    %v6483 = vunpack.c.l.b16 %v3674
    %v6484 = vunpack.c.h.b16 %v3674
    %v6485 = vunpack.c.l.b16 %v3675
    %v6486 = vunpack.c.h.b16 %v3675
    %v6487 = vunpack.c.l.b16 %v3676
    %v6488 = vunpack.c.h.b16 %v3676
    %v6489 = vunpack.c.l.b16 %v3677
    %v6490 = vunpack.c.h.b16 %v3677
    %v6491 = vunpack.c.l.b16 %v3678
    %v6492 = vunpack.c.h.b16 %v3678
    %v6493 = vunpack.c.l.b16 %v3679
    %v6494 = vunpack.c.h.b16 %v3679
    %v6495 = vunpack.c.l.b16 %v3680
    %v6496 = vunpack.c.h.b16 %v3680
    %v6497 = vunpack.c.l.b16 %v3681
    %v6498 = vunpack.c.h.b16 %v3681
    %v6499 = vunpack.c.l.b16 %v3682
    %v6500 = vunpack.c.h.b16 %v3682
    %v6501 = vunpack.c.l.b16 %v3683
    %v6502 = vunpack.c.h.b16 %v3683
    %v6503 = vunpack.c.l.b16 %v3684
    %v6504 = vunpack.c.h.b16 %v3684
    %v6505 = vunpack.c.l.b16 %v3685
    %v6506 = vunpack.c.h.b16 %v3685
    %v6507 = vunpack.c.l.b16 %v3686
    %v6508 = vunpack.c.h.b16 %v3686
    %v6509 = vunpack.c.l.b16 %v3687
    %v6510 = vunpack.c.h.b16 %v3687
    %v6511 = vunpack.c.l.b16 %v3688
    %v6512 = vunpack.c.h.b16 %v3688
    %v6513 = vunpack.c.l.b16 %v3689
    %v6514 = vunpack.c.h.b16 %v3689
    %v6515 = vunpack.c.l.b16 %v3690
    %v6516 = vunpack.c.h.b16 %v3690
    %v6517 = vunpack.c.l.b16 %v3691
    %v6518 = vunpack.c.h.b16 %v3691
    %v6519 = vunpack.c.l.b16 %v3692
    %v6520 = vunpack.c.h.b16 %v3692
    %v6521 = vunpack.c.l.b16 %v3693
    %v6522 = vunpack.c.h.b16 %v3693
    %v6523 = vunpack.c.l.b16 %v3694
    %v6524 = vunpack.c.h.b16 %v3694
    %v6525 = vunpack.c.l.b16 %v3695
    %v6526 = vunpack.c.h.b16 %v3695
    %v6527 = vunpack.c.l.b16 %v3696
    %v6528 = vunpack.c.h.b16 %v3696
    %v6529 = vunpack.c.l.b16 %v3697
    %v6530 = vunpack.c.h.b16 %v3697
    %v6531 = vunpack.c.l.b16 %v3698
    %v6532 = vunpack.c.h.b16 %v3698
    %v6533 = vunpack.c.l.b16 %v3699
    %v6534 = vunpack.c.h.b16 %v3699
    %v6535 = vunpack.c.l.b16 %v3700
    %v6536 = vunpack.c.h.b16 %v3700
    %v6537 = vunpack.c.l.b16 %v3701
    %v6538 = vunpack.c.h.b16 %v3701
    %v6539 = vunpack.c.l.b16 %v3702
    %v6540 = vunpack.c.h.b16 %v3702
    %v6541 = vunpack.c.l.b16 %v3703
    %v6542 = vunpack.c.h.b16 %v3703
    %v6543 = vunpack.c.l.b16 %v3704
    %v6544 = vunpack.c.h.b16 %v3704
    %v6545 = vunpack.c.l.b16 %v3705
    %v6546 = vunpack.c.h.b16 %v3705
    %v6547 = vunpack.c.l.b16 %v3706
    %v6548 = vunpack.c.h.b16 %v3706
    %v6549 = vunpack.c.l.b16 %v3707
    %v6550 = vunpack.c.h.b16 %v3707
    %v6551 = vunpack.c.l.b16 %v3708
    %v6552 = vunpack.c.h.b16 %v3708
    %v6553 = vunpack.c.l.b16 %v3709
    %v6554 = vunpack.c.h.b16 %v3709
    %v6555 = vunpack.c.l.b16 %v3710
    %v6556 = vunpack.c.h.b16 %v3710
    %v6557 = vunpack.c.l.b16 %v3711
    %v6558 = vunpack.c.h.b16 %v3711
    %v6559 = vunpack.c.l.b16 %v3712
    %v6560 = vunpack.c.h.b16 %v3712
    %v6561 = vunpack.c.l.b16 %v3713
    %v6562 = vunpack.c.h.b16 %v3713
    %v6563 = vunpack.c.l.b16 %v3714
    %v6564 = vunpack.c.h.b16 %v3714
    %v6565 = vunpack.c.l.b16 %v3715
    %v6566 = vunpack.c.h.b16 %v3715
    %v6567 = vunpack.c.l.b16 %v3716
    %v6568 = vunpack.c.h.b16 %v3716
    %v6569 = vunpack.c.l.b16 %v3717
    %v6570 = vunpack.c.h.b16 %v3717
    %v6571 = vunpack.c.l.b16 %v3718
    %v6572 = vunpack.c.h.b16 %v3718
    %v6573 = vunpack.c.l.b16 %v3719
    %v6574 = vunpack.c.h.b16 %v3719
    %v6575 = vunpack.c.l.b16 %v3720
    %v6576 = vunpack.c.h.b16 %v3720
    %v6577 = vunpack.c.l.b16 %v3721
    %v6578 = vunpack.c.h.b16 %v3721
    %v6579 = vunpack.c.l.b16 %v3722
    %v6580 = vunpack.c.h.b16 %v3722
    %v6581 = vunpack.c.l.b16 %v3723
    %v6582 = vunpack.c.h.b16 %v3723
    %v6583 = vunpack.c.l.b16 %v3724
    %v6584 = vunpack.c.h.b16 %v3724
    %v6585 = vunpack.c.l.b16 %v3725
    %v6586 = vunpack.c.h.b16 %v3725
    %v6587 = vunpack.c.l.b16 %v3726
    %v6588 = vunpack.c.h.b16 %v3726
    %v6589 = vunpack.c.l.b16 %v3727
    %v6590 = vunpack.c.h.b16 %v3727
    %v6591 = vunpack.c.l.b16 %v3728
    %v6592 = vunpack.c.h.b16 %v3728
    %v6593 = vunpack.c.l.b16 %v3729
    %v6594 = vunpack.c.h.b16 %v3729
    %v6595 = vunpack.c.l.b16 %v3730
    %v6596 = vunpack.c.h.b16 %v3730
    %v6597 = vunpack.c.l.b16 %v3731
    %v6598 = vunpack.c.h.b16 %v3731
    %v6599 = vunpack.c.l.b16 %v3732
    %v6600 = vunpack.c.h.b16 %v3732
    %v6601 = vunpack.c.l.b16 %v3733
    %v6602 = vunpack.c.h.b16 %v3733
    %v6603 = vunpack.c.l.b16 %v3734
    %v6604 = vunpack.c.h.b16 %v3734
    %v6605 = vunpack.c.l.b16 %v3735
    %v6606 = vunpack.c.h.b16 %v3735
    %v6607 = vunpack.c.l.b16 %v3736
    %v6608 = vunpack.c.h.b16 %v3736
    %v6609 = vunpack.c.l.b16 %v3737
    %v6610 = vunpack.c.h.b16 %v3737
    %v6611 = vunpack.c.l.b16 %v3738
    %v6612 = vunpack.c.h.b16 %v3738
    %v6613 = vunpack.c.l.b16 %v3739
    %v6614 = vunpack.c.h.b16 %v3739
    %v6615 = vunpack.c.l.b16 %v3740
    %v6616 = vunpack.c.h.b16 %v3740
    %v6617 = vunpack.c.l.b16 %v3741
    %v6618 = vunpack.c.h.b16 %v3741
    %v6619 = vunpack.c.l.b16 %v3742
    %v6620 = vunpack.c.h.b16 %v3742
    %v6621 = vunpack.c.l.b16 %v3743
    %v6622 = vunpack.c.h.b16 %v3743
    %v6623 = vunpack.c.l.b16 %v3744
    %v6624 = vunpack.c.h.b16 %v3744
    %v6625 = vunpack.c.l.b16 %v3745
    %v6626 = vunpack.c.h.b16 %v3745
    %v6627 = vunpack.c.l.b16 %v3746
    %v6628 = vunpack.c.h.b16 %v3746
    %v6629 = vunpack.c.l.b16 %v3747
    %v6630 = vunpack.c.h.b16 %v3747
    %v6631 = vunpack.c.l.b16 %v3748
    %v6632 = vunpack.c.h.b16 %v3748
    %v6633 = vunpack.c.l.b16 %v3749
    %v6634 = vunpack.c.h.b16 %v3749
    %v6635 = vunpack.c.l.b16 %v3750
    %v6636 = vunpack.c.h.b16 %v3750
    %v6637 = vunpack.c.l.b16 %v3751
    %v6638 = vunpack.c.h.b16 %v3751
    %v6639 = vunpack.c.l.b16 %v3752
    %v6640 = vunpack.c.h.b16 %v3752
    %v6641 = vunpack.c.l.b16 %v3753
    %v6642 = vunpack.c.h.b16 %v3753
    %v6643 = vunpack.c.l.b16 %v3754
    %v6644 = vunpack.c.h.b16 %v3754
    %v6645 = vunpack.c.l.b16 %v3755
    %v6646 = vunpack.c.h.b16 %v3755
    %v6647 = vunpack.c.l.b16 %v3756
    %v6648 = vunpack.c.h.b16 %v3756
    %v6649 = vunpack.c.l.b16 %v3757
    %v6650 = vunpack.c.h.b16 %v3757
    %v6651 = vunpack.c.l.b16 %v3758
    %v6652 = vunpack.c.h.b16 %v3758
    %v6653 = vunpack.c.l.b16 %v3759
    %v6654 = vunpack.c.h.b16 %v3759
    %v6655 = vunpack.c.l.b16 %v3760
    %v6656 = vunpack.c.h.b16 %v3760
    %v6657 = vunpack.c.l.b16 %v3761
    %v6658 = vunpack.c.h.b16 %v3761
    %v6659 = vunpack.c.l.b16 %v3762
    %v6660 = vunpack.c.h.b16 %v3762
    %v6661 = vunpack.c.l.b16 %v3763
    %v6662 = vunpack.c.h.b16 %v3763
    %v6663 = vunpack.c.l.b16 %v3764
    %v6664 = vunpack.c.h.b16 %v3764
    %v6665 = vunpack.c.l.b16 %v3765
    %v6666 = vunpack.c.h.b16 %v3765
    %v6667 = vunpack.c.l.b16 %v3766
    %v6668 = vunpack.c.h.b16 %v3766
    %v6669 = vunpack.c.l.b16 %v3767
    %v6670 = vunpack.c.h.b16 %v3767
    %v6671 = vunpack.c.l.b16 %v3768
    %v6672 = vunpack.c.h.b16 %v3768
    %v6673 = vunpack.c.l.b16 %v3769
    %v6674 = vunpack.c.h.b16 %v3769
    %v6675 = vunpack.c.l.b16 %v3770
    %v6676 = vunpack.c.h.b16 %v3770
    %v6677 = vunpack.c.l.b16 %v3771
    %v6678 = vunpack.c.h.b16 %v3771
    %v6679 = vunpack.c.l.b16 %v3772
    %v6680 = vunpack.c.h.b16 %v3772
    %v6681 = vunpack.c.l.b16 %v3773
    %v6682 = vunpack.c.h.b16 %v3773
    %v6683 = vunpack.c.l.b16 %v3774
    %v6684 = vunpack.c.h.b16 %v3774
    %v6685 = vunpack.c.l.b16 %v3775
    %v6686 = vunpack.c.h.b16 %v3775
    %v6687 = vunpack.c.l.b16 %v3776
    %v6688 = vunpack.c.h.b16 %v3776
    %v6689 = vunpack.c.l.b16 %v3777
    %v6690 = vunpack.c.h.b16 %v3777
    %v6691 = vunpack.c.l.b16 %v3778
    %v6692 = vunpack.c.h.b16 %v3778
    %v6693 = vunpack.c.l.b16 %v3779
    %v6694 = vunpack.c.h.b16 %v3779
    %v6695 = vunpack.c.l.b16 %v3780
    %v6696 = vunpack.c.h.b16 %v3780
    %v6697 = vunpack.c.l.b16 %v3781
    %v6698 = vunpack.c.h.b16 %v3781
    %v6699 = vunpack.c.l.b16 %v3782
    %v6700 = vunpack.c.h.b16 %v3782
    %v6701 = vunpack.c.l.b16 %v3783
    %v6702 = vunpack.c.h.b16 %v3783
    %v6703 = vunpack.c.l.b16 %v3784
    %v6704 = vunpack.c.h.b16 %v3784
    %v6705 = vunpack.c.l.b16 %v3785
    %v6706 = vunpack.c.h.b16 %v3785
    %v6707 = vunpack.c.l.b16 %v3786
    %v6708 = vunpack.c.h.b16 %v3786
    %v6709 = vunpack.c.l.b16 %v3787
    %v6710 = vunpack.c.h.b16 %v3787
    %v6711 = vunpack.c.l.b16 %v3788
    %v6712 = vunpack.c.h.b16 %v3788
    %v6713 = vunpack.c.l.b16 %v3789
    %v6714 = vunpack.c.h.b16 %v3789
    %v6715 = vunpack.c.l.b16 %v3790
    %v6716 = vunpack.c.h.b16 %v3790
    %v6717 = vunpack.c.l.b16 %v3791
    %v6718 = vunpack.c.h.b16 %v3791
    %v6719 = vunpack.c.l.b16 %v3792
    %v6720 = vunpack.c.h.b16 %v3792
    %v6721 = vunpack.c.l.b16 %v3793
    %v6722 = vunpack.c.h.b16 %v3793
    %v6723 = vunpack.c.l.b16 %v3794
    %v6724 = vunpack.c.h.b16 %v3794
    %v6725 = vunpack.c.l.b16 %v3795
    %v6726 = vunpack.c.h.b16 %v3795
    %v6727 = vunpack.c.l.b16 %v3796
    %v6728 = vunpack.c.h.b16 %v3796
    %v6729 = vunpack.c.l.b16 %v3797
    %v6730 = vunpack.c.h.b16 %v3797
    %v6731 = vunpack.c.l.b16 %v3798
    %v6732 = vunpack.c.h.b16 %v3798
    %v6733 = vunpack.c.l.b16 %v3799
    %v6734 = vunpack.c.h.b16 %v3799
    %v6735 = vunpack.c.l.b16 %v3800
    %v6736 = vunpack.c.h.b16 %v3800
    %v6737 = vunpack.c.l.b16 %v3801
    %v6738 = vunpack.c.h.b16 %v3801
    %v6739 = vunpack.c.l.b16 %v3802
    %v6740 = vunpack.c.h.b16 %v3802
    %v6741 = vunpack.c.l.b16 %v3803
    %v6742 = vunpack.c.h.b16 %v3803
    %v6743 = vunpack.c.l.b16 %v3804
    %v6744 = vunpack.c.h.b16 %v3804
    %v6745 = vunpack.c.l.b16 %v3805
    %v6746 = vunpack.c.h.b16 %v3805
    %v6747 = vunpack.c.l.b16 %v3806
    %v6748 = vunpack.c.h.b16 %v3806
    %v6749 = vunpack.c.l.b16 %v3807
    %v6750 = vunpack.c.h.b16 %v3807
    %v6751 = vunpack.c.l.b16 %v3808
    %v6752 = vunpack.c.h.b16 %v3808
    %v6753 = vunpack.c.l.b16 %v3809
    %v6754 = vunpack.c.h.b16 %v3809
    %v6755 = vunpack.c.l.b16 %v3810
    %v6756 = vunpack.c.h.b16 %v3810
    %v6757 = vunpack.c.l.b16 %v3811
    %v6758 = vunpack.c.h.b16 %v3811
    %v6759 = vunpack.c.l.b16 %v3812
    %v6760 = vunpack.c.h.b16 %v3812
    %v6761 = vunpack.c.l.b16 %v3813
    %v6762 = vunpack.c.h.b16 %v3813
    %v6763 = vunpack.c.l.b16 %v3814
    %v6764 = vunpack.c.h.b16 %v3814
    %v6765 = vunpack.c.l.b16 %v3815
    %v6766 = vunpack.c.h.b16 %v3815
    %v6767 = vunpack.c.l.b16 %v3816
    %v6768 = vunpack.c.h.b16 %v3816
    %v6769 = vunpack.c.l.b16 %v3817
    %v6770 = vunpack.c.h.b16 %v3817
    %v6771 = vunpack.c.l.b16 %v3818
    %v6772 = vunpack.c.h.b16 %v3818
    %v6773 = vunpack.c.l.b16 %v3819
    %v6774 = vunpack.c.h.b16 %v3819
    %v6775 = vunpack.c.l.b16 %v3820
    %v6776 = vunpack.c.h.b16 %v3820
    %v6777 = vunpack.c.l.b16 %v3821
    %v6778 = vunpack.c.h.b16 %v3821
    %v6779 = vunpack.c.l.b16 %v3822
    %v6780 = vunpack.c.h.b16 %v3822
    %v6781 = vunpack.c.l.b16 %v3823
    %v6782 = vunpack.c.h.b16 %v3823
    %v6783 = vunpack.c.l.b16 %v3824
    %v6784 = vunpack.c.h.b16 %v3824
    %v6785 = vunpack.c.l.b16 %v3825
    %v6786 = vunpack.c.h.b16 %v3825
    %v6787 = vunpack.c.l.b16 %v3826
    %v6788 = vunpack.c.h.b16 %v3826
    %v6789 = vunpack.c.l.b16 %v3827
    %v6790 = vunpack.c.h.b16 %v3827
    %v6791 = vunpack.c.l.b16 %v3828
    %v6792 = vunpack.c.h.b16 %v3828
    %v6793 = vunpack.c.l.b16 %v3829
    %v6794 = vunpack.c.h.b16 %v3829
    %v6795 = vunpack.c.l.b16 %v3830
    %v6796 = vunpack.c.h.b16 %v3830
    %v6797 = vunpack.c.l.b16 %v3831
    %v6798 = vunpack.c.h.b16 %v3831
    %v6799 = vunpack.c.l.b16 %v3832
    %v6800 = vunpack.c.h.b16 %v3832
    %v6801 = vunpack.c.l.b16 %v3833
    %v6802 = vunpack.c.h.b16 %v3833
    %v6803 = vunpack.c.l.b16 %v3834
    %v6804 = vunpack.c.h.b16 %v3834
    %v6805 = vunpack.c.l.b16 %v3835
    %v6806 = vunpack.c.h.b16 %v3835
    %v6807 = vunpack.c.l.b16 %v3836
    %v6808 = vunpack.c.h.b16 %v3836
    %v6809 = vunpack.c.l.b16 %v3837
    %v6810 = vunpack.c.h.b16 %v3837
    %v6811 = vunpack.c.l.b16 %v3838
    %v6812 = vunpack.c.h.b16 %v3838
    %v6813 = vunpack.c.l.b16 %v3839
    %v6814 = vunpack.c.h.b16 %v3839
    %v6815 = vunpack.c.l.b16 %v3840
    %v6816 = vunpack.c.h.b16 %v3840
    %v6817 = vunpack.c.l.b16 %v3841
    %v6818 = vunpack.c.h.b16 %v3841
    %v6819 = vunpack.c.l.b16 %v3842
    %v6820 = vunpack.c.h.b16 %v3842
    %v6821 = vunpack.c.l.b16 %v3843
    %v6822 = vunpack.c.h.b16 %v3843
    %v6823 = vunpack.c.l.b16 %v3844
    %v6824 = vunpack.c.h.b16 %v3844
    %v6825 = vunpack.c.l.b16 %v3845
    %v6826 = vunpack.c.h.b16 %v3845
    %v6827 = vunpack.c.l.b16 %v3846
    %v6828 = vunpack.c.h.b16 %v3846
    %v6829 = vunpack.c.l.b16 %v3847
    %v6830 = vunpack.c.h.b16 %v3847
    %v6831 = vunpack.c.l.b16 %v3848
    %v6832 = vunpack.c.h.b16 %v3848
    %v6833 = vunpack.c.l.b16 %v3849
    %v6834 = vunpack.c.h.b16 %v3849
    %v6835 = vunpack.c.l.b16 %v3850
    %v6836 = vunpack.c.h.b16 %v3850
    %v6837 = vunpack.c.l.b16 %v3851
    %v6838 = vunpack.c.h.b16 %v3851
    %v6839 = vunpack.c.l.b16 %v3852
    %v6840 = vunpack.c.h.b16 %v3852
    %v6841 = vunpack.c.l.b16 %v3853
    %v6842 = vunpack.c.h.b16 %v3853
    %v6843 = vunpack.c.l.b16 %v3854
    %v6844 = vunpack.c.h.b16 %v3854
    %v6845 = vunpack.c.l.b16 %v3855
    %v6846 = vunpack.c.h.b16 %v3855
    %v6847 = vunpack.c.l.b16 %v3856
    %v6848 = vunpack.c.h.b16 %v3856
    %v6849 = vunpack.c.l.b16 %v3857
    %v6850 = vunpack.c.h.b16 %v3857
    %v6851 = vunpack.c.l.b16 %v3858
    %v6852 = vunpack.c.h.b16 %v3858
    %v6853 = vunpack.c.l.b16 %v3859
    %v6854 = vunpack.c.h.b16 %v3859
    %v6855 = vunpack.c.l.b16 %v3860
    %v6856 = vunpack.c.h.b16 %v3860
    %v6857 = vunpack.c.l.b16 %v3861
    %v6858 = vunpack.c.h.b16 %v3861
    %v6859 = vunpack.c.l.b16 %v3862
    %v6860 = vunpack.c.h.b16 %v3862
    %v6861 = vunpack.c.l.b16 %v3863
    %v6862 = vunpack.c.h.b16 %v3863
    %v6863 = vunpack.c.l.b16 %v3864
    %v6864 = vunpack.c.h.b16 %v3864
    %v6865 = vunpack.c.l.b16 %v3865
    %v6866 = vunpack.c.h.b16 %v3865
    %v6867 = vunpack.c.l.b16 %v3866
    %v6868 = vunpack.c.h.b16 %v3866
    %v6869 = vunpack.c.l.b16 %v3867
    %v6870 = vunpack.c.h.b16 %v3867
    %v6871 = vunpack.c.l.b16 %v3868
    %v6872 = vunpack.c.h.b16 %v3868
    %v6873 = vunpack.c.l.b16 %v3869
    %v6874 = vunpack.c.h.b16 %v3869
    %v6875 = vunpack.c.l.b16 %v3870
    %v6876 = vunpack.c.h.b16 %v3870
    %v6877 = vunpack.c.l.b16 %v3871
    %v6878 = vunpack.c.h.b16 %v3871
    %v6879 = vunpack.c.l.b16 %v3872
    %v6880 = vunpack.c.h.b16 %v3872
    %v6881 = vunpack.c.l.b16 %v3873
    %v6882 = vunpack.c.h.b16 %v3873
    %v6883 = vunpack.c.l.b16 %v3874
    %v6884 = vunpack.c.h.b16 %v3874
    %v6885 = vunpack.c.l.b16 %v3875
    %v6886 = vunpack.c.h.b16 %v3875
    %v6887 = vunpack.c.l.b16 %v3876
    %v6888 = vunpack.c.h.b16 %v3876
    %v6889 = vunpack.c.l.b16 %v3877
    %v6890 = vunpack.c.h.b16 %v3877
    %v6891 = vunpack.c.l.b16 %v3878
    %v6892 = vunpack.c.h.b16 %v3878
    %v6893 = vunpack.c.l.b16 %v3879
    %v6894 = vunpack.c.h.b16 %v3879
    %v6895 = vunpack.c.l.b16 %v3880
    %v6896 = vunpack.c.h.b16 %v3880
    %v6897 = vunpack.c.l.b16 %v3881
    %v6898 = vunpack.c.h.b16 %v3881
    %v6899 = vunpack.c.l.b16 %v3882
    %v6900 = vunpack.c.h.b16 %v3882
    %v6901 = vunpack.c.l.b16 %v3883
    %v6902 = vunpack.c.h.b16 %v3883
    %v6903 = vunpack.c.l.b16 %v3884
    %v6904 = vunpack.c.h.b16 %v3884
    %v6905 = vunpack.c.l.b16 %v3885
    %v6906 = vunpack.c.h.b16 %v3885
    %v6907 = vunpack.c.l.b16 %v3886
    %v6908 = vunpack.c.h.b16 %v3886
    %v6909 = vunpack.c.l.b16 %v3887
    %v6910 = vunpack.c.h.b16 %v3887
    %v6911 = vunpack.c.l.b16 %v3888
    %v6912 = vunpack.c.h.b16 %v3888
    %v6913 = vunpack.c.l.b16 %v3889
    %v6914 = vunpack.c.h.b16 %v3889
    %v6915 = vunpack.c.l.b16 %v3890
    %v6916 = vunpack.c.h.b16 %v3890
    %v6917 = vunpack.c.l.b16 %v3891
    %v6918 = vunpack.c.h.b16 %v3891
    %v6919 = vunpack.c.l.b16 %v3892
    %v6920 = vunpack.c.h.b16 %v3892
    %v6921 = vunpack.c.l.b16 %v3893
    %v6922 = vunpack.c.h.b16 %v3893
    %v6923 = vunpack.c.l.b16 %v3894
    %v6924 = vunpack.c.h.b16 %v3894
    %v6925 = vunpack.c.l.b16 %v3895
    %v6926 = vunpack.c.h.b16 %v3895
    %v6927 = vunpack.c.l.b16 %v3896
    %v6928 = vunpack.c.h.b16 %v3896
    %v6929 = vunpack.c.l.b16 %v3897
    %v6930 = vunpack.c.h.b16 %v3897
    %v6931 = vunpack.c.l.b16 %v3898
    %v6932 = vunpack.c.h.b16 %v3898
    %v6933 = vunpack.c.l.b16 %v3899
    %v6934 = vunpack.c.h.b16 %v3899
    %v6935 = vunpack.c.l.b16 %v3900
    %v6936 = vunpack.c.h.b16 %v3900
    %v6937 = vunpack.c.l.b16 %v3901
    %v6938 = vunpack.c.h.b16 %v3901
    %v6939 = vunpack.c.l.b16 %v3902
    %v6940 = vunpack.c.h.b16 %v3902
    %v6941 = vunpack.c.l.b16 %v3903
    %v6942 = vunpack.c.h.b16 %v3903
    %v6943 = vunpack.c.l.b16 %v3904
    %v6944 = vunpack.c.h.b16 %v3904
    %v6945 = vunpack.c.l.b16 %v3905
    %v6946 = vunpack.c.h.b16 %v3905
    %v6947 = vunpack.c.l.b16 %v3906
    %v6948 = vunpack.c.h.b16 %v3906
    %v6949 = vunpack.c.l.b16 %v3907
    %v6950 = vunpack.c.h.b16 %v3907
    %v6951 = vunpack.c.l.b16 %v3908
    %v6952 = vunpack.c.h.b16 %v3908
    %v6953 = vunpack.c.l.b16 %v3909
    %v6954 = vunpack.c.h.b16 %v3909
    %v6955 = vunpack.c.l.b16 %v3910
    %v6956 = vunpack.c.h.b16 %v3910
    %v6957 = vunpack.c.l.b16 %v3911
    %v6958 = vunpack.c.h.b16 %v3911
    %v6959 = vunpack.c.l.b16 %v3912
    %v6960 = vunpack.c.h.b16 %v3912
    %v6961 = vunpack.c.l.b16 %v3913
    %v6962 = vunpack.c.h.b16 %v3913
    %v6963 = vunpack.c.l.b16 %v3914
    %v6964 = vunpack.c.h.b16 %v3914
    %v6965 = vunpack.c.l.b16 %v3915
    %v6966 = vunpack.c.h.b16 %v3915
    %v6967 = vunpack.c.l.b16 %v3916
    %v6968 = vunpack.c.h.b16 %v3916
    %v6969 = vunpack.c.l.b16 %v3917
    %v6970 = vunpack.c.h.b16 %v3917
    %v6971 = vunpack.c.l.b16 %v3918
    %v6972 = vunpack.c.h.b16 %v3918
    %v6973 = vunpack.c.l.b16 %v3919
    %v6974 = vunpack.c.h.b16 %v3919
    %v6975 = vunpack.c.l.b16 %v3920
    %v6976 = vunpack.c.h.b16 %v3920
    %v6977 = vunpack.c.l.b16 %v3921
    %v6978 = vunpack.c.h.b16 %v3921
    %v6979 = vunpack.c.l.b16 %v3922
    %v6980 = vunpack.c.h.b16 %v3922
    %v6981 = vunpack.c.l.b16 %v3923
    %v6982 = vunpack.c.h.b16 %v3923
    %v6983 = vunpack.c.l.b16 %v3924
    %v6984 = vunpack.c.h.b16 %v3924
    %v6985 = vunpack.c.l.b16 %v3925
    %v6986 = vunpack.c.h.b16 %v3925
    %v6987 = vunpack.c.l.b16 %v3926
    %v6988 = vunpack.c.h.b16 %v3926
    %v6989 = vunpack.c.l.b16 %v3927
    %v6990 = vunpack.c.h.b16 %v3927
    %v6991 = vunpack.c.l.b16 %v3928
    %v6992 = vunpack.c.h.b16 %v3928
    %v6993 = vunpack.c.l.b16 %v3929
    %v6994 = vunpack.c.h.b16 %v3929
    %v6995 = vunpack.c.l.b16 %v3930
    %v6996 = vunpack.c.h.b16 %v3930
    %v6997 = vunpack.c.l.b16 %v3931
    %v6998 = vunpack.c.h.b16 %v3931
    %v6999 = vunpack.c.l.b16 %v3932
    %v7000 = vunpack.c.h.b16 %v3932
    %v7001 = vunpack.c.l.b16 %v3933
    %v7002 = vunpack.c.h.b16 %v3933
    %v7003 = vunpack.c.l.b16 %v3934
    %v7004 = vunpack.c.h.b16 %v3934
    %v7005 = vunpack.c.l.b16 %v3935
    %v7006 = vunpack.c.h.b16 %v3935
    %v7007 = vunpack.c.l.b16 %v3936
    %v7008 = vunpack.c.h.b16 %v3936
    %v7009 = vunpack.c.l.b16 %v3937
    %v7010 = vunpack.c.h.b16 %v3937
    %v7011 = vunpack.c.l.b16 %v3938
    %v7012 = vunpack.c.h.b16 %v3938
    %v7013 = vunpack.c.l.b16 %v3939
    %v7014 = vunpack.c.h.b16 %v3939
    %v7015 = vunpack.c.l.b16 %v3940
    %v7016 = vunpack.c.h.b16 %v3940
    %v7017 = vunpack.c.l.b16 %v3941
    %v7018 = vunpack.c.h.b16 %v3941
    %v7019 = vunpack.c.l.b16 %v3942
    %v7020 = vunpack.c.h.b16 %v3942
    %v7021 = vunpack.c.l.b16 %v3943
    %v7022 = vunpack.c.h.b16 %v3943
    %v7023 = vunpack.c.l.b16 %v3944
    %v7024 = vunpack.c.h.b16 %v3944
    %v7025 = vunpack.c.l.b16 %v3945
    %v7026 = vunpack.c.h.b16 %v3945
    %v7027 = vunpack.c.l.b16 %v3946
    %v7028 = vunpack.c.h.b16 %v3946
    %v7029 = vunpack.c.l.b16 %v3947
    %v7030 = vunpack.c.h.b16 %v3947
    %v7031 = vunpack.c.l.b16 %v3948
    %v7032 = vunpack.c.h.b16 %v3948
    %v7033 = vunpack.c.l.b16 %v3949
    %v7034 = vunpack.c.h.b16 %v3949
    %v7035 = vunpack.c.l.b16 %v3950
    %v7036 = vunpack.c.h.b16 %v3950
    %v7037 = vunpack.c.l.b16 %v3951
    %v7038 = vunpack.c.h.b16 %v3951
    %v7039 = vunpack.c.l.b16 %v3952
    %v7040 = vunpack.c.h.b16 %v3952
    %v7041 = vunpack.c.l.b16 %v3953
    %v7042 = vunpack.c.h.b16 %v3953
    %v7043 = vunpack.c.l.b16 %v3954
    %v7044 = vunpack.c.h.b16 %v3954
    %v7045 = vunpack.c.l.b16 %v3955
    %v7046 = vunpack.c.h.b16 %v3955
    %v7047 = vunpack.c.l.b16 %v3956
    %v7048 = vunpack.c.h.b16 %v3956
    %v7049 = vunpack.c.l.b16 %v3957
    %v7050 = vunpack.c.h.b16 %v3957
    %v7051 = vunpack.c.l.b16 %v3958
    %v7052 = vunpack.c.h.b16 %v3958
    %v7053 = vunpack.c.l.b16 %v3959
    %v7054 = vunpack.c.h.b16 %v3959
    %v7055 = vunpack.c.l.b16 %v3960
    %v7056 = vunpack.c.h.b16 %v3960
    %v7057 = vunpack.c.l.b16 %v3961
    %v7058 = vunpack.c.h.b16 %v3961
    %v7059 = vunpack.c.l.b16 %v3962
    %v7060 = vunpack.c.h.b16 %v3962
    %v7061 = vunpack.c.l.b16 %v3963
    %v7062 = vunpack.c.h.b16 %v3963
    %v7063 = vunpack.c.l.b16 %v3964
    %v7064 = vunpack.c.h.b16 %v3964
    %v7065 = vunpack.c.l.b16 %v3965
    %v7066 = vunpack.c.h.b16 %v3965
    %v7067 = vunpack.c.l.b16 %v3966
    %v7068 = vunpack.c.h.b16 %v3966
    %v7069 = vunpack.c.l.b16 %v3967
    %v7070 = vunpack.c.h.b16 %v3967
    %v7071 = vunpack.c.l.b16 %v3968
    %v7072 = vunpack.c.h.b16 %v3968
    %v7073 = vunpack.c.l.b16 %v3969
    %v7074 = vunpack.c.h.b16 %v3969
    %v7075 = vunpack.c.l.b16 %v3970
    %v7076 = vunpack.c.h.b16 %v3970
    %v7077 = vunpack.c.l.b16 %v3971
    %v7078 = vunpack.c.h.b16 %v3971
    %v7079 = vunpack.c.l.b16 %v3972
    %v7080 = vunpack.c.h.b16 %v3972
    %v7081 = vunpack.c.l.b16 %v3973
    %v7082 = vunpack.c.h.b16 %v3973
    %v7083 = vunpack.c.l.b16 %v3974
    %v7084 = vunpack.c.h.b16 %v3974
    %v7085 = vunpack.c.l.b16 %v3975
    %v7086 = vunpack.c.h.b16 %v3975
    %v7087 = vunpack.c.l.b16 %v3976
    %v7088 = vunpack.c.h.b16 %v3976
    %v7089 = vunpack.c.l.b16 %v3977
    %v7090 = vunpack.c.h.b16 %v3977
    %v7091 = vunpack.c.l.b16 %v3978
    %v7092 = vunpack.c.h.b16 %v3978
    %v7093 = vunpack.c.l.b16 %v3979
    %v7094 = vunpack.c.h.b16 %v3979
    %v7095 = vunpack.c.l.b16 %v3980
    %v7096 = vunpack.c.h.b16 %v3980
    %v7097 = vunpack.c.l.b16 %v3981
    %v7098 = vunpack.c.h.b16 %v3981
    %v7099 = vunpack.c.l.b16 %v3982
    %v7100 = vunpack.c.h.b16 %v3982
    %v7101 = vunpack.c.l.b16 %v3983
    %v7102 = vunpack.c.h.b16 %v3983
    %v7103 = vunpack.c.l.b16 %v3984
    %v7104 = vunpack.c.h.b16 %v3984
    %v7105 = vunpack.c.l.b16 %v3985
    %v7106 = vunpack.c.h.b16 %v3985
    %v7107 = vunpack.c.l.b16 %v3986
    %v7108 = vunpack.c.h.b16 %v3986
    %v7109 = vunpack.c.l.b16 %v3987
    %v7110 = vunpack.c.h.b16 %v3987
    %v7111 = vunpack.c.l.b16 %v3988
    %v7112 = vunpack.c.h.b16 %v3988
    %v7113 = vunpack.c.l.b16 %v3989
    %v7114 = vunpack.c.h.b16 %v3989
    %v7115 = vunpack.c.l.b16 %v3990
    %v7116 = vunpack.c.h.b16 %v3990
    %v7117 = vunpack.c.l.b16 %v3991
    %v7118 = vunpack.c.h.b16 %v3991
    %v7119 = vunpack.c.l.b16 %v3992
    %v7120 = vunpack.c.h.b16 %v3992
    %v7121 = vunpack.c.l.b16 %v3993
    %v7122 = vunpack.c.h.b16 %v3993
    %v7123 = vunpack.c.l.b16 %v3994
    %v7124 = vunpack.c.h.b16 %v3994
    %v7125 = vunpack.c.l.b16 %v3995
    %v7126 = vunpack.c.h.b16 %v3995
    %v7127 = vunpack.c.l.b16 %v3996
    %v7128 = vunpack.c.h.b16 %v3996
    %v7129 = vunpack.c.l.b16 %v3997
    %v7130 = vunpack.c.h.b16 %v3997
    %v7131 = vunpack.c.l.b16 %v3998
    %v7132 = vunpack.c.h.b16 %v3998
    %v7133 = vunpack.c.l.b16 %v3999
    %v7134 = vunpack.c.h.b16 %v3999
    %v7135 = vunpack.c.l.b16 %v4000
    %v7136 = vunpack.c.h.b16 %v4000
    %v7137 = vunpack.c.l.b16 %v4001
    %v7138 = vunpack.c.h.b16 %v4001
    %v7139 = vunpack.c.l.b16 %v4002
    %v7140 = vunpack.c.h.b16 %v4002
    %v7141 = vunpack.c.l.b16 %v4003
    %v7142 = vunpack.c.h.b16 %v4003
    %v7143 = vunpack.c.l.b16 %v4004
    %v7144 = vunpack.c.h.b16 %v4004
    %v7145 = vunpack.c.l.b16 %v4005
    %v7146 = vunpack.c.h.b16 %v4005
    %v7147 = vunpack.c.l.b16 %v4006
    %v7148 = vunpack.c.h.b16 %v4006
    %v7149 = vunpack.c.l.b16 %v4007
    %v7150 = vunpack.c.h.b16 %v4007
    %v7151 = vunpack.c.l.b16 %v4008
    %v7152 = vunpack.c.h.b16 %v4008
    %v7153 = vunpack.c.l.b16 %v4009
    %v7154 = vunpack.c.h.b16 %v4009
    %v7155 = vunpack.c.l.b16 %v4010
    %v7156 = vunpack.c.h.b16 %v4010
    %v7157 = vunpack.c.l.b16 %v4011
    %v7158 = vunpack.c.h.b16 %v4011
    %v7159 = vunpack.c.l.b16 %v4012
    %v7160 = vunpack.c.h.b16 %v4012
    %v7161 = vunpack.c.l.b16 %v4013
    %v7162 = vunpack.c.h.b16 %v4013
    %v7163 = vunpack.c.l.b16 %v4014
    %v7164 = vunpack.c.h.b16 %v4014
    %v7165 = vunpack.c.l.b16 %v4015
    %v7166 = vunpack.c.h.b16 %v4015
    %v7167 = vunpack.c.l.b16 %v4016
    %v7168 = vunpack.c.h.b16 %v4016
    %v7169 = vunpack.c.l.b16 %v4017
    %v7170 = vunpack.c.h.b16 %v4017
    %v7171 = vunpack.c.l.b16 %v4018
    %v7172 = vunpack.c.h.b16 %v4018
    %v7173 = vunpack.c.l.b16 %v4019
    %v7174 = vunpack.c.h.b16 %v4019
    %v7175 = vunpack.c.l.b16 %v4020
    %v7176 = vunpack.c.h.b16 %v4020
    %v7177 = vunpack.c.l.b16 %v4021
    %v7178 = vunpack.c.h.b16 %v4021
    %v7179 = vunpack.c.l.b16 %v4022
    %v7180 = vunpack.c.h.b16 %v4022
    %v7181 = vunpack.c.l.b16 %v4023
    %v7182 = vunpack.c.h.b16 %v4023
    %v7183 = vunpack.c.l.b16 %v4024
    %v7184 = vunpack.c.h.b16 %v4024
    %v7185 = vunpack.c.l.b16 %v4025
    %v7186 = vunpack.c.h.b16 %v4025
    %v7187 = vunpack.c.l.b16 %v4026
    %v7188 = vunpack.c.h.b16 %v4026
    %v7189 = vunpack.c.l.b16 %v4027
    %v7190 = vunpack.c.h.b16 %v4027
    %v7191 = vunpack.c.l.b16 %v4028
    %v7192 = vunpack.c.h.b16 %v4028
    %v7193 = vunpack.c.l.b16 %v4029
    %v7194 = vunpack.c.h.b16 %v4029
    %v7195 = vunpack.c.l.b16 %v4030
    %v7196 = vunpack.c.h.b16 %v4030
    %v7197 = vunpack.c.l.b16 %v4031
    %v7198 = vunpack.c.h.b16 %v4031
    %v7199 = vunpack.c.l.b16 %v4032
    %v7200 = vunpack.c.h.b16 %v4032
    %v7201 = vunpack.c.l.b16 %v4033
    %v7202 = vunpack.c.h.b16 %v4033
    %v7203 = vunpack.c.l.b16 %v4034
    %v7204 = vunpack.c.h.b16 %v4034
    %v7205 = vpack.c.b16 %v5165, %v5157
    %v7206 = vpack.c.b16 %v5166, %v5158
    %v7207 = vpack.c.b16 %v5167, %v5159
    %v7208 = vpack.c.b16 %v5168, %v5160
    %v7209 = vpack.c.b16 %v5169, %v5161
    %v7210 = vpack.c.b16 %v5170, %v5162
    %v7211 = vpack.c.b16 %v5171, %v5163
    %v7212 = vpack.c.b16 %v5172, %v5164
    %v7213 = vpack.c.b16 %v5181, %v5173
    %v7214 = vpack.c.b16 %v5182, %v5174
    %v7215 = vpack.c.b16 %v5183, %v5175
    %v7216 = vpack.c.b16 %v5184, %v5176
    %v7217 = vpack.c.b16 %v5185, %v5177
    %v7218 = vpack.c.b16 %v5186, %v5178
    %v7219 = vpack.c.b16 %v5187, %v5179
    %v7220 = vpack.c.b16 %v5188, %v5180
    %v7221 = vpack.c.b16 %v5197, %v5189
    %v7222 = vpack.c.b16 %v5198, %v5190
    %v7223 = vpack.c.b16 %v5199, %v5191
    %v7224 = vpack.c.b16 %v5200, %v5192
    %v7225 = vpack.c.b16 %v5201, %v5193
    %v7226 = vpack.c.b16 %v5202, %v5194
    %v7227 = vpack.c.b16 %v5203, %v5195
    %v7228 = vpack.c.b16 %v5204, %v5196
    %v7229 = vpack.c.b16 %v5213, %v5205
    %v7230 = vpack.c.b16 %v5214, %v5206
    %v7231 = vpack.c.b16 %v5215, %v5207
    %v7232 = vpack.c.b16 %v5216, %v5208
    %v7233 = vpack.c.b16 %v5217, %v5209
    %v7234 = vpack.c.b16 %v5218, %v5210
    %v7235 = vpack.c.b16 %v5219, %v5211
    %v7236 = vpack.c.b16 %v5220, %v5212
    %v7237 = vpack.c.b16 %v5229, %v5221
    %v7238 = vpack.c.b16 %v5230, %v5222
    %v7239 = vpack.c.b16 %v5231, %v5223
    %v7240 = vpack.c.b16 %v5232, %v5224
    %v7241 = vpack.c.b16 %v5233, %v5225
    %v7242 = vpack.c.b16 %v5234, %v5226
    %v7243 = vpack.c.b16 %v5235, %v5227
    %v7244 = vpack.c.b16 %v5236, %v5228
    %v7245 = vpack.c.b16 %v5245, %v5237
    %v7246 = vpack.c.b16 %v5246, %v5238
    %v7247 = vpack.c.b16 %v5247, %v5239
    %v7248 = vpack.c.b16 %v5248, %v5240
    %v7249 = vpack.c.b16 %v5249, %v5241
    %v7250 = vpack.c.b16 %v5250, %v5242
    %v7251 = vpack.c.b16 %v5251, %v5243
    %v7252 = vpack.c.b16 %v5252, %v5244
    %v7253 = vpack.c.b16 %v5261, %v5253
    %v7254 = vpack.c.b16 %v5262, %v5254
    %v7255 = vpack.c.b16 %v5263, %v5255
    %v7256 = vpack.c.b16 %v5264, %v5256
    %v7257 = vpack.c.b16 %v5265, %v5257
    %v7258 = vpack.c.b16 %v5266, %v5258
    %v7259 = vpack.c.b16 %v5267, %v5259
    %v7260 = vpack.c.b16 %v5268, %v5260
    %v7261 = vpack.c.b16 %v5277, %v5269
    %v7262 = vpack.c.b16 %v5278, %v5270
    %v7263 = vpack.c.b16 %v5279, %v5271
    %v7264 = vpack.c.b16 %v5280, %v5272
    %v7265 = vpack.c.b16 %v5281, %v5273
    %v7266 = vpack.c.b16 %v5282, %v5274
    %v7267 = vpack.c.b16 %v5283, %v5275
    %v7268 = vpack.c.b16 %v5284, %v5276
    %v7269 = vpack.c.b16 %v5293, %v5285
    %v7270 = vpack.c.b16 %v5294, %v5286
    %v7271 = vpack.c.b16 %v5295, %v5287
    %v7272 = vpack.c.b16 %v5296, %v5288
    %v7273 = vpack.c.b16 %v5297, %v5289
    %v7274 = vpack.c.b16 %v5298, %v5290
    %v7275 = vpack.c.b16 %v5299, %v5291
    %v7276 = vpack.c.b16 %v5300, %v5292
    %v7277 = vpack.c.b16 %v5309, %v5301
    %v7278 = vpack.c.b16 %v5310, %v5302
    %v7279 = vpack.c.b16 %v5311, %v5303
    %v7280 = vpack.c.b16 %v5312, %v5304
    %v7281 = vpack.c.b16 %v5313, %v5305
    %v7282 = vpack.c.b16 %v5314, %v5306
    %v7283 = vpack.c.b16 %v5315, %v5307
    %v7284 = vpack.c.b16 %v5316, %v5308
    %v7285 = vpack.c.b16 %v5325, %v5317
    %v7286 = vpack.c.b16 %v5326, %v5318
    %v7287 = vpack.c.b16 %v5327, %v5319
    %v7288 = vpack.c.b16 %v5328, %v5320
    %v7289 = vpack.c.b16 %v5329, %v5321
    %v7290 = vpack.c.b16 %v5330, %v5322
    %v7291 = vpack.c.b16 %v5331, %v5323
    %v7292 = vpack.c.b16 %v5332, %v5324
    %v7293 = vpack.c.b16 %v5341, %v5333
    %v7294 = vpack.c.b16 %v5342, %v5334
    %v7295 = vpack.c.b16 %v5343, %v5335
    %v7296 = vpack.c.b16 %v5344, %v5336
    %v7297 = vpack.c.b16 %v5345, %v5337
    %v7298 = vpack.c.b16 %v5346, %v5338
    %v7299 = vpack.c.b16 %v5347, %v5339
    %v7300 = vpack.c.b16 %v5348, %v5340
    %v7301 = vpack.c.b16 %v5357, %v5349
    %v7302 = vpack.c.b16 %v5358, %v5350
    %v7303 = vpack.c.b16 %v5359, %v5351
    %v7304 = vpack.c.b16 %v5360, %v5352
    %v7305 = vpack.c.b16 %v5361, %v5353
    %v7306 = vpack.c.b16 %v5362, %v5354
    %v7307 = vpack.c.b16 %v5363, %v5355
    %v7308 = vpack.c.b16 %v5364, %v5356
    %v7309 = vpack.c.b16 %v5373, %v5365
    %v7310 = vpack.c.b16 %v5374, %v5366
    %v7311 = vpack.c.b16 %v5375, %v5367
    %v7312 = vpack.c.b16 %v5376, %v5368
    %v7313 = vpack.c.b16 %v5377, %v5369
    %v7314 = vpack.c.b16 %v5378, %v5370
    %v7315 = vpack.c.b16 %v5379, %v5371
    %v7316 = vpack.c.b16 %v5380, %v5372
    %v7317 = vpack.c.b16 %v5389, %v5381
    %v7318 = vpack.c.b16 %v5390, %v5382
    %v7319 = vpack.c.b16 %v5391, %v5383
    %v7320 = vpack.c.b16 %v5392, %v5384
    %v7321 = vpack.c.b16 %v5393, %v5385
    %v7322 = vpack.c.b16 %v5394, %v5386
    %v7323 = vpack.c.b16 %v5395, %v5387
    %v7324 = vpack.c.b16 %v5396, %v5388
    %v7325 = vpack.c.b16 %v5405, %v5397
    %v7326 = vpack.c.b16 %v5406, %v5398
    %v7327 = vpack.c.b16 %v5407, %v5399
    %v7328 = vpack.c.b16 %v5408, %v5400
    %v7329 = vpack.c.b16 %v5409, %v5401
    %v7330 = vpack.c.b16 %v5410, %v5402
    %v7331 = vpack.c.b16 %v5411, %v5403
    %v7332 = vpack.c.b16 %v5412, %v5404
    %v7333 = vpack.c.b16 %v5421, %v5413
    %v7334 = vpack.c.b16 %v5422, %v5414
    %v7335 = vpack.c.b16 %v5423, %v5415
    %v7336 = vpack.c.b16 %v5424, %v5416
    %v7337 = vpack.c.b16 %v5425, %v5417
    %v7338 = vpack.c.b16 %v5426, %v5418
    %v7339 = vpack.c.b16 %v5427, %v5419
    %v7340 = vpack.c.b16 %v5428, %v5420
    %v7341 = vpack.c.b16 %v5437, %v5429
    %v7342 = vpack.c.b16 %v5438, %v5430
    %v7343 = vpack.c.b16 %v5439, %v5431
    %v7344 = vpack.c.b16 %v5440, %v5432
    %v7345 = vpack.c.b16 %v5441, %v5433
    %v7346 = vpack.c.b16 %v5442, %v5434
    %v7347 = vpack.c.b16 %v5443, %v5435
    %v7348 = vpack.c.b16 %v5444, %v5436
    %v7349 = vpack.c.b16 %v5453, %v5445
    %v7350 = vpack.c.b16 %v5454, %v5446
    %v7351 = vpack.c.b16 %v5455, %v5447
    %v7352 = vpack.c.b16 %v5456, %v5448
    %v7353 = vpack.c.b16 %v5457, %v5449
    %v7354 = vpack.c.b16 %v5458, %v5450
    %v7355 = vpack.c.b16 %v5459, %v5451
    %v7356 = vpack.c.b16 %v5460, %v5452
    %v7357 = vpack.c.b16 %v5469, %v5461
    %v7358 = vpack.c.b16 %v5470, %v5462
    %v7359 = vpack.c.b16 %v5471, %v5463
    %v7360 = vpack.c.b16 %v5472, %v5464
    %v7361 = vpack.c.b16 %v5473, %v5465
    %v7362 = vpack.c.b16 %v5474, %v5466
    %v7363 = vpack.c.b16 %v5475, %v5467
    %v7364 = vpack.c.b16 %v5476, %v5468
    %v7365 = vpack.c.b16 %v5485, %v5477
    %v7366 = vpack.c.b16 %v5486, %v5478
    %v7367 = vpack.c.b16 %v5487, %v5479
    %v7368 = vpack.c.b16 %v5488, %v5480
    %v7369 = vpack.c.b16 %v5489, %v5481
    %v7370 = vpack.c.b16 %v5490, %v5482
    %v7371 = vpack.c.b16 %v5491, %v5483
    %v7372 = vpack.c.b16 %v5492, %v5484
    %v7373 = vpack.c.b16 %v5501, %v5493
    %v7374 = vpack.c.b16 %v5502, %v5494
    %v7375 = vpack.c.b16 %v5503, %v5495
    %v7376 = vpack.c.b16 %v5504, %v5496
    %v7377 = vpack.c.b16 %v5505, %v5497
    %v7378 = vpack.c.b16 %v5506, %v5498
    %v7379 = vpack.c.b16 %v5507, %v5499
    %v7380 = vpack.c.b16 %v5508, %v5500
    %v7381 = vpack.c.b16 %v5517, %v5509
    %v7382 = vpack.c.b16 %v5518, %v5510
    %v7383 = vpack.c.b16 %v5519, %v5511
    %v7384 = vpack.c.b16 %v5520, %v5512
    %v7385 = vpack.c.b16 %v5521, %v5513
    %v7386 = vpack.c.b16 %v5522, %v5514
    %v7387 = vpack.c.b16 %v5523, %v5515
    %v7388 = vpack.c.b16 %v5524, %v5516
    %v7389 = vpack.c.b16 %v5533, %v5525
    %v7390 = vpack.c.b16 %v5534, %v5526
    %v7391 = vpack.c.b16 %v5535, %v5527
    %v7392 = vpack.c.b16 %v5536, %v5528
    %v7393 = vpack.c.b16 %v5537, %v5529
    %v7394 = vpack.c.b16 %v5538, %v5530
    %v7395 = vpack.c.b16 %v5539, %v5531
    %v7396 = vpack.c.b16 %v5540, %v5532
    %v7397 = vpack.c.b16 %v5549, %v5541
    %v7398 = vpack.c.b16 %v5550, %v5542
    %v7399 = vpack.c.b16 %v5551, %v5543
    %v7400 = vpack.c.b16 %v5552, %v5544
    %v7401 = vpack.c.b16 %v5553, %v5545
    %v7402 = vpack.c.b16 %v5554, %v5546
    %v7403 = vpack.c.b16 %v5555, %v5547
    %v7404 = vpack.c.b16 %v5556, %v5548
    %v7405 = vpack.c.b16 %v5565, %v5557
    %v7406 = vpack.c.b16 %v5566, %v5558
    %v7407 = vpack.c.b16 %v5567, %v5559
    %v7408 = vpack.c.b16 %v5568, %v5560
    %v7409 = vpack.c.b16 %v5569, %v5561
    %v7410 = vpack.c.b16 %v5570, %v5562
    %v7411 = vpack.c.b16 %v5571, %v5563
    %v7412 = vpack.c.b16 %v5572, %v5564
    %v7413 = vpack.c.b16 %v5581, %v5573
    %v7414 = vpack.c.b16 %v5582, %v5574
    %v7415 = vpack.c.b16 %v5583, %v5575
    %v7416 = vpack.c.b16 %v5584, %v5576
    %v7417 = vpack.c.b16 %v5585, %v5577
    %v7418 = vpack.c.b16 %v5586, %v5578
    %v7419 = vpack.c.b16 %v5587, %v5579
    %v7420 = vpack.c.b16 %v5588, %v5580
    %v7421 = vpack.c.b16 %v5597, %v5589
    %v7422 = vpack.c.b16 %v5598, %v5590
    %v7423 = vpack.c.b16 %v5599, %v5591
    %v7424 = vpack.c.b16 %v5600, %v5592
    %v7425 = vpack.c.b16 %v5601, %v5593
    %v7426 = vpack.c.b16 %v5602, %v5594
    %v7427 = vpack.c.b16 %v5603, %v5595
    %v7428 = vpack.c.b16 %v5604, %v5596
    %v7429 = vpack.c.b16 %v5613, %v5605
    %v7430 = vpack.c.b16 %v5614, %v5606
    %v7431 = vpack.c.b16 %v5615, %v5607
    %v7432 = vpack.c.b16 %v5616, %v5608
    %v7433 = vpack.c.b16 %v5617, %v5609
    %v7434 = vpack.c.b16 %v5618, %v5610
    %v7435 = vpack.c.b16 %v5619, %v5611
    %v7436 = vpack.c.b16 %v5620, %v5612
    %v7437 = vpack.c.b16 %v5629, %v5621
    %v7438 = vpack.c.b16 %v5630, %v5622
    %v7439 = vpack.c.b16 %v5631, %v5623
    %v7440 = vpack.c.b16 %v5632, %v5624
    %v7441 = vpack.c.b16 %v5633, %v5625
    %v7442 = vpack.c.b16 %v5634, %v5626
    %v7443 = vpack.c.b16 %v5635, %v5627
    %v7444 = vpack.c.b16 %v5636, %v5628
    %v7445 = vpack.c.b16 %v5645, %v5637
    %v7446 = vpack.c.b16 %v5646, %v5638
    %v7447 = vpack.c.b16 %v5647, %v5639
    %v7448 = vpack.c.b16 %v5648, %v5640
    %v7449 = vpack.c.b16 %v5649, %v5641
    %v7450 = vpack.c.b16 %v5650, %v5642
    %v7451 = vpack.c.b16 %v5651, %v5643
    %v7452 = vpack.c.b16 %v5652, %v5644
    %v7453 = vpack.c.b16 %v5661, %v5653
    %v7454 = vpack.c.b16 %v5662, %v5654
    %v7455 = vpack.c.b16 %v5663, %v5655
    %v7456 = vpack.c.b16 %v5664, %v5656
    %v7457 = vpack.c.b16 %v5665, %v5657
    %v7458 = vpack.c.b16 %v5666, %v5658
    %v7459 = vpack.c.b16 %v5667, %v5659
    %v7460 = vpack.c.b16 %v5668, %v5660
    %v7461 = vpack.c.b16 %v5677, %v5669
    %v7462 = vpack.c.b16 %v5678, %v5670
    %v7463 = vpack.c.b16 %v5679, %v5671
    %v7464 = vpack.c.b16 %v5680, %v5672
    %v7465 = vpack.c.b16 %v5681, %v5673
    %v7466 = vpack.c.b16 %v5682, %v5674
    %v7467 = vpack.c.b16 %v5683, %v5675
    %v7468 = vpack.c.b16 %v5684, %v5676
    %v7469 = vpack.c.b16 %v5693, %v5685
    %v7470 = vpack.c.b16 %v5694, %v5686
    %v7471 = vpack.c.b16 %v5695, %v5687
    %v7472 = vpack.c.b16 %v5696, %v5688
    %v7473 = vpack.c.b16 %v5697, %v5689
    %v7474 = vpack.c.b16 %v5698, %v5690
    %v7475 = vpack.c.b16 %v5699, %v5691
    %v7476 = vpack.c.b16 %v5700, %v5692
    %v7477 = vpack.c.b16 %v5709, %v5701
    %v7478 = vpack.c.b16 %v5710, %v5702
    %v7479 = vpack.c.b16 %v5711, %v5703
    %v7480 = vpack.c.b16 %v5712, %v5704
    %v7481 = vpack.c.b16 %v5713, %v5705
    %v7482 = vpack.c.b16 %v5714, %v5706
    %v7483 = vpack.c.b16 %v5715, %v5707
    %v7484 = vpack.c.b16 %v5716, %v5708
    %v7485 = vpack.c.b16 %v5725, %v5717
    %v7486 = vpack.c.b16 %v5726, %v5718
    %v7487 = vpack.c.b16 %v5727, %v5719
    %v7488 = vpack.c.b16 %v5728, %v5720
    %v7489 = vpack.c.b16 %v5729, %v5721
    %v7490 = vpack.c.b16 %v5730, %v5722
    %v7491 = vpack.c.b16 %v5731, %v5723
    %v7492 = vpack.c.b16 %v5732, %v5724
    %v7493 = vpack.c.b16 %v5741, %v5733
    %v7494 = vpack.c.b16 %v5742, %v5734
    %v7495 = vpack.c.b16 %v5743, %v5735
    %v7496 = vpack.c.b16 %v5744, %v5736
    %v7497 = vpack.c.b16 %v5745, %v5737
    %v7498 = vpack.c.b16 %v5746, %v5738
    %v7499 = vpack.c.b16 %v5747, %v5739
    %v7500 = vpack.c.b16 %v5748, %v5740
    %v7501 = vpack.c.b16 %v5757, %v5749
    %v7502 = vpack.c.b16 %v5758, %v5750
    %v7503 = vpack.c.b16 %v5759, %v5751
    %v7504 = vpack.c.b16 %v5760, %v5752
    %v7505 = vpack.c.b16 %v5761, %v5753
    %v7506 = vpack.c.b16 %v5762, %v5754
    %v7507 = vpack.c.b16 %v5763, %v5755
    %v7508 = vpack.c.b16 %v5764, %v5756
    %v7509 = vpack.c.b16 %v5773, %v5765
    %v7510 = vpack.c.b16 %v5774, %v5766
    %v7511 = vpack.c.b16 %v5775, %v5767
    %v7512 = vpack.c.b16 %v5776, %v5768
    %v7513 = vpack.c.b16 %v5777, %v5769
    %v7514 = vpack.c.b16 %v5778, %v5770
    %v7515 = vpack.c.b16 %v5779, %v5771
    %v7516 = vpack.c.b16 %v5780, %v5772
    %v7517 = vpack.c.b16 %v5789, %v5781
    %v7518 = vpack.c.b16 %v5790, %v5782
    %v7519 = vpack.c.b16 %v5791, %v5783
    %v7520 = vpack.c.b16 %v5792, %v5784
    %v7521 = vpack.c.b16 %v5793, %v5785
    %v7522 = vpack.c.b16 %v5794, %v5786
    %v7523 = vpack.c.b16 %v5795, %v5787
    %v7524 = vpack.c.b16 %v5796, %v5788
    %v7525 = vpack.c.b16 %v5805, %v5797
    %v7526 = vpack.c.b16 %v5806, %v5798
    %v7527 = vpack.c.b16 %v5807, %v5799
    %v7528 = vpack.c.b16 %v5808, %v5800
    %v7529 = vpack.c.b16 %v5809, %v5801
    %v7530 = vpack.c.b16 %v5810, %v5802
    %v7531 = vpack.c.b16 %v5811, %v5803
    %v7532 = vpack.c.b16 %v5812, %v5804
    %v7533 = vpack.c.b16 %v5821, %v5813
    %v7534 = vpack.c.b16 %v5822, %v5814
    %v7535 = vpack.c.b16 %v5823, %v5815
    %v7536 = vpack.c.b16 %v5824, %v5816
    %v7537 = vpack.c.b16 %v5825, %v5817
    %v7538 = vpack.c.b16 %v5826, %v5818
    %v7539 = vpack.c.b16 %v5827, %v5819
    %v7540 = vpack.c.b16 %v5828, %v5820
    %v7541 = vpack.c.b16 %v5837, %v5829
    %v7542 = vpack.c.b16 %v5838, %v5830
    %v7543 = vpack.c.b16 %v5839, %v5831
    %v7544 = vpack.c.b16 %v5840, %v5832
    %v7545 = vpack.c.b16 %v5841, %v5833
    %v7546 = vpack.c.b16 %v5842, %v5834
    %v7547 = vpack.c.b16 %v5843, %v5835
    %v7548 = vpack.c.b16 %v5844, %v5836
    %v7549 = vpack.c.b16 %v5853, %v5845
    %v7550 = vpack.c.b16 %v5854, %v5846
    %v7551 = vpack.c.b16 %v5855, %v5847
    %v7552 = vpack.c.b16 %v5856, %v5848
    %v7553 = vpack.c.b16 %v5857, %v5849
    %v7554 = vpack.c.b16 %v5858, %v5850
    %v7555 = vpack.c.b16 %v5859, %v5851
    %v7556 = vpack.c.b16 %v5860, %v5852
    %v7557 = vpack.c.b16 %v5869, %v5861
    %v7558 = vpack.c.b16 %v5870, %v5862
    %v7559 = vpack.c.b16 %v5871, %v5863
    %v7560 = vpack.c.b16 %v5872, %v5864
    %v7561 = vpack.c.b16 %v5873, %v5865
    %v7562 = vpack.c.b16 %v5874, %v5866
    %v7563 = vpack.c.b16 %v5875, %v5867
    %v7564 = vpack.c.b16 %v5876, %v5868
    %v7565 = vpack.c.b16 %v5885, %v5877
    %v7566 = vpack.c.b16 %v5886, %v5878
    %v7567 = vpack.c.b16 %v5887, %v5879
    %v7568 = vpack.c.b16 %v5888, %v5880
    %v7569 = vpack.c.b16 %v5889, %v5881
    %v7570 = vpack.c.b16 %v5890, %v5882
    %v7571 = vpack.c.b16 %v5891, %v5883
    %v7572 = vpack.c.b16 %v5892, %v5884
    %v7573 = vpack.c.b16 %v5901, %v5893
    %v7574 = vpack.c.b16 %v5902, %v5894
    %v7575 = vpack.c.b16 %v5903, %v5895
    %v7576 = vpack.c.b16 %v5904, %v5896
    %v7577 = vpack.c.b16 %v5905, %v5897
    %v7578 = vpack.c.b16 %v5906, %v5898
    %v7579 = vpack.c.b16 %v5907, %v5899
    %v7580 = vpack.c.b16 %v5908, %v5900
    %v7581 = vpack.c.b16 %v5917, %v5909
    %v7582 = vpack.c.b16 %v5918, %v5910
    %v7583 = vpack.c.b16 %v5919, %v5911
    %v7584 = vpack.c.b16 %v5920, %v5912
    %v7585 = vpack.c.b16 %v5921, %v5913
    %v7586 = vpack.c.b16 %v5922, %v5914
    %v7587 = vpack.c.b16 %v5923, %v5915
    %v7588 = vpack.c.b16 %v5924, %v5916
    %v7589 = vpack.c.b16 %v5933, %v5925
    %v7590 = vpack.c.b16 %v5934, %v5926
    %v7591 = vpack.c.b16 %v5935, %v5927
    %v7592 = vpack.c.b16 %v5936, %v5928
    %v7593 = vpack.c.b16 %v5937, %v5929
    %v7594 = vpack.c.b16 %v5938, %v5930
    %v7595 = vpack.c.b16 %v5939, %v5931
    %v7596 = vpack.c.b16 %v5940, %v5932
    %v7597 = vpack.c.b16 %v5949, %v5941
    %v7598 = vpack.c.b16 %v5950, %v5942
    %v7599 = vpack.c.b16 %v5951, %v5943
    %v7600 = vpack.c.b16 %v5952, %v5944
    %v7601 = vpack.c.b16 %v5953, %v5945
    %v7602 = vpack.c.b16 %v5954, %v5946
    %v7603 = vpack.c.b16 %v5955, %v5947
    %v7604 = vpack.c.b16 %v5956, %v5948
    %v7605 = vpack.c.b16 %v5965, %v5957
    %v7606 = vpack.c.b16 %v5966, %v5958
    %v7607 = vpack.c.b16 %v5967, %v5959
    %v7608 = vpack.c.b16 %v5968, %v5960
    %v7609 = vpack.c.b16 %v5969, %v5961
    %v7610 = vpack.c.b16 %v5970, %v5962
    %v7611 = vpack.c.b16 %v5971, %v5963
    %v7612 = vpack.c.b16 %v5972, %v5964
    %v7613 = vpack.c.b16 %v5981, %v5973
    %v7614 = vpack.c.b16 %v5982, %v5974
    %v7615 = vpack.c.b16 %v5983, %v5975
    %v7616 = vpack.c.b16 %v5984, %v5976
    %v7617 = vpack.c.b16 %v5985, %v5977
    %v7618 = vpack.c.b16 %v5986, %v5978
    %v7619 = vpack.c.b16 %v5987, %v5979
    %v7620 = vpack.c.b16 %v5988, %v5980
    %v7621 = vpack.c.b16 %v5997, %v5989
    %v7622 = vpack.c.b16 %v5998, %v5990
    %v7623 = vpack.c.b16 %v5999, %v5991
    %v7624 = vpack.c.b16 %v6000, %v5992
    %v7625 = vpack.c.b16 %v6001, %v5993
    %v7626 = vpack.c.b16 %v6002, %v5994
    %v7627 = vpack.c.b16 %v6003, %v5995
    %v7628 = vpack.c.b16 %v6004, %v5996
    %v7629 = vpack.c.b16 %v6013, %v6005
    %v7630 = vpack.c.b16 %v6014, %v6006
    %v7631 = vpack.c.b16 %v6015, %v6007
    %v7632 = vpack.c.b16 %v6016, %v6008
    %v7633 = vpack.c.b16 %v6017, %v6009
    %v7634 = vpack.c.b16 %v6018, %v6010
    %v7635 = vpack.c.b16 %v6019, %v6011
    %v7636 = vpack.c.b16 %v6020, %v6012
    %v7637 = vpack.c.b16 %v6029, %v6021
    %v7638 = vpack.c.b16 %v6030, %v6022
    %v7639 = vpack.c.b16 %v6031, %v6023
    %v7640 = vpack.c.b16 %v6032, %v6024
    %v7641 = vpack.c.b16 %v6033, %v6025
    %v7642 = vpack.c.b16 %v6034, %v6026
    %v7643 = vpack.c.b16 %v6035, %v6027
    %v7644 = vpack.c.b16 %v6036, %v6028
    %v7645 = vpack.c.b16 %v6045, %v6037
    %v7646 = vpack.c.b16 %v6046, %v6038
    %v7647 = vpack.c.b16 %v6047, %v6039
    %v7648 = vpack.c.b16 %v6048, %v6040
    %v7649 = vpack.c.b16 %v6049, %v6041
    %v7650 = vpack.c.b16 %v6050, %v6042
    %v7651 = vpack.c.b16 %v6051, %v6043
    %v7652 = vpack.c.b16 %v6052, %v6044
    %v7653 = vpack.c.b16 %v6061, %v6053
    %v7654 = vpack.c.b16 %v6062, %v6054
    %v7655 = vpack.c.b16 %v6063, %v6055
    %v7656 = vpack.c.b16 %v6064, %v6056
    %v7657 = vpack.c.b16 %v6065, %v6057
    %v7658 = vpack.c.b16 %v6066, %v6058
    %v7659 = vpack.c.b16 %v6067, %v6059
    %v7660 = vpack.c.b16 %v6068, %v6060
    %v7661 = vpack.c.b16 %v6077, %v6069
    %v7662 = vpack.c.b16 %v6078, %v6070
    %v7663 = vpack.c.b16 %v6079, %v6071
    %v7664 = vpack.c.b16 %v6080, %v6072
    %v7665 = vpack.c.b16 %v6081, %v6073
    %v7666 = vpack.c.b16 %v6082, %v6074
    %v7667 = vpack.c.b16 %v6083, %v6075
    %v7668 = vpack.c.b16 %v6084, %v6076
    %v7669 = vpack.c.b16 %v6093, %v6085
    %v7670 = vpack.c.b16 %v6094, %v6086
    %v7671 = vpack.c.b16 %v6095, %v6087
    %v7672 = vpack.c.b16 %v6096, %v6088
    %v7673 = vpack.c.b16 %v6097, %v6089
    %v7674 = vpack.c.b16 %v6098, %v6090
    %v7675 = vpack.c.b16 %v6099, %v6091
    %v7676 = vpack.c.b16 %v6100, %v6092
    %v7677 = vpack.c.b16 %v6109, %v6101
    %v7678 = vpack.c.b16 %v6110, %v6102
    %v7679 = vpack.c.b16 %v6111, %v6103
    %v7680 = vpack.c.b16 %v6112, %v6104
    %v7681 = vpack.c.b16 %v6113, %v6105
    %v7682 = vpack.c.b16 %v6114, %v6106
    %v7683 = vpack.c.b16 %v6115, %v6107
    %v7684 = vpack.c.b16 %v6116, %v6108
    %v7685 = vpack.c.b16 %v6125, %v6117
    %v7686 = vpack.c.b16 %v6126, %v6118
    %v7687 = vpack.c.b16 %v6127, %v6119
    %v7688 = vpack.c.b16 %v6128, %v6120
    %v7689 = vpack.c.b16 %v6129, %v6121
    %v7690 = vpack.c.b16 %v6130, %v6122
    %v7691 = vpack.c.b16 %v6131, %v6123
    %v7692 = vpack.c.b16 %v6132, %v6124
    %v7693 = vpack.c.b16 %v6141, %v6133
    %v7694 = vpack.c.b16 %v6142, %v6134
    %v7695 = vpack.c.b16 %v6143, %v6135
    %v7696 = vpack.c.b16 %v6144, %v6136
    %v7697 = vpack.c.b16 %v6145, %v6137
    %v7698 = vpack.c.b16 %v6146, %v6138
    %v7699 = vpack.c.b16 %v6147, %v6139
    %v7700 = vpack.c.b16 %v6148, %v6140
    %v7701 = vpack.c.b16 %v6157, %v6149
    %v7702 = vpack.c.b16 %v6158, %v6150
    %v7703 = vpack.c.b16 %v6159, %v6151
    %v7704 = vpack.c.b16 %v6160, %v6152
    %v7705 = vpack.c.b16 %v6161, %v6153
    %v7706 = vpack.c.b16 %v6162, %v6154
    %v7707 = vpack.c.b16 %v6163, %v6155
    %v7708 = vpack.c.b16 %v6164, %v6156
    %v7709 = vpack.c.b16 %v6173, %v6165
    %v7710 = vpack.c.b16 %v6174, %v6166
    %v7711 = vpack.c.b16 %v6175, %v6167
    %v7712 = vpack.c.b16 %v6176, %v6168
    %v7713 = vpack.c.b16 %v6177, %v6169
    %v7714 = vpack.c.b16 %v6178, %v6170
    %v7715 = vpack.c.b16 %v6179, %v6171
    %v7716 = vpack.c.b16 %v6180, %v6172
    %v7717 = vpack.c.b16 %v6189, %v6181
    %v7718 = vpack.c.b16 %v6190, %v6182
    %v7719 = vpack.c.b16 %v6191, %v6183
    %v7720 = vpack.c.b16 %v6192, %v6184
    %v7721 = vpack.c.b16 %v6193, %v6185
    %v7722 = vpack.c.b16 %v6194, %v6186
    %v7723 = vpack.c.b16 %v6195, %v6187
    %v7724 = vpack.c.b16 %v6196, %v6188
    %v7725 = vpack.c.b16 %v6205, %v6197
    %v7726 = vpack.c.b16 %v6206, %v6198
    %v7727 = vpack.c.b16 %v6207, %v6199
    %v7728 = vpack.c.b16 %v6208, %v6200
    %v7729 = vpack.c.b16 %v6209, %v6201
    %v7730 = vpack.c.b16 %v6210, %v6202
    %v7731 = vpack.c.b16 %v6211, %v6203
    %v7732 = vpack.c.b16 %v6212, %v6204
    %v7733 = vpack.c.b16 %v6221, %v6213
    %v7734 = vpack.c.b16 %v6222, %v6214
    %v7735 = vpack.c.b16 %v6223, %v6215
    %v7736 = vpack.c.b16 %v6224, %v6216
    %v7737 = vpack.c.b16 %v6225, %v6217
    %v7738 = vpack.c.b16 %v6226, %v6218
    %v7739 = vpack.c.b16 %v6227, %v6219
    %v7740 = vpack.c.b16 %v6228, %v6220
    %v7741 = vpack.c.b16 %v6237, %v6229
    %v7742 = vpack.c.b16 %v6238, %v6230
    %v7743 = vpack.c.b16 %v6239, %v6231
    %v7744 = vpack.c.b16 %v6240, %v6232
    %v7745 = vpack.c.b16 %v6241, %v6233
    %v7746 = vpack.c.b16 %v6242, %v6234
    %v7747 = vpack.c.b16 %v6243, %v6235
    %v7748 = vpack.c.b16 %v6244, %v6236
    %v7749 = vpack.c.b16 %v6253, %v6245
    %v7750 = vpack.c.b16 %v6254, %v6246
    %v7751 = vpack.c.b16 %v6255, %v6247
    %v7752 = vpack.c.b16 %v6256, %v6248
    %v7753 = vpack.c.b16 %v6257, %v6249
    %v7754 = vpack.c.b16 %v6258, %v6250
    %v7755 = vpack.c.b16 %v6259, %v6251
    %v7756 = vpack.c.b16 %v6260, %v6252
    %v7757 = vpack.c.b16 %v6269, %v6261
    %v7758 = vpack.c.b16 %v6270, %v6262
    %v7759 = vpack.c.b16 %v6271, %v6263
    %v7760 = vpack.c.b16 %v6272, %v6264
    %v7761 = vpack.c.b16 %v6273, %v6265
    %v7762 = vpack.c.b16 %v6274, %v6266
    %v7763 = vpack.c.b16 %v6275, %v6267
    %v7764 = vpack.c.b16 %v6276, %v6268
    %v7765 = vpack.c.b16 %v6285, %v6277
    %v7766 = vpack.c.b16 %v6286, %v6278
    %v7767 = vpack.c.b16 %v6287, %v6279
    %v7768 = vpack.c.b16 %v6288, %v6280
    %v7769 = vpack.c.b16 %v6289, %v6281
    %v7770 = vpack.c.b16 %v6290, %v6282
    %v7771 = vpack.c.b16 %v6291, %v6283
    %v7772 = vpack.c.b16 %v6292, %v6284
    %v7773 = vpack.c.b16 %v6301, %v6293
    %v7774 = vpack.c.b16 %v6302, %v6294
    %v7775 = vpack.c.b16 %v6303, %v6295
    %v7776 = vpack.c.b16 %v6304, %v6296
    %v7777 = vpack.c.b16 %v6305, %v6297
    %v7778 = vpack.c.b16 %v6306, %v6298
    %v7779 = vpack.c.b16 %v6307, %v6299
    %v7780 = vpack.c.b16 %v6308, %v6300
    %v7781 = vpack.c.b16 %v6317, %v6309
    %v7782 = vpack.c.b16 %v6318, %v6310
    %v7783 = vpack.c.b16 %v6319, %v6311
    %v7784 = vpack.c.b16 %v6320, %v6312
    %v7785 = vpack.c.b16 %v6321, %v6313
    %v7786 = vpack.c.b16 %v6322, %v6314
    %v7787 = vpack.c.b16 %v6323, %v6315
    %v7788 = vpack.c.b16 %v6324, %v6316
    %v7789 = vpack.c.b16 %v6333, %v6325
    %v7790 = vpack.c.b16 %v6334, %v6326
    %v7791 = vpack.c.b16 %v6335, %v6327
    %v7792 = vpack.c.b16 %v6336, %v6328
    %v7793 = vpack.c.b16 %v6337, %v6329
    %v7794 = vpack.c.b16 %v6338, %v6330
    %v7795 = vpack.c.b16 %v6339, %v6331
    %v7796 = vpack.c.b16 %v6340, %v6332
    %v7797 = vpack.c.b16 %v6349, %v6341
    %v7798 = vpack.c.b16 %v6350, %v6342
    %v7799 = vpack.c.b16 %v6351, %v6343
    %v7800 = vpack.c.b16 %v6352, %v6344
    %v7801 = vpack.c.b16 %v6353, %v6345
    %v7802 = vpack.c.b16 %v6354, %v6346
    %v7803 = vpack.c.b16 %v6355, %v6347
    %v7804 = vpack.c.b16 %v6356, %v6348
    %v7805 = vpack.c.b16 %v6365, %v6357
    %v7806 = vpack.c.b16 %v6366, %v6358
    %v7807 = vpack.c.b16 %v6367, %v6359
    %v7808 = vpack.c.b16 %v6368, %v6360
    %v7809 = vpack.c.b16 %v6369, %v6361
    %v7810 = vpack.c.b16 %v6370, %v6362
    %v7811 = vpack.c.b16 %v6371, %v6363
    %v7812 = vpack.c.b16 %v6372, %v6364
    %v7813 = vpack.c.b16 %v6381, %v6373
    %v7814 = vpack.c.b16 %v6382, %v6374
    %v7815 = vpack.c.b16 %v6383, %v6375
    %v7816 = vpack.c.b16 %v6384, %v6376
    %v7817 = vpack.c.b16 %v6385, %v6377
    %v7818 = vpack.c.b16 %v6386, %v6378
    %v7819 = vpack.c.b16 %v6387, %v6379
    %v7820 = vpack.c.b16 %v6388, %v6380
    %v7821 = vpack.c.b16 %v6397, %v6389
    %v7822 = vpack.c.b16 %v6398, %v6390
    %v7823 = vpack.c.b16 %v6399, %v6391
    %v7824 = vpack.c.b16 %v6400, %v6392
    %v7825 = vpack.c.b16 %v6401, %v6393
    %v7826 = vpack.c.b16 %v6402, %v6394
    %v7827 = vpack.c.b16 %v6403, %v6395
    %v7828 = vpack.c.b16 %v6404, %v6396
    %v7829 = vpack.c.b16 %v6413, %v6405
    %v7830 = vpack.c.b16 %v6414, %v6406
    %v7831 = vpack.c.b16 %v6415, %v6407
    %v7832 = vpack.c.b16 %v6416, %v6408
    %v7833 = vpack.c.b16 %v6417, %v6409
    %v7834 = vpack.c.b16 %v6418, %v6410
    %v7835 = vpack.c.b16 %v6419, %v6411
    %v7836 = vpack.c.b16 %v6420, %v6412
    %v7837 = vpack.c.b16 %v6429, %v6421
    %v7838 = vpack.c.b16 %v6430, %v6422
    %v7839 = vpack.c.b16 %v6431, %v6423
    %v7840 = vpack.c.b16 %v6432, %v6424
    %v7841 = vpack.c.b16 %v6433, %v6425
    %v7842 = vpack.c.b16 %v6434, %v6426
    %v7843 = vpack.c.b16 %v6435, %v6427
    %v7844 = vpack.c.b16 %v6436, %v6428
    %v7845 = vpack.c.b16 %v6445, %v6437
    %v7846 = vpack.c.b16 %v6446, %v6438
    %v7847 = vpack.c.b16 %v6447, %v6439
    %v7848 = vpack.c.b16 %v6448, %v6440
    %v7849 = vpack.c.b16 %v6449, %v6441
    %v7850 = vpack.c.b16 %v6450, %v6442
    %v7851 = vpack.c.b16 %v6451, %v6443
    %v7852 = vpack.c.b16 %v6452, %v6444
    %v7853 = vpack.c.b16 %v6461, %v6453
    %v7854 = vpack.c.b16 %v6462, %v6454
    %v7855 = vpack.c.b16 %v6463, %v6455
    %v7856 = vpack.c.b16 %v6464, %v6456
    %v7857 = vpack.c.b16 %v6465, %v6457
    %v7858 = vpack.c.b16 %v6466, %v6458
    %v7859 = vpack.c.b16 %v6467, %v6459
    %v7860 = vpack.c.b16 %v6468, %v6460
    %v7861 = vpack.c.b16 %v6477, %v6469
    %v7862 = vpack.c.b16 %v6478, %v6470
    %v7863 = vpack.c.b16 %v6479, %v6471
    %v7864 = vpack.c.b16 %v6480, %v6472
    %v7865 = vpack.c.b16 %v6481, %v6473
    %v7866 = vpack.c.b16 %v6482, %v6474
    %v7867 = vpack.c.b16 %v6483, %v6475
    %v7868 = vpack.c.b16 %v6484, %v6476
    %v7869 = vpack.c.b16 %v6493, %v6485
    %v7870 = vpack.c.b16 %v6494, %v6486
    %v7871 = vpack.c.b16 %v6495, %v6487
    %v7872 = vpack.c.b16 %v6496, %v6488
    %v7873 = vpack.c.b16 %v6497, %v6489
    %v7874 = vpack.c.b16 %v6498, %v6490
    %v7875 = vpack.c.b16 %v6499, %v6491
    %v7876 = vpack.c.b16 %v6500, %v6492
    %v7877 = vpack.c.b16 %v6509, %v6501
    %v7878 = vpack.c.b16 %v6510, %v6502
    %v7879 = vpack.c.b16 %v6511, %v6503
    %v7880 = vpack.c.b16 %v6512, %v6504
    %v7881 = vpack.c.b16 %v6513, %v6505
    %v7882 = vpack.c.b16 %v6514, %v6506
    %v7883 = vpack.c.b16 %v6515, %v6507
    %v7884 = vpack.c.b16 %v6516, %v6508
    %v7885 = vpack.c.b16 %v6525, %v6517
    %v7886 = vpack.c.b16 %v6526, %v6518
    %v7887 = vpack.c.b16 %v6527, %v6519
    %v7888 = vpack.c.b16 %v6528, %v6520
    %v7889 = vpack.c.b16 %v6529, %v6521
    %v7890 = vpack.c.b16 %v6530, %v6522
    %v7891 = vpack.c.b16 %v6531, %v6523
    %v7892 = vpack.c.b16 %v6532, %v6524
    %v7893 = vpack.c.b16 %v6541, %v6533
    %v7894 = vpack.c.b16 %v6542, %v6534
    %v7895 = vpack.c.b16 %v6543, %v6535
    %v7896 = vpack.c.b16 %v6544, %v6536
    %v7897 = vpack.c.b16 %v6545, %v6537
    %v7898 = vpack.c.b16 %v6546, %v6538
    %v7899 = vpack.c.b16 %v6547, %v6539
    %v7900 = vpack.c.b16 %v6548, %v6540
    %v7901 = vpack.c.b16 %v6557, %v6549
    %v7902 = vpack.c.b16 %v6558, %v6550
    %v7903 = vpack.c.b16 %v6559, %v6551
    %v7904 = vpack.c.b16 %v6560, %v6552
    %v7905 = vpack.c.b16 %v6561, %v6553
    %v7906 = vpack.c.b16 %v6562, %v6554
    %v7907 = vpack.c.b16 %v6563, %v6555
    %v7908 = vpack.c.b16 %v6564, %v6556
    %v7909 = vpack.c.b16 %v6573, %v6565
    %v7910 = vpack.c.b16 %v6574, %v6566
    %v7911 = vpack.c.b16 %v6575, %v6567
    %v7912 = vpack.c.b16 %v6576, %v6568
    %v7913 = vpack.c.b16 %v6577, %v6569
    %v7914 = vpack.c.b16 %v6578, %v6570
    %v7915 = vpack.c.b16 %v6579, %v6571
    %v7916 = vpack.c.b16 %v6580, %v6572
    %v7917 = vpack.c.b16 %v6589, %v6581
    %v7918 = vpack.c.b16 %v6590, %v6582
    %v7919 = vpack.c.b16 %v6591, %v6583
    %v7920 = vpack.c.b16 %v6592, %v6584
    %v7921 = vpack.c.b16 %v6593, %v6585
    %v7922 = vpack.c.b16 %v6594, %v6586
    %v7923 = vpack.c.b16 %v6595, %v6587
    %v7924 = vpack.c.b16 %v6596, %v6588
    %v7925 = vpack.c.b16 %v6605, %v6597
    %v7926 = vpack.c.b16 %v6606, %v6598
    %v7927 = vpack.c.b16 %v6607, %v6599
    %v7928 = vpack.c.b16 %v6608, %v6600
    %v7929 = vpack.c.b16 %v6609, %v6601
    %v7930 = vpack.c.b16 %v6610, %v6602
    %v7931 = vpack.c.b16 %v6611, %v6603
    %v7932 = vpack.c.b16 %v6612, %v6604
    %v7933 = vpack.c.b16 %v6621, %v6613
    %v7934 = vpack.c.b16 %v6622, %v6614
    %v7935 = vpack.c.b16 %v6623, %v6615
    %v7936 = vpack.c.b16 %v6624, %v6616
    %v7937 = vpack.c.b16 %v6625, %v6617
    %v7938 = vpack.c.b16 %v6626, %v6618
    %v7939 = vpack.c.b16 %v6627, %v6619
    %v7940 = vpack.c.b16 %v6628, %v6620
    %v7941 = vpack.c.b16 %v6637, %v6629
    %v7942 = vpack.c.b16 %v6638, %v6630
    %v7943 = vpack.c.b16 %v6639, %v6631
    %v7944 = vpack.c.b16 %v6640, %v6632
    %v7945 = vpack.c.b16 %v6641, %v6633
    %v7946 = vpack.c.b16 %v6642, %v6634
    %v7947 = vpack.c.b16 %v6643, %v6635
    %v7948 = vpack.c.b16 %v6644, %v6636
    %v7949 = vpack.c.b16 %v6653, %v6645
    %v7950 = vpack.c.b16 %v6654, %v6646
    %v7951 = vpack.c.b16 %v6655, %v6647
    %v7952 = vpack.c.b16 %v6656, %v6648
    %v7953 = vpack.c.b16 %v6657, %v6649
    %v7954 = vpack.c.b16 %v6658, %v6650
    %v7955 = vpack.c.b16 %v6659, %v6651
    %v7956 = vpack.c.b16 %v6660, %v6652
    %v7957 = vpack.c.b16 %v6669, %v6661
    %v7958 = vpack.c.b16 %v6670, %v6662
    %v7959 = vpack.c.b16 %v6671, %v6663
    %v7960 = vpack.c.b16 %v6672, %v6664
    %v7961 = vpack.c.b16 %v6673, %v6665
    %v7962 = vpack.c.b16 %v6674, %v6666
    %v7963 = vpack.c.b16 %v6675, %v6667
    %v7964 = vpack.c.b16 %v6676, %v6668
    %v7965 = vpack.c.b16 %v6685, %v6677
    %v7966 = vpack.c.b16 %v6686, %v6678
    %v7967 = vpack.c.b16 %v6687, %v6679
    %v7968 = vpack.c.b16 %v6688, %v6680
    %v7969 = vpack.c.b16 %v6689, %v6681
    %v7970 = vpack.c.b16 %v6690, %v6682
    %v7971 = vpack.c.b16 %v6691, %v6683
    %v7972 = vpack.c.b16 %v6692, %v6684
    %v7973 = vpack.c.b16 %v6701, %v6693
    %v7974 = vpack.c.b16 %v6702, %v6694
    %v7975 = vpack.c.b16 %v6703, %v6695
    %v7976 = vpack.c.b16 %v6704, %v6696
    %v7977 = vpack.c.b16 %v6705, %v6697
    %v7978 = vpack.c.b16 %v6706, %v6698
    %v7979 = vpack.c.b16 %v6707, %v6699
    %v7980 = vpack.c.b16 %v6708, %v6700
    %v7981 = vpack.c.b16 %v6717, %v6709
    %v7982 = vpack.c.b16 %v6718, %v6710
    %v7983 = vpack.c.b16 %v6719, %v6711
    %v7984 = vpack.c.b16 %v6720, %v6712
    %v7985 = vpack.c.b16 %v6721, %v6713
    %v7986 = vpack.c.b16 %v6722, %v6714
    %v7987 = vpack.c.b16 %v6723, %v6715
    %v7988 = vpack.c.b16 %v6724, %v6716
    %v7989 = vpack.c.b16 %v6733, %v6725
    %v7990 = vpack.c.b16 %v6734, %v6726
    %v7991 = vpack.c.b16 %v6735, %v6727
    %v7992 = vpack.c.b16 %v6736, %v6728
    %v7993 = vpack.c.b16 %v6737, %v6729
    %v7994 = vpack.c.b16 %v6738, %v6730
    %v7995 = vpack.c.b16 %v6739, %v6731
    %v7996 = vpack.c.b16 %v6740, %v6732
    %v7997 = vpack.c.b16 %v6749, %v6741
    %v7998 = vpack.c.b16 %v6750, %v6742
    %v7999 = vpack.c.b16 %v6751, %v6743
    %v8000 = vpack.c.b16 %v6752, %v6744
    %v8001 = vpack.c.b16 %v6753, %v6745
    %v8002 = vpack.c.b16 %v6754, %v6746
    %v8003 = vpack.c.b16 %v6755, %v6747
    %v8004 = vpack.c.b16 %v6756, %v6748
    %v8005 = vpack.c.b16 %v6765, %v6757
    %v8006 = vpack.c.b16 %v6766, %v6758
    %v8007 = vpack.c.b16 %v6767, %v6759
    %v8008 = vpack.c.b16 %v6768, %v6760
    %v8009 = vpack.c.b16 %v6769, %v6761
    %v8010 = vpack.c.b16 %v6770, %v6762
    %v8011 = vpack.c.b16 %v6771, %v6763
    %v8012 = vpack.c.b16 %v6772, %v6764
    %v8013 = vpack.c.b16 %v6781, %v6773
    %v8014 = vpack.c.b16 %v6782, %v6774
    %v8015 = vpack.c.b16 %v6783, %v6775
    %v8016 = vpack.c.b16 %v6784, %v6776
    %v8017 = vpack.c.b16 %v6785, %v6777
    %v8018 = vpack.c.b16 %v6786, %v6778
    %v8019 = vpack.c.b16 %v6787, %v6779
    %v8020 = vpack.c.b16 %v6788, %v6780
    %v8021 = vpack.c.b16 %v6797, %v6789
    %v8022 = vpack.c.b16 %v6798, %v6790
    %v8023 = vpack.c.b16 %v6799, %v6791
    %v8024 = vpack.c.b16 %v6800, %v6792
    %v8025 = vpack.c.b16 %v6801, %v6793
    %v8026 = vpack.c.b16 %v6802, %v6794
    %v8027 = vpack.c.b16 %v6803, %v6795
    %v8028 = vpack.c.b16 %v6804, %v6796
    %v8029 = vpack.c.b16 %v6813, %v6805
    %v8030 = vpack.c.b16 %v6814, %v6806
    %v8031 = vpack.c.b16 %v6815, %v6807
    %v8032 = vpack.c.b16 %v6816, %v6808
    %v8033 = vpack.c.b16 %v6817, %v6809
    %v8034 = vpack.c.b16 %v6818, %v6810
    %v8035 = vpack.c.b16 %v6819, %v6811
    %v8036 = vpack.c.b16 %v6820, %v6812
    %v8037 = vpack.c.b16 %v6829, %v6821
    %v8038 = vpack.c.b16 %v6830, %v6822
    %v8039 = vpack.c.b16 %v6831, %v6823
    %v8040 = vpack.c.b16 %v6832, %v6824
    %v8041 = vpack.c.b16 %v6833, %v6825
    %v8042 = vpack.c.b16 %v6834, %v6826
    %v8043 = vpack.c.b16 %v6835, %v6827
    %v8044 = vpack.c.b16 %v6836, %v6828
    %v8045 = vpack.c.b16 %v6845, %v6837
    %v8046 = vpack.c.b16 %v6846, %v6838
    %v8047 = vpack.c.b16 %v6847, %v6839
    %v8048 = vpack.c.b16 %v6848, %v6840
    %v8049 = vpack.c.b16 %v6849, %v6841
    %v8050 = vpack.c.b16 %v6850, %v6842
    %v8051 = vpack.c.b16 %v6851, %v6843
    %v8052 = vpack.c.b16 %v6852, %v6844
    %v8053 = vpack.c.b16 %v6861, %v6853
    %v8054 = vpack.c.b16 %v6862, %v6854
    %v8055 = vpack.c.b16 %v6863, %v6855
    %v8056 = vpack.c.b16 %v6864, %v6856
    %v8057 = vpack.c.b16 %v6865, %v6857
    %v8058 = vpack.c.b16 %v6866, %v6858
    %v8059 = vpack.c.b16 %v6867, %v6859
    %v8060 = vpack.c.b16 %v6868, %v6860
    %v8061 = vpack.c.b16 %v6877, %v6869
    %v8062 = vpack.c.b16 %v6878, %v6870
    %v8063 = vpack.c.b16 %v6879, %v6871
    %v8064 = vpack.c.b16 %v6880, %v6872
    %v8065 = vpack.c.b16 %v6881, %v6873
    %v8066 = vpack.c.b16 %v6882, %v6874
    %v8067 = vpack.c.b16 %v6883, %v6875
    %v8068 = vpack.c.b16 %v6884, %v6876
    %v8069 = vpack.c.b16 %v6893, %v6885
    %v8070 = vpack.c.b16 %v6894, %v6886
    %v8071 = vpack.c.b16 %v6895, %v6887
    %v8072 = vpack.c.b16 %v6896, %v6888
    %v8073 = vpack.c.b16 %v6897, %v6889
    %v8074 = vpack.c.b16 %v6898, %v6890
    %v8075 = vpack.c.b16 %v6899, %v6891
    %v8076 = vpack.c.b16 %v6900, %v6892
    %v8077 = vpack.c.b16 %v6909, %v6901
    %v8078 = vpack.c.b16 %v6910, %v6902
    %v8079 = vpack.c.b16 %v6911, %v6903
    %v8080 = vpack.c.b16 %v6912, %v6904
    %v8081 = vpack.c.b16 %v6913, %v6905
    %v8082 = vpack.c.b16 %v6914, %v6906
    %v8083 = vpack.c.b16 %v6915, %v6907
    %v8084 = vpack.c.b16 %v6916, %v6908
    %v8085 = vpack.c.b16 %v6925, %v6917
    %v8086 = vpack.c.b16 %v6926, %v6918
    %v8087 = vpack.c.b16 %v6927, %v6919
    %v8088 = vpack.c.b16 %v6928, %v6920
    %v8089 = vpack.c.b16 %v6929, %v6921
    %v8090 = vpack.c.b16 %v6930, %v6922
    %v8091 = vpack.c.b16 %v6931, %v6923
    %v8092 = vpack.c.b16 %v6932, %v6924
    %v8093 = vpack.c.b16 %v6941, %v6933
    %v8094 = vpack.c.b16 %v6942, %v6934
    %v8095 = vpack.c.b16 %v6943, %v6935
    %v8096 = vpack.c.b16 %v6944, %v6936
    %v8097 = vpack.c.b16 %v6945, %v6937
    %v8098 = vpack.c.b16 %v6946, %v6938
    %v8099 = vpack.c.b16 %v6947, %v6939
    %v8100 = vpack.c.b16 %v6948, %v6940
    %v8101 = vpack.c.b16 %v6957, %v6949
    %v8102 = vpack.c.b16 %v6958, %v6950
    %v8103 = vpack.c.b16 %v6959, %v6951
    %v8104 = vpack.c.b16 %v6960, %v6952
    %v8105 = vpack.c.b16 %v6961, %v6953
    %v8106 = vpack.c.b16 %v6962, %v6954
    %v8107 = vpack.c.b16 %v6963, %v6955
    %v8108 = vpack.c.b16 %v6964, %v6956
    %v8109 = vpack.c.b16 %v6973, %v6965
    %v8110 = vpack.c.b16 %v6974, %v6966
    %v8111 = vpack.c.b16 %v6975, %v6967
    %v8112 = vpack.c.b16 %v6976, %v6968
    %v8113 = vpack.c.b16 %v6977, %v6969
    %v8114 = vpack.c.b16 %v6978, %v6970
    %v8115 = vpack.c.b16 %v6979, %v6971
    %v8116 = vpack.c.b16 %v6980, %v6972
    %v8117 = vpack.c.b16 %v6989, %v6981
    %v8118 = vpack.c.b16 %v6990, %v6982
    %v8119 = vpack.c.b16 %v6991, %v6983
    %v8120 = vpack.c.b16 %v6992, %v6984
    %v8121 = vpack.c.b16 %v6993, %v6985
    %v8122 = vpack.c.b16 %v6994, %v6986
    %v8123 = vpack.c.b16 %v6995, %v6987
    %v8124 = vpack.c.b16 %v6996, %v6988
    %v8125 = vpack.c.b16 %v7005, %v6997
    %v8126 = vpack.c.b16 %v7006, %v6998
    %v8127 = vpack.c.b16 %v7007, %v6999
    %v8128 = vpack.c.b16 %v7008, %v7000
    %v8129 = vpack.c.b16 %v7009, %v7001
    %v8130 = vpack.c.b16 %v7010, %v7002
    %v8131 = vpack.c.b16 %v7011, %v7003
    %v8132 = vpack.c.b16 %v7012, %v7004
    %v8133 = vpack.c.b16 %v7021, %v7013
    %v8134 = vpack.c.b16 %v7022, %v7014
    %v8135 = vpack.c.b16 %v7023, %v7015
    %v8136 = vpack.c.b16 %v7024, %v7016
    %v8137 = vpack.c.b16 %v7025, %v7017
    %v8138 = vpack.c.b16 %v7026, %v7018
    %v8139 = vpack.c.b16 %v7027, %v7019
    %v8140 = vpack.c.b16 %v7028, %v7020
    %v8141 = vpack.c.b16 %v7037, %v7029
    %v8142 = vpack.c.b16 %v7038, %v7030
    %v8143 = vpack.c.b16 %v7039, %v7031
    %v8144 = vpack.c.b16 %v7040, %v7032
    %v8145 = vpack.c.b16 %v7041, %v7033
    %v8146 = vpack.c.b16 %v7042, %v7034
    %v8147 = vpack.c.b16 %v7043, %v7035
    %v8148 = vpack.c.b16 %v7044, %v7036
    %v8149 = vpack.c.b16 %v7053, %v7045
    %v8150 = vpack.c.b16 %v7054, %v7046
    %v8151 = vpack.c.b16 %v7055, %v7047
    %v8152 = vpack.c.b16 %v7056, %v7048
    %v8153 = vpack.c.b16 %v7057, %v7049
    %v8154 = vpack.c.b16 %v7058, %v7050
    %v8155 = vpack.c.b16 %v7059, %v7051
    %v8156 = vpack.c.b16 %v7060, %v7052
    %v8157 = vpack.c.b16 %v7069, %v7061
    %v8158 = vpack.c.b16 %v7070, %v7062
    %v8159 = vpack.c.b16 %v7071, %v7063
    %v8160 = vpack.c.b16 %v7072, %v7064
    %v8161 = vpack.c.b16 %v7073, %v7065
    %v8162 = vpack.c.b16 %v7074, %v7066
    %v8163 = vpack.c.b16 %v7075, %v7067
    %v8164 = vpack.c.b16 %v7076, %v7068
    %v8165 = vpack.c.b16 %v7085, %v7077
    %v8166 = vpack.c.b16 %v7086, %v7078
    %v8167 = vpack.c.b16 %v7087, %v7079
    %v8168 = vpack.c.b16 %v7088, %v7080
    %v8169 = vpack.c.b16 %v7089, %v7081
    %v8170 = vpack.c.b16 %v7090, %v7082
    %v8171 = vpack.c.b16 %v7091, %v7083
    %v8172 = vpack.c.b16 %v7092, %v7084
    %v8173 = vpack.c.b16 %v7101, %v7093
    %v8174 = vpack.c.b16 %v7102, %v7094
    %v8175 = vpack.c.b16 %v7103, %v7095
    %v8176 = vpack.c.b16 %v7104, %v7096
    %v8177 = vpack.c.b16 %v7105, %v7097
    %v8178 = vpack.c.b16 %v7106, %v7098
    %v8179 = vpack.c.b16 %v7107, %v7099
    %v8180 = vpack.c.b16 %v7108, %v7100
    %v8181 = vpack.c.b16 %v7117, %v7109
    %v8182 = vpack.c.b16 %v7118, %v7110
    %v8183 = vpack.c.b16 %v7119, %v7111
    %v8184 = vpack.c.b16 %v7120, %v7112
    %v8185 = vpack.c.b16 %v7121, %v7113
    %v8186 = vpack.c.b16 %v7122, %v7114
    %v8187 = vpack.c.b16 %v7123, %v7115
    %v8188 = vpack.c.b16 %v7124, %v7116
    %v8189 = vpack.c.b16 %v7133, %v7125
    %v8190 = vpack.c.b16 %v7134, %v7126
    %v8191 = vpack.c.b16 %v7135, %v7127
    %v8192 = vpack.c.b16 %v7136, %v7128
    %v8193 = vpack.c.b16 %v7137, %v7129
    %v8194 = vpack.c.b16 %v7138, %v7130
    %v8195 = vpack.c.b16 %v7139, %v7131
    %v8196 = vpack.c.b16 %v7140, %v7132
    %v8197 = vpack.c.b16 %v7149, %v7141
    %v8198 = vpack.c.b16 %v7150, %v7142
    %v8199 = vpack.c.b16 %v7151, %v7143
    %v8200 = vpack.c.b16 %v7152, %v7144
    %v8201 = vpack.c.b16 %v7153, %v7145
    %v8202 = vpack.c.b16 %v7154, %v7146
    %v8203 = vpack.c.b16 %v7155, %v7147
    %v8204 = vpack.c.b16 %v7156, %v7148
    %v8205 = vpack.c.b16 %v7165, %v7157
    %v8206 = vpack.c.b16 %v7166, %v7158
    %v8207 = vpack.c.b16 %v7167, %v7159
    %v8208 = vpack.c.b16 %v7168, %v7160
    %v8209 = vpack.c.b16 %v7169, %v7161
    %v8210 = vpack.c.b16 %v7170, %v7162
    %v8211 = vpack.c.b16 %v7171, %v7163
    %v8212 = vpack.c.b16 %v7172, %v7164
    %v8213 = vpack.c.b16 %v7181, %v7173
    %v8214 = vpack.c.b16 %v7182, %v7174
    %v8215 = vpack.c.b16 %v7183, %v7175
    %v8216 = vpack.c.b16 %v7184, %v7176
    %v8217 = vpack.c.b16 %v7185, %v7177
    %v8218 = vpack.c.b16 %v7186, %v7178
    %v8219 = vpack.c.b16 %v7187, %v7179
    %v8220 = vpack.c.b16 %v7188, %v7180
    %v8221 = vpack.c.b16 %v7197, %v7189
    %v8222 = vpack.c.b16 %v7198, %v7190
    %v8223 = vpack.c.b16 %v7199, %v7191
    %v8224 = vpack.c.b16 %v7200, %v7192
    %v8225 = vpack.c.b16 %v7201, %v7193
    %v8226 = vpack.c.b16 %v7202, %v7194
    %v8227 = vpack.c.b16 %v7203, %v7195
    %v8228 = vpack.c.b16 %v7204, %v7196
    %9253 = vmatprep.subr.bf16.mxu0 %v7262
    %9254 = vmatpush1.bf16.msra.mxu0 %v7261
    %9255 = vmatprep.subr.bf16.mxu0 %v7254
    %9256 = vmatpush1.bf16.msra.mxu0 %v7253
    %9257 = vmatprep.subr.bf16.mxu0 %v7246
    %9258 = vmatpush1.bf16.msra.mxu0 %v7245
    %9259 = vmatprep.subr.bf16.mxu0 %v7238
    %9260 = vmatpush1.bf16.msra.mxu0 %v7237
    %9261 = vmatprep.subr.bf16.mxu0 %v7230
    %9262 = vmatpush1.bf16.msra.mxu0 %v7229
    %9263 = vmatprep.subr.bf16.mxu0 %v7222
    %9264 = vmatpush1.bf16.msra.mxu0 %v7221
    %9265 = vmatprep.subr.bf16.mxu0 %v7214
    %9266 = vmatpush1.bf16.msra.mxu0 %v7213
    %9267 = vmatprep.subr.bf16.mxu0 %v7206
    %9268 = vmatpush1.bf16.msra.mxu0 %v7205
    %9269 = vmatprep.subr.bf16.mxu0 %v7326
    %9270 = vmatpush2.bf16.msra.mxu0 %v7325
    %9271 = vmatprep.subr.bf16.mxu0 %v7318
    %9272 = vmatpush2.bf16.msra.mxu0 %v7317
    %9273 = vmatprep.subr.bf16.mxu0 %v7310
    %9274 = vmatpush2.bf16.msra.mxu0 %v7309
    %9275 = vmatprep.subr.bf16.mxu0 %v7302
    %9276 = vmatpush2.bf16.msra.mxu0 %v7301
    %9277 = vmatprep.subr.bf16.mxu0 %v7294
    %9278 = vmatpush2.bf16.msra.mxu0 %v7293
    %9279 = vmatprep.subr.bf16.mxu0 %v7286
    %9280 = vmatpush2.bf16.msra.mxu0 %v7285
    %9281 = vmatprep.subr.bf16.mxu0 %v7278
    %9282 = vmatpush2.bf16.msra.mxu0 %v7277
    %9283 = vmatprep.subr.bf16.mxu0 %v7270
    %9284 = vmatpush2.bf16.msra.mxu0 %v7269
    %9285 = vmatprep.mubr.bf16.mxu0 %v4102
    %9286 = vmatmul.mubr.bf16.gmra.mxu0 %v4101
    %v9287 = vpop.f32.mrf.mxu0
    %v9288 = vadd.f32 %v4040, %v9287
    %v9289 = vpop.f32.mrf.mxu0
    %v9290 = vadd.f32 %v4044, %v9289
    %v9291 = vpop.f32.mrf.mxu0
    %v9292 = vpop.f32.mrf.mxu0
    %9293 = vdwg.mxu0
    %9294 = vmatprep.subr.bf16.mxu0 %v7390
    %9295 = vmatpush1.bf16.msra.mxu0 %v7389
    %9296 = vmatprep.subr.bf16.mxu0 %v7382
    %9297 = vmatpush1.bf16.msra.mxu0 %v7381
    %9298 = vmatprep.subr.bf16.mxu0 %v7374
    %9299 = vmatpush1.bf16.msra.mxu0 %v7373
    %9300 = vmatprep.subr.bf16.mxu0 %v7366
    %9301 = vmatpush1.bf16.msra.mxu0 %v7365
    %9302 = vmatprep.subr.bf16.mxu0 %v7358
    %9303 = vmatpush1.bf16.msra.mxu0 %v7357
    %9304 = vmatprep.subr.bf16.mxu0 %v7350
    %9305 = vmatpush1.bf16.msra.mxu0 %v7349
    %9306 = vmatprep.subr.bf16.mxu0 %v7342
    %9307 = vmatpush1.bf16.msra.mxu0 %v7341
    %9308 = vmatprep.subr.bf16.mxu0 %v7334
    %9309 = vmatpush1.bf16.msra.mxu0 %v7333
    %9310 = vmatprep.subr.bf16.mxu0 %v7454
    %9311 = vmatpush2.bf16.msra.mxu0 %v7453
    %9312 = vmatprep.subr.bf16.mxu0 %v7446
    %9313 = vmatpush2.bf16.msra.mxu0 %v7445
    %9314 = vmatprep.subr.bf16.mxu0 %v7438
    %9315 = vmatpush2.bf16.msra.mxu0 %v7437
    %9316 = vmatprep.subr.bf16.mxu0 %v7430
    %9317 = vmatpush2.bf16.msra.mxu0 %v7429
    %9318 = vmatprep.subr.bf16.mxu0 %v7422
    %9319 = vmatpush2.bf16.msra.mxu0 %v7421
    %9320 = vmatprep.subr.bf16.mxu0 %v7414
    %9321 = vmatpush2.bf16.msra.mxu0 %v7413
    %9322 = vmatprep.subr.bf16.mxu0 %v7406
    %9323 = vmatpush2.bf16.msra.mxu0 %v7405
    %9324 = vmatprep.subr.bf16.mxu0 %v7398
    %9325 = vmatpush2.bf16.msra.mxu0 %v7397
    %9326 = vmatprep.mubr.bf16.mxu0 %v4104
    %9327 = vmatmul.mubr.bf16.gmra.mxu0 %v4103
    %v9328 = vpop.f32.mrf.mxu0
    %v9329 = vadd.f32 %v9288, %v9328
    %v9330 = vpop.f32.mrf.mxu0
    %v9331 = vadd.f32 %v9290, %v9330
    %v9332 = vpop.f32.mrf.mxu0
    %v9333 = vpop.f32.mrf.mxu0
    %9334 = vdwg.mxu0
    %9335 = vmatprep.subr.bf16.mxu0 %v7518
    %9336 = vmatpush1.bf16.msra.mxu0 %v7517
    %9337 = vmatprep.subr.bf16.mxu0 %v7510
    %9338 = vmatpush1.bf16.msra.mxu0 %v7509
    %9339 = vmatprep.subr.bf16.mxu0 %v7502
    %9340 = vmatpush1.bf16.msra.mxu0 %v7501
    %9341 = vmatprep.subr.bf16.mxu0 %v7494
    %9342 = vmatpush1.bf16.msra.mxu0 %v7493
    %9343 = vmatprep.subr.bf16.mxu0 %v7486
    %9344 = vmatpush1.bf16.msra.mxu0 %v7485
    %9345 = vmatprep.subr.bf16.mxu0 %v7478
    %9346 = vmatpush1.bf16.msra.mxu0 %v7477
    %9347 = vmatprep.subr.bf16.mxu0 %v7470
    %9348 = vmatpush1.bf16.msra.mxu0 %v7469
    %9349 = vmatprep.subr.bf16.mxu0 %v7462
    %9350 = vmatpush1.bf16.msra.mxu0 %v7461
    %9351 = vmatprep.subr.bf16.mxu0 %v7582
    %9352 = vmatpush2.bf16.msra.mxu0 %v7581
    %9353 = vmatprep.subr.bf16.mxu0 %v7574
    %9354 = vmatpush2.bf16.msra.mxu0 %v7573
    %9355 = vmatprep.subr.bf16.mxu0 %v7566
    %9356 = vmatpush2.bf16.msra.mxu0 %v7565
    %9357 = vmatprep.subr.bf16.mxu0 %v7558
    %9358 = vmatpush2.bf16.msra.mxu0 %v7557
    %9359 = vmatprep.subr.bf16.mxu0 %v7550
    %9360 = vmatpush2.bf16.msra.mxu0 %v7549
    %9361 = vmatprep.subr.bf16.mxu0 %v7542
    %9362 = vmatpush2.bf16.msra.mxu0 %v7541
    %9363 = vmatprep.subr.bf16.mxu0 %v7534
    %9364 = vmatpush2.bf16.msra.mxu0 %v7533
    %9365 = vmatprep.subr.bf16.mxu0 %v7526
    %9366 = vmatpush2.bf16.msra.mxu0 %v7525
    %9367 = vmatprep.mubr.bf16.mxu0 %v4106
    %9368 = vmatmul.mubr.bf16.gmra.mxu0 %v4105
    %v9369 = vpop.f32.mrf.mxu0
    %v9370 = vadd.f32 %v9329, %v9369
    %v9371 = vpop.f32.mrf.mxu0
    %v9372 = vadd.f32 %v9331, %v9371
    %v9373 = vpop.f32.mrf.mxu0
    %v9374 = vpop.f32.mrf.mxu0
    %9375 = vdwg.mxu0
    %9376 = vmatprep.subr.bf16.mxu0 %v7646
    %9377 = vmatpush1.bf16.msra.mxu0 %v7645
    %9378 = vmatprep.subr.bf16.mxu0 %v7638
    %9379 = vmatpush1.bf16.msra.mxu0 %v7637
    %9380 = vmatprep.subr.bf16.mxu0 %v7630
    %9381 = vmatpush1.bf16.msra.mxu0 %v7629
    %9382 = vmatprep.subr.bf16.mxu0 %v7622
    %9383 = vmatpush1.bf16.msra.mxu0 %v7621
    %9384 = vmatprep.subr.bf16.mxu0 %v7614
    %9385 = vmatpush1.bf16.msra.mxu0 %v7613
    %9386 = vmatprep.subr.bf16.mxu0 %v7606
    %9387 = vmatpush1.bf16.msra.mxu0 %v7605
    %9388 = vmatprep.subr.bf16.mxu0 %v7598
    %9389 = vmatpush1.bf16.msra.mxu0 %v7597
    %9390 = vmatprep.subr.bf16.mxu0 %v7590
    %9391 = vmatpush1.bf16.msra.mxu0 %v7589
    %9392 = vmatprep.subr.bf16.mxu0 %v7710
    %9393 = vmatpush2.bf16.msra.mxu0 %v7709
    %9394 = vmatprep.subr.bf16.mxu0 %v7702
    %9395 = vmatpush2.bf16.msra.mxu0 %v7701
    %9396 = vmatprep.subr.bf16.mxu0 %v7694
    %9397 = vmatpush2.bf16.msra.mxu0 %v7693
    %9398 = vmatprep.subr.bf16.mxu0 %v7686
    %9399 = vmatpush2.bf16.msra.mxu0 %v7685
    %9400 = vmatprep.subr.bf16.mxu0 %v7678
    %9401 = vmatpush2.bf16.msra.mxu0 %v7677
    %9402 = vmatprep.subr.bf16.mxu0 %v7670
    %9403 = vmatpush2.bf16.msra.mxu0 %v7669
    %9404 = vmatprep.subr.bf16.mxu0 %v7662
    %9405 = vmatpush2.bf16.msra.mxu0 %v7661
    %9406 = vmatprep.subr.bf16.mxu0 %v7654
    %9407 = vmatpush2.bf16.msra.mxu0 %v7653
    %9408 = vmatprep.mubr.bf16.mxu0 %v4108
    %9409 = vmatmul.mubr.bf16.gmra.mxu0 %v4107
    %v9410 = vpop.f32.mrf.mxu0
    %v9411 = vadd.f32 %v9370, %v9410
    %v9412 = vpop.f32.mrf.mxu0
    %v9413 = vadd.f32 %v9372, %v9412
    %v9414 = vpop.f32.mrf.mxu0
    %v9415 = vpop.f32.mrf.mxu0
    %9416 = vdwg.mxu0
    %9417 = vmatprep.subr.bf16.mxu0 %v7774
    %9418 = vmatpush1.bf16.msra.mxu0 %v7773
    %9419 = vmatprep.subr.bf16.mxu0 %v7766
    %9420 = vmatpush1.bf16.msra.mxu0 %v7765
    %9421 = vmatprep.subr.bf16.mxu0 %v7758
    %9422 = vmatpush1.bf16.msra.mxu0 %v7757
    %9423 = vmatprep.subr.bf16.mxu0 %v7750
    %9424 = vmatpush1.bf16.msra.mxu0 %v7749
    %9425 = vmatprep.subr.bf16.mxu0 %v7742
    %9426 = vmatpush1.bf16.msra.mxu0 %v7741
    %9427 = vmatprep.subr.bf16.mxu0 %v7734
    %9428 = vmatpush1.bf16.msra.mxu0 %v7733
    %9429 = vmatprep.subr.bf16.mxu0 %v7726
    %9430 = vmatpush1.bf16.msra.mxu0 %v7725
    %9431 = vmatprep.subr.bf16.mxu0 %v7718
    %9432 = vmatpush1.bf16.msra.mxu0 %v7717
    %9433 = vmatprep.subr.bf16.mxu0 %v7838
    %9434 = vmatpush2.bf16.msra.mxu0 %v7837
    %9435 = vmatprep.subr.bf16.mxu0 %v7830
    %9436 = vmatpush2.bf16.msra.mxu0 %v7829
    %9437 = vmatprep.subr.bf16.mxu0 %v7822
    %9438 = vmatpush2.bf16.msra.mxu0 %v7821
    %9439 = vmatprep.subr.bf16.mxu0 %v7814
    %9440 = vmatpush2.bf16.msra.mxu0 %v7813
    %9441 = vmatprep.subr.bf16.mxu0 %v7806
    %9442 = vmatpush2.bf16.msra.mxu0 %v7805
    %9443 = vmatprep.subr.bf16.mxu0 %v7798
    %9444 = vmatpush2.bf16.msra.mxu0 %v7797
    %9445 = vmatprep.subr.bf16.mxu0 %v7790
    %9446 = vmatpush2.bf16.msra.mxu0 %v7789
    %9447 = vmatprep.subr.bf16.mxu0 %v7782
    %9448 = vmatpush2.bf16.msra.mxu0 %v7781
    %9449 = vmatprep.mubr.bf16.mxu0 %v4110
    %9450 = vmatmul.mubr.bf16.gmra.mxu0 %v4109
    %v9451 = vpop.f32.mrf.mxu0
    %v9452 = vadd.f32 %v9411, %v9451
    %v9453 = vpop.f32.mrf.mxu0
    %v9454 = vadd.f32 %v9413, %v9453
    %v9455 = vpop.f32.mrf.mxu0
    %v9456 = vpop.f32.mrf.mxu0
    %9457 = vdwg.mxu0
    %9458 = vmatprep.subr.bf16.mxu0 %v7902
    %9459 = vmatpush1.bf16.msra.mxu0 %v7901
    %9460 = vmatprep.subr.bf16.mxu0 %v7894
    %9461 = vmatpush1.bf16.msra.mxu0 %v7893
    %9462 = vmatprep.subr.bf16.mxu0 %v7886
    %9463 = vmatpush1.bf16.msra.mxu0 %v7885
    %9464 = vmatprep.subr.bf16.mxu0 %v7878
    %9465 = vmatpush1.bf16.msra.mxu0 %v7877
    %9466 = vmatprep.subr.bf16.mxu0 %v7870
    %9467 = vmatpush1.bf16.msra.mxu0 %v7869
    %9468 = vmatprep.subr.bf16.mxu0 %v7862
    %9469 = vmatpush1.bf16.msra.mxu0 %v7861
    %9470 = vmatprep.subr.bf16.mxu0 %v7854
    %9471 = vmatpush1.bf16.msra.mxu0 %v7853
    %9472 = vmatprep.subr.bf16.mxu0 %v7846
    %9473 = vmatpush1.bf16.msra.mxu0 %v7845
    %9474 = vmatprep.subr.bf16.mxu0 %v7966
    %9475 = vmatpush2.bf16.msra.mxu0 %v7965
    %9476 = vmatprep.subr.bf16.mxu0 %v7958
    %9477 = vmatpush2.bf16.msra.mxu0 %v7957
    %9478 = vmatprep.subr.bf16.mxu0 %v7950
    %9479 = vmatpush2.bf16.msra.mxu0 %v7949
    %9480 = vmatprep.subr.bf16.mxu0 %v7942
    %9481 = vmatpush2.bf16.msra.mxu0 %v7941
    %9482 = vmatprep.subr.bf16.mxu0 %v7934
    %9483 = vmatpush2.bf16.msra.mxu0 %v7933
    %9484 = vmatprep.subr.bf16.mxu0 %v7926
    %9485 = vmatpush2.bf16.msra.mxu0 %v7925
    %9486 = vmatprep.subr.bf16.mxu0 %v7918
    %9487 = vmatpush2.bf16.msra.mxu0 %v7917
    %9488 = vmatprep.subr.bf16.mxu0 %v7910
    %9489 = vmatpush2.bf16.msra.mxu0 %v7909
    %9490 = vmatprep.mubr.bf16.mxu0 %v4112
    %9491 = vmatmul.mubr.bf16.gmra.mxu0 %v4111
    %v9492 = vpop.f32.mrf.mxu0
    %v9493 = vadd.f32 %v9452, %v9492
    %v9494 = vpop.f32.mrf.mxu0
    %v9495 = vadd.f32 %v9454, %v9494
    %v9496 = vpop.f32.mrf.mxu0
    %v9497 = vpop.f32.mrf.mxu0
    %9498 = vdwg.mxu0
    %9499 = vmatprep.subr.bf16.mxu0 %v8030
    %9500 = vmatpush1.bf16.msra.mxu0 %v8029
    %9501 = vmatprep.subr.bf16.mxu0 %v8022
    %9502 = vmatpush1.bf16.msra.mxu0 %v8021
    %9503 = vmatprep.subr.bf16.mxu0 %v8014
    %9504 = vmatpush1.bf16.msra.mxu0 %v8013
    %9505 = vmatprep.subr.bf16.mxu0 %v8006
    %9506 = vmatpush1.bf16.msra.mxu0 %v8005
    %9507 = vmatprep.subr.bf16.mxu0 %v7998
    %9508 = vmatpush1.bf16.msra.mxu0 %v7997
    %9509 = vmatprep.subr.bf16.mxu0 %v7990
    %9510 = vmatpush1.bf16.msra.mxu0 %v7989
    %9511 = vmatprep.subr.bf16.mxu0 %v7982
    %9512 = vmatpush1.bf16.msra.mxu0 %v7981
    %9513 = vmatprep.subr.bf16.mxu0 %v7974
    %9514 = vmatpush1.bf16.msra.mxu0 %v7973
    %9515 = vmatprep.subr.bf16.mxu0 %v8094
    %9516 = vmatpush2.bf16.msra.mxu0 %v8093
    %9517 = vmatprep.subr.bf16.mxu0 %v8086
    %9518 = vmatpush2.bf16.msra.mxu0 %v8085
    %9519 = vmatprep.subr.bf16.mxu0 %v8078
    %9520 = vmatpush2.bf16.msra.mxu0 %v8077
    %9521 = vmatprep.subr.bf16.mxu0 %v8070
    %9522 = vmatpush2.bf16.msra.mxu0 %v8069
    %9523 = vmatprep.subr.bf16.mxu0 %v8062
    %9524 = vmatpush2.bf16.msra.mxu0 %v8061
    %9525 = vmatprep.subr.bf16.mxu0 %v8054
    %9526 = vmatpush2.bf16.msra.mxu0 %v8053
    %9527 = vmatprep.subr.bf16.mxu0 %v8046
    %9528 = vmatpush2.bf16.msra.mxu0 %v8045
    %9529 = vmatprep.subr.bf16.mxu0 %v8038
    %9530 = vmatpush2.bf16.msra.mxu0 %v8037
    %9531 = vmatprep.mubr.bf16.mxu0 %v4114
    %9532 = vmatmul.mubr.bf16.gmra.mxu0 %v4113
    %v9533 = vpop.f32.mrf.mxu0
    %v9534 = vadd.f32 %v9493, %v9533
    %v9535 = vpop.f32.mrf.mxu0
    %v9536 = vadd.f32 %v9495, %v9535
    %v9537 = vpop.f32.mrf.mxu0
    %v9538 = vpop.f32.mrf.mxu0
    %9539 = vdwg.mxu0
    %9540 = vmatprep.subr.bf16.mxu0 %v8158
    %9541 = vmatpush1.bf16.msra.mxu0 %v8157
    %9542 = vmatprep.subr.bf16.mxu0 %v8150
    %9543 = vmatpush1.bf16.msra.mxu0 %v8149
    %9544 = vmatprep.subr.bf16.mxu0 %v8142
    %9545 = vmatpush1.bf16.msra.mxu0 %v8141
    %9546 = vmatprep.subr.bf16.mxu0 %v8134
    %9547 = vmatpush1.bf16.msra.mxu0 %v8133
    %9548 = vmatprep.subr.bf16.mxu0 %v8126
    %9549 = vmatpush1.bf16.msra.mxu0 %v8125
    %9550 = vmatprep.subr.bf16.mxu0 %v8118
    %9551 = vmatpush1.bf16.msra.mxu0 %v8117
    %9552 = vmatprep.subr.bf16.mxu0 %v8110
    %9553 = vmatpush1.bf16.msra.mxu0 %v8109
    %9554 = vmatprep.subr.bf16.mxu0 %v8102
    %9555 = vmatpush1.bf16.msra.mxu0 %v8101
    %9556 = vmatprep.subr.bf16.mxu0 %v8222
    %9557 = vmatpush2.bf16.msra.mxu0 %v8221
    %9558 = vmatprep.subr.bf16.mxu0 %v8214
    %9559 = vmatpush2.bf16.msra.mxu0 %v8213
    %9560 = vmatprep.subr.bf16.mxu0 %v8206
    %9561 = vmatpush2.bf16.msra.mxu0 %v8205
    %9562 = vmatprep.subr.bf16.mxu0 %v8198
    %9563 = vmatpush2.bf16.msra.mxu0 %v8197
    %9564 = vmatprep.subr.bf16.mxu0 %v8190
    %9565 = vmatpush2.bf16.msra.mxu0 %v8189
    %9566 = vmatprep.subr.bf16.mxu0 %v8182
    %9567 = vmatpush2.bf16.msra.mxu0 %v8181
    %9568 = vmatprep.subr.bf16.mxu0 %v8174
    %9569 = vmatpush2.bf16.msra.mxu0 %v8173
    %9570 = vmatprep.subr.bf16.mxu0 %v8166
    %9571 = vmatpush2.bf16.msra.mxu0 %v8165
    %9572 = vmatprep.mubr.bf16.mxu0 %v4116
    %9573 = vmatmul.mubr.bf16.gmra.mxu0 %v4115
    %v9574 = vpop.f32.mrf.mxu0
    %v9575 = vadd.f32 %v9534, %v9574
    %v9576 = vpop.f32.mrf.mxu0
    %v9577 = vadd.f32 %v9536, %v9576
    %v9578 = vpop.f32.mrf.mxu0
    %v9579 = vpop.f32.mrf.mxu0
    %9580 = vdwg.mxu0
    %9581 = vmatprep.subr.bf16.mxu0 %v7264
    %9582 = vmatpush1.bf16.msra.mxu0 %v7263
    %9583 = vmatprep.subr.bf16.mxu0 %v7256
    %9584 = vmatpush1.bf16.msra.mxu0 %v7255
    %9585 = vmatprep.subr.bf16.mxu0 %v7248
    %9586 = vmatpush1.bf16.msra.mxu0 %v7247
    %9587 = vmatprep.subr.bf16.mxu0 %v7240
    %9588 = vmatpush1.bf16.msra.mxu0 %v7239
    %9589 = vmatprep.subr.bf16.mxu0 %v7232
    %9590 = vmatpush1.bf16.msra.mxu0 %v7231
    %9591 = vmatprep.subr.bf16.mxu0 %v7224
    %9592 = vmatpush1.bf16.msra.mxu0 %v7223
    %9593 = vmatprep.subr.bf16.mxu0 %v7216
    %9594 = vmatpush1.bf16.msra.mxu0 %v7215
    %9595 = vmatprep.subr.bf16.mxu0 %v7208
    %9596 = vmatpush1.bf16.msra.mxu0 %v7207
    %9597 = vmatprep.subr.bf16.mxu0 %v7328
    %9598 = vmatpush2.bf16.msra.mxu0 %v7327
    %9599 = vmatprep.subr.bf16.mxu0 %v7320
    %9600 = vmatpush2.bf16.msra.mxu0 %v7319
    %9601 = vmatprep.subr.bf16.mxu0 %v7312
    %9602 = vmatpush2.bf16.msra.mxu0 %v7311
    %9603 = vmatprep.subr.bf16.mxu0 %v7304
    %9604 = vmatpush2.bf16.msra.mxu0 %v7303
    %9605 = vmatprep.subr.bf16.mxu0 %v7296
    %9606 = vmatpush2.bf16.msra.mxu0 %v7295
    %9607 = vmatprep.subr.bf16.mxu0 %v7288
    %9608 = vmatpush2.bf16.msra.mxu0 %v7287
    %9609 = vmatprep.subr.bf16.mxu0 %v7280
    %9610 = vmatpush2.bf16.msra.mxu0 %v7279
    %9611 = vmatprep.subr.bf16.mxu0 %v7272
    %9612 = vmatpush2.bf16.msra.mxu0 %v7271
    %9613 = vmatprep.mubr.bf16.mxu0 %v4102
    %9614 = vmatmul.mubr.bf16.gmra.mxu0 %v4101
    %v9615 = vpop.f32.mrf.mxu0
    %v9616 = vadd.f32 %v4048, %v9615
    %v9617 = vpop.f32.mrf.mxu0
    %v9618 = vadd.f32 %v4052, %v9617
    %v9619 = vpop.f32.mrf.mxu0
    %v9620 = vpop.f32.mrf.mxu0
    %9621 = vdwg.mxu0
    %9622 = vmatprep.subr.bf16.mxu0 %v7392
    %9623 = vmatpush1.bf16.msra.mxu0 %v7391
    %9624 = vmatprep.subr.bf16.mxu0 %v7384
    %9625 = vmatpush1.bf16.msra.mxu0 %v7383
    %9626 = vmatprep.subr.bf16.mxu0 %v7376
    %9627 = vmatpush1.bf16.msra.mxu0 %v7375
    %9628 = vmatprep.subr.bf16.mxu0 %v7368
    %9629 = vmatpush1.bf16.msra.mxu0 %v7367
    %9630 = vmatprep.subr.bf16.mxu0 %v7360
    %9631 = vmatpush1.bf16.msra.mxu0 %v7359
    %9632 = vmatprep.subr.bf16.mxu0 %v7352
    %9633 = vmatpush1.bf16.msra.mxu0 %v7351
    %9634 = vmatprep.subr.bf16.mxu0 %v7344
    %9635 = vmatpush1.bf16.msra.mxu0 %v7343
    %9636 = vmatprep.subr.bf16.mxu0 %v7336
    %9637 = vmatpush1.bf16.msra.mxu0 %v7335
    %9638 = vmatprep.subr.bf16.mxu0 %v7456
    %9639 = vmatpush2.bf16.msra.mxu0 %v7455
    %9640 = vmatprep.subr.bf16.mxu0 %v7448
    %9641 = vmatpush2.bf16.msra.mxu0 %v7447
    %9642 = vmatprep.subr.bf16.mxu0 %v7440
    %9643 = vmatpush2.bf16.msra.mxu0 %v7439
    %9644 = vmatprep.subr.bf16.mxu0 %v7432
    %9645 = vmatpush2.bf16.msra.mxu0 %v7431
    %9646 = vmatprep.subr.bf16.mxu0 %v7424
    %9647 = vmatpush2.bf16.msra.mxu0 %v7423
    %9648 = vmatprep.subr.bf16.mxu0 %v7416
    %9649 = vmatpush2.bf16.msra.mxu0 %v7415
    %9650 = vmatprep.subr.bf16.mxu0 %v7408
    %9651 = vmatpush2.bf16.msra.mxu0 %v7407
    %9652 = vmatprep.subr.bf16.mxu0 %v7400
    %9653 = vmatpush2.bf16.msra.mxu0 %v7399
    %9654 = vmatprep.mubr.bf16.mxu0 %v4104
    %9655 = vmatmul.mubr.bf16.gmra.mxu0 %v4103
    %v9656 = vpop.f32.mrf.mxu0
    %v9657 = vadd.f32 %v9616, %v9656
    %v9658 = vpop.f32.mrf.mxu0
    %v9659 = vadd.f32 %v9618, %v9658
    %v9660 = vpop.f32.mrf.mxu0
    %v9661 = vpop.f32.mrf.mxu0
    %9662 = vdwg.mxu0
    %9663 = vmatprep.subr.bf16.mxu0 %v7520
    %9664 = vmatpush1.bf16.msra.mxu0 %v7519
    %9665 = vmatprep.subr.bf16.mxu0 %v7512
    %9666 = vmatpush1.bf16.msra.mxu0 %v7511
    %9667 = vmatprep.subr.bf16.mxu0 %v7504
    %9668 = vmatpush1.bf16.msra.mxu0 %v7503
    %9669 = vmatprep.subr.bf16.mxu0 %v7496
    %9670 = vmatpush1.bf16.msra.mxu0 %v7495
    %9671 = vmatprep.subr.bf16.mxu0 %v7488
    %9672 = vmatpush1.bf16.msra.mxu0 %v7487
    %9673 = vmatprep.subr.bf16.mxu0 %v7480
    %9674 = vmatpush1.bf16.msra.mxu0 %v7479
    %9675 = vmatprep.subr.bf16.mxu0 %v7472
    %9676 = vmatpush1.bf16.msra.mxu0 %v7471
    %9677 = vmatprep.subr.bf16.mxu0 %v7464
    %9678 = vmatpush1.bf16.msra.mxu0 %v7463
    %9679 = vmatprep.subr.bf16.mxu0 %v7584
    %9680 = vmatpush2.bf16.msra.mxu0 %v7583
    %9681 = vmatprep.subr.bf16.mxu0 %v7576
    %9682 = vmatpush2.bf16.msra.mxu0 %v7575
    %9683 = vmatprep.subr.bf16.mxu0 %v7568
    %9684 = vmatpush2.bf16.msra.mxu0 %v7567
    %9685 = vmatprep.subr.bf16.mxu0 %v7560
    %9686 = vmatpush2.bf16.msra.mxu0 %v7559
    %9687 = vmatprep.subr.bf16.mxu0 %v7552
    %9688 = vmatpush2.bf16.msra.mxu0 %v7551
    %9689 = vmatprep.subr.bf16.mxu0 %v7544
    %9690 = vmatpush2.bf16.msra.mxu0 %v7543
    %9691 = vmatprep.subr.bf16.mxu0 %v7536
    %9692 = vmatpush2.bf16.msra.mxu0 %v7535
    %9693 = vmatprep.subr.bf16.mxu0 %v7528
    %9694 = vmatpush2.bf16.msra.mxu0 %v7527
    %9695 = vmatprep.mubr.bf16.mxu0 %v4106
    %9696 = vmatmul.mubr.bf16.gmra.mxu0 %v4105
    %v9697 = vpop.f32.mrf.mxu0
    %v9698 = vadd.f32 %v9657, %v9697
    %v9699 = vpop.f32.mrf.mxu0
    %v9700 = vadd.f32 %v9659, %v9699
    %v9701 = vpop.f32.mrf.mxu0
    %v9702 = vpop.f32.mrf.mxu0
    %9703 = vdwg.mxu0
    %9704 = vmatprep.subr.bf16.mxu0 %v7648
    %9705 = vmatpush1.bf16.msra.mxu0 %v7647
    %9706 = vmatprep.subr.bf16.mxu0 %v7640
    %9707 = vmatpush1.bf16.msra.mxu0 %v7639
    %9708 = vmatprep.subr.bf16.mxu0 %v7632
    %9709 = vmatpush1.bf16.msra.mxu0 %v7631
    %9710 = vmatprep.subr.bf16.mxu0 %v7624
    %9711 = vmatpush1.bf16.msra.mxu0 %v7623
    %9712 = vmatprep.subr.bf16.mxu0 %v7616
    %9713 = vmatpush1.bf16.msra.mxu0 %v7615
    %9714 = vmatprep.subr.bf16.mxu0 %v7608
    %9715 = vmatpush1.bf16.msra.mxu0 %v7607
    %9716 = vmatprep.subr.bf16.mxu0 %v7600
    %9717 = vmatpush1.bf16.msra.mxu0 %v7599
    %9718 = vmatprep.subr.bf16.mxu0 %v7592
    %9719 = vmatpush1.bf16.msra.mxu0 %v7591
    %9720 = vmatprep.subr.bf16.mxu0 %v7712
    %9721 = vmatpush2.bf16.msra.mxu0 %v7711
    %9722 = vmatprep.subr.bf16.mxu0 %v7704
    %9723 = vmatpush2.bf16.msra.mxu0 %v7703
    %9724 = vmatprep.subr.bf16.mxu0 %v7696
    %9725 = vmatpush2.bf16.msra.mxu0 %v7695
    %9726 = vmatprep.subr.bf16.mxu0 %v7688
    %9727 = vmatpush2.bf16.msra.mxu0 %v7687
    %9728 = vmatprep.subr.bf16.mxu0 %v7680
    %9729 = vmatpush2.bf16.msra.mxu0 %v7679
    %9730 = vmatprep.subr.bf16.mxu0 %v7672
    %9731 = vmatpush2.bf16.msra.mxu0 %v7671
    %9732 = vmatprep.subr.bf16.mxu0 %v7664
    %9733 = vmatpush2.bf16.msra.mxu0 %v7663
    %9734 = vmatprep.subr.bf16.mxu0 %v7656
    %9735 = vmatpush2.bf16.msra.mxu0 %v7655
    %9736 = vmatprep.mubr.bf16.mxu0 %v4108
    %9737 = vmatmul.mubr.bf16.gmra.mxu0 %v4107
    %v9738 = vpop.f32.mrf.mxu0
    %v9739 = vadd.f32 %v9698, %v9738
    %v9740 = vpop.f32.mrf.mxu0
    %v9741 = vadd.f32 %v9700, %v9740
    %v9742 = vpop.f32.mrf.mxu0
    %v9743 = vpop.f32.mrf.mxu0
    %9744 = vdwg.mxu0
    %9745 = vmatprep.subr.bf16.mxu0 %v7776
    %9746 = vmatpush1.bf16.msra.mxu0 %v7775
    %9747 = vmatprep.subr.bf16.mxu0 %v7768
    %9748 = vmatpush1.bf16.msra.mxu0 %v7767
    %9749 = vmatprep.subr.bf16.mxu0 %v7760
    %9750 = vmatpush1.bf16.msra.mxu0 %v7759
    %9751 = vmatprep.subr.bf16.mxu0 %v7752
    %9752 = vmatpush1.bf16.msra.mxu0 %v7751
    %9753 = vmatprep.subr.bf16.mxu0 %v7744
    %9754 = vmatpush1.bf16.msra.mxu0 %v7743
    %9755 = vmatprep.subr.bf16.mxu0 %v7736
    %9756 = vmatpush1.bf16.msra.mxu0 %v7735
    %9757 = vmatprep.subr.bf16.mxu0 %v7728
    %9758 = vmatpush1.bf16.msra.mxu0 %v7727
    %9759 = vmatprep.subr.bf16.mxu0 %v7720
    %9760 = vmatpush1.bf16.msra.mxu0 %v7719
    %9761 = vmatprep.subr.bf16.mxu0 %v7840
    %9762 = vmatpush2.bf16.msra.mxu0 %v7839
    %9763 = vmatprep.subr.bf16.mxu0 %v7832
    %9764 = vmatpush2.bf16.msra.mxu0 %v7831
    %9765 = vmatprep.subr.bf16.mxu0 %v7824
    %9766 = vmatpush2.bf16.msra.mxu0 %v7823
    %9767 = vmatprep.subr.bf16.mxu0 %v7816
    %9768 = vmatpush2.bf16.msra.mxu0 %v7815
    %9769 = vmatprep.subr.bf16.mxu0 %v7808
    %9770 = vmatpush2.bf16.msra.mxu0 %v7807
    %9771 = vmatprep.subr.bf16.mxu0 %v7800
    %9772 = vmatpush2.bf16.msra.mxu0 %v7799
    %9773 = vmatprep.subr.bf16.mxu0 %v7792
    %9774 = vmatpush2.bf16.msra.mxu0 %v7791
    %9775 = vmatprep.subr.bf16.mxu0 %v7784
    %9776 = vmatpush2.bf16.msra.mxu0 %v7783
    %9777 = vmatprep.mubr.bf16.mxu0 %v4110
    %9778 = vmatmul.mubr.bf16.gmra.mxu0 %v4109
    %v9779 = vpop.f32.mrf.mxu0
    %v9780 = vadd.f32 %v9739, %v9779
    %v9781 = vpop.f32.mrf.mxu0
    %v9782 = vadd.f32 %v9741, %v9781
    %v9783 = vpop.f32.mrf.mxu0
    %v9784 = vpop.f32.mrf.mxu0
    %9785 = vdwg.mxu0
    %9786 = vmatprep.subr.bf16.mxu0 %v7904
    %9787 = vmatpush1.bf16.msra.mxu0 %v7903
    %9788 = vmatprep.subr.bf16.mxu0 %v7896
    %9789 = vmatpush1.bf16.msra.mxu0 %v7895
    %9790 = vmatprep.subr.bf16.mxu0 %v7888
    %9791 = vmatpush1.bf16.msra.mxu0 %v7887
    %9792 = vmatprep.subr.bf16.mxu0 %v7880
    %9793 = vmatpush1.bf16.msra.mxu0 %v7879
    %9794 = vmatprep.subr.bf16.mxu0 %v7872
    %9795 = vmatpush1.bf16.msra.mxu0 %v7871
    %9796 = vmatprep.subr.bf16.mxu0 %v7864
    %9797 = vmatpush1.bf16.msra.mxu0 %v7863
    %9798 = vmatprep.subr.bf16.mxu0 %v7856
    %9799 = vmatpush1.bf16.msra.mxu0 %v7855
    %9800 = vmatprep.subr.bf16.mxu0 %v7848
    %9801 = vmatpush1.bf16.msra.mxu0 %v7847
    %9802 = vmatprep.subr.bf16.mxu0 %v7968
    %9803 = vmatpush2.bf16.msra.mxu0 %v7967
    %9804 = vmatprep.subr.bf16.mxu0 %v7960
    %9805 = vmatpush2.bf16.msra.mxu0 %v7959
    %9806 = vmatprep.subr.bf16.mxu0 %v7952
    %9807 = vmatpush2.bf16.msra.mxu0 %v7951
    %9808 = vmatprep.subr.bf16.mxu0 %v7944
    %9809 = vmatpush2.bf16.msra.mxu0 %v7943
    %9810 = vmatprep.subr.bf16.mxu0 %v7936
    %9811 = vmatpush2.bf16.msra.mxu0 %v7935
    %9812 = vmatprep.subr.bf16.mxu0 %v7928
    %9813 = vmatpush2.bf16.msra.mxu0 %v7927
    %9814 = vmatprep.subr.bf16.mxu0 %v7920
    %9815 = vmatpush2.bf16.msra.mxu0 %v7919
    %9816 = vmatprep.subr.bf16.mxu0 %v7912
    %9817 = vmatpush2.bf16.msra.mxu0 %v7911
    %9818 = vmatprep.mubr.bf16.mxu0 %v4112
    %9819 = vmatmul.mubr.bf16.gmra.mxu0 %v4111
    %v9820 = vpop.f32.mrf.mxu0
    %v9821 = vadd.f32 %v9780, %v9820
    %v9822 = vpop.f32.mrf.mxu0
    %v9823 = vadd.f32 %v9782, %v9822
    %v9824 = vpop.f32.mrf.mxu0
    %v9825 = vpop.f32.mrf.mxu0
    %9826 = vdwg.mxu0
    %9827 = vmatprep.subr.bf16.mxu0 %v8032
    %9828 = vmatpush1.bf16.msra.mxu0 %v8031
    %9829 = vmatprep.subr.bf16.mxu0 %v8024
    %9830 = vmatpush1.bf16.msra.mxu0 %v8023
    %9831 = vmatprep.subr.bf16.mxu0 %v8016
    %9832 = vmatpush1.bf16.msra.mxu0 %v8015
    %9833 = vmatprep.subr.bf16.mxu0 %v8008
    %9834 = vmatpush1.bf16.msra.mxu0 %v8007
    %9835 = vmatprep.subr.bf16.mxu0 %v8000
    %9836 = vmatpush1.bf16.msra.mxu0 %v7999
    %9837 = vmatprep.subr.bf16.mxu0 %v7992
    %9838 = vmatpush1.bf16.msra.mxu0 %v7991
    %9839 = vmatprep.subr.bf16.mxu0 %v7984
    %9840 = vmatpush1.bf16.msra.mxu0 %v7983
    %9841 = vmatprep.subr.bf16.mxu0 %v7976
    %9842 = vmatpush1.bf16.msra.mxu0 %v7975
    %9843 = vmatprep.subr.bf16.mxu0 %v8096
    %9844 = vmatpush2.bf16.msra.mxu0 %v8095
    %9845 = vmatprep.subr.bf16.mxu0 %v8088
    %9846 = vmatpush2.bf16.msra.mxu0 %v8087
    %9847 = vmatprep.subr.bf16.mxu0 %v8080
    %9848 = vmatpush2.bf16.msra.mxu0 %v8079
    %9849 = vmatprep.subr.bf16.mxu0 %v8072
    %9850 = vmatpush2.bf16.msra.mxu0 %v8071
    %9851 = vmatprep.subr.bf16.mxu0 %v8064
    %9852 = vmatpush2.bf16.msra.mxu0 %v8063
    %9853 = vmatprep.subr.bf16.mxu0 %v8056
    %9854 = vmatpush2.bf16.msra.mxu0 %v8055
    %9855 = vmatprep.subr.bf16.mxu0 %v8048
    %9856 = vmatpush2.bf16.msra.mxu0 %v8047
    %9857 = vmatprep.subr.bf16.mxu0 %v8040
    %9858 = vmatpush2.bf16.msra.mxu0 %v8039
    %9859 = vmatprep.mubr.bf16.mxu0 %v4114
    %9860 = vmatmul.mubr.bf16.gmra.mxu0 %v4113
    %v9861 = vpop.f32.mrf.mxu0
    %v9862 = vadd.f32 %v9821, %v9861
    %v9863 = vpop.f32.mrf.mxu0
    %v9864 = vadd.f32 %v9823, %v9863
    %v9865 = vpop.f32.mrf.mxu0
    %v9866 = vpop.f32.mrf.mxu0
    %9867 = vdwg.mxu0
    %9868 = vmatprep.subr.bf16.mxu0 %v8160
    %9869 = vmatpush1.bf16.msra.mxu0 %v8159
    %9870 = vmatprep.subr.bf16.mxu0 %v8152
    %9871 = vmatpush1.bf16.msra.mxu0 %v8151
    %9872 = vmatprep.subr.bf16.mxu0 %v8144
    %9873 = vmatpush1.bf16.msra.mxu0 %v8143
    %9874 = vmatprep.subr.bf16.mxu0 %v8136
    %9875 = vmatpush1.bf16.msra.mxu0 %v8135
    %9876 = vmatprep.subr.bf16.mxu0 %v8128
    %9877 = vmatpush1.bf16.msra.mxu0 %v8127
    %9878 = vmatprep.subr.bf16.mxu0 %v8120
    %9879 = vmatpush1.bf16.msra.mxu0 %v8119
    %9880 = vmatprep.subr.bf16.mxu0 %v8112
    %9881 = vmatpush1.bf16.msra.mxu0 %v8111
    %9882 = vmatprep.subr.bf16.mxu0 %v8104
    %9883 = vmatpush1.bf16.msra.mxu0 %v8103
    %9884 = vmatprep.subr.bf16.mxu0 %v8224
    %9885 = vmatpush2.bf16.msra.mxu0 %v8223
    %9886 = vmatprep.subr.bf16.mxu0 %v8216
    %9887 = vmatpush2.bf16.msra.mxu0 %v8215
    %9888 = vmatprep.subr.bf16.mxu0 %v8208
    %9889 = vmatpush2.bf16.msra.mxu0 %v8207
    %9890 = vmatprep.subr.bf16.mxu0 %v8200
    %9891 = vmatpush2.bf16.msra.mxu0 %v8199
    %9892 = vmatprep.subr.bf16.mxu0 %v8192
    %9893 = vmatpush2.bf16.msra.mxu0 %v8191
    %9894 = vmatprep.subr.bf16.mxu0 %v8184
    %9895 = vmatpush2.bf16.msra.mxu0 %v8183
    %9896 = vmatprep.subr.bf16.mxu0 %v8176
    %9897 = vmatpush2.bf16.msra.mxu0 %v8175
    %9898 = vmatprep.subr.bf16.mxu0 %v8168
    %9899 = vmatpush2.bf16.msra.mxu0 %v8167
    %9900 = vmatprep.mubr.bf16.mxu0 %v4116
    %9901 = vmatmul.mubr.bf16.gmra.mxu0 %v4115
    %v9902 = vpop.f32.mrf.mxu0
    %v9903 = vadd.f32 %v9862, %v9902
    %v9904 = vpop.f32.mrf.mxu0
    %v9905 = vadd.f32 %v9864, %v9904
    %v9906 = vpop.f32.mrf.mxu0
    %v9907 = vpop.f32.mrf.mxu0
    %9908 = vdwg.mxu0
    %9909 = vmatprep.subr.bf16.mxu0 %v7266
    %9910 = vmatpush1.bf16.msra.mxu0 %v7265
    %9911 = vmatprep.subr.bf16.mxu0 %v7258
    %9912 = vmatpush1.bf16.msra.mxu0 %v7257
    %9913 = vmatprep.subr.bf16.mxu0 %v7250
    %9914 = vmatpush1.bf16.msra.mxu0 %v7249
    %9915 = vmatprep.subr.bf16.mxu0 %v7242
    %9916 = vmatpush1.bf16.msra.mxu0 %v7241
    %9917 = vmatprep.subr.bf16.mxu0 %v7234
    %9918 = vmatpush1.bf16.msra.mxu0 %v7233
    %9919 = vmatprep.subr.bf16.mxu0 %v7226
    %9920 = vmatpush1.bf16.msra.mxu0 %v7225
    %9921 = vmatprep.subr.bf16.mxu0 %v7218
    %9922 = vmatpush1.bf16.msra.mxu0 %v7217
    %9923 = vmatprep.subr.bf16.mxu0 %v7210
    %9924 = vmatpush1.bf16.msra.mxu0 %v7209
    %9925 = vmatprep.subr.bf16.mxu0 %v7330
    %9926 = vmatpush2.bf16.msra.mxu0 %v7329
    %9927 = vmatprep.subr.bf16.mxu0 %v7322
    %9928 = vmatpush2.bf16.msra.mxu0 %v7321
    %9929 = vmatprep.subr.bf16.mxu0 %v7314
    %9930 = vmatpush2.bf16.msra.mxu0 %v7313
    %9931 = vmatprep.subr.bf16.mxu0 %v7306
    %9932 = vmatpush2.bf16.msra.mxu0 %v7305
    %9933 = vmatprep.subr.bf16.mxu0 %v7298
    %9934 = vmatpush2.bf16.msra.mxu0 %v7297
    %9935 = vmatprep.subr.bf16.mxu0 %v7290
    %9936 = vmatpush2.bf16.msra.mxu0 %v7289
    %9937 = vmatprep.subr.bf16.mxu0 %v7282
    %9938 = vmatpush2.bf16.msra.mxu0 %v7281
    %9939 = vmatprep.subr.bf16.mxu0 %v7274
    %9940 = vmatpush2.bf16.msra.mxu0 %v7273
    %9941 = vmatprep.mubr.bf16.mxu0 %v4102
    %9942 = vmatmul.mubr.bf16.gmra.mxu0 %v4101
    %v9943 = vpop.f32.mrf.mxu0
    %v9944 = vadd.f32 %v4056, %v9943
    %v9945 = vpop.f32.mrf.mxu0
    %v9946 = vadd.f32 %v4060, %v9945
    %v9947 = vpop.f32.mrf.mxu0
    %v9948 = vpop.f32.mrf.mxu0
    %9949 = vdwg.mxu0
    %9950 = vmatprep.subr.bf16.mxu0 %v7394
    %9951 = vmatpush1.bf16.msra.mxu0 %v7393
    %9952 = vmatprep.subr.bf16.mxu0 %v7386
    %9953 = vmatpush1.bf16.msra.mxu0 %v7385
    %9954 = vmatprep.subr.bf16.mxu0 %v7378
    %9955 = vmatpush1.bf16.msra.mxu0 %v7377
    %9956 = vmatprep.subr.bf16.mxu0 %v7370
    %9957 = vmatpush1.bf16.msra.mxu0 %v7369
    %9958 = vmatprep.subr.bf16.mxu0 %v7362
    %9959 = vmatpush1.bf16.msra.mxu0 %v7361
    %9960 = vmatprep.subr.bf16.mxu0 %v7354
    %9961 = vmatpush1.bf16.msra.mxu0 %v7353
    %9962 = vmatprep.subr.bf16.mxu0 %v7346
    %9963 = vmatpush1.bf16.msra.mxu0 %v7345
    %9964 = vmatprep.subr.bf16.mxu0 %v7338
    %9965 = vmatpush1.bf16.msra.mxu0 %v7337
    %9966 = vmatprep.subr.bf16.mxu0 %v7458
    %9967 = vmatpush2.bf16.msra.mxu0 %v7457
    %9968 = vmatprep.subr.bf16.mxu0 %v7450
    %9969 = vmatpush2.bf16.msra.mxu0 %v7449
    %9970 = vmatprep.subr.bf16.mxu0 %v7442
    %9971 = vmatpush2.bf16.msra.mxu0 %v7441
    %9972 = vmatprep.subr.bf16.mxu0 %v7434
    %9973 = vmatpush2.bf16.msra.mxu0 %v7433
    %9974 = vmatprep.subr.bf16.mxu0 %v7426
    %9975 = vmatpush2.bf16.msra.mxu0 %v7425
    %9976 = vmatprep.subr.bf16.mxu0 %v7418
    %9977 = vmatpush2.bf16.msra.mxu0 %v7417
    %9978 = vmatprep.subr.bf16.mxu0 %v7410
    %9979 = vmatpush2.bf16.msra.mxu0 %v7409
    %9980 = vmatprep.subr.bf16.mxu0 %v7402
    %9981 = vmatpush2.bf16.msra.mxu0 %v7401
    %9982 = vmatprep.mubr.bf16.mxu0 %v4104
    %9983 = vmatmul.mubr.bf16.gmra.mxu0 %v4103
    %v9984 = vpop.f32.mrf.mxu0
    %v9985 = vadd.f32 %v9944, %v9984
    %v9986 = vpop.f32.mrf.mxu0
    %v9987 = vadd.f32 %v9946, %v9986
    %v9988 = vpop.f32.mrf.mxu0
    %v9989 = vpop.f32.mrf.mxu0
    %9990 = vdwg.mxu0
    %9991 = vmatprep.subr.bf16.mxu0 %v7522
    %9992 = vmatpush1.bf16.msra.mxu0 %v7521
    %9993 = vmatprep.subr.bf16.mxu0 %v7514
    %9994 = vmatpush1.bf16.msra.mxu0 %v7513
    %9995 = vmatprep.subr.bf16.mxu0 %v7506
    %9996 = vmatpush1.bf16.msra.mxu0 %v7505
    %9997 = vmatprep.subr.bf16.mxu0 %v7498
    %9998 = vmatpush1.bf16.msra.mxu0 %v7497
    %9999 = vmatprep.subr.bf16.mxu0 %v7490
    %10000 = vmatpush1.bf16.msra.mxu0 %v7489
    %10001 = vmatprep.subr.bf16.mxu0 %v7482
    %10002 = vmatpush1.bf16.msra.mxu0 %v7481
    %10003 = vmatprep.subr.bf16.mxu0 %v7474
    %10004 = vmatpush1.bf16.msra.mxu0 %v7473
    %10005 = vmatprep.subr.bf16.mxu0 %v7466
    %10006 = vmatpush1.bf16.msra.mxu0 %v7465
    %10007 = vmatprep.subr.bf16.mxu0 %v7586
    %10008 = vmatpush2.bf16.msra.mxu0 %v7585
    %10009 = vmatprep.subr.bf16.mxu0 %v7578
    %10010 = vmatpush2.bf16.msra.mxu0 %v7577
    %10011 = vmatprep.subr.bf16.mxu0 %v7570
    %10012 = vmatpush2.bf16.msra.mxu0 %v7569
    %10013 = vmatprep.subr.bf16.mxu0 %v7562
    %10014 = vmatpush2.bf16.msra.mxu0 %v7561
    %10015 = vmatprep.subr.bf16.mxu0 %v7554
    %10016 = vmatpush2.bf16.msra.mxu0 %v7553
    %10017 = vmatprep.subr.bf16.mxu0 %v7546
    %10018 = vmatpush2.bf16.msra.mxu0 %v7545
    %10019 = vmatprep.subr.bf16.mxu0 %v7538
    %10020 = vmatpush2.bf16.msra.mxu0 %v7537
    %10021 = vmatprep.subr.bf16.mxu0 %v7530
    %10022 = vmatpush2.bf16.msra.mxu0 %v7529
    %10023 = vmatprep.mubr.bf16.mxu0 %v4106
    %10024 = vmatmul.mubr.bf16.gmra.mxu0 %v4105
    %v10025 = vpop.f32.mrf.mxu0
    %v10026 = vadd.f32 %v9985, %v10025
    %v10027 = vpop.f32.mrf.mxu0
    %v10028 = vadd.f32 %v9987, %v10027
    %v10029 = vpop.f32.mrf.mxu0
    %v10030 = vpop.f32.mrf.mxu0
    %10031 = vdwg.mxu0
    %10032 = vmatprep.subr.bf16.mxu0 %v7650
    %10033 = vmatpush1.bf16.msra.mxu0 %v7649
    %10034 = vmatprep.subr.bf16.mxu0 %v7642
    %10035 = vmatpush1.bf16.msra.mxu0 %v7641
    %10036 = vmatprep.subr.bf16.mxu0 %v7634
    %10037 = vmatpush1.bf16.msra.mxu0 %v7633
    %10038 = vmatprep.subr.bf16.mxu0 %v7626
    %10039 = vmatpush1.bf16.msra.mxu0 %v7625
    %10040 = vmatprep.subr.bf16.mxu0 %v7618
    %10041 = vmatpush1.bf16.msra.mxu0 %v7617
    %10042 = vmatprep.subr.bf16.mxu0 %v7610
    %10043 = vmatpush1.bf16.msra.mxu0 %v7609
    %10044 = vmatprep.subr.bf16.mxu0 %v7602
    %10045 = vmatpush1.bf16.msra.mxu0 %v7601
    %10046 = vmatprep.subr.bf16.mxu0 %v7594
    %10047 = vmatpush1.bf16.msra.mxu0 %v7593
    %10048 = vmatprep.subr.bf16.mxu0 %v7714
    %10049 = vmatpush2.bf16.msra.mxu0 %v7713
    %10050 = vmatprep.subr.bf16.mxu0 %v7706
    %10051 = vmatpush2.bf16.msra.mxu0 %v7705
    %10052 = vmatprep.subr.bf16.mxu0 %v7698
    %10053 = vmatpush2.bf16.msra.mxu0 %v7697
    %10054 = vmatprep.subr.bf16.mxu0 %v7690
    %10055 = vmatpush2.bf16.msra.mxu0 %v7689
    %10056 = vmatprep.subr.bf16.mxu0 %v7682
    %10057 = vmatpush2.bf16.msra.mxu0 %v7681
    %10058 = vmatprep.subr.bf16.mxu0 %v7674
    %10059 = vmatpush2.bf16.msra.mxu0 %v7673
    %10060 = vmatprep.subr.bf16.mxu0 %v7666
    %10061 = vmatpush2.bf16.msra.mxu0 %v7665
    %10062 = vmatprep.subr.bf16.mxu0 %v7658
    %10063 = vmatpush2.bf16.msra.mxu0 %v7657
    %10064 = vmatprep.mubr.bf16.mxu0 %v4108
    %10065 = vmatmul.mubr.bf16.gmra.mxu0 %v4107
    %v10066 = vpop.f32.mrf.mxu0
    %v10067 = vadd.f32 %v10026, %v10066
    %v10068 = vpop.f32.mrf.mxu0
    %v10069 = vadd.f32 %v10028, %v10068
    %v10070 = vpop.f32.mrf.mxu0
    %v10071 = vpop.f32.mrf.mxu0
    %10072 = vdwg.mxu0
    %10073 = vmatprep.subr.bf16.mxu0 %v7778
    %10074 = vmatpush1.bf16.msra.mxu0 %v7777
    %10075 = vmatprep.subr.bf16.mxu0 %v7770
    %10076 = vmatpush1.bf16.msra.mxu0 %v7769
    %10077 = vmatprep.subr.bf16.mxu0 %v7762
    %10078 = vmatpush1.bf16.msra.mxu0 %v7761
    %10079 = vmatprep.subr.bf16.mxu0 %v7754
    %10080 = vmatpush1.bf16.msra.mxu0 %v7753
    %10081 = vmatprep.subr.bf16.mxu0 %v7746
    %10082 = vmatpush1.bf16.msra.mxu0 %v7745
    %10083 = vmatprep.subr.bf16.mxu0 %v7738
    %10084 = vmatpush1.bf16.msra.mxu0 %v7737
    %10085 = vmatprep.subr.bf16.mxu0 %v7730
    %10086 = vmatpush1.bf16.msra.mxu0 %v7729
    %10087 = vmatprep.subr.bf16.mxu0 %v7722
    %10088 = vmatpush1.bf16.msra.mxu0 %v7721
    %10089 = vmatprep.subr.bf16.mxu0 %v7842
    %10090 = vmatpush2.bf16.msra.mxu0 %v7841
    %10091 = vmatprep.subr.bf16.mxu0 %v7834
    %10092 = vmatpush2.bf16.msra.mxu0 %v7833
    %10093 = vmatprep.subr.bf16.mxu0 %v7826
    %10094 = vmatpush2.bf16.msra.mxu0 %v7825
    %10095 = vmatprep.subr.bf16.mxu0 %v7818
    %10096 = vmatpush2.bf16.msra.mxu0 %v7817
    %10097 = vmatprep.subr.bf16.mxu0 %v7810
    %10098 = vmatpush2.bf16.msra.mxu0 %v7809
    %10099 = vmatprep.subr.bf16.mxu0 %v7802
    %10100 = vmatpush2.bf16.msra.mxu0 %v7801
    %10101 = vmatprep.subr.bf16.mxu0 %v7794
    %10102 = vmatpush2.bf16.msra.mxu0 %v7793
    %10103 = vmatprep.subr.bf16.mxu0 %v7786
    %10104 = vmatpush2.bf16.msra.mxu0 %v7785
    %10105 = vmatprep.mubr.bf16.mxu0 %v4110
    %10106 = vmatmul.mubr.bf16.gmra.mxu0 %v4109
    %v10107 = vpop.f32.mrf.mxu0
    %v10108 = vadd.f32 %v10067, %v10107
    %v10109 = vpop.f32.mrf.mxu0
    %v10110 = vadd.f32 %v10069, %v10109
    %v10111 = vpop.f32.mrf.mxu0
    %v10112 = vpop.f32.mrf.mxu0
    %10113 = vdwg.mxu0
    %10114 = vmatprep.subr.bf16.mxu0 %v7906
    %10115 = vmatpush1.bf16.msra.mxu0 %v7905
    %10116 = vmatprep.subr.bf16.mxu0 %v7898
    %10117 = vmatpush1.bf16.msra.mxu0 %v7897
    %10118 = vmatprep.subr.bf16.mxu0 %v7890
    %10119 = vmatpush1.bf16.msra.mxu0 %v7889
    %10120 = vmatprep.subr.bf16.mxu0 %v7882
    %10121 = vmatpush1.bf16.msra.mxu0 %v7881
    %10122 = vmatprep.subr.bf16.mxu0 %v7874
    %10123 = vmatpush1.bf16.msra.mxu0 %v7873
    %10124 = vmatprep.subr.bf16.mxu0 %v7866
    %10125 = vmatpush1.bf16.msra.mxu0 %v7865
    %10126 = vmatprep.subr.bf16.mxu0 %v7858
    %10127 = vmatpush1.bf16.msra.mxu0 %v7857
    %10128 = vmatprep.subr.bf16.mxu0 %v7850
    %10129 = vmatpush1.bf16.msra.mxu0 %v7849
    %10130 = vmatprep.subr.bf16.mxu0 %v7970
    %10131 = vmatpush2.bf16.msra.mxu0 %v7969
    %10132 = vmatprep.subr.bf16.mxu0 %v7962
    %10133 = vmatpush2.bf16.msra.mxu0 %v7961
    %10134 = vmatprep.subr.bf16.mxu0 %v7954
    %10135 = vmatpush2.bf16.msra.mxu0 %v7953
    %10136 = vmatprep.subr.bf16.mxu0 %v7946
    %10137 = vmatpush2.bf16.msra.mxu0 %v7945
    %10138 = vmatprep.subr.bf16.mxu0 %v7938
    %10139 = vmatpush2.bf16.msra.mxu0 %v7937
    %10140 = vmatprep.subr.bf16.mxu0 %v7930
    %10141 = vmatpush2.bf16.msra.mxu0 %v7929
    %10142 = vmatprep.subr.bf16.mxu0 %v7922
    %10143 = vmatpush2.bf16.msra.mxu0 %v7921
    %10144 = vmatprep.subr.bf16.mxu0 %v7914
    %10145 = vmatpush2.bf16.msra.mxu0 %v7913
    %10146 = vmatprep.mubr.bf16.mxu0 %v4112
    %10147 = vmatmul.mubr.bf16.gmra.mxu0 %v4111
    %v10148 = vpop.f32.mrf.mxu0
    %v10149 = vadd.f32 %v10108, %v10148
    %v10150 = vpop.f32.mrf.mxu0
    %v10151 = vadd.f32 %v10110, %v10150
    %v10152 = vpop.f32.mrf.mxu0
    %v10153 = vpop.f32.mrf.mxu0
    %10154 = vdwg.mxu0
    %10155 = vmatprep.subr.bf16.mxu0 %v8034
    %10156 = vmatpush1.bf16.msra.mxu0 %v8033
    %10157 = vmatprep.subr.bf16.mxu0 %v8026
    %10158 = vmatpush1.bf16.msra.mxu0 %v8025
    %10159 = vmatprep.subr.bf16.mxu0 %v8018
    %10160 = vmatpush1.bf16.msra.mxu0 %v8017
    %10161 = vmatprep.subr.bf16.mxu0 %v8010
    %10162 = vmatpush1.bf16.msra.mxu0 %v8009
    %10163 = vmatprep.subr.bf16.mxu0 %v8002
    %10164 = vmatpush1.bf16.msra.mxu0 %v8001
    %10165 = vmatprep.subr.bf16.mxu0 %v7994
    %10166 = vmatpush1.bf16.msra.mxu0 %v7993
    %10167 = vmatprep.subr.bf16.mxu0 %v7986
    %10168 = vmatpush1.bf16.msra.mxu0 %v7985
    %10169 = vmatprep.subr.bf16.mxu0 %v7978
    %10170 = vmatpush1.bf16.msra.mxu0 %v7977
    %10171 = vmatprep.subr.bf16.mxu0 %v8098
    %10172 = vmatpush2.bf16.msra.mxu0 %v8097
    %10173 = vmatprep.subr.bf16.mxu0 %v8090
    %10174 = vmatpush2.bf16.msra.mxu0 %v8089
    %10175 = vmatprep.subr.bf16.mxu0 %v8082
    %10176 = vmatpush2.bf16.msra.mxu0 %v8081
    %10177 = vmatprep.subr.bf16.mxu0 %v8074
    %10178 = vmatpush2.bf16.msra.mxu0 %v8073
    %10179 = vmatprep.subr.bf16.mxu0 %v8066
    %10180 = vmatpush2.bf16.msra.mxu0 %v8065
    %10181 = vmatprep.subr.bf16.mxu0 %v8058
    %10182 = vmatpush2.bf16.msra.mxu0 %v8057
    %10183 = vmatprep.subr.bf16.mxu0 %v8050
    %10184 = vmatpush2.bf16.msra.mxu0 %v8049
    %10185 = vmatprep.subr.bf16.mxu0 %v8042
    %10186 = vmatpush2.bf16.msra.mxu0 %v8041
    %10187 = vmatprep.mubr.bf16.mxu0 %v4114
    %10188 = vmatmul.mubr.bf16.gmra.mxu0 %v4113
    %v10189 = vpop.f32.mrf.mxu0
    %v10190 = vadd.f32 %v10149, %v10189
    %v10191 = vpop.f32.mrf.mxu0
    %v10192 = vadd.f32 %v10151, %v10191
    %v10193 = vpop.f32.mrf.mxu0
    %v10194 = vpop.f32.mrf.mxu0
    %10195 = vdwg.mxu0
    %10196 = vmatprep.subr.bf16.mxu0 %v8162
    %10197 = vmatpush1.bf16.msra.mxu0 %v8161
    %10198 = vmatprep.subr.bf16.mxu0 %v8154
    %10199 = vmatpush1.bf16.msra.mxu0 %v8153
    %10200 = vmatprep.subr.bf16.mxu0 %v8146
    %10201 = vmatpush1.bf16.msra.mxu0 %v8145
    %10202 = vmatprep.subr.bf16.mxu0 %v8138
    %10203 = vmatpush1.bf16.msra.mxu0 %v8137
    %10204 = vmatprep.subr.bf16.mxu0 %v8130
    %10205 = vmatpush1.bf16.msra.mxu0 %v8129
    %10206 = vmatprep.subr.bf16.mxu0 %v8122
    %10207 = vmatpush1.bf16.msra.mxu0 %v8121
    %10208 = vmatprep.subr.bf16.mxu0 %v8114
    %10209 = vmatpush1.bf16.msra.mxu0 %v8113
    %10210 = vmatprep.subr.bf16.mxu0 %v8106
    %10211 = vmatpush1.bf16.msra.mxu0 %v8105
    %10212 = vmatprep.subr.bf16.mxu0 %v8226
    %10213 = vmatpush2.bf16.msra.mxu0 %v8225
    %10214 = vmatprep.subr.bf16.mxu0 %v8218
    %10215 = vmatpush2.bf16.msra.mxu0 %v8217
    %10216 = vmatprep.subr.bf16.mxu0 %v8210
    %10217 = vmatpush2.bf16.msra.mxu0 %v8209
    %10218 = vmatprep.subr.bf16.mxu0 %v8202
    %10219 = vmatpush2.bf16.msra.mxu0 %v8201
    %10220 = vmatprep.subr.bf16.mxu0 %v8194
    %10221 = vmatpush2.bf16.msra.mxu0 %v8193
    %10222 = vmatprep.subr.bf16.mxu0 %v8186
    %10223 = vmatpush2.bf16.msra.mxu0 %v8185
    %10224 = vmatprep.subr.bf16.mxu0 %v8178
    %10225 = vmatpush2.bf16.msra.mxu0 %v8177
    %10226 = vmatprep.subr.bf16.mxu0 %v8170
    %10227 = vmatpush2.bf16.msra.mxu0 %v8169
    %10228 = vmatprep.mubr.bf16.mxu0 %v4116
    %10229 = vmatmul.mubr.bf16.gmra.mxu0 %v4115
    %v10230 = vpop.f32.mrf.mxu0
    %v10231 = vadd.f32 %v10190, %v10230
    %v10232 = vpop.f32.mrf.mxu0
    %v10233 = vadd.f32 %v10192, %v10232
    %v10234 = vpop.f32.mrf.mxu0
    %v10235 = vpop.f32.mrf.mxu0
    %10236 = vdwg.mxu0
    %10237 = vmatprep.subr.bf16.mxu0 %v7268
    %10238 = vmatpush1.bf16.msra.mxu0 %v7267
    %10239 = vmatprep.subr.bf16.mxu0 %v7260
    %10240 = vmatpush1.bf16.msra.mxu0 %v7259
    %10241 = vmatprep.subr.bf16.mxu0 %v7252
    %10242 = vmatpush1.bf16.msra.mxu0 %v7251
    %10243 = vmatprep.subr.bf16.mxu0 %v7244
    %10244 = vmatpush1.bf16.msra.mxu0 %v7243
    %10245 = vmatprep.subr.bf16.mxu0 %v7236
    %10246 = vmatpush1.bf16.msra.mxu0 %v7235
    %10247 = vmatprep.subr.bf16.mxu0 %v7228
    %10248 = vmatpush1.bf16.msra.mxu0 %v7227
    %10249 = vmatprep.subr.bf16.mxu0 %v7220
    %10250 = vmatpush1.bf16.msra.mxu0 %v7219
    %10251 = vmatprep.subr.bf16.mxu0 %v7212
    %10252 = vmatpush1.bf16.msra.mxu0 %v7211
    %10253 = vmatprep.subr.bf16.mxu0 %v7332
    %10254 = vmatpush2.bf16.msra.mxu0 %v7331
    %10255 = vmatprep.subr.bf16.mxu0 %v7324
    %10256 = vmatpush2.bf16.msra.mxu0 %v7323
    %10257 = vmatprep.subr.bf16.mxu0 %v7316
    %10258 = vmatpush2.bf16.msra.mxu0 %v7315
    %10259 = vmatprep.subr.bf16.mxu0 %v7308
    %10260 = vmatpush2.bf16.msra.mxu0 %v7307
    %10261 = vmatprep.subr.bf16.mxu0 %v7300
    %10262 = vmatpush2.bf16.msra.mxu0 %v7299
    %10263 = vmatprep.subr.bf16.mxu0 %v7292
    %10264 = vmatpush2.bf16.msra.mxu0 %v7291
    %10265 = vmatprep.subr.bf16.mxu0 %v7284
    %10266 = vmatpush2.bf16.msra.mxu0 %v7283
    %10267 = vmatprep.subr.bf16.mxu0 %v7276
    %10268 = vmatpush2.bf16.msra.mxu0 %v7275
    %10269 = vmatprep.mubr.bf16.mxu0 %v4102
    %10270 = vmatmul.mubr.bf16.gmra.mxu0 %v4101
    %v10271 = vpop.f32.mrf.mxu0
    %v10272 = vadd.f32 %v4064, %v10271
    %v10273 = vpop.f32.mrf.mxu0
    %v10274 = vadd.f32 %v4068, %v10273
    %v10275 = vpop.f32.mrf.mxu0
    %v10276 = vpop.f32.mrf.mxu0
    %10277 = vdwg.mxu0
    %10278 = vmatprep.subr.bf16.mxu0 %v7396
    %10279 = vmatpush1.bf16.msra.mxu0 %v7395
    %10280 = vmatprep.subr.bf16.mxu0 %v7388
    %10281 = vmatpush1.bf16.msra.mxu0 %v7387
    %10282 = vmatprep.subr.bf16.mxu0 %v7380
    %10283 = vmatpush1.bf16.msra.mxu0 %v7379
    %10284 = vmatprep.subr.bf16.mxu0 %v7372
    %10285 = vmatpush1.bf16.msra.mxu0 %v7371
    %10286 = vmatprep.subr.bf16.mxu0 %v7364
    %10287 = vmatpush1.bf16.msra.mxu0 %v7363
    %10288 = vmatprep.subr.bf16.mxu0 %v7356
    %10289 = vmatpush1.bf16.msra.mxu0 %v7355
    %10290 = vmatprep.subr.bf16.mxu0 %v7348
    %10291 = vmatpush1.bf16.msra.mxu0 %v7347
    %10292 = vmatprep.subr.bf16.mxu0 %v7340
    %10293 = vmatpush1.bf16.msra.mxu0 %v7339
    %10294 = vmatprep.subr.bf16.mxu0 %v7460
    %10295 = vmatpush2.bf16.msra.mxu0 %v7459
    %10296 = vmatprep.subr.bf16.mxu0 %v7452
    %10297 = vmatpush2.bf16.msra.mxu0 %v7451
    %10298 = vmatprep.subr.bf16.mxu0 %v7444
    %10299 = vmatpush2.bf16.msra.mxu0 %v7443
    %10300 = vmatprep.subr.bf16.mxu0 %v7436
    %10301 = vmatpush2.bf16.msra.mxu0 %v7435
    %10302 = vmatprep.subr.bf16.mxu0 %v7428
    %10303 = vmatpush2.bf16.msra.mxu0 %v7427
    %10304 = vmatprep.subr.bf16.mxu0 %v7420
    %10305 = vmatpush2.bf16.msra.mxu0 %v7419
    %10306 = vmatprep.subr.bf16.mxu0 %v7412
    %10307 = vmatpush2.bf16.msra.mxu0 %v7411
    %10308 = vmatprep.subr.bf16.mxu0 %v7404
    %10309 = vmatpush2.bf16.msra.mxu0 %v7403
    %10310 = vmatprep.mubr.bf16.mxu0 %v4104
    %10311 = vmatmul.mubr.bf16.gmra.mxu0 %v4103
    %v10312 = vpop.f32.mrf.mxu0
    %v10313 = vadd.f32 %v10272, %v10312
    %v10314 = vpop.f32.mrf.mxu0
    %v10315 = vadd.f32 %v10274, %v10314
    %v10316 = vpop.f32.mrf.mxu0
    %v10317 = vpop.f32.mrf.mxu0
    %10318 = vdwg.mxu0
    %10319 = vmatprep.subr.bf16.mxu0 %v7524
    %10320 = vmatpush1.bf16.msra.mxu0 %v7523
    %10321 = vmatprep.subr.bf16.mxu0 %v7516
    %10322 = vmatpush1.bf16.msra.mxu0 %v7515
    %10323 = vmatprep.subr.bf16.mxu0 %v7508
    %10324 = vmatpush1.bf16.msra.mxu0 %v7507
    %10325 = vmatprep.subr.bf16.mxu0 %v7500
    %10326 = vmatpush1.bf16.msra.mxu0 %v7499
    %10327 = vmatprep.subr.bf16.mxu0 %v7492
    %10328 = vmatpush1.bf16.msra.mxu0 %v7491
    %10329 = vmatprep.subr.bf16.mxu0 %v7484
    %10330 = vmatpush1.bf16.msra.mxu0 %v7483
    %10331 = vmatprep.subr.bf16.mxu0 %v7476
    %10332 = vmatpush1.bf16.msra.mxu0 %v7475
    %10333 = vmatprep.subr.bf16.mxu0 %v7468
    %10334 = vmatpush1.bf16.msra.mxu0 %v7467
    %10335 = vmatprep.subr.bf16.mxu0 %v7588
    %10336 = vmatpush2.bf16.msra.mxu0 %v7587
    %10337 = vmatprep.subr.bf16.mxu0 %v7580
    %10338 = vmatpush2.bf16.msra.mxu0 %v7579
    %10339 = vmatprep.subr.bf16.mxu0 %v7572
    %10340 = vmatpush2.bf16.msra.mxu0 %v7571
    %10341 = vmatprep.subr.bf16.mxu0 %v7564
    %10342 = vmatpush2.bf16.msra.mxu0 %v7563
    %10343 = vmatprep.subr.bf16.mxu0 %v7556
    %10344 = vmatpush2.bf16.msra.mxu0 %v7555
    %10345 = vmatprep.subr.bf16.mxu0 %v7548
    %10346 = vmatpush2.bf16.msra.mxu0 %v7547
    %10347 = vmatprep.subr.bf16.mxu0 %v7540
    %10348 = vmatpush2.bf16.msra.mxu0 %v7539
    %10349 = vmatprep.subr.bf16.mxu0 %v7532
    %10350 = vmatpush2.bf16.msra.mxu0 %v7531
    %10351 = vmatprep.mubr.bf16.mxu0 %v4106
    %10352 = vmatmul.mubr.bf16.gmra.mxu0 %v4105
    %v10353 = vpop.f32.mrf.mxu0
    %v10354 = vadd.f32 %v10313, %v10353
    %v10355 = vpop.f32.mrf.mxu0
    %v10356 = vadd.f32 %v10315, %v10355
    %v10357 = vpop.f32.mrf.mxu0
    %v10358 = vpop.f32.mrf.mxu0
    %10359 = vdwg.mxu0
    %10360 = vmatprep.subr.bf16.mxu0 %v7652
    %10361 = vmatpush1.bf16.msra.mxu0 %v7651
    %10362 = vmatprep.subr.bf16.mxu0 %v7644
    %10363 = vmatpush1.bf16.msra.mxu0 %v7643
    %10364 = vmatprep.subr.bf16.mxu0 %v7636
    %10365 = vmatpush1.bf16.msra.mxu0 %v7635
    %10366 = vmatprep.subr.bf16.mxu0 %v7628
    %10367 = vmatpush1.bf16.msra.mxu0 %v7627
    %10368 = vmatprep.subr.bf16.mxu0 %v7620
    %10369 = vmatpush1.bf16.msra.mxu0 %v7619
    %10370 = vmatprep.subr.bf16.mxu0 %v7612
    %10371 = vmatpush1.bf16.msra.mxu0 %v7611
    %10372 = vmatprep.subr.bf16.mxu0 %v7604
    %10373 = vmatpush1.bf16.msra.mxu0 %v7603
    %10374 = vmatprep.subr.bf16.mxu0 %v7596
    %10375 = vmatpush1.bf16.msra.mxu0 %v7595
    %10376 = vmatprep.subr.bf16.mxu0 %v7716
    %10377 = vmatpush2.bf16.msra.mxu0 %v7715
    %10378 = vmatprep.subr.bf16.mxu0 %v7708
    %10379 = vmatpush2.bf16.msra.mxu0 %v7707
    %10380 = vmatprep.subr.bf16.mxu0 %v7700
    %10381 = vmatpush2.bf16.msra.mxu0 %v7699
    %10382 = vmatprep.subr.bf16.mxu0 %v7692
    %10383 = vmatpush2.bf16.msra.mxu0 %v7691
    %10384 = vmatprep.subr.bf16.mxu0 %v7684
    %10385 = vmatpush2.bf16.msra.mxu0 %v7683
    %10386 = vmatprep.subr.bf16.mxu0 %v7676
    %10387 = vmatpush2.bf16.msra.mxu0 %v7675
    %10388 = vmatprep.subr.bf16.mxu0 %v7668
    %10389 = vmatpush2.bf16.msra.mxu0 %v7667
    %10390 = vmatprep.subr.bf16.mxu0 %v7660
    %10391 = vmatpush2.bf16.msra.mxu0 %v7659
    %10392 = vmatprep.mubr.bf16.mxu0 %v4108
    %10393 = vmatmul.mubr.bf16.gmra.mxu0 %v4107
    %v10394 = vpop.f32.mrf.mxu0
    %v10395 = vadd.f32 %v10354, %v10394
    %v10396 = vpop.f32.mrf.mxu0
    %v10397 = vadd.f32 %v10356, %v10396
    %v10398 = vpop.f32.mrf.mxu0
    %v10399 = vpop.f32.mrf.mxu0
    %10400 = vdwg.mxu0
    %10401 = vmatprep.subr.bf16.mxu0 %v7780
    %10402 = vmatpush1.bf16.msra.mxu0 %v7779
    %10403 = vmatprep.subr.bf16.mxu0 %v7772
    %10404 = vmatpush1.bf16.msra.mxu0 %v7771
    %10405 = vmatprep.subr.bf16.mxu0 %v7764
    %10406 = vmatpush1.bf16.msra.mxu0 %v7763
    %10407 = vmatprep.subr.bf16.mxu0 %v7756
    %10408 = vmatpush1.bf16.msra.mxu0 %v7755
    %10409 = vmatprep.subr.bf16.mxu0 %v7748
    %10410 = vmatpush1.bf16.msra.mxu0 %v7747
    %10411 = vmatprep.subr.bf16.mxu0 %v7740
    %10412 = vmatpush1.bf16.msra.mxu0 %v7739
    %10413 = vmatprep.subr.bf16.mxu0 %v7732
    %10414 = vmatpush1.bf16.msra.mxu0 %v7731
    %10415 = vmatprep.subr.bf16.mxu0 %v7724
    %10416 = vmatpush1.bf16.msra.mxu0 %v7723
    %10417 = vmatprep.subr.bf16.mxu0 %v7844
    %10418 = vmatpush2.bf16.msra.mxu0 %v7843
    %10419 = vmatprep.subr.bf16.mxu0 %v7836
    %10420 = vmatpush2.bf16.msra.mxu0 %v7835
    %10421 = vmatprep.subr.bf16.mxu0 %v7828
    %10422 = vmatpush2.bf16.msra.mxu0 %v7827
    %10423 = vmatprep.subr.bf16.mxu0 %v7820
    %10424 = vmatpush2.bf16.msra.mxu0 %v7819
    %10425 = vmatprep.subr.bf16.mxu0 %v7812
    %10426 = vmatpush2.bf16.msra.mxu0 %v7811
    %10427 = vmatprep.subr.bf16.mxu0 %v7804
    %10428 = vmatpush2.bf16.msra.mxu0 %v7803
    %10429 = vmatprep.subr.bf16.mxu0 %v7796
    %10430 = vmatpush2.bf16.msra.mxu0 %v7795
    %10431 = vmatprep.subr.bf16.mxu0 %v7788
    %10432 = vmatpush2.bf16.msra.mxu0 %v7787
    %10433 = vmatprep.mubr.bf16.mxu0 %v4110
    %10434 = vmatmul.mubr.bf16.gmra.mxu0 %v4109
    %v10435 = vpop.f32.mrf.mxu0
    %v10436 = vadd.f32 %v10395, %v10435
    %v10437 = vpop.f32.mrf.mxu0
    %v10438 = vadd.f32 %v10397, %v10437
    %v10439 = vpop.f32.mrf.mxu0
    %v10440 = vpop.f32.mrf.mxu0
    %10441 = vdwg.mxu0
    %10442 = vmatprep.subr.bf16.mxu0 %v7908
    %10443 = vmatpush1.bf16.msra.mxu0 %v7907
    %10444 = vmatprep.subr.bf16.mxu0 %v7900
    %10445 = vmatpush1.bf16.msra.mxu0 %v7899
    %10446 = vmatprep.subr.bf16.mxu0 %v7892
    %10447 = vmatpush1.bf16.msra.mxu0 %v7891
    %10448 = vmatprep.subr.bf16.mxu0 %v7884
    %10449 = vmatpush1.bf16.msra.mxu0 %v7883
    %10450 = vmatprep.subr.bf16.mxu0 %v7876
    %10451 = vmatpush1.bf16.msra.mxu0 %v7875
    %10452 = vmatprep.subr.bf16.mxu0 %v7868
    %10453 = vmatpush1.bf16.msra.mxu0 %v7867
    %10454 = vmatprep.subr.bf16.mxu0 %v7860
    %10455 = vmatpush1.bf16.msra.mxu0 %v7859
    %10456 = vmatprep.subr.bf16.mxu0 %v7852
    %10457 = vmatpush1.bf16.msra.mxu0 %v7851
    %10458 = vmatprep.subr.bf16.mxu0 %v7972
    %10459 = vmatpush2.bf16.msra.mxu0 %v7971
    %10460 = vmatprep.subr.bf16.mxu0 %v7964
    %10461 = vmatpush2.bf16.msra.mxu0 %v7963
    %10462 = vmatprep.subr.bf16.mxu0 %v7956
    %10463 = vmatpush2.bf16.msra.mxu0 %v7955
    %10464 = vmatprep.subr.bf16.mxu0 %v7948
    %10465 = vmatpush2.bf16.msra.mxu0 %v7947
    %10466 = vmatprep.subr.bf16.mxu0 %v7940
    %10467 = vmatpush2.bf16.msra.mxu0 %v7939
    %10468 = vmatprep.subr.bf16.mxu0 %v7932
    %10469 = vmatpush2.bf16.msra.mxu0 %v7931
    %10470 = vmatprep.subr.bf16.mxu0 %v7924
    %10471 = vmatpush2.bf16.msra.mxu0 %v7923
    %10472 = vmatprep.subr.bf16.mxu0 %v7916
    %10473 = vmatpush2.bf16.msra.mxu0 %v7915
    %10474 = vmatprep.mubr.bf16.mxu0 %v4112
    %10475 = vmatmul.mubr.bf16.gmra.mxu0 %v4111
    %v10476 = vpop.f32.mrf.mxu0
    %v10477 = vadd.f32 %v10436, %v10476
    %v10478 = vpop.f32.mrf.mxu0
    %v10479 = vadd.f32 %v10438, %v10478
    %v10480 = vpop.f32.mrf.mxu0
    %v10481 = vpop.f32.mrf.mxu0
    %10482 = vdwg.mxu0
    %10483 = vmatprep.subr.bf16.mxu0 %v8036
    %10484 = vmatpush1.bf16.msra.mxu0 %v8035
    %10485 = vmatprep.subr.bf16.mxu0 %v8028
    %10486 = vmatpush1.bf16.msra.mxu0 %v8027
    %10487 = vmatprep.subr.bf16.mxu0 %v8020
    %10488 = vmatpush1.bf16.msra.mxu0 %v8019
    %10489 = vmatprep.subr.bf16.mxu0 %v8012
    %10490 = vmatpush1.bf16.msra.mxu0 %v8011
    %10491 = vmatprep.subr.bf16.mxu0 %v8004
    %10492 = vmatpush1.bf16.msra.mxu0 %v8003
    %10493 = vmatprep.subr.bf16.mxu0 %v7996
    %10494 = vmatpush1.bf16.msra.mxu0 %v7995
    %10495 = vmatprep.subr.bf16.mxu0 %v7988
    %10496 = vmatpush1.bf16.msra.mxu0 %v7987
    %10497 = vmatprep.subr.bf16.mxu0 %v7980
    %10498 = vmatpush1.bf16.msra.mxu0 %v7979
    %10499 = vmatprep.subr.bf16.mxu0 %v8100
    %10500 = vmatpush2.bf16.msra.mxu0 %v8099
    %10501 = vmatprep.subr.bf16.mxu0 %v8092
    %10502 = vmatpush2.bf16.msra.mxu0 %v8091
    %10503 = vmatprep.subr.bf16.mxu0 %v8084
    %10504 = vmatpush2.bf16.msra.mxu0 %v8083
    %10505 = vmatprep.subr.bf16.mxu0 %v8076
    %10506 = vmatpush2.bf16.msra.mxu0 %v8075
    %10507 = vmatprep.subr.bf16.mxu0 %v8068
    %10508 = vmatpush2.bf16.msra.mxu0 %v8067
    %10509 = vmatprep.subr.bf16.mxu0 %v8060
    %10510 = vmatpush2.bf16.msra.mxu0 %v8059
    %10511 = vmatprep.subr.bf16.mxu0 %v8052
    %10512 = vmatpush2.bf16.msra.mxu0 %v8051
    %10513 = vmatprep.subr.bf16.mxu0 %v8044
    %10514 = vmatpush2.bf16.msra.mxu0 %v8043
    %10515 = vmatprep.mubr.bf16.mxu0 %v4114
    %10516 = vmatmul.mubr.bf16.gmra.mxu0 %v4113
    %v10517 = vpop.f32.mrf.mxu0
    %v10518 = vadd.f32 %v10477, %v10517
    %v10519 = vpop.f32.mrf.mxu0
    %v10520 = vadd.f32 %v10479, %v10519
    %v10521 = vpop.f32.mrf.mxu0
    %v10522 = vpop.f32.mrf.mxu0
    %10523 = vdwg.mxu0
    %10524 = vmatprep.subr.bf16.mxu0 %v8164
    %10525 = vmatpush1.bf16.msra.mxu0 %v8163
    %10526 = vmatprep.subr.bf16.mxu0 %v8156
    %10527 = vmatpush1.bf16.msra.mxu0 %v8155
    %10528 = vmatprep.subr.bf16.mxu0 %v8148
    %10529 = vmatpush1.bf16.msra.mxu0 %v8147
    %10530 = vmatprep.subr.bf16.mxu0 %v8140
    %10531 = vmatpush1.bf16.msra.mxu0 %v8139
    %10532 = vmatprep.subr.bf16.mxu0 %v8132
    %10533 = vmatpush1.bf16.msra.mxu0 %v8131
    %10534 = vmatprep.subr.bf16.mxu0 %v8124
    %10535 = vmatpush1.bf16.msra.mxu0 %v8123
    %10536 = vmatprep.subr.bf16.mxu0 %v8116
    %10537 = vmatpush1.bf16.msra.mxu0 %v8115
    %10538 = vmatprep.subr.bf16.mxu0 %v8108
    %10539 = vmatpush1.bf16.msra.mxu0 %v8107
    %10540 = vmatprep.subr.bf16.mxu0 %v8228
    %10541 = vmatpush2.bf16.msra.mxu0 %v8227
    %10542 = vmatprep.subr.bf16.mxu0 %v8220
    %10543 = vmatpush2.bf16.msra.mxu0 %v8219
    %10544 = vmatprep.subr.bf16.mxu0 %v8212
    %10545 = vmatpush2.bf16.msra.mxu0 %v8211
    %10546 = vmatprep.subr.bf16.mxu0 %v8204
    %10547 = vmatpush2.bf16.msra.mxu0 %v8203
    %10548 = vmatprep.subr.bf16.mxu0 %v8196
    %10549 = vmatpush2.bf16.msra.mxu0 %v8195
    %10550 = vmatprep.subr.bf16.mxu0 %v8188
    %10551 = vmatpush2.bf16.msra.mxu0 %v8187
    %10552 = vmatprep.subr.bf16.mxu0 %v8180
    %10553 = vmatpush2.bf16.msra.mxu0 %v8179
    %10554 = vmatprep.subr.bf16.mxu0 %v8172
    %10555 = vmatpush2.bf16.msra.mxu0 %v8171
    %10556 = vmatprep.mubr.bf16.mxu0 %v4116
    %10557 = vmatmul.mubr.bf16.gmra.mxu0 %v4115
    %v10558 = vpop.f32.mrf.mxu0
    %v10559 = vadd.f32 %v10518, %v10558
    %v10560 = vpop.f32.mrf.mxu0
    %v10561 = vadd.f32 %v10520, %v10560
    %v10562 = vpop.f32.mrf.mxu0
    %v10563 = vpop.f32.mrf.mxu0
    %10564 = vdwg.mxu0
    %v10565 = vmax.f32 %v9575, 0.0
    %v10566 = vmax.f32 %v9577, 0.0
    %v10567 = vmax.f32 %v9903, 0.0
    %v10568 = vmax.f32 %v9905, 0.0
    %v10569 = vmax.f32 %v10231, 0.0
    %v10570 = vmax.f32 %v10233, 0.0
    %v10571 = vmax.f32 %v10559, 0.0
    %v10572 = vmax.f32 %v10561, 0.0
    %v10573 = vpack.c.bf16 %v10565, %v10565
    %v10574 = vpack.c.bf16 %v10566, %v10566
    %v10575 = vpack.c.bf16 %v10567, %v10567
    %v10576 = vpack.c.bf16 %v10568, %v10568
    %v10577 = vpack.c.bf16 %v10569, %v10569
    %v10578 = vpack.c.bf16 %v10570, %v10570
    %v10579 = vpack.c.bf16 %v10571, %v10571
    %v10580 = vpack.c.bf16 %v10572, %v10572
    %v10581 = vld [vmem:[#allocation10] sm:$0xf]
    %v10582 = vld [vmem:[#allocation10 + $0x4] sm:$0xf]
    %v10583 = vld [vmem:[#allocation10 + $0x8] sm:$0xf]
    %v10584 = vld [vmem:[#allocation10 + $0xc] sm:$0xf]
    %v10585 = vld [vmem:[#allocation10 + $0x10] sm:$0xf]
    %v10586 = vld [vmem:[#allocation10 + $0x14] sm:$0xf]
    %v10587 = vld [vmem:[#allocation10 + $0x18] sm:$0xf]
    %v10588 = vld [vmem:[#allocation10 + $0x1c] sm:$0xf]
    %v10589 = vld [vmem:[#allocation10 + $0x20] sm:$0xf]
    %v10590 = vld [vmem:[#allocation10 + $0x24] sm:$0xf]
    %v10591 = vld [vmem:[#allocation10 + $0x28] sm:$0xf]
    %v10592 = vld [vmem:[#allocation10 + $0x2c] sm:$0xf]
    %v10593 = vld [vmem:[#allocation10 + $0x30] sm:$0xf]
    %v10594 = vld [vmem:[#allocation10 + $0x34] sm:$0xf]
    %v10595 = vld [vmem:[#allocation10 + $0x38] sm:$0xf]
    %v10596 = vld [vmem:[#allocation10 + $0x3c] sm:$0xf]
    %v10597 = vld [vmem:[#allocation10 + $0x40] sm:$0xf]
    %v10598 = vld [vmem:[#allocation10 + $0x44] sm:$0xf]
    %v10599 = vld [vmem:[#allocation10 + $0x48] sm:$0xf]
    %v10600 = vld [vmem:[#allocation10 + $0x4c] sm:$0xf]
    %v10601 = vld [vmem:[#allocation10 + $0x50] sm:$0xf]
    %v10602 = vld [vmem:[#allocation10 + $0x54] sm:$0xf]
    %v10603 = vld [vmem:[#allocation10 + $0x58] sm:$0xf]
    %v10604 = vld [vmem:[#allocation10 + $0x5c] sm:$0xf]
    %v10605 = vld [vmem:[#allocation10 + $0x60] sm:$0xf]
    %v10606 = vld [vmem:[#allocation10 + $0x64] sm:$0xf]
    %v10607 = vld [vmem:[#allocation10 + $0x68] sm:$0xf]
    %v10608 = vld [vmem:[#allocation10 + $0x6c] sm:$0xf]
    %v10609 = vld [vmem:[#allocation10 + $0x70] sm:$0xf]
    %v10610 = vld [vmem:[#allocation10 + $0x74] sm:$0xf]
    %v10611 = vld [vmem:[#allocation10 + $0x78] sm:$0xf]
    %v10612 = vld [vmem:[#allocation10 + $0x7c] sm:$0xf]
    %v10613 = vld [vmem:[#allocation10 + $0x80] sm:$0xf]
    %v10614 = vld [vmem:[#allocation10 + $0x84] sm:$0xf]
    %v10615 = vld [vmem:[#allocation10 + $0x88] sm:$0xf]
    %v10616 = vld [vmem:[#allocation10 + $0x8c] sm:$0xf]
    %v10617 = vld [vmem:[#allocation10 + $0x90] sm:$0xf]
    %v10618 = vld [vmem:[#allocation10 + $0x94] sm:$0xf]
    %v10619 = vld [vmem:[#allocation10 + $0x98] sm:$0xf]
    %v10620 = vld [vmem:[#allocation10 + $0x9c] sm:$0xf]
    %v10621 = vld [vmem:[#allocation10 + $0xa0] sm:$0xf]
    %v10622 = vld [vmem:[#allocation10 + $0xa4] sm:$0xf]
    %v10623 = vld [vmem:[#allocation10 + $0xa8] sm:$0xf]
    %v10624 = vld [vmem:[#allocation10 + $0xac] sm:$0xf]
    %v10625 = vld [vmem:[#allocation10 + $0xb0] sm:$0xf]
    %v10626 = vld [vmem:[#allocation10 + $0xb4] sm:$0xf]
    %v10627 = vld [vmem:[#allocation10 + $0xb8] sm:$0xf]
    %v10628 = vld [vmem:[#allocation10 + $0xbc] sm:$0xf]
    %v10629 = vld [vmem:[#allocation10 + $0xc0] sm:$0xf]
    %v10630 = vld [vmem:[#allocation10 + $0xc4] sm:$0xf]
    %v10631 = vld [vmem:[#allocation10 + $0xc8] sm:$0xf]
    %v10632 = vld [vmem:[#allocation10 + $0xcc] sm:$0xf]
    %v10633 = vld [vmem:[#allocation10 + $0xd0] sm:$0xf]
    %v10634 = vld [vmem:[#allocation10 + $0xd4] sm:$0xf]
    %v10635 = vld [vmem:[#allocation10 + $0xd8] sm:$0xf]
    %v10636 = vld [vmem:[#allocation10 + $0xdc] sm:$0xf]
    %v10637 = vld [vmem:[#allocation10 + $0xe0] sm:$0xf]
    %v10638 = vld [vmem:[#allocation10 + $0xe4] sm:$0xf]
    %v10639 = vld [vmem:[#allocation10 + $0xe8] sm:$0xf]
    %v10640 = vld [vmem:[#allocation10 + $0xec] sm:$0xf]
    %v10641 = vld [vmem:[#allocation10 + $0xf0] sm:$0xf]
    %v10642 = vld [vmem:[#allocation10 + $0xf4] sm:$0xf]
    %v10643 = vld [vmem:[#allocation10 + $0xf8] sm:$0xf]
    %v10644 = vld [vmem:[#allocation10 + $0xfc] sm:$0xf]
    %v10645 = vld [vmem:[#allocation10 + $0x100] sm:$0xf]
    %v10646 = vld [vmem:[#allocation10 + $0x104] sm:$0xf]
    %v10647 = vld [vmem:[#allocation10 + $0x108] sm:$0xf]
    %v10648 = vld [vmem:[#allocation10 + $0x10c] sm:$0xf]
    %v10649 = vld [vmem:[#allocation10 + $0x110] sm:$0xf]
    %v10650 = vld [vmem:[#allocation10 + $0x114] sm:$0xf]
    %v10651 = vld [vmem:[#allocation10 + $0x118] sm:$0xf]
    %v10652 = vld [vmem:[#allocation10 + $0x11c] sm:$0xf]
    %v10653 = vld [vmem:[#allocation10 + $0x120] sm:$0xf]
    %v10654 = vld [vmem:[#allocation10 + $0x124] sm:$0xf]
    %v10655 = vld [vmem:[#allocation10 + $0x128] sm:$0xf]
    %v10656 = vld [vmem:[#allocation10 + $0x12c] sm:$0xf]
    %v10657 = vld [vmem:[#allocation10 + $0x130] sm:$0xf]
    %v10658 = vld [vmem:[#allocation10 + $0x134] sm:$0xf]
    %v10659 = vld [vmem:[#allocation10 + $0x138] sm:$0xf]
    %v10660 = vld [vmem:[#allocation10 + $0x13c] sm:$0xf]
    %v10661 = vld [vmem:[#allocation10 + $0x140] sm:$0xf]
    %v10662 = vld [vmem:[#allocation10 + $0x144] sm:$0xf]
    %v10663 = vld [vmem:[#allocation10 + $0x148] sm:$0xf]
    %v10664 = vld [vmem:[#allocation10 + $0x14c] sm:$0xf]
    %v10665 = vld [vmem:[#allocation10 + $0x150] sm:$0xf]
    %v10666 = vld [vmem:[#allocation10 + $0x154] sm:$0xf]
    %v10667 = vld [vmem:[#allocation10 + $0x158] sm:$0xf]
    %v10668 = vld [vmem:[#allocation10 + $0x15c] sm:$0xf]
    %v10669 = vld [vmem:[#allocation10 + $0x160] sm:$0xf]
    %v10670 = vld [vmem:[#allocation10 + $0x164] sm:$0xf]
    %v10671 = vld [vmem:[#allocation10 + $0x168] sm:$0xf]
    %v10672 = vld [vmem:[#allocation10 + $0x16c] sm:$0xf]
    %v10673 = vld [vmem:[#allocation10 + $0x170] sm:$0xf]
    %v10674 = vld [vmem:[#allocation10 + $0x174] sm:$0xf]
    %v10675 = vld [vmem:[#allocation10 + $0x178] sm:$0xf]
    %v10676 = vld [vmem:[#allocation10 + $0x17c] sm:$0xf]
    %v10677 = vld [vmem:[#allocation10 + $0x180] sm:$0xf]
    %v10678 = vld [vmem:[#allocation10 + $0x184] sm:$0xf]
    %v10679 = vld [vmem:[#allocation10 + $0x188] sm:$0xf]
    %v10680 = vld [vmem:[#allocation10 + $0x18c] sm:$0xf]
    %v10681 = vld [vmem:[#allocation10 + $0x190] sm:$0xf]
    %v10682 = vld [vmem:[#allocation10 + $0x194] sm:$0xf]
    %v10683 = vld [vmem:[#allocation10 + $0x198] sm:$0xf]
    %v10684 = vld [vmem:[#allocation10 + $0x19c] sm:$0xf]
    %v10685 = vld [vmem:[#allocation10 + $0x1a0] sm:$0xf]
    %v10686 = vld [vmem:[#allocation10 + $0x1a4] sm:$0xf]
    %v10687 = vld [vmem:[#allocation10 + $0x1a8] sm:$0xf]
    %v10688 = vld [vmem:[#allocation10 + $0x1ac] sm:$0xf]
    %v10689 = vld [vmem:[#allocation10 + $0x1b0] sm:$0xf]
    %v10690 = vld [vmem:[#allocation10 + $0x1b4] sm:$0xf]
    %v10691 = vld [vmem:[#allocation10 + $0x1b8] sm:$0xf]
    %v10692 = vld [vmem:[#allocation10 + $0x1bc] sm:$0xf]
    %v10693 = vld [vmem:[#allocation10 + $0x1c0] sm:$0xf]
    %v10694 = vld [vmem:[#allocation10 + $0x1c4] sm:$0xf]
    %v10695 = vld [vmem:[#allocation10 + $0x1c8] sm:$0xf]
    %v10696 = vld [vmem:[#allocation10 + $0x1cc] sm:$0xf]
    %v10697 = vld [vmem:[#allocation10 + $0x1d0] sm:$0xf]
    %v10698 = vld [vmem:[#allocation10 + $0x1d4] sm:$0xf]
    %v10699 = vld [vmem:[#allocation10 + $0x1d8] sm:$0xf]
    %v10700 = vld [vmem:[#allocation10 + $0x1dc] sm:$0xf]
    %v10701 = vld [vmem:[#allocation10 + $0x1e0] sm:$0xf]
    %v10702 = vld [vmem:[#allocation10 + $0x1e4] sm:$0xf]
    %v10703 = vld [vmem:[#allocation10 + $0x1e8] sm:$0xf]
    %v10704 = vld [vmem:[#allocation10 + $0x1ec] sm:$0xf]
    %v10705 = vld [vmem:[#allocation10 + $0x1f0] sm:$0xf]
    %v10706 = vld [vmem:[#allocation10 + $0x1f4] sm:$0xf]
    %v10707 = vld [vmem:[#allocation10 + $0x1f8] sm:$0xf]
    %v10708 = vld [vmem:[#allocation10 + $0x1fc] sm:$0xf]
    %v10709 = vld [vmem:[#allocation11] sm:$0x1]
    %v10711 = vlaneseq
    %v10712 = vshrl.u32 %v10711, 7
    %v10713 = vsub.s32 0, %v10712
    %v10714 = vrot.slane %v10709, %v10713
    %v10844 = vunpack.c.l.b16 %v10581
    %v10845 = vunpack.c.l.b16 %v10582
    %v10846 = vunpack.c.l.b16 %v10583
    %v10847 = vunpack.c.l.b16 %v10584
    %v10848 = vunpack.c.l.b16 %v10585
    %v10849 = vunpack.c.l.b16 %v10586
    %v10850 = vunpack.c.l.b16 %v10587
    %v10851 = vunpack.c.l.b16 %v10588
    %v10852 = vunpack.c.l.b16 %v10589
    %v10853 = vunpack.c.l.b16 %v10590
    %v10854 = vunpack.c.l.b16 %v10591
    %v10855 = vunpack.c.l.b16 %v10592
    %v10856 = vunpack.c.l.b16 %v10593
    %v10857 = vunpack.c.l.b16 %v10594
    %v10858 = vunpack.c.l.b16 %v10595
    %v10859 = vunpack.c.l.b16 %v10596
    %v10860 = vunpack.c.l.b16 %v10597
    %v10861 = vunpack.c.l.b16 %v10598
    %v10862 = vunpack.c.l.b16 %v10599
    %v10863 = vunpack.c.l.b16 %v10600
    %v10864 = vunpack.c.l.b16 %v10601
    %v10865 = vunpack.c.l.b16 %v10602
    %v10866 = vunpack.c.l.b16 %v10603
    %v10867 = vunpack.c.l.b16 %v10604
    %v10868 = vunpack.c.l.b16 %v10605
    %v10869 = vunpack.c.l.b16 %v10606
    %v10870 = vunpack.c.l.b16 %v10607
    %v10871 = vunpack.c.l.b16 %v10608
    %v10872 = vunpack.c.l.b16 %v10609
    %v10873 = vunpack.c.l.b16 %v10610
    %v10874 = vunpack.c.l.b16 %v10611
    %v10875 = vunpack.c.l.b16 %v10612
    %v10876 = vunpack.c.l.b16 %v10613
    %v10877 = vunpack.c.l.b16 %v10614
    %v10878 = vunpack.c.l.b16 %v10615
    %v10879 = vunpack.c.l.b16 %v10616
    %v10880 = vunpack.c.l.b16 %v10617
    %v10881 = vunpack.c.l.b16 %v10618
    %v10882 = vunpack.c.l.b16 %v10619
    %v10883 = vunpack.c.l.b16 %v10620
    %v10884 = vunpack.c.l.b16 %v10621
    %v10885 = vunpack.c.l.b16 %v10622
    %v10886 = vunpack.c.l.b16 %v10623
    %v10887 = vunpack.c.l.b16 %v10624
    %v10888 = vunpack.c.l.b16 %v10625
    %v10889 = vunpack.c.l.b16 %v10626
    %v10890 = vunpack.c.l.b16 %v10627
    %v10891 = vunpack.c.l.b16 %v10628
    %v10892 = vunpack.c.l.b16 %v10629
    %v10893 = vunpack.c.l.b16 %v10630
    %v10894 = vunpack.c.l.b16 %v10631
    %v10895 = vunpack.c.l.b16 %v10632
    %v10896 = vunpack.c.l.b16 %v10633
    %v10897 = vunpack.c.l.b16 %v10634
    %v10898 = vunpack.c.l.b16 %v10635
    %v10899 = vunpack.c.l.b16 %v10636
    %v10900 = vunpack.c.l.b16 %v10637
    %v10901 = vunpack.c.l.b16 %v10638
    %v10902 = vunpack.c.l.b16 %v10639
    %v10903 = vunpack.c.l.b16 %v10640
    %v10904 = vunpack.c.l.b16 %v10641
    %v10905 = vunpack.c.l.b16 %v10642
    %v10906 = vunpack.c.l.b16 %v10643
    %v10907 = vunpack.c.l.b16 %v10644
    %v10908 = vunpack.c.l.b16 %v10645
    %v10909 = vunpack.c.l.b16 %v10646
    %v10910 = vunpack.c.l.b16 %v10647
    %v10911 = vunpack.c.l.b16 %v10648
    %v10912 = vunpack.c.l.b16 %v10649
    %v10913 = vunpack.c.l.b16 %v10650
    %v10914 = vunpack.c.l.b16 %v10651
    %v10915 = vunpack.c.l.b16 %v10652
    %v10916 = vunpack.c.l.b16 %v10653
    %v10917 = vunpack.c.l.b16 %v10654
    %v10918 = vunpack.c.l.b16 %v10655
    %v10919 = vunpack.c.l.b16 %v10656
    %v10920 = vunpack.c.l.b16 %v10657
    %v10921 = vunpack.c.l.b16 %v10658
    %v10922 = vunpack.c.l.b16 %v10659
    %v10923 = vunpack.c.l.b16 %v10660
    %v10924 = vunpack.c.l.b16 %v10661
    %v10925 = vunpack.c.l.b16 %v10662
    %v10926 = vunpack.c.l.b16 %v10663
    %v10927 = vunpack.c.l.b16 %v10664
    %v10928 = vunpack.c.l.b16 %v10665
    %v10929 = vunpack.c.l.b16 %v10666
    %v10930 = vunpack.c.l.b16 %v10667
    %v10931 = vunpack.c.l.b16 %v10668
    %v10932 = vunpack.c.l.b16 %v10669
    %v10933 = vunpack.c.l.b16 %v10670
    %v10934 = vunpack.c.l.b16 %v10671
    %v10935 = vunpack.c.l.b16 %v10672
    %v10936 = vunpack.c.l.b16 %v10673
    %v10937 = vunpack.c.l.b16 %v10674
    %v10938 = vunpack.c.l.b16 %v10675
    %v10939 = vunpack.c.l.b16 %v10676
    %v10940 = vunpack.c.l.b16 %v10677
    %v10941 = vunpack.c.l.b16 %v10678
    %v10942 = vunpack.c.l.b16 %v10679
    %v10943 = vunpack.c.l.b16 %v10680
    %v10944 = vunpack.c.l.b16 %v10681
    %v10945 = vunpack.c.l.b16 %v10682
    %v10946 = vunpack.c.l.b16 %v10683
    %v10947 = vunpack.c.l.b16 %v10684
    %v10948 = vunpack.c.l.b16 %v10685
    %v10949 = vunpack.c.l.b16 %v10686
    %v10950 = vunpack.c.l.b16 %v10687
    %v10951 = vunpack.c.l.b16 %v10688
    %v10952 = vunpack.c.l.b16 %v10689
    %v10953 = vunpack.c.l.b16 %v10690
    %v10954 = vunpack.c.l.b16 %v10691
    %v10955 = vunpack.c.l.b16 %v10692
    %v10956 = vunpack.c.l.b16 %v10693
    %v10957 = vunpack.c.l.b16 %v10694
    %v10958 = vunpack.c.l.b16 %v10695
    %v10959 = vunpack.c.l.b16 %v10696
    %v10960 = vunpack.c.l.b16 %v10697
    %v10961 = vunpack.c.l.b16 %v10698
    %v10962 = vunpack.c.l.b16 %v10699
    %v10963 = vunpack.c.l.b16 %v10700
    %v10964 = vunpack.c.l.b16 %v10701
    %v10965 = vunpack.c.l.b16 %v10702
    %v10966 = vunpack.c.l.b16 %v10703
    %v10967 = vunpack.c.l.b16 %v10704
    %v10968 = vunpack.c.l.b16 %v10705
    %v10969 = vunpack.c.l.b16 %v10706
    %v10970 = vunpack.c.l.b16 %v10707
    %v10971 = vunpack.c.l.b16 %v10708
    %v10972 = vpack.c.b16 %v10845, %v10844
    %v10973 = vpack.c.b16 %v10847, %v10846
    %v10974 = vpack.c.b16 %v10849, %v10848
    %v10975 = vpack.c.b16 %v10851, %v10850
    %v10976 = vpack.c.b16 %v10853, %v10852
    %v10977 = vpack.c.b16 %v10855, %v10854
    %v10978 = vpack.c.b16 %v10857, %v10856
    %v10979 = vpack.c.b16 %v10859, %v10858
    %v10980 = vpack.c.b16 %v10861, %v10860
    %v10981 = vpack.c.b16 %v10863, %v10862
    %v10982 = vpack.c.b16 %v10865, %v10864
    %v10983 = vpack.c.b16 %v10867, %v10866
    %v10984 = vpack.c.b16 %v10869, %v10868
    %v10985 = vpack.c.b16 %v10871, %v10870
    %v10986 = vpack.c.b16 %v10873, %v10872
    %v10987 = vpack.c.b16 %v10875, %v10874
    %v10988 = vpack.c.b16 %v10877, %v10876
    %v10989 = vpack.c.b16 %v10879, %v10878
    %v10990 = vpack.c.b16 %v10881, %v10880
    %v10991 = vpack.c.b16 %v10883, %v10882
    %v10992 = vpack.c.b16 %v10885, %v10884
    %v10993 = vpack.c.b16 %v10887, %v10886
    %v10994 = vpack.c.b16 %v10889, %v10888
    %v10995 = vpack.c.b16 %v10891, %v10890
    %v10996 = vpack.c.b16 %v10893, %v10892
    %v10997 = vpack.c.b16 %v10895, %v10894
    %v10998 = vpack.c.b16 %v10897, %v10896
    %v10999 = vpack.c.b16 %v10899, %v10898
    %v11000 = vpack.c.b16 %v10901, %v10900
    %v11001 = vpack.c.b16 %v10903, %v10902
    %v11002 = vpack.c.b16 %v10905, %v10904
    %v11003 = vpack.c.b16 %v10907, %v10906
    %v11004 = vpack.c.b16 %v10909, %v10908
    %v11005 = vpack.c.b16 %v10911, %v10910
    %v11006 = vpack.c.b16 %v10913, %v10912
    %v11007 = vpack.c.b16 %v10915, %v10914
    %v11008 = vpack.c.b16 %v10917, %v10916
    %v11009 = vpack.c.b16 %v10919, %v10918
    %v11010 = vpack.c.b16 %v10921, %v10920
    %v11011 = vpack.c.b16 %v10923, %v10922
    %v11012 = vpack.c.b16 %v10925, %v10924
    %v11013 = vpack.c.b16 %v10927, %v10926
    %v11014 = vpack.c.b16 %v10929, %v10928
    %v11015 = vpack.c.b16 %v10931, %v10930
    %v11016 = vpack.c.b16 %v10933, %v10932
    %v11017 = vpack.c.b16 %v10935, %v10934
    %v11018 = vpack.c.b16 %v10937, %v10936
    %v11019 = vpack.c.b16 %v10939, %v10938
    %v11020 = vpack.c.b16 %v10941, %v10940
    %v11021 = vpack.c.b16 %v10943, %v10942
    %v11022 = vpack.c.b16 %v10945, %v10944
    %v11023 = vpack.c.b16 %v10947, %v10946
    %v11024 = vpack.c.b16 %v10949, %v10948
    %v11025 = vpack.c.b16 %v10951, %v10950
    %v11026 = vpack.c.b16 %v10953, %v10952
    %v11027 = vpack.c.b16 %v10955, %v10954
    %v11028 = vpack.c.b16 %v10957, %v10956
    %v11029 = vpack.c.b16 %v10959, %v10958
    %v11030 = vpack.c.b16 %v10961, %v10960
    %v11031 = vpack.c.b16 %v10963, %v10962
    %v11032 = vpack.c.b16 %v10965, %v10964
    %v11033 = vpack.c.b16 %v10967, %v10966
    %v11034 = vpack.c.b16 %v10969, %v10968
    %v11035 = vpack.c.b16 %v10971, %v10970
    %11100 = vmatprep.subr.bf16.mxu0 0
    %11101 = vmatpush1.bf16.msra.mxu0 %v10979
    %11102 = vmatprep.subr.bf16.mxu0 0
    %11103 = vmatpush1.bf16.msra.mxu0 %v10978
    %11104 = vmatprep.subr.bf16.mxu0 0
    %11105 = vmatpush1.bf16.msra.mxu0 %v10977
    %11106 = vmatprep.subr.bf16.mxu0 0
    %11107 = vmatpush1.bf16.msra.mxu0 %v10976
    %11108 = vmatprep.subr.bf16.mxu0 0
    %11109 = vmatpush1.bf16.msra.mxu0 %v10975
    %11110 = vmatprep.subr.bf16.mxu0 0
    %11111 = vmatpush1.bf16.msra.mxu0 %v10974
    %11112 = vmatprep.subr.bf16.mxu0 0
    %11113 = vmatpush1.bf16.msra.mxu0 %v10973
    %11114 = vmatprep.subr.bf16.mxu0 0
    %11115 = vmatpush1.bf16.msra.mxu0 %v10972
    %11116 = vmatprep.subr.bf16.mxu0 0
    %11117 = vmatpush2.bf16.msra.mxu0 %v10987
    %11118 = vmatprep.subr.bf16.mxu0 0
    %11119 = vmatpush2.bf16.msra.mxu0 %v10986
    %11120 = vmatprep.subr.bf16.mxu0 0
    %11121 = vmatpush2.bf16.msra.mxu0 %v10985
    %11122 = vmatprep.subr.bf16.mxu0 0
    %11123 = vmatpush2.bf16.msra.mxu0 %v10984
    %11124 = vmatprep.subr.bf16.mxu0 0
    %11125 = vmatpush2.bf16.msra.mxu0 %v10983
    %11126 = vmatprep.subr.bf16.mxu0 0
    %11127 = vmatpush2.bf16.msra.mxu0 %v10982
    %11128 = vmatprep.subr.bf16.mxu0 0
    %11129 = vmatpush2.bf16.msra.mxu0 %v10981
    %11130 = vmatprep.subr.bf16.mxu0 0
    %11131 = vmatpush2.bf16.msra.mxu0 %v10980
    %11132 = vmatprep.mubr.bf16.mxu0 %v10574
    %11133 = vmatmul.mubr.bf16.gmra.mxu0 %v10573
    %v11134 = vpop.f32.mrf.mxu0
    %v11135 = vadd.f32 %v10714, %v11134
    %v11136 = vpop.f32.mrf.mxu0
    %v11137 = vpop.f32.mrf.mxu0
    %v11138 = vpop.f32.mrf.mxu0
    %11139 = vdwg.mxu0
    %11140 = vmatprep.subr.bf16.mxu0 0
    %11141 = vmatpush1.bf16.msra.mxu0 %v10995
    %11142 = vmatprep.subr.bf16.mxu0 0
    %11143 = vmatpush1.bf16.msra.mxu0 %v10994
    %11144 = vmatprep.subr.bf16.mxu0 0
    %11145 = vmatpush1.bf16.msra.mxu0 %v10993
    %11146 = vmatprep.subr.bf16.mxu0 0
    %11147 = vmatpush1.bf16.msra.mxu0 %v10992
    %11148 = vmatprep.subr.bf16.mxu0 0
    %11149 = vmatpush1.bf16.msra.mxu0 %v10991
    %11150 = vmatprep.subr.bf16.mxu0 0
    %11151 = vmatpush1.bf16.msra.mxu0 %v10990
    %11152 = vmatprep.subr.bf16.mxu0 0
    %11153 = vmatpush1.bf16.msra.mxu0 %v10989
    %11154 = vmatprep.subr.bf16.mxu0 0
    %11155 = vmatpush1.bf16.msra.mxu0 %v10988
    %11156 = vmatprep.subr.bf16.mxu0 0
    %11157 = vmatpush2.bf16.msra.mxu0 %v11003
    %11158 = vmatprep.subr.bf16.mxu0 0
    %11159 = vmatpush2.bf16.msra.mxu0 %v11002
    %11160 = vmatprep.subr.bf16.mxu0 0
    %11161 = vmatpush2.bf16.msra.mxu0 %v11001
    %11162 = vmatprep.subr.bf16.mxu0 0
    %11163 = vmatpush2.bf16.msra.mxu0 %v11000
    %11164 = vmatprep.subr.bf16.mxu0 0
    %11165 = vmatpush2.bf16.msra.mxu0 %v10999
    %11166 = vmatprep.subr.bf16.mxu0 0
    %11167 = vmatpush2.bf16.msra.mxu0 %v10998
    %11168 = vmatprep.subr.bf16.mxu0 0
    %11169 = vmatpush2.bf16.msra.mxu0 %v10997
    %11170 = vmatprep.subr.bf16.mxu0 0
    %11171 = vmatpush2.bf16.msra.mxu0 %v10996
    %11172 = vmatprep.mubr.bf16.mxu0 %v10576
    %11173 = vmatmul.mubr.bf16.gmra.mxu0 %v10575
    %v11174 = vpop.f32.mrf.mxu0
    %v11175 = vadd.f32 %v11135, %v11174
    %v11176 = vpop.f32.mrf.mxu0
    %v11177 = vpop.f32.mrf.mxu0
    %v11178 = vpop.f32.mrf.mxu0
    %11179 = vdwg.mxu0
    %11180 = vmatprep.subr.bf16.mxu0 0
    %11181 = vmatpush1.bf16.msra.mxu0 %v11011
    %11182 = vmatprep.subr.bf16.mxu0 0
    %11183 = vmatpush1.bf16.msra.mxu0 %v11010
    %11184 = vmatprep.subr.bf16.mxu0 0
    %11185 = vmatpush1.bf16.msra.mxu0 %v11009
    %11186 = vmatprep.subr.bf16.mxu0 0
    %11187 = vmatpush1.bf16.msra.mxu0 %v11008
    %11188 = vmatprep.subr.bf16.mxu0 0
    %11189 = vmatpush1.bf16.msra.mxu0 %v11007
    %11190 = vmatprep.subr.bf16.mxu0 0
    %11191 = vmatpush1.bf16.msra.mxu0 %v11006
    %11192 = vmatprep.subr.bf16.mxu0 0
    %11193 = vmatpush1.bf16.msra.mxu0 %v11005
    %11194 = vmatprep.subr.bf16.mxu0 0
    %11195 = vmatpush1.bf16.msra.mxu0 %v11004
    %11196 = vmatprep.subr.bf16.mxu0 0
    %11197 = vmatpush2.bf16.msra.mxu0 %v11019
    %11198 = vmatprep.subr.bf16.mxu0 0
    %11199 = vmatpush2.bf16.msra.mxu0 %v11018
    %11200 = vmatprep.subr.bf16.mxu0 0
    %11201 = vmatpush2.bf16.msra.mxu0 %v11017
    %11202 = vmatprep.subr.bf16.mxu0 0
    %11203 = vmatpush2.bf16.msra.mxu0 %v11016
    %11204 = vmatprep.subr.bf16.mxu0 0
    %11205 = vmatpush2.bf16.msra.mxu0 %v11015
    %11206 = vmatprep.subr.bf16.mxu0 0
    %11207 = vmatpush2.bf16.msra.mxu0 %v11014
    %11208 = vmatprep.subr.bf16.mxu0 0
    %11209 = vmatpush2.bf16.msra.mxu0 %v11013
    %11210 = vmatprep.subr.bf16.mxu0 0
    %11211 = vmatpush2.bf16.msra.mxu0 %v11012
    %11212 = vmatprep.mubr.bf16.mxu0 %v10578
    %11213 = vmatmul.mubr.bf16.gmra.mxu0 %v10577
    %v11214 = vpop.f32.mrf.mxu0
    %v11215 = vadd.f32 %v11175, %v11214
    %v11216 = vpop.f32.mrf.mxu0
    %v11217 = vpop.f32.mrf.mxu0
    %v11218 = vpop.f32.mrf.mxu0
    %11219 = vdwg.mxu0
    %11220 = vmatprep.subr.bf16.mxu0 0
    %11221 = vmatpush1.bf16.msra.mxu0 %v11027
    %11222 = vmatprep.subr.bf16.mxu0 0
    %11223 = vmatpush1.bf16.msra.mxu0 %v11026
    %11224 = vmatprep.subr.bf16.mxu0 0
    %11225 = vmatpush1.bf16.msra.mxu0 %v11025
    %11226 = vmatprep.subr.bf16.mxu0 0
    %11227 = vmatpush1.bf16.msra.mxu0 %v11024
    %11228 = vmatprep.subr.bf16.mxu0 0
    %11229 = vmatpush1.bf16.msra.mxu0 %v11023
    %11230 = vmatprep.subr.bf16.mxu0 0
    %11231 = vmatpush1.bf16.msra.mxu0 %v11022
    %11232 = vmatprep.subr.bf16.mxu0 0
    %11233 = vmatpush1.bf16.msra.mxu0 %v11021
    %11234 = vmatprep.subr.bf16.mxu0 0
    %11235 = vmatpush1.bf16.msra.mxu0 %v11020
    %11236 = vmatprep.subr.bf16.mxu0 0
    %11237 = vmatpush2.bf16.msra.mxu0 %v11035
    %11238 = vmatprep.subr.bf16.mxu0 0
    %11239 = vmatpush2.bf16.msra.mxu0 %v11034
    %11240 = vmatprep.subr.bf16.mxu0 0
    %11241 = vmatpush2.bf16.msra.mxu0 %v11033
    %11242 = vmatprep.subr.bf16.mxu0 0
    %11243 = vmatpush2.bf16.msra.mxu0 %v11032
    %11244 = vmatprep.subr.bf16.mxu0 0
    %11245 = vmatpush2.bf16.msra.mxu0 %v11031
    %11246 = vmatprep.subr.bf16.mxu0 0
    %11247 = vmatpush2.bf16.msra.mxu0 %v11030
    %11248 = vmatprep.subr.bf16.mxu0 0
    %11249 = vmatpush2.bf16.msra.mxu0 %v11029
    %11250 = vmatprep.subr.bf16.mxu0 0
    %11251 = vmatpush2.bf16.msra.mxu0 %v11028
    %11252 = vmatprep.mubr.bf16.mxu0 %v10580
    %11253 = vmatmul.mubr.bf16.gmra.mxu0 %v10579
    %v11254 = vpop.f32.mrf.mxu0
    %v11255 = vadd.f32 %v11215, %v11254
    %v11256 = vpop.f32.mrf.mxu0
    %v11257 = vpop.f32.mrf.mxu0
    %v11258 = vpop.f32.mrf.mxu0
    %11259 = vdwg.mxu0
    %11260 = vst [vmem:[%s7] sm:$0xff] %v11255
    // Predicated region
    $region54: #{inception_aux_forward.1} parent=1 // pred_check
      _
    $region55: #{inception_aux_forward.1} parent=1 // pred_check_branch
      %11262 = sbr.rel (0) target = $region57
    $region56: #{inception_aux_forward.1} parent=1 // pred_region
      _
    $region57: #{inception_aux_forward.1} parent=1 // pred_fallthru
      _
    // Predicated region
    $region58: #{inception_aux_forward.1} parent=1 // pred_check
      _
    $region59: #{inception_aux_forward.1} parent=1 // pred_check_branch
      %11264 = sbr.rel (0) target = $region61
    $region60: #{inception_aux_forward.1} parent=1 // pred_region
      _
    $region61: #{inception_aux_forward.1} parent=1 // pred_fallthru
      _
    %11265 = vsyncpa [#allocation4], 1
    %11266 = vsyncpa [#allocation6], 1
    %11267 = vsyncpa [#allocation9], 1
    %11268 = vsyncpa [#allocation12], 1

</llo_original>
